<compile_context>
chip_gen: v5e
topology: v5e:2x2
jax: 0.10.0
libtpu: 0.0.40
codegen_flags: <defaults>
</compile_context>

<pallas_src>
import functools
import math

import jax
import jax.numpy as jnp
import numpy as np
from jax.experimental import pallas as pl
from jax.experimental.pallas import tpu as pltpu


def _round_up(x, m):
    return ((x + m - 1) // m) * m


def _pick_tile_and_vmem(tile_pillars=None):
    """Pillar tile + scoped-VMEM limit per TPU generation.

    64 MiB-VMEM chips (v7x): tile=256 pillars, 48 MiB limit.
    128 MiB-VMEM chips (v5e/v6e): tile=512 pillars, 96 MiB limit.
    Always leaves ~25% of physical VMEM as headroom for double-buffering + temps.
    """
    phys = 64 << 20
    try:
        phys = pltpu.get_tpu_info().vmem_capacity_bytes
    except Exception:
        pass
    if tile_pillars is not None:
        tile = int(tile_pillars)
    else:
        tile = 512 if phys >= (128 << 20) else 256
    vmem_limit = max(32 << 20, min(int(phys) * 3 // 4, 96 << 20))
    return tile, vmem_limit


# ----------------------------------------------------------------------------------
# Pass 1: per-channel BatchNorm statistics -> folded (scale, shift)
# ----------------------------------------------------------------------------------
def pfn_stats_kernel(x_ref, w_ref, gamma_ref, beta_ref,      # inputs
                     scale_ref, shift_ref,                   # outputs (1, C) each
                     mean_acc, m2_acc,                        # VMEM scratch (1, C) each
                     *, n_pillars, points_per_pillar, eps):
    i = pl.program_id(0)
    rows = x_ref.shape[0]                        # tile * P (static block shape)
    tile = rows // points_per_pillar

    @pl.when(i == 0)
    def _init():
        mean_acc[...] = jnp.zeros_like(mean_acc)
        m2_acc[...] = jnp.zeros_like(m2_acc)

    # Linear (MXU): (tile*P, Cin) @ (Cin, C) -> (tile*P, C)
    lin = jnp.dot(x_ref[...], w_ref[...], preferred_element_type=jnp.float32)

    # Edge block only: rows past the last valid pillar hold unspecified stale VMEM data
    # (the input is NOT padded). jnp.where zeroes them NaN-safely; zero rows contribute 0
    # to both sums -> single-sweep statistics.
    valid_pillars = jnp.minimum(n_pillars - i * tile, tile)            # int32 scalar
    valid_rows = valid_pillars * points_per_pillar                      # int32 scalar
    row_ids = jax.lax.broadcasted_iota(jnp.int32, (rows, 1), 0)
    lin_m = jnp.where(row_ids < valid_rows, lin, 0.0)

    n_b = valid_rows.astype(jnp.float32)
    sum_b = jnp.sum(lin_m, axis=0, keepdims=True)                       # (1, C)
    sq_b = jnp.sum(lin_m * lin_m, axis=0, keepdims=True)                # (1, C)
    mean_b = sum_b / n_b
    m2_b = sq_b - sum_b * mean_b

    # Chan / Welford parallel combine with the running (mean, M2). Correct because the
    # grid axis is "arbitrary" (sequential); all previous tiles are full.
    n_a = (i * rows).astype(jnp.float32)
    n = n_a + n_b
    delta = mean_b - mean_acc[...]
    mean_acc[...] = mean_acc[...] + delta * (n_b / n)
    m2_acc[...] = m2_acc[...] + m2_b + (delta * delta) * (n_a * n_b / n)

    @pl.when(i == pl.num_programs(0) - 1)
    def _finalize():
        n_total = float(n_pillars * points_per_pillar)
        var = m2_acc[...] / n_total              # biased variance (PyTorch BN forward)
        inv_std = jax.lax.rsqrt(var + eps)
        scale_ref[...] = gamma_ref[...] * inv_std
        shift_ref[...] = beta_ref[...] - mean_acc[...] * gamma_ref[...] * inv_std


# ----------------------------------------------------------------------------------
# Pass 2: (folded) linear + bias + relu + max-over-points, halves written directly
# ----------------------------------------------------------------------------------
def pfn_apply_kernel(x_ref, w_ref, b_ref, out_ref):
    # x_ref: (tile*P, Cin)   w_ref: (Cin, C)   b_ref: (1, C)   out_ref: (tile, P, 2C)
    tile, P, _ = out_ref.shape
    C = w_ref.shape[1]

    lin = jnp.dot(x_ref[...], w_ref[...], preferred_element_type=jnp.float32) + b_ref[...]
    act = jnp.maximum(lin, 0.0).reshape(tile, P, C)        # minor-dim-preserving reshape
    x_max = jnp.max(act, axis=1, keepdims=True)            # (tile, 1, C)

    # Write the two 32-lane halves directly (no concat / x_rep temporaries).
    out_ref[:, :, :C] = act
    out_ref[:, :, C:] = jnp.broadcast_to(x_max, (tile, P, C))


# ----------------------------------------------------------------------------------
# Wrapper
# ----------------------------------------------------------------------------------
def pfn_layer(inputs, weight, gamma, beta, *, eps=1e-3, tile_pillars=None):
    """PFNLayer forward (use_norm=True, last_layer=False).

    inputs: (N, P, Cin) f32   weight: (Cin, C) f32 (C = out_channels // 2)
    gamma, beta: (1, C) f32   returns: (N, P, 2*C) f32
    """
    N, P, Cin = inputs.shape
    Cw, C = weight.shape
    assert Cw == Cin

    tile, vmem_limit = _pick_tile_and_vmem(tile_pillars)
    if tile >= N:
        tile = N                                 # single full block: no edge masking
    else:
        # Keep the flattened (tile*P) row-block a multiple of 8 (sublane constraint).
        tile = _round_up(tile, 8 // math.gcd(P, 8))
        if tile >= N:
            tile = N
    num_tiles = pl.cdiv(N, tile)

    # Flat (pillars*points, Cin) view of the input -- free, metadata-only reshape.
    # No zero padding: ragged tails are handled in-kernel / by edge-block masking.
    x2 = inputs.reshape(N * P, Cin)

    def _const2d(shape):
        return pl.BlockSpec(shape, lambda i: (0, 0))

    # ---- pass 1: batch statistics -> folded BN (scale, shift) ----
    scale, shift = pl.pallas_call(
        functools.partial(pfn_stats_kernel,
                          n_pillars=N, points_per_pillar=P, eps=eps),
        out_shape=(jax.ShapeDtypeStruct((1, C), jnp.float32),
                   jax.ShapeDtypeStruct((1, C), jnp.float32)),
        grid_spec=pltpu.PrefetchScalarGridSpec(
            num_scalar_prefetch=0,
            grid=(num_tiles,),
            in_specs=[pl.BlockSpec((tile * P, Cin), lambda i: (i, 0)),
                      _const2d((Cin, C)),
                      _const2d((1, C)),
                      _const2d((1, C))],
            out_specs=[_const2d((1, C)), _const2d((1, C))],
            scratch_shapes=[pltpu.VMEM((1, C), jnp.float32),
                            pltpu.VMEM((1, C), jnp.float32)]),
        compiler_params=pltpu.CompilerParams(
            dimension_semantics=("arbitrary",),          # ordered cross-tile reduction
            vmem_limit_bytes=vmem_limit),
    )(x2, weight, gamma, beta)

    # Fold BN into the tiny weight/bias: y = (x @ W) * scale + shift = x @ (W*scale) + shift
    w_fold = weight * scale                              # (Cin, C)
    bias = shift                                         # (1, C)

    # ---- pass 2: folded linear + relu + max-over-points + [x | x_max] output ----
    out = pl.pallas_call(
        pfn_apply_kernel,
        out_shape=jax.ShapeDtypeStruct((N, P, 2 * C), jnp.float32),
        grid_spec=pltpu.PrefetchScalarGridSpec(
            num_scalar_prefetch=0,
            grid=(num_tiles,),
            in_specs=[pl.BlockSpec((tile * P, Cin), lambda i: (i, 0)),
                      _const2d((Cin, C)),
                      _const2d((1, C))],
            out_specs=pl.BlockSpec((tile, P, 2 * C), lambda i: (i, 0, 0))),
        compiler_params=pltpu.CompilerParams(
            dimension_semantics=("parallel",),           # independent pillar tiles
            vmem_limit_bytes=vmem_limit),
    )(x2, w_fold, bias)

    return out


# ----------------------------------------------------------------------------------
# Pure-JAX reference mirroring the PyTorch forward
# ----------------------------------------------------------------------------------
def pfn_layer_ref(inputs, weight, gamma, beta, eps=1e-3):
    lin = jnp.einsum("npi,ic->npc", inputs, weight)
    mean = jnp.mean(lin, axis=(0, 1), keepdims=True)
    var = jnp.mean((lin - mean) ** 2, axis=(0, 1), keepdims=True)
    xn = (lin - mean) / jnp.sqrt(var + eps) * gamma + beta
    act = jnp.maximum(xn, 0.0)
    x_max = jnp.max(act, axis=1, keepdims=True)
    return jnp.concatenate([act, jnp.broadcast_to(x_max, act.shape)], axis=-1)


if __name__ == "__main__":
    key = jax.random.PRNGKey(0)
    k_x, k_w, k_g, k_b = jax.random.split(key, 4)

    # PFNLayer(in_channels=10, out_channels=64, use_norm=True, last_layer=False)
    # -> internal C = 64 // 2 = 32, output channel dim = 64.
    N, P, Cin, C_out = 300, 32, 10, 64
    C = C_out // 2

    inputs = jax.random.normal(k_x, (N, P, Cin), dtype=jnp.float32)
    weight = (jax.random.normal(k_w, (Cin, C), dtype=jnp.float32)
              * (1.0 / jnp.sqrt(jnp.float32(Cin))))
    gamma = 1.0 + 0.1 * jax.random.normal(k_g, (1, C), dtype=jnp.float32)
    beta = 0.1 * jax.random.normal(k_b, (1, C), dtype=jnp.float32)

    ref = pfn_layer_ref(inputs, weight, gamma, beta)

    # (a) multi-tile path with a ragged tail tile (300 = 2*128 + 44): exercises the
    #     where-masked statistics, the Chan combine and edge-block writeback masking.
    out = jax.block_until_ready(pfn_layer(inputs, weight, gamma, beta, tile_pillars=128))
    assert out.shape == (N, P, 2 * C)
    np.testing.assert_allclose(np.asarray(out), np.asarray(ref), rtol=1e-4, atol=1e-4)

    # (b) default per-generation tile (256 on v7x -> 2 tiles here; 512 on v5e/v6e ->
    #     clamps to a single full block), covering the un-masked fast path too.
    out2 = jax.block_until_ready(pfn_layer(inputs, weight, gamma, beta))
    np.testing.assert_allclose(np.asarray(out2), np.asarray(ref), rtol=1e-4, atol=1e-4)

    print("KERNEL_OK")
</pallas_src>

<mosaic_0001>
module attributes {stable_mosaic.version = 11 : i64} {
  func.func @pfn_stats_kernel(%arg0: i32, %arg1: memref<4096x10xf32, #tpu.memory_space<vmem>>, %arg2: memref<10x32xf32, #tpu.memory_space<vmem>>, %arg3: memref<1x32xf32, #tpu.memory_space<vmem>>, %arg4: memref<1x32xf32, #tpu.memory_space<vmem>>, %arg5: memref<1x32xf32, #tpu.memory_space<vmem>>, %arg6: memref<1x32xf32, #tpu.memory_space<vmem>>, %arg7: memref<1x32xf32, #tpu.memory_space<vmem>>, %arg8: memref<1x32xf32, #tpu.memory_space<vmem>>) attributes {dimension_semantics = [#tpu.dimension_semantics<arbitrary>], iteration_bounds = array<i64: 3>, scalar_prefetch = 0 : i64, scratch_operands = 2 : i64, tpu.core_type = #tpu.core_type<tc>, window_params = [{transform_indices = @transform_0, window_bounds = array<i64: 4096, 10>}, {pipeline_mode = #tpu.pipeline_mode<synchronous>, transform_indices = @transform_1, window_bounds = array<i64: 10, 32>}, {pipeline_mode = #tpu.pipeline_mode<synchronous>, transform_indices = @transform_2, window_bounds = array<i64: 1, 32>}, {pipeline_mode = #tpu.pipeline_mode<synchronous>, transform_indices = @transform_3, window_bounds = array<i64: 1, 32>}, {pipeline_mode = #tpu.pipeline_mode<synchronous>, transform_indices = @transform_4, window_bounds = array<i64: 1, 32>}, {pipeline_mode = #tpu.pipeline_mode<synchronous>, transform_indices = @transform_5, window_bounds = array<i64: 1, 32>}]} {
    %c0_i32 = arith.constant 0 : i32
    %0 = arith.cmpi eq, %arg0, %c0_i32 : i32
    %1 = arith.extui %0 : i1 to i32
    %c0_i32_0 = arith.constant 0 : i32
    %2 = arith.cmpi ne, %1, %c0_i32_0 : i32
    scf.if %2 {
      %cst_19 = arith.constant 0.000000e+00 : f32
      %50 = vector.broadcast %cst_19 : f32 to vector<1x32xf32>
      %c0_20 = arith.constant 0 : index
      %c0_21 = arith.constant 0 : index
      %51 = vector.load %arg7[%c0_20, %c0_21] : memref<1x32xf32, #tpu.memory_space<vmem>>, vector<1x32xf32>
      tpu.vector_store %arg7[%c0_20, %c0_21], %50 {strides = array<i32>} : memref<1x32xf32, #tpu.memory_space<vmem>>, vector<1x32xf32>,
      %cst_22 = arith.constant 0.000000e+00 : f32
      %52 = vector.broadcast %cst_22 : f32 to vector<1x32xf32>
      %c0_23 = arith.constant 0 : index
      %c0_24 = arith.constant 0 : index
      %53 = vector.load %arg8[%c0_23, %c0_24] : memref<1x32xf32, #tpu.memory_space<vmem>>, vector<1x32xf32>
      tpu.vector_store %arg8[%c0_23, %c0_24], %52 {strides = array<i32>} : memref<1x32xf32, #tpu.memory_space<vmem>>, vector<1x32xf32>,
    } else {
    }
    %c0 = arith.constant 0 : index
    %c0_1 = arith.constant 0 : index
    %3 = vector.load %arg1[%c0, %c0_1] : memref<4096x10xf32, #tpu.memory_space<vmem>>, vector<4096x10xf32>
    %c0_2 = arith.constant 0 : index
    %c0_3 = arith.constant 0 : index
    %4 = vector.load %arg2[%c0_2, %c0_3] : memref<10x32xf32, #tpu.memory_space<vmem>>, vector<10x32xf32>
    %cst = arith.constant dense<0.000000e+00> : vector<4096x32xf32>
    %5 = tpu.matmul %3, %4, %cst {dimension_numbers = #tpu.dot_dimension_numbers<[1], [0], [0], [1], [0, 0, 1, 1], [], []>} : vector<4096x10xf32>, vector<10x32xf32>, vector<4096x32xf32> -> vector<4096x32xf32>
    %c128_i32 = arith.constant 128 : i32
    %6 = arith.muli %arg0, %c128_i32 : i32
    %c300_i32 = arith.constant 300 : i32
    %7 = arith.subi %c300_i32, %6 : i32
    %c128_i32_4 = arith.constant 128 : i32
    %8 = arith.minsi %7, %c128_i32_4 : i32
    %c32_i32 = arith.constant 32 : i32
    %9 = arith.muli %8, %c32_i32 : i32
    %10 = tpu.iota {dimensions = array<i32: 0>} : vector<4096x1xi32>
    %11 = vector.broadcast %9 : i32 to vector<4096x1xi32>
    %12 = arith.cmpi slt, %10, %11 : vector<4096x1xi32>
    %cst_5 = arith.constant 0.000000e+00 : f32
    %13 = vector.shape_cast %12 : vector<4096x1xi1> to vector<4096x1xi1>
    %14 = vector.broadcast %13 : vector<4096x1xi1> to vector<4096x32xi1>
    %15 = vector.broadcast %cst_5 : f32 to vector<4096x32xf32>
    %16 = arith.select %14, %5, %15 : vector<4096x32xi1>, vector<4096x32xf32>
    %17 = arith.sitofp %9 : i32 to f32
    %cst_6 = arith.constant dense<0.000000e+00> : vector<32xf32>
    %18 = vector.multi_reduction <add>, %16, %cst_6 [0] : vector<4096x32xf32> to vector<32xf32>
    %19 = vector.shape_cast %18 : vector<32xf32> to vector<1x32xf32>
    %20 = arith.mulf %16, %16 : vector<4096x32xf32>
    %cst_7 = arith.constant dense<0.000000e+00> : vector<32xf32>
    %21 = vector.multi_reduction <add>, %20, %cst_7 [0] : vector<4096x32xf32> to vector<32xf32>
    %22 = vector.shape_cast %21 : vector<32xf32> to vector<1x32xf32>
    %23 = vector.broadcast %17 : f32 to vector<1x32xf32>
    %24 = arith.divf %19, %23 : vector<1x32xf32>
    %25 = arith.mulf %19, %24 : vector<1x32xf32>
    %26 = arith.subf %22, %25 : vector<1x32xf32>
    %c4096_i32 = arith.constant 4096 : i32
    %27 = arith.muli %arg0, %c4096_i32 : i32
    %28 = arith.sitofp %27 : i32 to f32
    %29 = arith.addf %28, %17 : f32
    %c0_8 = arith.constant 0 : index
    %c0_9 = arith.constant 0 : index
    %30 = vector.load %arg7[%c0_8, %c0_9] : memref<1x32xf32, #tpu.memory_space<vmem>>, vector<1x32xf32>
    %31 = arith.subf %24, %30 : vector<1x32xf32>
    %c0_10 = arith.constant 0 : index
    %c0_11 = arith.constant 0 : index
    %32 = vector.load %arg7[%c0_10, %c0_11] : memref<1x32xf32, #tpu.memory_space<vmem>>, vector<1x32xf32>
    %33 = arith.divf %17, %29 : f32
    %34 = vector.broadcast %33 : f32 to vector<1x32xf32>
    %35 = arith.mulf %31, %34 : vector<1x32xf32>
    %36 = arith.addf %32, %35 : vector<1x32xf32>
    %c0_12 = arith.constant 0 : index
    %c0_13 = arith.constant 0 : index
    %37 = vector.load %arg7[%c0_12, %c0_13] : memref<1x32xf32, #tpu.memory_space<vmem>>, vector<1x32xf32>
    tpu.vector_store %arg7[%c0_12, %c0_13], %36 {strides = array<i32>} : memref<1x32xf32, #tpu.memory_space<vmem>>, vector<1x32xf32>,
    %c0_14 = arith.constant 0 : index
    %c0_15 = arith.constant 0 : index
    %38 = vector.load %arg8[%c0_14, %c0_15] : memref<1x32xf32, #tpu.memory_space<vmem>>, vector<1x32xf32>
    %39 = arith.addf %38, %26 : vector<1x32xf32>
    %40 = arith.mulf %31, %31 : vector<1x32xf32>
    %41 = arith.mulf %28, %17 : f32
    %42 = arith.divf %41, %29 : f32
    %43 = vector.broadcast %42 : f32 to vector<1x32xf32>
    %44 = arith.mulf %40, %43 : vector<1x32xf32>
    %45 = arith.addf %39, %44 : vector<1x32xf32>
    %c0_16 = arith.constant 0 : index
    %c0_17 = arith.constant 0 : index
    %46 = vector.load %arg8[%c0_16, %c0_17] : memref<1x32xf32, #tpu.memory_space<vmem>>, vector<1x32xf32>
    tpu.vector_store %arg8[%c0_16, %c0_17], %45 {strides = array<i32>} : memref<1x32xf32, #tpu.memory_space<vmem>>, vector<1x32xf32>,
    %c2_i32 = arith.constant 2 : i32
    %47 = arith.cmpi eq, %arg0, %c2_i32 : i32
    %48 = arith.extui %47 : i1 to i32
    %c0_i32_18 = arith.constant 0 : i32
    %49 = arith.cmpi ne, %48, %c0_i32_18 : i32
    scf.if %49 {
      %c0_19 = arith.constant 0 : index
      %c0_20 = arith.constant 0 : index
      %50 = vector.load %arg8[%c0_19, %c0_20] : memref<1x32xf32, #tpu.memory_space<vmem>>, vector<1x32xf32>
      %cst_21 = arith.constant 9.600000e+03 : f32
      %51 = vector.broadcast %cst_21 : f32 to vector<1x32xf32>
      %52 = arith.divf %50, %51 : vector<1x32xf32>
      %cst_22 = arith.constant 1.000000e-03 : f32
      %53 = vector.broadcast %cst_22 : f32 to vector<1x32xf32>
      %54 = arith.addf %52, %53 : vector<1x32xf32>
      %55 = math.rsqrt %54 : vector<1x32xf32>
      %c0_23 = arith.constant 0 : index
      %c0_24 = arith.constant 0 : index
      %56 = vector.load %arg3[%c0_23, %c0_24] : memref<1x32xf32, #tpu.memory_space<vmem>>, vector<1x32xf32>
      %57 = arith.mulf %56, %55 : vector<1x32xf32>
      %c0_25 = arith.constant 0 : index
      %c0_26 = arith.constant 0 : index
      %58 = vector.load %arg5[%c0_25, %c0_26] : memref<1x32xf32, #tpu.memory_space<vmem>>, vector<1x32xf32>
      tpu.vector_store %arg5[%c0_25, %c0_26], %57 {strides = array<i32>} : memref<1x32xf32, #tpu.memory_space<vmem>>, vector<1x32xf32>,
      %c0_27 = arith.constant 0 : index
      %c0_28 = arith.constant 0 : index
      %59 = vector.load %arg4[%c0_27, %c0_28] : memref<1x32xf32, #tpu.memory_space<vmem>>, vector<1x32xf32>
      %c0_29 = arith.constant 0 : index
      %c0_30 = arith.constant 0 : index
      %60 = vector.load %arg7[%c0_29, %c0_30] : memref<1x32xf32, #tpu.memory_space<vmem>>, vector<1x32xf32>
      %c0_31 = arith.constant 0 : index
      %c0_32 = arith.constant 0 : index
      %61 = vector.load %arg3[%c0_31, %c0_32] : memref<1x32xf32, #tpu.memory_space<vmem>>, vector<1x32xf32>
      %62 = arith.mulf %60, %61 : vector<1x32xf32>
      %63 = arith.mulf %62, %55 : vector<1x32xf32>
      %64 = arith.subf %59, %63 : vector<1x32xf32>
      %c0_33 = arith.constant 0 : index
      %c0_34 = arith.constant 0 : index
      %65 = vector.load %arg6[%c0_33, %c0_34] : memref<1x32xf32, #tpu.memory_space<vmem>>, vector<1x32xf32>
      tpu.vector_store %arg6[%c0_33, %c0_34], %64 {strides = array<i32>} : memref<1x32xf32, #tpu.memory_space<vmem>>, vector<1x32xf32>,
    } else {
    }
    return
  }
  func.func @transform_0(%arg0: i32) -> (i32, i32) {
    %c0_i32 = arith.constant 0 : i32
    %c0_i32_0 = arith.constant 0 : i32
    return %arg0, %c0_i32 : i32, i32
  }
  func.func @transform_1(%arg0: i32) -> (i32, i32) {
    %c0_i32 = arith.constant 0 : i32
    %c0_i32_0 = arith.constant 0 : i32
    %c0_i32_1 = arith.constant 0 : i32
    return %c0_i32, %c0_i32_0 : i32, i32
  }
  func.func @transform_2(%arg0: i32) -> (i32, i32) {
    %c0_i32 = arith.constant 0 : i32
    %c0_i32_0 = arith.constant 0 : i32
    %c0_i32_1 = arith.constant 0 : i32
    return %c0_i32, %c0_i32_0 : i32, i32
  }
  func.func @transform_3(%arg0: i32) -> (i32, i32) {
    %c0_i32 = arith.constant 0 : i32
    %c0_i32_0 = arith.constant 0 : i32
    %c0_i32_1 = arith.constant 0 : i32
    return %c0_i32, %c0_i32_0 : i32, i32
  }
  func.func @transform_4(%arg0: i32) -> (i32, i32) {
    %c0_i32 = arith.constant 0 : i32
    %c0_i32_0 = arith.constant 0 : i32
    %c0_i32_1 = arith.constant 0 : i32
    return %c0_i32, %c0_i32_0 : i32, i32
  }
  func.func @transform_5(%arg0: i32) -> (i32, i32) {
    %c0_i32 = arith.constant 0 : i32
    %c0_i32_0 = arith.constant 0 : i32
    %c0_i32_1 = arith.constant 0 : i32
    return %c0_i32, %c0_i32_0 : i32, i32
  }
}

</mosaic_0001>

<llo_original>
// kernel: tpu_custom_call.1
$region0: #{tpu_custom_call.1}
  #allocation0 [shape = 'u32[]', space=smem, size = 0x4, offset = 0x4, fixed_abs, tag = 'smem constant byte address 0x4 - core index']
  #allocation1 [shape = 'u32[72,128]{1,0:T(1,128)}', space=vmem, size = 0x9000, scoped, tag = 'internal scratch']
  #allocation2 [shape = 'f32[1,32]{1,0:T(1,128)}', space=vmem, size = 0x200, scoped, tag = 'scratch operand']
  #allocation3 [shape = 'f32[1,32]{1,0:T(1,128)}', space=vmem, size = 0x200, scoped, tag = 'scratch operand']
  %s0 = inlined_call_operand.vmem [shape: f32[9600,10], index: 0, kind: input, shape index: {}]
  %s1 = inlined_call_operand.vmem [shape: f32[10,32], index: 1, kind: input, shape index: {}]
  %s2 = inlined_call_operand.vmem [shape: f32[1,32], index: 2, kind: input, shape index: {}]
  %s3 = inlined_call_operand.vmem [shape: f32[1,32], index: 3, kind: input, shape index: {}]
  %s4 = inlined_call_operand.hbm [shape: f32[1,32], index: 4, kind: output, shape index: {0}]
  %s5 = inlined_call_operand.hbm [shape: f32[1,32], index: 5, kind: output, shape index: {1}]
  %6 = xla_tuple %s4, %s5
  %s7 = sld [smem:[#allocation0]]
  $region65: #{tpu_custom_call.1} parent=0
    _
  %s9 = ssub.s32 1, %s7
  %s10 = scalar_select 0, %s9, %s7
  $region1: #{tpu_custom_call.1} parent=0
    #allocation4 [shape = 'u8[512]{0}', space=vmem, size = 0x400, scoped, tag = 'output window, operand 0, single buffered']
    #allocation5 [shape = 's32[2]{0}', space=sflag, size = 0x8, scoped, tag = 'scoped memory for tpu_custom_call.1']
    #allocation6 [shape = 'u8[512]{0}', space=vmem, size = 0x400, scoped, tag = 'output window, operand 1, single buffered']
    #allocation7 [shape = 's32[1]{0}', space=sflag, size = 0x4, scoped, tag = 'scoped memory for tpu_custom_call.1']
    %11 = vsyncpa [#allocation5], 0
    %12 = vsyncpa [#allocation7], 0
    loop: start=0, step=1, limit=5
    $region2: #{tpu_custom_call.1} parent=1 // loop_pre_header
      _
    $region3: #{tpu_custom_call.1} parent=1 // loop_header
      %s14 = sphi 0, %s18
      %p15 = scmp.ge.s32.totalorder %s14, 5
      %s24 = sphi 0, %s26
      %s27 = sphi 0, %s24
      %s28 = sphi 0, %s27
      %s44 = sphi 0, %s28
      %s48 = sphi 0, %s48
      %s50 = sphi 0, %s48
      %s51 = sphi 0, %s50
      %s65 = sphi 0, %s51
      %s69 = sphi 0, %s69
      %s71 = sphi 0, %s69
      %s72 = sphi 0, %s71
      %s86 = sphi 0, %s72
      %s90 = sphi 0, %s90
      %s92 = sphi 0, %s90
      %s93 = sphi 0, %s92
      %s107 = sphi 0, %s93
      %s111 = sphi 0, %s111
      %s113 = sphi 0, %s111
      %s114 = sphi 0, %s113
      %s128 = sphi 0, %s114
      %s132 = sphi 0, %s132
      %s134 = sphi 0, %s132
      %s135 = sphi 0, %s134
      %s149 = sphi 0, %s135
    $region4: #{tpu_custom_call.1} parent=1 // loop_header_branch
      %17 = sbr.rel (%p15) target = $region8
    $region5: #{tpu_custom_call.1} parent=1 // loop_body
      %s19 = ssub.s32 %s14, 1
      %s20 = ssub.s32 %s14, 2
      %s21 = sadd.s32 %s14, 1
      %s22 = ssub.s32 %s14, %s21
      %p23 = scmp.eq.s32.totalorder %s22, 0
      %s25 = sadd.s32 %s24, 1
      %s26 = scalar_select %p23, %s24, %s25
      %p29 = pneg %p23
      %p30 = scmp.eq.s32.totalorder %s14, 2
      %p31 = por %p29, %p30
      %p32 = scmp.ne.s32.totalorder %s24, %s27
      %p33 = scmp.eq.s32.totalorder %s14, 0
      %p34 = por %p32, %p33
      %p35 = scmp.ne.s32.totalorder %s24, %s27
      %p36 = scmp.eq.s32.totalorder %s19, 2
      %p37 = por %p35, %p36
      %p38 = scmp.ne.s32.totalorder %s27, %s28
      %p39 = scmp.eq.s32.totalorder %s19, 0
      %p40 = por %p38, %p39
      %p41 = scmp.ne.s32.totalorder %s27, %s28
      %p42 = scmp.eq.s32.totalorder %s20, 2
      %p43 = por %p41, %p42
      %p45 = scmp.ne.s32.totalorder %s28, %s44
      %p46 = scmp.eq.s32.totalorder %s20, 0
      %p47 = por %p45, %p46
      %s49 = sadd.s32 %s48, 1
      %p52 = scmp.eq.s32.totalorder %s14, 2
      %p53 = scmp.ne.s32.totalorder %s48, %s50
      %p54 = scmp.eq.s32.totalorder %s14, 0
      %p55 = por %p53, %p54
      %p56 = scmp.ne.s32.totalorder %s48, %s50
      %p57 = scmp.eq.s32.totalorder %s19, 2
      %p58 = por %p56, %p57
      %p59 = scmp.ne.s32.totalorder %s50, %s51
      %p60 = scmp.eq.s32.totalorder %s19, 0
      %p61 = por %p59, %p60
      %p62 = scmp.ne.s32.totalorder %s50, %s51
      %p63 = scmp.eq.s32.totalorder %s20, 2
      %p64 = por %p62, %p63
      %p66 = scmp.ne.s32.totalorder %s51, %s65
      %p67 = scmp.eq.s32.totalorder %s20, 0
      %p68 = por %p66, %p67
      %s70 = sadd.s32 %s69, 1
      %p73 = scmp.eq.s32.totalorder %s14, 2
      %p74 = scmp.ne.s32.totalorder %s69, %s71
      %p75 = scmp.eq.s32.totalorder %s14, 0
      %p76 = por %p74, %p75
      %p77 = scmp.ne.s32.totalorder %s69, %s71
      %p78 = scmp.eq.s32.totalorder %s19, 2
      %p79 = por %p77, %p78
      %p80 = scmp.ne.s32.totalorder %s71, %s72
      %p81 = scmp.eq.s32.totalorder %s19, 0
      %p82 = por %p80, %p81
      %p83 = scmp.ne.s32.totalorder %s71, %s72
      %p84 = scmp.eq.s32.totalorder %s20, 2
      %p85 = por %p83, %p84
      %p87 = scmp.ne.s32.totalorder %s72, %s86
      %p88 = scmp.eq.s32.totalorder %s20, 0
      %p89 = por %p87, %p88
      %s91 = sadd.s32 %s90, 1
      %p94 = scmp.eq.s32.totalorder %s14, 2
      %p95 = scmp.ne.s32.totalorder %s90, %s92
      %p96 = scmp.eq.s32.totalorder %s14, 0
      %p97 = por %p95, %p96
      %p98 = scmp.ne.s32.totalorder %s90, %s92
      %p99 = scmp.eq.s32.totalorder %s19, 2
      %p100 = por %p98, %p99
      %p101 = scmp.ne.s32.totalorder %s92, %s93
      %p102 = scmp.eq.s32.totalorder %s19, 0
      %p103 = por %p101, %p102
      %p104 = scmp.ne.s32.totalorder %s92, %s93
      %p105 = scmp.eq.s32.totalorder %s20, 2
      %p106 = por %p104, %p105
      %p108 = scmp.ne.s32.totalorder %s93, %s107
      %p109 = scmp.eq.s32.totalorder %s20, 0
      %p110 = por %p108, %p109
      %s112 = sadd.s32 %s111, 1
      %p115 = scmp.eq.s32.totalorder %s14, 2
      %p116 = scmp.ne.s32.totalorder %s111, %s113
      %p117 = scmp.eq.s32.totalorder %s14, 0
      %p118 = por %p116, %p117
      %p119 = scmp.ne.s32.totalorder %s111, %s113
      %p120 = scmp.eq.s32.totalorder %s19, 2
      %p121 = por %p119, %p120
      %p122 = scmp.ne.s32.totalorder %s113, %s114
      %p123 = scmp.eq.s32.totalorder %s19, 0
      %p124 = por %p122, %p123
      %p125 = scmp.ne.s32.totalorder %s113, %s114
      %p126 = scmp.eq.s32.totalorder %s20, 2
      %p127 = por %p125, %p126
      %p129 = scmp.ne.s32.totalorder %s114, %s128
      %p130 = scmp.eq.s32.totalorder %s20, 0
      %p131 = por %p129, %p130
      %s133 = sadd.s32 %s132, 1
      %p136 = scmp.eq.s32.totalorder %s14, 2
      %p137 = scmp.ne.s32.totalorder %s132, %s134
      %p138 = scmp.eq.s32.totalorder %s14, 0
      %p139 = por %p137, %p138
      %p140 = scmp.ne.s32.totalorder %s132, %s134
      %p141 = scmp.eq.s32.totalorder %s19, 2
      %p142 = por %p140, %p141
      %p143 = scmp.ne.s32.totalorder %s134, %s135
      %p144 = scmp.eq.s32.totalorder %s19, 0
      %p145 = por %p143, %p144
      %p146 = scmp.ne.s32.totalorder %s134, %s135
      %p147 = scmp.eq.s32.totalorder %s20, 2
      %p148 = por %p146, %p147
      %p150 = scmp.ne.s32.totalorder %s135, %s149
      %p151 = scmp.eq.s32.totalorder %s20, 0
      %p152 = por %p150, %p151
      %p153 = scmp.le.s32.totalorder 1, %s14
      %p154 = scmp.lt.s32.totalorder %s14, 4
      %p155 = pnand %p153, %p154
      %p156 = pneg %p155
      // Predicated region
      $region9: #{tpu_custom_call.1} parent=5 // pred_check
        _
      $region10: #{tpu_custom_call.1} parent=5 // pred_check_branch
        %158 = sbr.rel (%p155) target = $region12
      $region11: #{tpu_custom_call.1} parent=5 // pred_region
        %s159 = ssub.s32 %s14, 1
        // Predicated region
        $region13: #{tpu_custom_call.1} parent=11 // pred_check
          %p160 = pneg %p61
        $region14: #{tpu_custom_call.1} parent=11 // pred_check_branch
          %162 = sbr.rel (%p160) target = $region16
        $region15: #{tpu_custom_call.1} parent=11 // pred_region
          _
        $region16: #{tpu_custom_call.1} parent=11 // pred_fallthru
          _
        // Predicated region
        $region17: #{tpu_custom_call.1} parent=11 // pred_check
          %p163 = pneg %p82
        $region18: #{tpu_custom_call.1} parent=11 // pred_check_branch
          %165 = sbr.rel (%p163) target = $region20
        $region19: #{tpu_custom_call.1} parent=11 // pred_region
          _
        $region20: #{tpu_custom_call.1} parent=11 // pred_fallthru
          _
        // Predicated region
        $region21: #{tpu_custom_call.1} parent=11 // pred_check
          %p166 = pneg %p103
        $region22: #{tpu_custom_call.1} parent=11 // pred_check_branch
          %168 = sbr.rel (%p166) target = $region24
        $region23: #{tpu_custom_call.1} parent=11 // pred_region
          _
        $region24: #{tpu_custom_call.1} parent=11 // pred_fallthru
          _
      $region12: #{tpu_custom_call.1} parent=5 // pred_fallthru
        _
      %p169 = scmp.lt.s32.totalorder %s14, 3
      // Predicated region
      $region25: #{tpu_custom_call.1} parent=5 // pred_check
        %p170 = pneg %p169
      $region26: #{tpu_custom_call.1} parent=5 // pred_check_branch
        %172 = sbr.rel (%p170) target = $region28
      $region27: #{tpu_custom_call.1} parent=5 // pred_region
        // Predicated region
        $region29: #{tpu_custom_call.1} parent=27 // pred_check
          %p173 = pneg %p34
        $region30: #{tpu_custom_call.1} parent=27 // pred_check_branch
          %175 = sbr.rel (%p173) target = $region32
        $region31: #{tpu_custom_call.1} parent=27 // pred_region
          %s176 = smul.u32 512, %s14
          %s177 = ssub.s32 1200, %s176
          %p178 = scmp.lt.s32.totalorder %s177, 512
          %s179 = scalar_select %p178, %s177, 512
          %s180 = smul.u32 8, %s179
          %p181 = scmp.lt.s32.totalorder %s176, 1199
          %s182 = scalar_select %p181, %s176, 1199
          %s183 = smul.addr %s182, 8
          %s184 = scalar_lea.vmem %s0, %s183
          %s185 = smul.u32 512, %s14
          %s186 = ssub.s32 1200, %s185
          %p187 = scmp.lt.s32.totalorder %s186, 512
          %s188 = scalar_select %p187, %s186, 512
          %s189 = smul.u32 8, %s188
        $region32: #{tpu_custom_call.1} parent=27 // pred_fallthru
          _
      $region28: #{tpu_custom_call.1} parent=5 // pred_fallthru
        _
      %p190 = scmp.le.s32.totalorder 1, %s14
      %p191 = scmp.lt.s32.totalorder %s14, 4
      %p192 = pnand %p190, %p191
      %p193 = pneg %p192
      // Predicated region
      $region33: #{tpu_custom_call.1} parent=5 // pred_check
        _
      $region34: #{tpu_custom_call.1} parent=5 // pred_check_branch
        %195 = sbr.rel (%p192) target = $region36
      $region35: #{tpu_custom_call.1} parent=5 // pred_region
        %s196 = ssub.s32 %s14, 1
        %s197 = smul.u32 512, %s19
        %s198 = ssub.s32 1200, %s197
        %p199 = scmp.lt.s32.totalorder %s198, 512
        %s200 = scalar_select %p199, %s198, 512
        %s201 = smul.u32 8, %s200
        %p202 = scmp.lt.s32.totalorder %s197, 1199
        %s203 = scalar_select %p202, %s197, 1199
        %s204 = smul.addr %s203, 8
        %s205 = scalar_lea.vmem %s0, %s204
        %p206 = pneg %p40
        %p207 = pneg %p37
        %p208 = pneg %p61
        %p209 = pneg %p58
        %p210 = pneg %p82
        %p211 = pneg %p79
        %p212 = pneg %p103
        %p213 = pneg %p100
        %p214 = pneg %p124
        %p215 = pneg %p121
        %p216 = pneg %p145
        %p217 = pneg %p142
        %s218 = smul.u32 512, %s19
        %s219 = ssub.s32 1200, %s218
        %p220 = scmp.lt.s32.totalorder %s219, 512
        %s221 = scalar_select %p220, %s219, 512
        %s222 = smul.u32 8, %s221
        %p223 = scmp.lt.s32.totalorder %s218, 1199
        %s224 = scalar_select %p223, %s218, 1199
        %s225 = smul.addr %s224, 8
        %s226 = scalar_lea.vmem %s0, %s225
        %s227 = smul.u32 512, %s19
        %s228 = ssub.s32 1200, %s227
        %p229 = scmp.lt.s32.totalorder %s228, 512
        %s230 = scalar_select %p229, %s228, 512
        %s231 = smul.u32 8, %s230
        %p232 = scmp.eq.s32.totalorder %s19, 0
        // Predicated region
        $region37: #{tpu_custom_call.1} parent=35 // pred_check
          %p233 = pneg %p232
        $region38: #{tpu_custom_call.1} parent=35 // pred_check_branch
          %235 = sbr.rel (%p233) target = $region40
        $region39: #{tpu_custom_call.1} parent=35 // pred_region
          %vm236 = vcmask 253952
          %237 = vst.msk [vmem:[#allocation2] sm:$0x1] %vm236, 0.0
          %238 = vst.msk [vmem:[#allocation3] sm:$0x1] %vm236, 0.0
        $region40: #{tpu_custom_call.1} parent=35 // pred_fallthru
          _
        %v239 = vld [vmem:[%s226] sm:$0xff]
        %v240 = vld [vmem:[%s226 + $0x8] sm:$0xff]
        %v241 = vld [vmem:[%s226 + $0x10] sm:$0xff]
        %v242 = vld [vmem:[%s226 + $0x18] sm:$0xff]
        %v243 = vld [vmem:[%s226 + $0x20] sm:$0xff]
        %v244 = vld [vmem:[%s226 + $0x28] sm:$0xff]
        %v245 = vld [vmem:[%s226 + $0x30] sm:$0xff]
        %v246 = vld [vmem:[%s226 + $0x38] sm:$0xff]
        %v247 = vld [vmem:[%s226 + $0x40] sm:$0xff]
        %v248 = vld [vmem:[%s226 + $0x48] sm:$0xff]
        %v249 = vld [vmem:[%s226 + $0x50] sm:$0xff]
        %v250 = vld [vmem:[%s226 + $0x58] sm:$0xff]
        %v251 = vld [vmem:[%s226 + $0x60] sm:$0xff]
        %v252 = vld [vmem:[%s226 + $0x68] sm:$0xff]
        %v253 = vld [vmem:[%s226 + $0x70] sm:$0xff]
        %v254 = vld [vmem:[%s226 + $0x78] sm:$0xff]
        %v255 = vld [vmem:[%s226 + $0x80] sm:$0xff]
        %v256 = vld [vmem:[%s226 + $0x88] sm:$0xff]
        %v257 = vld [vmem:[%s226 + $0x90] sm:$0xff]
        %v258 = vld [vmem:[%s226 + $0x98] sm:$0xff]
        %v259 = vld [vmem:[%s226 + $0xa0] sm:$0xff]
        %v260 = vld [vmem:[%s226 + $0xa8] sm:$0xff]
        %v261 = vld [vmem:[%s226 + $0xb0] sm:$0xff]
        %v262 = vld [vmem:[%s226 + $0xb8] sm:$0xff]
        %v263 = vld [vmem:[%s226 + $0xc0] sm:$0xff]
        %v264 = vld [vmem:[%s226 + $0xc8] sm:$0xff]
        %v265 = vld [vmem:[%s226 + $0xd0] sm:$0xff]
        %v266 = vld [vmem:[%s226 + $0xd8] sm:$0xff]
        %v267 = vld [vmem:[%s226 + $0xe0] sm:$0xff]
        %v268 = vld [vmem:[%s226 + $0xe8] sm:$0xff]
        %v269 = vld [vmem:[%s226 + $0xf0] sm:$0xff]
        %v270 = vld [vmem:[%s226 + $0xf8] sm:$0xff]
        %v271 = vld [vmem:[%s226 + $0x100] sm:$0xff]
        %v272 = vld [vmem:[%s226 + $0x108] sm:$0xff]
        %v273 = vld [vmem:[%s226 + $0x110] sm:$0xff]
        %v274 = vld [vmem:[%s226 + $0x118] sm:$0xff]
        %v275 = vld [vmem:[%s226 + $0x120] sm:$0xff]
        %v276 = vld [vmem:[%s226 + $0x128] sm:$0xff]
        %v277 = vld [vmem:[%s226 + $0x130] sm:$0xff]
        %v278 = vld [vmem:[%s226 + $0x138] sm:$0xff]
        %v279 = vld [vmem:[%s226 + $0x140] sm:$0xff]
        %v280 = vld [vmem:[%s226 + $0x148] sm:$0xff]
        %v281 = vld [vmem:[%s226 + $0x150] sm:$0xff]
        %v282 = vld [vmem:[%s226 + $0x158] sm:$0xff]
        %v283 = vld [vmem:[%s226 + $0x160] sm:$0xff]
        %v284 = vld [vmem:[%s226 + $0x168] sm:$0xff]
        %v285 = vld [vmem:[%s226 + $0x170] sm:$0xff]
        %v286 = vld [vmem:[%s226 + $0x178] sm:$0xff]
        %v287 = vld [vmem:[%s226 + $0x180] sm:$0xff]
        %v288 = vld [vmem:[%s226 + $0x188] sm:$0xff]
        %v289 = vld [vmem:[%s226 + $0x190] sm:$0xff]
        %v290 = vld [vmem:[%s226 + $0x198] sm:$0xff]
        %v291 = vld [vmem:[%s226 + $0x1a0] sm:$0xff]
        %v292 = vld [vmem:[%s226 + $0x1a8] sm:$0xff]
        %v293 = vld [vmem:[%s226 + $0x1b0] sm:$0xff]
        %v294 = vld [vmem:[%s226 + $0x1b8] sm:$0xff]
        %v295 = vld [vmem:[%s226 + $0x1c0] sm:$0xff]
        %v296 = vld [vmem:[%s226 + $0x1c8] sm:$0xff]
        %v297 = vld [vmem:[%s226 + $0x1d0] sm:$0xff]
        %v298 = vld [vmem:[%s226 + $0x1d8] sm:$0xff]
        %v299 = vld [vmem:[%s226 + $0x1e0] sm:$0xff]
        %v300 = vld [vmem:[%s226 + $0x1e8] sm:$0xff]
        %v301 = vld [vmem:[%s226 + $0x1f0] sm:$0xff]
        %v302 = vld [vmem:[%s226 + $0x1f8] sm:$0xff]
        %v303 = vld [vmem:[%s226 + $0x200] sm:$0xff]
        %v304 = vld [vmem:[%s226 + $0x208] sm:$0xff]
        %v305 = vld [vmem:[%s226 + $0x210] sm:$0xff]
        %v306 = vld [vmem:[%s226 + $0x218] sm:$0xff]
        %v307 = vld [vmem:[%s226 + $0x220] sm:$0xff]
        %v308 = vld [vmem:[%s226 + $0x228] sm:$0xff]
        %v309 = vld [vmem:[%s226 + $0x230] sm:$0xff]
        %v310 = vld [vmem:[%s226 + $0x238] sm:$0xff]
        %v311 = vld [vmem:[%s226 + $0x240] sm:$0xff]
        %v312 = vld [vmem:[%s226 + $0x248] sm:$0xff]
        %v313 = vld [vmem:[%s226 + $0x250] sm:$0xff]
        %v314 = vld [vmem:[%s226 + $0x258] sm:$0xff]
        %v315 = vld [vmem:[%s226 + $0x260] sm:$0xff]
        %v316 = vld [vmem:[%s226 + $0x268] sm:$0xff]
        %v317 = vld [vmem:[%s226 + $0x270] sm:$0xff]
        %v318 = vld [vmem:[%s226 + $0x278] sm:$0xff]
        %v319 = vld [vmem:[%s226 + $0x280] sm:$0xff]
        %v320 = vld [vmem:[%s226 + $0x288] sm:$0xff]
        %v321 = vld [vmem:[%s226 + $0x290] sm:$0xff]
        %v322 = vld [vmem:[%s226 + $0x298] sm:$0xff]
        %v323 = vld [vmem:[%s226 + $0x2a0] sm:$0xff]
        %v324 = vld [vmem:[%s226 + $0x2a8] sm:$0xff]
        %v325 = vld [vmem:[%s226 + $0x2b0] sm:$0xff]
        %v326 = vld [vmem:[%s226 + $0x2b8] sm:$0xff]
        %v327 = vld [vmem:[%s226 + $0x2c0] sm:$0xff]
        %v328 = vld [vmem:[%s226 + $0x2c8] sm:$0xff]
        %v329 = vld [vmem:[%s226 + $0x2d0] sm:$0xff]
        %v330 = vld [vmem:[%s226 + $0x2d8] sm:$0xff]
        %v331 = vld [vmem:[%s226 + $0x2e0] sm:$0xff]
        %v332 = vld [vmem:[%s226 + $0x2e8] sm:$0xff]
        %v333 = vld [vmem:[%s226 + $0x2f0] sm:$0xff]
        %v334 = vld [vmem:[%s226 + $0x2f8] sm:$0xff]
        %v335 = vld [vmem:[%s226 + $0x300] sm:$0xff]
        %v336 = vld [vmem:[%s226 + $0x308] sm:$0xff]
        %v337 = vld [vmem:[%s226 + $0x310] sm:$0xff]
        %v338 = vld [vmem:[%s226 + $0x318] sm:$0xff]
        %v339 = vld [vmem:[%s226 + $0x320] sm:$0xff]
        %v340 = vld [vmem:[%s226 + $0x328] sm:$0xff]
        %v341 = vld [vmem:[%s226 + $0x330] sm:$0xff]
        %v342 = vld [vmem:[%s226 + $0x338] sm:$0xff]
        %v343 = vld [vmem:[%s226 + $0x340] sm:$0xff]
        %v344 = vld [vmem:[%s226 + $0x348] sm:$0xff]
        %v345 = vld [vmem:[%s226 + $0x350] sm:$0xff]
        %v346 = vld [vmem:[%s226 + $0x358] sm:$0xff]
        %v347 = vld [vmem:[%s226 + $0x360] sm:$0xff]
        %v348 = vld [vmem:[%s226 + $0x368] sm:$0xff]
        %v349 = vld [vmem:[%s226 + $0x370] sm:$0xff]
        %v350 = vld [vmem:[%s226 + $0x378] sm:$0xff]
        %v351 = vld [vmem:[%s226 + $0x380] sm:$0xff]
        %v352 = vld [vmem:[%s226 + $0x388] sm:$0xff]
        %v353 = vld [vmem:[%s226 + $0x390] sm:$0xff]
        %v354 = vld [vmem:[%s226 + $0x398] sm:$0xff]
        %v355 = vld [vmem:[%s226 + $0x3a0] sm:$0xff]
        %v356 = vld [vmem:[%s226 + $0x3a8] sm:$0xff]
        %v357 = vld [vmem:[%s226 + $0x3b0] sm:$0xff]
        %v358 = vld [vmem:[%s226 + $0x3b8] sm:$0xff]
        %v359 = vld [vmem:[%s226 + $0x3c0] sm:$0xff]
        %v360 = vld [vmem:[%s226 + $0x3c8] sm:$0xff]
        %v361 = vld [vmem:[%s226 + $0x3d0] sm:$0xff]
        %v362 = vld [vmem:[%s226 + $0x3d8] sm:$0xff]
        %v363 = vld [vmem:[%s226 + $0x3e0] sm:$0xff]
        %v364 = vld [vmem:[%s226 + $0x3e8] sm:$0xff]
        %v365 = vld [vmem:[%s226 + $0x3f0] sm:$0xff]
        %v366 = vld [vmem:[%s226 + $0x3f8] sm:$0xff]
        %v367 = vld [vmem:[%s226 + $0x400] sm:$0xff]
        %v368 = vld [vmem:[%s226 + $0x408] sm:$0xff]
        %v369 = vld [vmem:[%s226 + $0x410] sm:$0xff]
        %v370 = vld [vmem:[%s226 + $0x418] sm:$0xff]
        %v371 = vld [vmem:[%s226 + $0x420] sm:$0xff]
        %v372 = vld [vmem:[%s226 + $0x428] sm:$0xff]
        %v373 = vld [vmem:[%s226 + $0x430] sm:$0xff]
        %v374 = vld [vmem:[%s226 + $0x438] sm:$0xff]
        %v375 = vld [vmem:[%s226 + $0x440] sm:$0xff]
        %v376 = vld [vmem:[%s226 + $0x448] sm:$0xff]
        %v377 = vld [vmem:[%s226 + $0x450] sm:$0xff]
        %v378 = vld [vmem:[%s226 + $0x458] sm:$0xff]
        %v379 = vld [vmem:[%s226 + $0x460] sm:$0xff]
        %v380 = vld [vmem:[%s226 + $0x468] sm:$0xff]
        %v381 = vld [vmem:[%s226 + $0x470] sm:$0xff]
        %v382 = vld [vmem:[%s226 + $0x478] sm:$0xff]
        %v383 = vld [vmem:[%s226 + $0x480] sm:$0xff]
        %v384 = vld [vmem:[%s226 + $0x488] sm:$0xff]
        %v385 = vld [vmem:[%s226 + $0x490] sm:$0xff]
        %v386 = vld [vmem:[%s226 + $0x498] sm:$0xff]
        %v387 = vld [vmem:[%s226 + $0x4a0] sm:$0xff]
        %v388 = vld [vmem:[%s226 + $0x4a8] sm:$0xff]
        %v389 = vld [vmem:[%s226 + $0x4b0] sm:$0xff]
        %v390 = vld [vmem:[%s226 + $0x4b8] sm:$0xff]
        %v391 = vld [vmem:[%s226 + $0x4c0] sm:$0xff]
        %v392 = vld [vmem:[%s226 + $0x4c8] sm:$0xff]
        %v393 = vld [vmem:[%s226 + $0x4d0] sm:$0xff]
        %v394 = vld [vmem:[%s226 + $0x4d8] sm:$0xff]
        %v395 = vld [vmem:[%s226 + $0x4e0] sm:$0xff]
        %v396 = vld [vmem:[%s226 + $0x4e8] sm:$0xff]
        %v397 = vld [vmem:[%s226 + $0x4f0] sm:$0xff]
        %v398 = vld [vmem:[%s226 + $0x4f8] sm:$0xff]
        %v399 = vld [vmem:[%s226 + $0x500] sm:$0xff]
        %v400 = vld [vmem:[%s226 + $0x508] sm:$0xff]
        %v401 = vld [vmem:[%s226 + $0x510] sm:$0xff]
        %v402 = vld [vmem:[%s226 + $0x518] sm:$0xff]
        %v403 = vld [vmem:[%s226 + $0x520] sm:$0xff]
        %v404 = vld [vmem:[%s226 + $0x528] sm:$0xff]
        %v405 = vld [vmem:[%s226 + $0x530] sm:$0xff]
        %v406 = vld [vmem:[%s226 + $0x538] sm:$0xff]
        %v407 = vld [vmem:[%s226 + $0x540] sm:$0xff]
        %v408 = vld [vmem:[%s226 + $0x548] sm:$0xff]
        %v409 = vld [vmem:[%s226 + $0x550] sm:$0xff]
        %v410 = vld [vmem:[%s226 + $0x558] sm:$0xff]
        %v411 = vld [vmem:[%s226 + $0x560] sm:$0xff]
        %v412 = vld [vmem:[%s226 + $0x568] sm:$0xff]
        %v413 = vld [vmem:[%s226 + $0x570] sm:$0xff]
        %v414 = vld [vmem:[%s226 + $0x578] sm:$0xff]
        %v415 = vld [vmem:[%s226 + $0x580] sm:$0xff]
        %v416 = vld [vmem:[%s226 + $0x588] sm:$0xff]
        %v417 = vld [vmem:[%s226 + $0x590] sm:$0xff]
        %v418 = vld [vmem:[%s226 + $0x598] sm:$0xff]
        %v419 = vld [vmem:[%s226 + $0x5a0] sm:$0xff]
        %v420 = vld [vmem:[%s226 + $0x5a8] sm:$0xff]
        %v421 = vld [vmem:[%s226 + $0x5b0] sm:$0xff]
        %v422 = vld [vmem:[%s226 + $0x5b8] sm:$0xff]
        %v423 = vld [vmem:[%s226 + $0x5c0] sm:$0xff]
        %v424 = vld [vmem:[%s226 + $0x5c8] sm:$0xff]
        %v425 = vld [vmem:[%s226 + $0x5d0] sm:$0xff]
        %v426 = vld [vmem:[%s226 + $0x5d8] sm:$0xff]
        %v427 = vld [vmem:[%s226 + $0x5e0] sm:$0xff]
        %v428 = vld [vmem:[%s226 + $0x5e8] sm:$0xff]
        %v429 = vld [vmem:[%s226 + $0x5f0] sm:$0xff]
        %v430 = vld [vmem:[%s226 + $0x5f8] sm:$0xff]
        %v431 = vld [vmem:[%s226 + $0x600] sm:$0xff]
        %v432 = vld [vmem:[%s226 + $0x608] sm:$0xff]
        %v433 = vld [vmem:[%s226 + $0x610] sm:$0xff]
        %v434 = vld [vmem:[%s226 + $0x618] sm:$0xff]
        %v435 = vld [vmem:[%s226 + $0x620] sm:$0xff]
        %v436 = vld [vmem:[%s226 + $0x628] sm:$0xff]
        %v437 = vld [vmem:[%s226 + $0x630] sm:$0xff]
        %v438 = vld [vmem:[%s226 + $0x638] sm:$0xff]
        %v439 = vld [vmem:[%s226 + $0x640] sm:$0xff]
        %v440 = vld [vmem:[%s226 + $0x648] sm:$0xff]
        %v441 = vld [vmem:[%s226 + $0x650] sm:$0xff]
        %v442 = vld [vmem:[%s226 + $0x658] sm:$0xff]
        %v443 = vld [vmem:[%s226 + $0x660] sm:$0xff]
        %v444 = vld [vmem:[%s226 + $0x668] sm:$0xff]
        %v445 = vld [vmem:[%s226 + $0x670] sm:$0xff]
        %v446 = vld [vmem:[%s226 + $0x678] sm:$0xff]
        %v447 = vld [vmem:[%s226 + $0x680] sm:$0xff]
        %v448 = vld [vmem:[%s226 + $0x688] sm:$0xff]
        %v449 = vld [vmem:[%s226 + $0x690] sm:$0xff]
        %v450 = vld [vmem:[%s226 + $0x698] sm:$0xff]
        %v451 = vld [vmem:[%s226 + $0x6a0] sm:$0xff]
        %v452 = vld [vmem:[%s226 + $0x6a8] sm:$0xff]
        %v453 = vld [vmem:[%s226 + $0x6b0] sm:$0xff]
        %v454 = vld [vmem:[%s226 + $0x6b8] sm:$0xff]
        %v455 = vld [vmem:[%s226 + $0x6c0] sm:$0xff]
        %v456 = vld [vmem:[%s226 + $0x6c8] sm:$0xff]
        %v457 = vld [vmem:[%s226 + $0x6d0] sm:$0xff]
        %v458 = vld [vmem:[%s226 + $0x6d8] sm:$0xff]
        %v459 = vld [vmem:[%s226 + $0x6e0] sm:$0xff]
        %v460 = vld [vmem:[%s226 + $0x6e8] sm:$0xff]
        %v461 = vld [vmem:[%s226 + $0x6f0] sm:$0xff]
        %v462 = vld [vmem:[%s226 + $0x6f8] sm:$0xff]
        %v463 = vld [vmem:[%s226 + $0x700] sm:$0xff]
        %v464 = vld [vmem:[%s226 + $0x708] sm:$0xff]
        %v465 = vld [vmem:[%s226 + $0x710] sm:$0xff]
        %v466 = vld [vmem:[%s226 + $0x718] sm:$0xff]
        %v467 = vld [vmem:[%s226 + $0x720] sm:$0xff]
        %v468 = vld [vmem:[%s226 + $0x728] sm:$0xff]
        %v469 = vld [vmem:[%s226 + $0x730] sm:$0xff]
        %v470 = vld [vmem:[%s226 + $0x738] sm:$0xff]
        %v471 = vld [vmem:[%s226 + $0x740] sm:$0xff]
        %v472 = vld [vmem:[%s226 + $0x748] sm:$0xff]
        %v473 = vld [vmem:[%s226 + $0x750] sm:$0xff]
        %v474 = vld [vmem:[%s226 + $0x758] sm:$0xff]
        %v475 = vld [vmem:[%s226 + $0x760] sm:$0xff]
        %v476 = vld [vmem:[%s226 + $0x768] sm:$0xff]
        %v477 = vld [vmem:[%s226 + $0x770] sm:$0xff]
        %v478 = vld [vmem:[%s226 + $0x778] sm:$0xff]
        %v479 = vld [vmem:[%s226 + $0x780] sm:$0xff]
        %v480 = vld [vmem:[%s226 + $0x788] sm:$0xff]
        %v481 = vld [vmem:[%s226 + $0x790] sm:$0xff]
        %v482 = vld [vmem:[%s226 + $0x798] sm:$0xff]
        %v483 = vld [vmem:[%s226 + $0x7a0] sm:$0xff]
        %v484 = vld [vmem:[%s226 + $0x7a8] sm:$0xff]
        %v485 = vld [vmem:[%s226 + $0x7b0] sm:$0xff]
        %v486 = vld [vmem:[%s226 + $0x7b8] sm:$0xff]
        %v487 = vld [vmem:[%s226 + $0x7c0] sm:$0xff]
        %v488 = vld [vmem:[%s226 + $0x7c8] sm:$0xff]
        %v489 = vld [vmem:[%s226 + $0x7d0] sm:$0xff]
        %v490 = vld [vmem:[%s226 + $0x7d8] sm:$0xff]
        %v491 = vld [vmem:[%s226 + $0x7e0] sm:$0xff]
        %v492 = vld [vmem:[%s226 + $0x7e8] sm:$0xff]
        %v493 = vld [vmem:[%s226 + $0x7f0] sm:$0xff]
        %v494 = vld [vmem:[%s226 + $0x7f8] sm:$0xff]
        %v495 = vld [vmem:[%s226 + $0x800] sm:$0xff]
        %v496 = vld [vmem:[%s226 + $0x808] sm:$0xff]
        %v497 = vld [vmem:[%s226 + $0x810] sm:$0xff]
        %v498 = vld [vmem:[%s226 + $0x818] sm:$0xff]
        %v499 = vld [vmem:[%s226 + $0x820] sm:$0xff]
        %v500 = vld [vmem:[%s226 + $0x828] sm:$0xff]
        %v501 = vld [vmem:[%s226 + $0x830] sm:$0xff]
        %v502 = vld [vmem:[%s226 + $0x838] sm:$0xff]
        %v503 = vld [vmem:[%s226 + $0x840] sm:$0xff]
        %v504 = vld [vmem:[%s226 + $0x848] sm:$0xff]
        %v505 = vld [vmem:[%s226 + $0x850] sm:$0xff]
        %v506 = vld [vmem:[%s226 + $0x858] sm:$0xff]
        %v507 = vld [vmem:[%s226 + $0x860] sm:$0xff]
        %v508 = vld [vmem:[%s226 + $0x868] sm:$0xff]
        %v509 = vld [vmem:[%s226 + $0x870] sm:$0xff]
        %v510 = vld [vmem:[%s226 + $0x878] sm:$0xff]
        %v511 = vld [vmem:[%s226 + $0x880] sm:$0xff]
        %v512 = vld [vmem:[%s226 + $0x888] sm:$0xff]
        %v513 = vld [vmem:[%s226 + $0x890] sm:$0xff]
        %v514 = vld [vmem:[%s226 + $0x898] sm:$0xff]
        %v515 = vld [vmem:[%s226 + $0x8a0] sm:$0xff]
        %v516 = vld [vmem:[%s226 + $0x8a8] sm:$0xff]
        %v517 = vld [vmem:[%s226 + $0x8b0] sm:$0xff]
        %v518 = vld [vmem:[%s226 + $0x8b8] sm:$0xff]
        %v519 = vld [vmem:[%s226 + $0x8c0] sm:$0xff]
        %v520 = vld [vmem:[%s226 + $0x8c8] sm:$0xff]
        %v521 = vld [vmem:[%s226 + $0x8d0] sm:$0xff]
        %v522 = vld [vmem:[%s226 + $0x8d8] sm:$0xff]
        %v523 = vld [vmem:[%s226 + $0x8e0] sm:$0xff]
        %v524 = vld [vmem:[%s226 + $0x8e8] sm:$0xff]
        %v525 = vld [vmem:[%s226 + $0x8f0] sm:$0xff]
        %v526 = vld [vmem:[%s226 + $0x8f8] sm:$0xff]
        %v527 = vld [vmem:[%s226 + $0x900] sm:$0xff]
        %v528 = vld [vmem:[%s226 + $0x908] sm:$0xff]
        %v529 = vld [vmem:[%s226 + $0x910] sm:$0xff]
        %v530 = vld [vmem:[%s226 + $0x918] sm:$0xff]
        %v531 = vld [vmem:[%s226 + $0x920] sm:$0xff]
        %v532 = vld [vmem:[%s226 + $0x928] sm:$0xff]
        %v533 = vld [vmem:[%s226 + $0x930] sm:$0xff]
        %v534 = vld [vmem:[%s226 + $0x938] sm:$0xff]
        %v535 = vld [vmem:[%s226 + $0x940] sm:$0xff]
        %v536 = vld [vmem:[%s226 + $0x948] sm:$0xff]
        %v537 = vld [vmem:[%s226 + $0x950] sm:$0xff]
        %v538 = vld [vmem:[%s226 + $0x958] sm:$0xff]
        %v539 = vld [vmem:[%s226 + $0x960] sm:$0xff]
        %v540 = vld [vmem:[%s226 + $0x968] sm:$0xff]
        %v541 = vld [vmem:[%s226 + $0x970] sm:$0xff]
        %v542 = vld [vmem:[%s226 + $0x978] sm:$0xff]
        %v543 = vld [vmem:[%s226 + $0x980] sm:$0xff]
        %v544 = vld [vmem:[%s226 + $0x988] sm:$0xff]
        %v545 = vld [vmem:[%s226 + $0x990] sm:$0xff]
        %v546 = vld [vmem:[%s226 + $0x998] sm:$0xff]
        %v547 = vld [vmem:[%s226 + $0x9a0] sm:$0xff]
        %v548 = vld [vmem:[%s226 + $0x9a8] sm:$0xff]
        %v549 = vld [vmem:[%s226 + $0x9b0] sm:$0xff]
        %v550 = vld [vmem:[%s226 + $0x9b8] sm:$0xff]
        %v551 = vld [vmem:[%s226 + $0x9c0] sm:$0xff]
        %v552 = vld [vmem:[%s226 + $0x9c8] sm:$0xff]
        %v553 = vld [vmem:[%s226 + $0x9d0] sm:$0xff]
        %v554 = vld [vmem:[%s226 + $0x9d8] sm:$0xff]
        %v555 = vld [vmem:[%s226 + $0x9e0] sm:$0xff]
        %v556 = vld [vmem:[%s226 + $0x9e8] sm:$0xff]
        %v557 = vld [vmem:[%s226 + $0x9f0] sm:$0xff]
        %v558 = vld [vmem:[%s226 + $0x9f8] sm:$0xff]
        %v559 = vld [vmem:[%s226 + $0xa00] sm:$0xff]
        %v560 = vld [vmem:[%s226 + $0xa08] sm:$0xff]
        %v561 = vld [vmem:[%s226 + $0xa10] sm:$0xff]
        %v562 = vld [vmem:[%s226 + $0xa18] sm:$0xff]
        %v563 = vld [vmem:[%s226 + $0xa20] sm:$0xff]
        %v564 = vld [vmem:[%s226 + $0xa28] sm:$0xff]
        %v565 = vld [vmem:[%s226 + $0xa30] sm:$0xff]
        %v566 = vld [vmem:[%s226 + $0xa38] sm:$0xff]
        %v567 = vld [vmem:[%s226 + $0xa40] sm:$0xff]
        %v568 = vld [vmem:[%s226 + $0xa48] sm:$0xff]
        %v569 = vld [vmem:[%s226 + $0xa50] sm:$0xff]
        %v570 = vld [vmem:[%s226 + $0xa58] sm:$0xff]
        %v571 = vld [vmem:[%s226 + $0xa60] sm:$0xff]
        %v572 = vld [vmem:[%s226 + $0xa68] sm:$0xff]
        %v573 = vld [vmem:[%s226 + $0xa70] sm:$0xff]
        %v574 = vld [vmem:[%s226 + $0xa78] sm:$0xff]
        %v575 = vld [vmem:[%s226 + $0xa80] sm:$0xff]
        %v576 = vld [vmem:[%s226 + $0xa88] sm:$0xff]
        %v577 = vld [vmem:[%s226 + $0xa90] sm:$0xff]
        %v578 = vld [vmem:[%s226 + $0xa98] sm:$0xff]
        %v579 = vld [vmem:[%s226 + $0xaa0] sm:$0xff]
        %v580 = vld [vmem:[%s226 + $0xaa8] sm:$0xff]
        %v581 = vld [vmem:[%s226 + $0xab0] sm:$0xff]
        %v582 = vld [vmem:[%s226 + $0xab8] sm:$0xff]
        %v583 = vld [vmem:[%s226 + $0xac0] sm:$0xff]
        %v584 = vld [vmem:[%s226 + $0xac8] sm:$0xff]
        %v585 = vld [vmem:[%s226 + $0xad0] sm:$0xff]
        %v586 = vld [vmem:[%s226 + $0xad8] sm:$0xff]
        %v587 = vld [vmem:[%s226 + $0xae0] sm:$0xff]
        %v588 = vld [vmem:[%s226 + $0xae8] sm:$0xff]
        %v589 = vld [vmem:[%s226 + $0xaf0] sm:$0xff]
        %v590 = vld [vmem:[%s226 + $0xaf8] sm:$0xff]
        %v591 = vld [vmem:[%s226 + $0xb00] sm:$0xff]
        %v592 = vld [vmem:[%s226 + $0xb08] sm:$0xff]
        %v593 = vld [vmem:[%s226 + $0xb10] sm:$0xff]
        %v594 = vld [vmem:[%s226 + $0xb18] sm:$0xff]
        %v595 = vld [vmem:[%s226 + $0xb20] sm:$0xff]
        %v596 = vld [vmem:[%s226 + $0xb28] sm:$0xff]
        %v597 = vld [vmem:[%s226 + $0xb30] sm:$0xff]
        %v598 = vld [vmem:[%s226 + $0xb38] sm:$0xff]
        %v599 = vld [vmem:[%s226 + $0xb40] sm:$0xff]
        %v600 = vld [vmem:[%s226 + $0xb48] sm:$0xff]
        %v601 = vld [vmem:[%s226 + $0xb50] sm:$0xff]
        %v602 = vld [vmem:[%s226 + $0xb58] sm:$0xff]
        %v603 = vld [vmem:[%s226 + $0xb60] sm:$0xff]
        %v604 = vld [vmem:[%s226 + $0xb68] sm:$0xff]
        %v605 = vld [vmem:[%s226 + $0xb70] sm:$0xff]
        %v606 = vld [vmem:[%s226 + $0xb78] sm:$0xff]
        %v607 = vld [vmem:[%s226 + $0xb80] sm:$0xff]
        %v608 = vld [vmem:[%s226 + $0xb88] sm:$0xff]
        %v609 = vld [vmem:[%s226 + $0xb90] sm:$0xff]
        %v610 = vld [vmem:[%s226 + $0xb98] sm:$0xff]
        %v611 = vld [vmem:[%s226 + $0xba0] sm:$0xff]
        %v612 = vld [vmem:[%s226 + $0xba8] sm:$0xff]
        %v613 = vld [vmem:[%s226 + $0xbb0] sm:$0xff]
        %v614 = vld [vmem:[%s226 + $0xbb8] sm:$0xff]
        %v615 = vld [vmem:[%s226 + $0xbc0] sm:$0xff]
        %v616 = vld [vmem:[%s226 + $0xbc8] sm:$0xff]
        %v617 = vld [vmem:[%s226 + $0xbd0] sm:$0xff]
        %v618 = vld [vmem:[%s226 + $0xbd8] sm:$0xff]
        %v619 = vld [vmem:[%s226 + $0xbe0] sm:$0xff]
        %v620 = vld [vmem:[%s226 + $0xbe8] sm:$0xff]
        %v621 = vld [vmem:[%s226 + $0xbf0] sm:$0xff]
        %v622 = vld [vmem:[%s226 + $0xbf8] sm:$0xff]
        %v623 = vld [vmem:[%s226 + $0xc00] sm:$0xff]
        %v624 = vld [vmem:[%s226 + $0xc08] sm:$0xff]
        %v625 = vld [vmem:[%s226 + $0xc10] sm:$0xff]
        %v626 = vld [vmem:[%s226 + $0xc18] sm:$0xff]
        %v627 = vld [vmem:[%s226 + $0xc20] sm:$0xff]
        %v628 = vld [vmem:[%s226 + $0xc28] sm:$0xff]
        %v629 = vld [vmem:[%s226 + $0xc30] sm:$0xff]
        %v630 = vld [vmem:[%s226 + $0xc38] sm:$0xff]
        %v631 = vld [vmem:[%s226 + $0xc40] sm:$0xff]
        %v632 = vld [vmem:[%s226 + $0xc48] sm:$0xff]
        %v633 = vld [vmem:[%s226 + $0xc50] sm:$0xff]
        %v634 = vld [vmem:[%s226 + $0xc58] sm:$0xff]
        %v635 = vld [vmem:[%s226 + $0xc60] sm:$0xff]
        %v636 = vld [vmem:[%s226 + $0xc68] sm:$0xff]
        %v637 = vld [vmem:[%s226 + $0xc70] sm:$0xff]
        %v638 = vld [vmem:[%s226 + $0xc78] sm:$0xff]
        %v639 = vld [vmem:[%s226 + $0xc80] sm:$0xff]
        %v640 = vld [vmem:[%s226 + $0xc88] sm:$0xff]
        %v641 = vld [vmem:[%s226 + $0xc90] sm:$0xff]
        %v642 = vld [vmem:[%s226 + $0xc98] sm:$0xff]
        %v643 = vld [vmem:[%s226 + $0xca0] sm:$0xff]
        %v644 = vld [vmem:[%s226 + $0xca8] sm:$0xff]
        %v645 = vld [vmem:[%s226 + $0xcb0] sm:$0xff]
        %v646 = vld [vmem:[%s226 + $0xcb8] sm:$0xff]
        %v647 = vld [vmem:[%s226 + $0xcc0] sm:$0xff]
        %v648 = vld [vmem:[%s226 + $0xcc8] sm:$0xff]
        %v649 = vld [vmem:[%s226 + $0xcd0] sm:$0xff]
        %v650 = vld [vmem:[%s226 + $0xcd8] sm:$0xff]
        %v651 = vld [vmem:[%s226 + $0xce0] sm:$0xff]
        %v652 = vld [vmem:[%s226 + $0xce8] sm:$0xff]
        %v653 = vld [vmem:[%s226 + $0xcf0] sm:$0xff]
        %v654 = vld [vmem:[%s226 + $0xcf8] sm:$0xff]
        %v655 = vld [vmem:[%s226 + $0xd00] sm:$0xff]
        %v656 = vld [vmem:[%s226 + $0xd08] sm:$0xff]
        %v657 = vld [vmem:[%s226 + $0xd10] sm:$0xff]
        %v658 = vld [vmem:[%s226 + $0xd18] sm:$0xff]
        %v659 = vld [vmem:[%s226 + $0xd20] sm:$0xff]
        %v660 = vld [vmem:[%s226 + $0xd28] sm:$0xff]
        %v661 = vld [vmem:[%s226 + $0xd30] sm:$0xff]
        %v662 = vld [vmem:[%s226 + $0xd38] sm:$0xff]
        %v663 = vld [vmem:[%s226 + $0xd40] sm:$0xff]
        %v664 = vld [vmem:[%s226 + $0xd48] sm:$0xff]
        %v665 = vld [vmem:[%s226 + $0xd50] sm:$0xff]
        %v666 = vld [vmem:[%s226 + $0xd58] sm:$0xff]
        %v667 = vld [vmem:[%s226 + $0xd60] sm:$0xff]
        %v668 = vld [vmem:[%s226 + $0xd68] sm:$0xff]
        %v669 = vld [vmem:[%s226 + $0xd70] sm:$0xff]
        %v670 = vld [vmem:[%s226 + $0xd78] sm:$0xff]
        %v671 = vld [vmem:[%s226 + $0xd80] sm:$0xff]
        %v672 = vld [vmem:[%s226 + $0xd88] sm:$0xff]
        %v673 = vld [vmem:[%s226 + $0xd90] sm:$0xff]
        %v674 = vld [vmem:[%s226 + $0xd98] sm:$0xff]
        %v675 = vld [vmem:[%s226 + $0xda0] sm:$0xff]
        %v676 = vld [vmem:[%s226 + $0xda8] sm:$0xff]
        %v677 = vld [vmem:[%s226 + $0xdb0] sm:$0xff]
        %v678 = vld [vmem:[%s226 + $0xdb8] sm:$0xff]
        %v679 = vld [vmem:[%s226 + $0xdc0] sm:$0xff]
        %v680 = vld [vmem:[%s226 + $0xdc8] sm:$0xff]
        %v681 = vld [vmem:[%s226 + $0xdd0] sm:$0xff]
        %v682 = vld [vmem:[%s226 + $0xdd8] sm:$0xff]
        %v683 = vld [vmem:[%s226 + $0xde0] sm:$0xff]
        %v684 = vld [vmem:[%s226 + $0xde8] sm:$0xff]
        %v685 = vld [vmem:[%s226 + $0xdf0] sm:$0xff]
        %v686 = vld [vmem:[%s226 + $0xdf8] sm:$0xff]
        %v687 = vld [vmem:[%s226 + $0xe00] sm:$0xff]
        %v688 = vld [vmem:[%s226 + $0xe08] sm:$0xff]
        %v689 = vld [vmem:[%s226 + $0xe10] sm:$0xff]
        %v690 = vld [vmem:[%s226 + $0xe18] sm:$0xff]
        %v691 = vld [vmem:[%s226 + $0xe20] sm:$0xff]
        %v692 = vld [vmem:[%s226 + $0xe28] sm:$0xff]
        %v693 = vld [vmem:[%s226 + $0xe30] sm:$0xff]
        %v694 = vld [vmem:[%s226 + $0xe38] sm:$0xff]
        %v695 = vld [vmem:[%s226 + $0xe40] sm:$0xff]
        %v696 = vld [vmem:[%s226 + $0xe48] sm:$0xff]
        %v697 = vld [vmem:[%s226 + $0xe50] sm:$0xff]
        %v698 = vld [vmem:[%s226 + $0xe58] sm:$0xff]
        %v699 = vld [vmem:[%s226 + $0xe60] sm:$0xff]
        %v700 = vld [vmem:[%s226 + $0xe68] sm:$0xff]
        %v701 = vld [vmem:[%s226 + $0xe70] sm:$0xff]
        %v702 = vld [vmem:[%s226 + $0xe78] sm:$0xff]
        %v703 = vld [vmem:[%s226 + $0xe80] sm:$0xff]
        %v704 = vld [vmem:[%s226 + $0xe88] sm:$0xff]
        %v705 = vld [vmem:[%s226 + $0xe90] sm:$0xff]
        %v706 = vld [vmem:[%s226 + $0xe98] sm:$0xff]
        %v707 = vld [vmem:[%s226 + $0xea0] sm:$0xff]
        %v708 = vld [vmem:[%s226 + $0xea8] sm:$0xff]
        %v709 = vld [vmem:[%s226 + $0xeb0] sm:$0xff]
        %v710 = vld [vmem:[%s226 + $0xeb8] sm:$0xff]
        %v711 = vld [vmem:[%s226 + $0xec0] sm:$0xff]
        %v712 = vld [vmem:[%s226 + $0xec8] sm:$0xff]
        %v713 = vld [vmem:[%s226 + $0xed0] sm:$0xff]
        %v714 = vld [vmem:[%s226 + $0xed8] sm:$0xff]
        %v715 = vld [vmem:[%s226 + $0xee0] sm:$0xff]
        %v716 = vld [vmem:[%s226 + $0xee8] sm:$0xff]
        %v717 = vld [vmem:[%s226 + $0xef0] sm:$0xff]
        %v718 = vld [vmem:[%s226 + $0xef8] sm:$0xff]
        %v719 = vld [vmem:[%s226 + $0xf00] sm:$0xff]
        %v720 = vld [vmem:[%s226 + $0xf08] sm:$0xff]
        %v721 = vld [vmem:[%s226 + $0xf10] sm:$0xff]
        %v722 = vld [vmem:[%s226 + $0xf18] sm:$0xff]
        %v723 = vld [vmem:[%s226 + $0xf20] sm:$0xff]
        %v724 = vld [vmem:[%s226 + $0xf28] sm:$0xff]
        %v725 = vld [vmem:[%s226 + $0xf30] sm:$0xff]
        %v726 = vld [vmem:[%s226 + $0xf38] sm:$0xff]
        %v727 = vld [vmem:[%s226 + $0xf40] sm:$0xff]
        %v728 = vld [vmem:[%s226 + $0xf48] sm:$0xff]
        %v729 = vld [vmem:[%s226 + $0xf50] sm:$0xff]
        %v730 = vld [vmem:[%s226 + $0xf58] sm:$0xff]
        %v731 = vld [vmem:[%s226 + $0xf60] sm:$0xff]
        %v732 = vld [vmem:[%s226 + $0xf68] sm:$0xff]
        %v733 = vld [vmem:[%s226 + $0xf70] sm:$0xff]
        %v734 = vld [vmem:[%s226 + $0xf78] sm:$0xff]
        %v735 = vld [vmem:[%s226 + $0xf80] sm:$0xff]
        %v736 = vld [vmem:[%s226 + $0xf88] sm:$0xff]
        %v737 = vld [vmem:[%s226 + $0xf90] sm:$0xff]
        %v738 = vld [vmem:[%s226 + $0xf98] sm:$0xff]
        %v739 = vld [vmem:[%s226 + $0xfa0] sm:$0xff]
        %v740 = vld [vmem:[%s226 + $0xfa8] sm:$0xff]
        %v741 = vld [vmem:[%s226 + $0xfb0] sm:$0xff]
        %v742 = vld [vmem:[%s226 + $0xfb8] sm:$0xff]
        %v743 = vld [vmem:[%s226 + $0xfc0] sm:$0xff]
        %v744 = vld [vmem:[%s226 + $0xfc8] sm:$0xff]
        %v745 = vld [vmem:[%s226 + $0xfd0] sm:$0xff]
        %v746 = vld [vmem:[%s226 + $0xfd8] sm:$0xff]
        %v747 = vld [vmem:[%s226 + $0xfe0] sm:$0xff]
        %v748 = vld [vmem:[%s226 + $0xfe8] sm:$0xff]
        %v749 = vld [vmem:[%s226 + $0xff0] sm:$0xff]
        %v750 = vld [vmem:[%s226 + $0xff8] sm:$0xff]
        %v751 = vld [vmem:[%s1] sm:$0xff]
        %v752 = vld [vmem:[%s1 + $0x8] sm:$0x3]
        %vm753 = vcmask 80896
        %v755 = vsel %vm753, %v239, 0
        %v758 = vsel %vm753, %v240, 0
        %v761 = vsel %vm753, %v241, 0
        %v764 = vsel %vm753, %v242, 0
        %v767 = vsel %vm753, %v243, 0
        %v770 = vsel %vm753, %v244, 0
        %v773 = vsel %vm753, %v245, 0
        %v776 = vsel %vm753, %v246, 0
        %v779 = vsel %vm753, %v247, 0
        %v782 = vsel %vm753, %v248, 0
        %v785 = vsel %vm753, %v249, 0
        %v788 = vsel %vm753, %v250, 0
        %v791 = vsel %vm753, %v251, 0
        %v794 = vsel %vm753, %v252, 0
        %v797 = vsel %vm753, %v253, 0
        %v800 = vsel %vm753, %v254, 0
        %v803 = vsel %vm753, %v255, 0
        %v806 = vsel %vm753, %v256, 0
        %v809 = vsel %vm753, %v257, 0
        %v812 = vsel %vm753, %v258, 0
        %v815 = vsel %vm753, %v259, 0
        %v818 = vsel %vm753, %v260, 0
        %v821 = vsel %vm753, %v261, 0
        %v824 = vsel %vm753, %v262, 0
        %v827 = vsel %vm753, %v263, 0
        %v830 = vsel %vm753, %v264, 0
        %v833 = vsel %vm753, %v265, 0
        %v836 = vsel %vm753, %v266, 0
        %v839 = vsel %vm753, %v267, 0
        %v842 = vsel %vm753, %v268, 0
        %v845 = vsel %vm753, %v269, 0
        %v848 = vsel %vm753, %v270, 0
        %v851 = vsel %vm753, %v271, 0
        %v854 = vsel %vm753, %v272, 0
        %v857 = vsel %vm753, %v273, 0
        %v860 = vsel %vm753, %v274, 0
        %v863 = vsel %vm753, %v275, 0
        %v866 = vsel %vm753, %v276, 0
        %v869 = vsel %vm753, %v277, 0
        %v872 = vsel %vm753, %v278, 0
        %v875 = vsel %vm753, %v279, 0
        %v878 = vsel %vm753, %v280, 0
        %v881 = vsel %vm753, %v281, 0
        %v884 = vsel %vm753, %v282, 0
        %v887 = vsel %vm753, %v283, 0
        %v890 = vsel %vm753, %v284, 0
        %v893 = vsel %vm753, %v285, 0
        %v896 = vsel %vm753, %v286, 0
        %v899 = vsel %vm753, %v287, 0
        %v902 = vsel %vm753, %v288, 0
        %v905 = vsel %vm753, %v289, 0
        %v908 = vsel %vm753, %v290, 0
        %v911 = vsel %vm753, %v291, 0
        %v914 = vsel %vm753, %v292, 0
        %v917 = vsel %vm753, %v293, 0
        %v920 = vsel %vm753, %v294, 0
        %v923 = vsel %vm753, %v295, 0
        %v926 = vsel %vm753, %v296, 0
        %v929 = vsel %vm753, %v297, 0
        %v932 = vsel %vm753, %v298, 0
        %v935 = vsel %vm753, %v299, 0
        %v938 = vsel %vm753, %v300, 0
        %v941 = vsel %vm753, %v301, 0
        %v944 = vsel %vm753, %v302, 0
        %v947 = vsel %vm753, %v303, 0
        %v950 = vsel %vm753, %v304, 0
        %v953 = vsel %vm753, %v305, 0
        %v956 = vsel %vm753, %v306, 0
        %v959 = vsel %vm753, %v307, 0
        %v962 = vsel %vm753, %v308, 0
        %v965 = vsel %vm753, %v309, 0
        %v968 = vsel %vm753, %v310, 0
        %v971 = vsel %vm753, %v311, 0
        %v974 = vsel %vm753, %v312, 0
        %v977 = vsel %vm753, %v313, 0
        %v980 = vsel %vm753, %v314, 0
        %v983 = vsel %vm753, %v315, 0
        %v986 = vsel %vm753, %v316, 0
        %v989 = vsel %vm753, %v317, 0
        %v992 = vsel %vm753, %v318, 0
        %v995 = vsel %vm753, %v319, 0
        %v998 = vsel %vm753, %v320, 0
        %v1001 = vsel %vm753, %v321, 0
        %v1004 = vsel %vm753, %v322, 0
        %v1007 = vsel %vm753, %v323, 0
        %v1010 = vsel %vm753, %v324, 0
        %v1013 = vsel %vm753, %v325, 0
        %v1016 = vsel %vm753, %v326, 0
        %v1019 = vsel %vm753, %v327, 0
        %v1022 = vsel %vm753, %v328, 0
        %v1025 = vsel %vm753, %v329, 0
        %v1028 = vsel %vm753, %v330, 0
        %v1031 = vsel %vm753, %v331, 0
        %v1034 = vsel %vm753, %v332, 0
        %v1037 = vsel %vm753, %v333, 0
        %v1040 = vsel %vm753, %v334, 0
        %v1043 = vsel %vm753, %v335, 0
        %v1046 = vsel %vm753, %v336, 0
        %v1049 = vsel %vm753, %v337, 0
        %v1052 = vsel %vm753, %v338, 0
        %v1055 = vsel %vm753, %v339, 0
        %v1058 = vsel %vm753, %v340, 0
        %v1061 = vsel %vm753, %v341, 0
        %v1064 = vsel %vm753, %v342, 0
        %v1067 = vsel %vm753, %v343, 0
        %v1070 = vsel %vm753, %v344, 0
        %v1073 = vsel %vm753, %v345, 0
        %v1076 = vsel %vm753, %v346, 0
        %v1079 = vsel %vm753, %v347, 0
        %v1082 = vsel %vm753, %v348, 0
        %v1085 = vsel %vm753, %v349, 0
        %v1088 = vsel %vm753, %v350, 0
        %v1091 = vsel %vm753, %v351, 0
        %v1094 = vsel %vm753, %v352, 0
        %v1097 = vsel %vm753, %v353, 0
        %v1100 = vsel %vm753, %v354, 0
        %v1103 = vsel %vm753, %v355, 0
        %v1106 = vsel %vm753, %v356, 0
        %v1109 = vsel %vm753, %v357, 0
        %v1112 = vsel %vm753, %v358, 0
        %v1115 = vsel %vm753, %v359, 0
        %v1118 = vsel %vm753, %v360, 0
        %v1121 = vsel %vm753, %v361, 0
        %v1124 = vsel %vm753, %v362, 0
        %v1127 = vsel %vm753, %v363, 0
        %v1130 = vsel %vm753, %v364, 0
        %v1133 = vsel %vm753, %v365, 0
        %v1136 = vsel %vm753, %v366, 0
        %v1139 = vsel %vm753, %v367, 0
        %v1142 = vsel %vm753, %v368, 0
        %v1145 = vsel %vm753, %v369, 0
        %v1148 = vsel %vm753, %v370, 0
        %v1151 = vsel %vm753, %v371, 0
        %v1154 = vsel %vm753, %v372, 0
        %v1157 = vsel %vm753, %v373, 0
        %v1160 = vsel %vm753, %v374, 0
        %v1163 = vsel %vm753, %v375, 0
        %v1166 = vsel %vm753, %v376, 0
        %v1169 = vsel %vm753, %v377, 0
        %v1172 = vsel %vm753, %v378, 0
        %v1175 = vsel %vm753, %v379, 0
        %v1178 = vsel %vm753, %v380, 0
        %v1181 = vsel %vm753, %v381, 0
        %v1184 = vsel %vm753, %v382, 0
        %v1187 = vsel %vm753, %v383, 0
        %v1190 = vsel %vm753, %v384, 0
        %v1193 = vsel %vm753, %v385, 0
        %v1196 = vsel %vm753, %v386, 0
        %v1199 = vsel %vm753, %v387, 0
        %v1202 = vsel %vm753, %v388, 0
        %v1205 = vsel %vm753, %v389, 0
        %v1208 = vsel %vm753, %v390, 0
        %v1211 = vsel %vm753, %v391, 0
        %v1214 = vsel %vm753, %v392, 0
        %v1217 = vsel %vm753, %v393, 0
        %v1220 = vsel %vm753, %v394, 0
        %v1223 = vsel %vm753, %v395, 0
        %v1226 = vsel %vm753, %v396, 0
        %v1229 = vsel %vm753, %v397, 0
        %v1232 = vsel %vm753, %v398, 0
        %v1235 = vsel %vm753, %v399, 0
        %v1238 = vsel %vm753, %v400, 0
        %v1241 = vsel %vm753, %v401, 0
        %v1244 = vsel %vm753, %v402, 0
        %v1247 = vsel %vm753, %v403, 0
        %v1250 = vsel %vm753, %v404, 0
        %v1253 = vsel %vm753, %v405, 0
        %v1256 = vsel %vm753, %v406, 0
        %v1259 = vsel %vm753, %v407, 0
        %v1262 = vsel %vm753, %v408, 0
        %v1265 = vsel %vm753, %v409, 0
        %v1268 = vsel %vm753, %v410, 0
        %v1271 = vsel %vm753, %v411, 0
        %v1274 = vsel %vm753, %v412, 0
        %v1277 = vsel %vm753, %v413, 0
        %v1280 = vsel %vm753, %v414, 0
        %v1283 = vsel %vm753, %v415, 0
        %v1286 = vsel %vm753, %v416, 0
        %v1289 = vsel %vm753, %v417, 0
        %v1292 = vsel %vm753, %v418, 0
        %v1295 = vsel %vm753, %v419, 0
        %v1298 = vsel %vm753, %v420, 0
        %v1301 = vsel %vm753, %v421, 0
        %v1304 = vsel %vm753, %v422, 0
        %v1307 = vsel %vm753, %v423, 0
        %v1310 = vsel %vm753, %v424, 0
        %v1313 = vsel %vm753, %v425, 0
        %v1316 = vsel %vm753, %v426, 0
        %v1319 = vsel %vm753, %v427, 0
        %v1322 = vsel %vm753, %v428, 0
        %v1325 = vsel %vm753, %v429, 0
        %v1328 = vsel %vm753, %v430, 0
        %v1331 = vsel %vm753, %v431, 0
        %v1334 = vsel %vm753, %v432, 0
        %v1337 = vsel %vm753, %v433, 0
        %v1340 = vsel %vm753, %v434, 0
        %v1343 = vsel %vm753, %v435, 0
        %v1346 = vsel %vm753, %v436, 0
        %v1349 = vsel %vm753, %v437, 0
        %v1352 = vsel %vm753, %v438, 0
        %v1355 = vsel %vm753, %v439, 0
        %v1358 = vsel %vm753, %v440, 0
        %v1361 = vsel %vm753, %v441, 0
        %v1364 = vsel %vm753, %v442, 0
        %v1367 = vsel %vm753, %v443, 0
        %v1370 = vsel %vm753, %v444, 0
        %v1373 = vsel %vm753, %v445, 0
        %v1376 = vsel %vm753, %v446, 0
        %v1379 = vsel %vm753, %v447, 0
        %v1382 = vsel %vm753, %v448, 0
        %v1385 = vsel %vm753, %v449, 0
        %v1388 = vsel %vm753, %v450, 0
        %v1391 = vsel %vm753, %v451, 0
        %v1394 = vsel %vm753, %v452, 0
        %v1397 = vsel %vm753, %v453, 0
        %v1400 = vsel %vm753, %v454, 0
        %v1403 = vsel %vm753, %v455, 0
        %v1406 = vsel %vm753, %v456, 0
        %v1409 = vsel %vm753, %v457, 0
        %v1412 = vsel %vm753, %v458, 0
        %v1415 = vsel %vm753, %v459, 0
        %v1418 = vsel %vm753, %v460, 0
        %v1421 = vsel %vm753, %v461, 0
        %v1424 = vsel %vm753, %v462, 0
        %v1427 = vsel %vm753, %v463, 0
        %v1430 = vsel %vm753, %v464, 0
        %v1433 = vsel %vm753, %v465, 0
        %v1436 = vsel %vm753, %v466, 0
        %v1439 = vsel %vm753, %v467, 0
        %v1442 = vsel %vm753, %v468, 0
        %v1445 = vsel %vm753, %v469, 0
        %v1448 = vsel %vm753, %v470, 0
        %v1451 = vsel %vm753, %v471, 0
        %v1454 = vsel %vm753, %v472, 0
        %v1457 = vsel %vm753, %v473, 0
        %v1460 = vsel %vm753, %v474, 0
        %v1463 = vsel %vm753, %v475, 0
        %v1466 = vsel %vm753, %v476, 0
        %v1469 = vsel %vm753, %v477, 0
        %v1472 = vsel %vm753, %v478, 0
        %v1475 = vsel %vm753, %v479, 0
        %v1478 = vsel %vm753, %v480, 0
        %v1481 = vsel %vm753, %v481, 0
        %v1484 = vsel %vm753, %v482, 0
        %v1487 = vsel %vm753, %v483, 0
        %v1490 = vsel %vm753, %v484, 0
        %v1493 = vsel %vm753, %v485, 0
        %v1496 = vsel %vm753, %v486, 0
        %v1499 = vsel %vm753, %v487, 0
        %v1502 = vsel %vm753, %v488, 0
        %v1505 = vsel %vm753, %v489, 0
        %v1508 = vsel %vm753, %v490, 0
        %v1511 = vsel %vm753, %v491, 0
        %v1514 = vsel %vm753, %v492, 0
        %v1517 = vsel %vm753, %v493, 0
        %v1520 = vsel %vm753, %v494, 0
        %v1523 = vsel %vm753, %v495, 0
        %v1526 = vsel %vm753, %v496, 0
        %v1529 = vsel %vm753, %v497, 0
        %v1532 = vsel %vm753, %v498, 0
        %v1535 = vsel %vm753, %v499, 0
        %v1538 = vsel %vm753, %v500, 0
        %v1541 = vsel %vm753, %v501, 0
        %v1544 = vsel %vm753, %v502, 0
        %v1547 = vsel %vm753, %v503, 0
        %v1550 = vsel %vm753, %v504, 0
        %v1553 = vsel %vm753, %v505, 0
        %v1556 = vsel %vm753, %v506, 0
        %v1559 = vsel %vm753, %v507, 0
        %v1562 = vsel %vm753, %v508, 0
        %v1565 = vsel %vm753, %v509, 0
        %v1568 = vsel %vm753, %v510, 0
        %v1571 = vsel %vm753, %v511, 0
        %v1574 = vsel %vm753, %v512, 0
        %v1577 = vsel %vm753, %v513, 0
        %v1580 = vsel %vm753, %v514, 0
        %v1583 = vsel %vm753, %v515, 0
        %v1586 = vsel %vm753, %v516, 0
        %v1589 = vsel %vm753, %v517, 0
        %v1592 = vsel %vm753, %v518, 0
        %v1595 = vsel %vm753, %v519, 0
        %v1598 = vsel %vm753, %v520, 0
        %v1601 = vsel %vm753, %v521, 0
        %v1604 = vsel %vm753, %v522, 0
        %v1607 = vsel %vm753, %v523, 0
        %v1610 = vsel %vm753, %v524, 0
        %v1613 = vsel %vm753, %v525, 0
        %v1616 = vsel %vm753, %v526, 0
        %v1619 = vsel %vm753, %v527, 0
        %v1622 = vsel %vm753, %v528, 0
        %v1625 = vsel %vm753, %v529, 0
        %v1628 = vsel %vm753, %v530, 0
        %v1631 = vsel %vm753, %v531, 0
        %v1634 = vsel %vm753, %v532, 0
        %v1637 = vsel %vm753, %v533, 0
        %v1640 = vsel %vm753, %v534, 0
        %v1643 = vsel %vm753, %v535, 0
        %v1646 = vsel %vm753, %v536, 0
        %v1649 = vsel %vm753, %v537, 0
        %v1652 = vsel %vm753, %v538, 0
        %v1655 = vsel %vm753, %v539, 0
        %v1658 = vsel %vm753, %v540, 0
        %v1661 = vsel %vm753, %v541, 0
        %v1664 = vsel %vm753, %v542, 0
        %v1667 = vsel %vm753, %v543, 0
        %v1670 = vsel %vm753, %v544, 0
        %v1673 = vsel %vm753, %v545, 0
        %v1676 = vsel %vm753, %v546, 0
        %v1679 = vsel %vm753, %v547, 0
        %v1682 = vsel %vm753, %v548, 0
        %v1685 = vsel %vm753, %v549, 0
        %v1688 = vsel %vm753, %v550, 0
        %v1691 = vsel %vm753, %v551, 0
        %v1694 = vsel %vm753, %v552, 0
        %v1697 = vsel %vm753, %v553, 0
        %v1700 = vsel %vm753, %v554, 0
        %v1703 = vsel %vm753, %v555, 0
        %v1706 = vsel %vm753, %v556, 0
        %v1709 = vsel %vm753, %v557, 0
        %v1712 = vsel %vm753, %v558, 0
        %v1715 = vsel %vm753, %v559, 0
        %v1718 = vsel %vm753, %v560, 0
        %v1721 = vsel %vm753, %v561, 0
        %v1724 = vsel %vm753, %v562, 0
        %v1727 = vsel %vm753, %v563, 0
        %v1730 = vsel %vm753, %v564, 0
        %v1733 = vsel %vm753, %v565, 0
        %v1736 = vsel %vm753, %v566, 0
        %v1739 = vsel %vm753, %v567, 0
        %v1742 = vsel %vm753, %v568, 0
        %v1745 = vsel %vm753, %v569, 0
        %v1748 = vsel %vm753, %v570, 0
        %v1751 = vsel %vm753, %v571, 0
        %v1754 = vsel %vm753, %v572, 0
        %v1757 = vsel %vm753, %v573, 0
        %v1760 = vsel %vm753, %v574, 0
        %v1763 = vsel %vm753, %v575, 0
        %v1766 = vsel %vm753, %v576, 0
        %v1769 = vsel %vm753, %v577, 0
        %v1772 = vsel %vm753, %v578, 0
        %v1775 = vsel %vm753, %v579, 0
        %v1778 = vsel %vm753, %v580, 0
        %v1781 = vsel %vm753, %v581, 0
        %v1784 = vsel %vm753, %v582, 0
        %v1787 = vsel %vm753, %v583, 0
        %v1790 = vsel %vm753, %v584, 0
        %v1793 = vsel %vm753, %v585, 0
        %v1796 = vsel %vm753, %v586, 0
        %v1799 = vsel %vm753, %v587, 0
        %v1802 = vsel %vm753, %v588, 0
        %v1805 = vsel %vm753, %v589, 0
        %v1808 = vsel %vm753, %v590, 0
        %v1811 = vsel %vm753, %v591, 0
        %v1814 = vsel %vm753, %v592, 0
        %v1817 = vsel %vm753, %v593, 0
        %v1820 = vsel %vm753, %v594, 0
        %v1823 = vsel %vm753, %v595, 0
        %v1826 = vsel %vm753, %v596, 0
        %v1829 = vsel %vm753, %v597, 0
        %v1832 = vsel %vm753, %v598, 0
        %v1835 = vsel %vm753, %v599, 0
        %v1838 = vsel %vm753, %v600, 0
        %v1841 = vsel %vm753, %v601, 0
        %v1844 = vsel %vm753, %v602, 0
        %v1847 = vsel %vm753, %v603, 0
        %v1850 = vsel %vm753, %v604, 0
        %v1853 = vsel %vm753, %v605, 0
        %v1856 = vsel %vm753, %v606, 0
        %v1859 = vsel %vm753, %v607, 0
        %v1862 = vsel %vm753, %v608, 0
        %v1865 = vsel %vm753, %v609, 0
        %v1868 = vsel %vm753, %v610, 0
        %v1871 = vsel %vm753, %v611, 0
        %v1874 = vsel %vm753, %v612, 0
        %v1877 = vsel %vm753, %v613, 0
        %v1880 = vsel %vm753, %v614, 0
        %v1883 = vsel %vm753, %v615, 0
        %v1886 = vsel %vm753, %v616, 0
        %v1889 = vsel %vm753, %v617, 0
        %v1892 = vsel %vm753, %v618, 0
        %v1895 = vsel %vm753, %v619, 0
        %v1898 = vsel %vm753, %v620, 0
        %v1901 = vsel %vm753, %v621, 0
        %v1904 = vsel %vm753, %v622, 0
        %v1907 = vsel %vm753, %v623, 0
        %v1910 = vsel %vm753, %v624, 0
        %v1913 = vsel %vm753, %v625, 0
        %v1916 = vsel %vm753, %v626, 0
        %v1919 = vsel %vm753, %v627, 0
        %v1922 = vsel %vm753, %v628, 0
        %v1925 = vsel %vm753, %v629, 0
        %v1928 = vsel %vm753, %v630, 0
        %v1931 = vsel %vm753, %v631, 0
        %v1934 = vsel %vm753, %v632, 0
        %v1937 = vsel %vm753, %v633, 0
        %v1940 = vsel %vm753, %v634, 0
        %v1943 = vsel %vm753, %v635, 0
        %v1946 = vsel %vm753, %v636, 0
        %v1949 = vsel %vm753, %v637, 0
        %v1952 = vsel %vm753, %v638, 0
        %v1955 = vsel %vm753, %v639, 0
        %v1958 = vsel %vm753, %v640, 0
        %v1961 = vsel %vm753, %v641, 0
        %v1964 = vsel %vm753, %v642, 0
        %v1967 = vsel %vm753, %v643, 0
        %v1970 = vsel %vm753, %v644, 0
        %v1973 = vsel %vm753, %v645, 0
        %v1976 = vsel %vm753, %v646, 0
        %v1979 = vsel %vm753, %v647, 0
        %v1982 = vsel %vm753, %v648, 0
        %v1985 = vsel %vm753, %v649, 0
        %v1988 = vsel %vm753, %v650, 0
        %v1991 = vsel %vm753, %v651, 0
        %v1994 = vsel %vm753, %v652, 0
        %v1997 = vsel %vm753, %v653, 0
        %v2000 = vsel %vm753, %v654, 0
        %v2003 = vsel %vm753, %v655, 0
        %v2006 = vsel %vm753, %v656, 0
        %v2009 = vsel %vm753, %v657, 0
        %v2012 = vsel %vm753, %v658, 0
        %v2015 = vsel %vm753, %v659, 0
        %v2018 = vsel %vm753, %v660, 0
        %v2021 = vsel %vm753, %v661, 0
        %v2024 = vsel %vm753, %v662, 0
        %v2027 = vsel %vm753, %v663, 0
        %v2030 = vsel %vm753, %v664, 0
        %v2033 = vsel %vm753, %v665, 0
        %v2036 = vsel %vm753, %v666, 0
        %v2039 = vsel %vm753, %v667, 0
        %v2042 = vsel %vm753, %v668, 0
        %v2045 = vsel %vm753, %v669, 0
        %v2048 = vsel %vm753, %v670, 0
        %v2051 = vsel %vm753, %v671, 0
        %v2054 = vsel %vm753, %v672, 0
        %v2057 = vsel %vm753, %v673, 0
        %v2060 = vsel %vm753, %v674, 0
        %v2063 = vsel %vm753, %v675, 0
        %v2066 = vsel %vm753, %v676, 0
        %v2069 = vsel %vm753, %v677, 0
        %v2072 = vsel %vm753, %v678, 0
        %v2075 = vsel %vm753, %v679, 0
        %v2078 = vsel %vm753, %v680, 0
        %v2081 = vsel %vm753, %v681, 0
        %v2084 = vsel %vm753, %v682, 0
        %v2087 = vsel %vm753, %v683, 0
        %v2090 = vsel %vm753, %v684, 0
        %v2093 = vsel %vm753, %v685, 0
        %v2096 = vsel %vm753, %v686, 0
        %v2099 = vsel %vm753, %v687, 0
        %v2102 = vsel %vm753, %v688, 0
        %v2105 = vsel %vm753, %v689, 0
        %v2108 = vsel %vm753, %v690, 0
        %v2111 = vsel %vm753, %v691, 0
        %v2114 = vsel %vm753, %v692, 0
        %v2117 = vsel %vm753, %v693, 0
        %v2120 = vsel %vm753, %v694, 0
        %v2123 = vsel %vm753, %v695, 0
        %v2126 = vsel %vm753, %v696, 0
        %v2129 = vsel %vm753, %v697, 0
        %v2132 = vsel %vm753, %v698, 0
        %v2135 = vsel %vm753, %v699, 0
        %v2138 = vsel %vm753, %v700, 0
        %v2141 = vsel %vm753, %v701, 0
        %v2144 = vsel %vm753, %v702, 0
        %v2147 = vsel %vm753, %v703, 0
        %v2150 = vsel %vm753, %v704, 0
        %v2153 = vsel %vm753, %v705, 0
        %v2156 = vsel %vm753, %v706, 0
        %v2159 = vsel %vm753, %v707, 0
        %v2162 = vsel %vm753, %v708, 0
        %v2165 = vsel %vm753, %v709, 0
        %v2168 = vsel %vm753, %v710, 0
        %v2171 = vsel %vm753, %v711, 0
        %v2174 = vsel %vm753, %v712, 0
        %v2177 = vsel %vm753, %v713, 0
        %v2180 = vsel %vm753, %v714, 0
        %v2183 = vsel %vm753, %v715, 0
        %v2186 = vsel %vm753, %v716, 0
        %v2189 = vsel %vm753, %v717, 0
        %v2192 = vsel %vm753, %v718, 0
        %v2195 = vsel %vm753, %v719, 0
        %v2198 = vsel %vm753, %v720, 0
        %v2201 = vsel %vm753, %v721, 0
        %v2204 = vsel %vm753, %v722, 0
        %v2207 = vsel %vm753, %v723, 0
        %v2210 = vsel %vm753, %v724, 0
        %v2213 = vsel %vm753, %v725, 0
        %v2216 = vsel %vm753, %v726, 0
        %v2219 = vsel %vm753, %v727, 0
        %v2222 = vsel %vm753, %v728, 0
        %v2225 = vsel %vm753, %v729, 0
        %v2228 = vsel %vm753, %v730, 0
        %v2231 = vsel %vm753, %v731, 0
        %v2234 = vsel %vm753, %v732, 0
        %v2237 = vsel %vm753, %v733, 0
        %v2240 = vsel %vm753, %v734, 0
        %v2243 = vsel %vm753, %v735, 0
        %v2246 = vsel %vm753, %v736, 0
        %v2249 = vsel %vm753, %v737, 0
        %v2252 = vsel %vm753, %v738, 0
        %v2255 = vsel %vm753, %v739, 0
        %v2258 = vsel %vm753, %v740, 0
        %v2261 = vsel %vm753, %v741, 0
        %v2264 = vsel %vm753, %v742, 0
        %v2267 = vsel %vm753, %v743, 0
        %v2270 = vsel %vm753, %v744, 0
        %v2273 = vsel %vm753, %v745, 0
        %v2276 = vsel %vm753, %v746, 0
        %v2279 = vsel %vm753, %v747, 0
        %v2282 = vsel %vm753, %v748, 0
        %v2285 = vsel %vm753, %v749, 0
        %v2288 = vsel %vm753, %v750, 0
        %vm2290 = vcmask 1041408
        %v2292 = vsel %vm2290, %v752, 0
        %2294 = vmatpush.msra.mxu0 0.0
        %2295 = vmatpush.msra.mxu0 0.0
        %2296 = vmatpush.msra.mxu0 0.0
        %2297 = vmatpush.msra.mxu0 0.0
        %2298 = vmatpush.msra.mxu0 0.0
        %2299 = vmatpush.msra.mxu0 0.0
        %2300 = vmatpush.msra.mxu0 0.0
        %2301 = vmatpush.msra.mxu0 0.0
        %2302 = vmatpush.msra.mxu0 0.0
        %2303 = vmatpush.msra.mxu0 0.0
        %2304 = vmatpush.msra.mxu0 0.0
        %2305 = vmatpush.msra.mxu0 0.0
        %2306 = vmatpush.msra.mxu0 0.0
        %2307 = vmatpush.msra.mxu0 0.0
        %2308 = vmatpush.msra.mxu0 %v2292
        %2309 = vmatpush.msra.mxu0 %v751
        %2310 = vmatmul.f32.gmra.mxu0 %v755
        %v2311 = vpop.f32.mrf.mxu0
        %v2312 = vadd.f32 0.0, %v2311
        %2313 = vmatmul.f32.gmra.mxu0 %v758
        %v2314 = vpop.f32.mrf.mxu0
        %v2315 = vadd.f32 0.0, %v2314
        %2316 = vmatmul.f32.gmra.mxu0 %v761
        %v2317 = vpop.f32.mrf.mxu0
        %v2318 = vadd.f32 0.0, %v2317
        %2319 = vmatmul.f32.gmra.mxu0 %v764
        %v2320 = vpop.f32.mrf.mxu0
        %v2321 = vadd.f32 0.0, %v2320
        %2322 = vmatmul.f32.gmra.mxu0 %v767
        %v2323 = vpop.f32.mrf.mxu0
        %v2324 = vadd.f32 0.0, %v2323
        %2325 = vmatmul.f32.gmra.mxu0 %v770
        %v2326 = vpop.f32.mrf.mxu0
        %v2327 = vadd.f32 0.0, %v2326
        %2328 = vmatmul.f32.gmra.mxu0 %v773
        %v2329 = vpop.f32.mrf.mxu0
        %v2330 = vadd.f32 0.0, %v2329
        %2331 = vmatmul.f32.gmra.mxu0 %v776
        %v2332 = vpop.f32.mrf.mxu0
        %v2333 = vadd.f32 0.0, %v2332
        %2334 = vmatmul.f32.gmra.mxu0 %v779
        %v2335 = vpop.f32.mrf.mxu0
        %v2336 = vadd.f32 0.0, %v2335
        %2337 = vmatmul.f32.gmra.mxu0 %v782
        %v2338 = vpop.f32.mrf.mxu0
        %v2339 = vadd.f32 0.0, %v2338
        %2340 = vmatmul.f32.gmra.mxu0 %v785
        %v2341 = vpop.f32.mrf.mxu0
        %v2342 = vadd.f32 0.0, %v2341
        %2343 = vmatmul.f32.gmra.mxu0 %v788
        %v2344 = vpop.f32.mrf.mxu0
        %v2345 = vadd.f32 0.0, %v2344
        %2346 = vmatmul.f32.gmra.mxu0 %v791
        %v2347 = vpop.f32.mrf.mxu0
        %v2348 = vadd.f32 0.0, %v2347
        %2349 = vmatmul.f32.gmra.mxu0 %v794
        %v2350 = vpop.f32.mrf.mxu0
        %v2351 = vadd.f32 0.0, %v2350
        %2352 = vmatmul.f32.gmra.mxu0 %v797
        %v2353 = vpop.f32.mrf.mxu0
        %v2354 = vadd.f32 0.0, %v2353
        %2355 = vmatmul.f32.gmra.mxu0 %v800
        %v2356 = vpop.f32.mrf.mxu0
        %v2357 = vadd.f32 0.0, %v2356
        %2358 = vmatmul.f32.gmra.mxu0 %v803
        %v2359 = vpop.f32.mrf.mxu0
        %v2360 = vadd.f32 0.0, %v2359
        %2361 = vmatmul.f32.gmra.mxu0 %v806
        %v2362 = vpop.f32.mrf.mxu0
        %v2363 = vadd.f32 0.0, %v2362
        %2364 = vmatmul.f32.gmra.mxu0 %v809
        %v2365 = vpop.f32.mrf.mxu0
        %v2366 = vadd.f32 0.0, %v2365
        %2367 = vmatmul.f32.gmra.mxu0 %v812
        %v2368 = vpop.f32.mrf.mxu0
        %v2369 = vadd.f32 0.0, %v2368
        %2370 = vmatmul.f32.gmra.mxu0 %v815
        %v2371 = vpop.f32.mrf.mxu0
        %v2372 = vadd.f32 0.0, %v2371
        %2373 = vmatmul.f32.gmra.mxu0 %v818
        %v2374 = vpop.f32.mrf.mxu0
        %v2375 = vadd.f32 0.0, %v2374
        %2376 = vmatmul.f32.gmra.mxu0 %v821
        %v2377 = vpop.f32.mrf.mxu0
        %v2378 = vadd.f32 0.0, %v2377
        %2379 = vmatmul.f32.gmra.mxu0 %v824
        %v2380 = vpop.f32.mrf.mxu0
        %v2381 = vadd.f32 0.0, %v2380
        %2382 = vmatmul.f32.gmra.mxu0 %v827
        %v2383 = vpop.f32.mrf.mxu0
        %v2384 = vadd.f32 0.0, %v2383
        %2385 = vmatmul.f32.gmra.mxu0 %v830
        %v2386 = vpop.f32.mrf.mxu0
        %v2387 = vadd.f32 0.0, %v2386
        %2388 = vmatmul.f32.gmra.mxu0 %v833
        %v2389 = vpop.f32.mrf.mxu0
        %v2390 = vadd.f32 0.0, %v2389
        %2391 = vmatmul.f32.gmra.mxu0 %v836
        %v2392 = vpop.f32.mrf.mxu0
        %v2393 = vadd.f32 0.0, %v2392
        %2394 = vmatmul.f32.gmra.mxu0 %v839
        %v2395 = vpop.f32.mrf.mxu0
        %v2396 = vadd.f32 0.0, %v2395
        %2397 = vmatmul.f32.gmra.mxu0 %v842
        %v2398 = vpop.f32.mrf.mxu0
        %v2399 = vadd.f32 0.0, %v2398
        %2400 = vmatmul.f32.gmra.mxu0 %v845
        %v2401 = vpop.f32.mrf.mxu0
        %v2402 = vadd.f32 0.0, %v2401
        %2403 = vmatmul.f32.gmra.mxu0 %v848
        %v2404 = vpop.f32.mrf.mxu0
        %v2405 = vadd.f32 0.0, %v2404
        %2406 = vmatmul.f32.gmra.mxu0 %v851
        %v2407 = vpop.f32.mrf.mxu0
        %v2408 = vadd.f32 0.0, %v2407
        %2409 = vmatmul.f32.gmra.mxu0 %v854
        %v2410 = vpop.f32.mrf.mxu0
        %v2411 = vadd.f32 0.0, %v2410
        %2412 = vmatmul.f32.gmra.mxu0 %v857
        %v2413 = vpop.f32.mrf.mxu0
        %v2414 = vadd.f32 0.0, %v2413
        %2415 = vmatmul.f32.gmra.mxu0 %v860
        %v2416 = vpop.f32.mrf.mxu0
        %v2417 = vadd.f32 0.0, %v2416
        %2418 = vmatmul.f32.gmra.mxu0 %v863
        %v2419 = vpop.f32.mrf.mxu0
        %v2420 = vadd.f32 0.0, %v2419
        %2421 = vmatmul.f32.gmra.mxu0 %v866
        %v2422 = vpop.f32.mrf.mxu0
        %v2423 = vadd.f32 0.0, %v2422
        %2424 = vmatmul.f32.gmra.mxu0 %v869
        %v2425 = vpop.f32.mrf.mxu0
        %v2426 = vadd.f32 0.0, %v2425
        %2427 = vmatmul.f32.gmra.mxu0 %v872
        %v2428 = vpop.f32.mrf.mxu0
        %v2429 = vadd.f32 0.0, %v2428
        %2430 = vmatmul.f32.gmra.mxu0 %v875
        %v2431 = vpop.f32.mrf.mxu0
        %v2432 = vadd.f32 0.0, %v2431
        %2433 = vmatmul.f32.gmra.mxu0 %v878
        %v2434 = vpop.f32.mrf.mxu0
        %v2435 = vadd.f32 0.0, %v2434
        %2436 = vmatmul.f32.gmra.mxu0 %v881
        %v2437 = vpop.f32.mrf.mxu0
        %v2438 = vadd.f32 0.0, %v2437
        %2439 = vmatmul.f32.gmra.mxu0 %v884
        %v2440 = vpop.f32.mrf.mxu0
        %v2441 = vadd.f32 0.0, %v2440
        %2442 = vmatmul.f32.gmra.mxu0 %v887
        %v2443 = vpop.f32.mrf.mxu0
        %v2444 = vadd.f32 0.0, %v2443
        %2445 = vmatmul.f32.gmra.mxu0 %v890
        %v2446 = vpop.f32.mrf.mxu0
        %v2447 = vadd.f32 0.0, %v2446
        %2448 = vmatmul.f32.gmra.mxu0 %v893
        %v2449 = vpop.f32.mrf.mxu0
        %v2450 = vadd.f32 0.0, %v2449
        %2451 = vmatmul.f32.gmra.mxu0 %v896
        %v2452 = vpop.f32.mrf.mxu0
        %v2453 = vadd.f32 0.0, %v2452
        %2454 = vmatmul.f32.gmra.mxu0 %v899
        %v2455 = vpop.f32.mrf.mxu0
        %v2456 = vadd.f32 0.0, %v2455
        %2457 = vmatmul.f32.gmra.mxu0 %v902
        %v2458 = vpop.f32.mrf.mxu0
        %v2459 = vadd.f32 0.0, %v2458
        %2460 = vmatmul.f32.gmra.mxu0 %v905
        %v2461 = vpop.f32.mrf.mxu0
        %v2462 = vadd.f32 0.0, %v2461
        %2463 = vmatmul.f32.gmra.mxu0 %v908
        %v2464 = vpop.f32.mrf.mxu0
        %v2465 = vadd.f32 0.0, %v2464
        %2466 = vmatmul.f32.gmra.mxu0 %v911
        %v2467 = vpop.f32.mrf.mxu0
        %v2468 = vadd.f32 0.0, %v2467
        %2469 = vmatmul.f32.gmra.mxu0 %v914
        %v2470 = vpop.f32.mrf.mxu0
        %v2471 = vadd.f32 0.0, %v2470
        %2472 = vmatmul.f32.gmra.mxu0 %v917
        %v2473 = vpop.f32.mrf.mxu0
        %v2474 = vadd.f32 0.0, %v2473
        %2475 = vmatmul.f32.gmra.mxu0 %v920
        %v2476 = vpop.f32.mrf.mxu0
        %v2477 = vadd.f32 0.0, %v2476
        %2478 = vmatmul.f32.gmra.mxu0 %v923
        %v2479 = vpop.f32.mrf.mxu0
        %v2480 = vadd.f32 0.0, %v2479
        %2481 = vmatmul.f32.gmra.mxu0 %v926
        %v2482 = vpop.f32.mrf.mxu0
        %v2483 = vadd.f32 0.0, %v2482
        %2484 = vmatmul.f32.gmra.mxu0 %v929
        %v2485 = vpop.f32.mrf.mxu0
        %v2486 = vadd.f32 0.0, %v2485
        %2487 = vmatmul.f32.gmra.mxu0 %v932
        %v2488 = vpop.f32.mrf.mxu0
        %v2489 = vadd.f32 0.0, %v2488
        %2490 = vmatmul.f32.gmra.mxu0 %v935
        %v2491 = vpop.f32.mrf.mxu0
        %v2492 = vadd.f32 0.0, %v2491
        %2493 = vmatmul.f32.gmra.mxu0 %v938
        %v2494 = vpop.f32.mrf.mxu0
        %v2495 = vadd.f32 0.0, %v2494
        %2496 = vmatmul.f32.gmra.mxu0 %v941
        %v2497 = vpop.f32.mrf.mxu0
        %v2498 = vadd.f32 0.0, %v2497
        %2499 = vmatmul.f32.gmra.mxu0 %v944
        %v2500 = vpop.f32.mrf.mxu0
        %v2501 = vadd.f32 0.0, %v2500
        %2502 = vmatmul.f32.gmra.mxu0 %v947
        %v2503 = vpop.f32.mrf.mxu0
        %v2504 = vadd.f32 0.0, %v2503
        %2505 = vmatmul.f32.gmra.mxu0 %v950
        %v2506 = vpop.f32.mrf.mxu0
        %v2507 = vadd.f32 0.0, %v2506
        %2508 = vmatmul.f32.gmra.mxu0 %v953
        %v2509 = vpop.f32.mrf.mxu0
        %v2510 = vadd.f32 0.0, %v2509
        %2511 = vmatmul.f32.gmra.mxu0 %v956
        %v2512 = vpop.f32.mrf.mxu0
        %v2513 = vadd.f32 0.0, %v2512
        %2514 = vmatmul.f32.gmra.mxu0 %v959
        %v2515 = vpop.f32.mrf.mxu0
        %v2516 = vadd.f32 0.0, %v2515
        %2517 = vmatmul.f32.gmra.mxu0 %v962
        %v2518 = vpop.f32.mrf.mxu0
        %v2519 = vadd.f32 0.0, %v2518
        %2520 = vmatmul.f32.gmra.mxu0 %v965
        %v2521 = vpop.f32.mrf.mxu0
        %v2522 = vadd.f32 0.0, %v2521
        %2523 = vmatmul.f32.gmra.mxu0 %v968
        %v2524 = vpop.f32.mrf.mxu0
        %v2525 = vadd.f32 0.0, %v2524
        %2526 = vmatmul.f32.gmra.mxu0 %v971
        %v2527 = vpop.f32.mrf.mxu0
        %v2528 = vadd.f32 0.0, %v2527
        %2529 = vmatmul.f32.gmra.mxu0 %v974
        %v2530 = vpop.f32.mrf.mxu0
        %v2531 = vadd.f32 0.0, %v2530
        %2532 = vmatmul.f32.gmra.mxu0 %v977
        %v2533 = vpop.f32.mrf.mxu0
        %v2534 = vadd.f32 0.0, %v2533
        %2535 = vmatmul.f32.gmra.mxu0 %v980
        %v2536 = vpop.f32.mrf.mxu0
        %v2537 = vadd.f32 0.0, %v2536
        %2538 = vmatmul.f32.gmra.mxu0 %v983
        %v2539 = vpop.f32.mrf.mxu0
        %v2540 = vadd.f32 0.0, %v2539
        %2541 = vmatmul.f32.gmra.mxu0 %v986
        %v2542 = vpop.f32.mrf.mxu0
        %v2543 = vadd.f32 0.0, %v2542
        %2544 = vmatmul.f32.gmra.mxu0 %v989
        %v2545 = vpop.f32.mrf.mxu0
        %v2546 = vadd.f32 0.0, %v2545
        %2547 = vmatmul.f32.gmra.mxu0 %v992
        %v2548 = vpop.f32.mrf.mxu0
        %v2549 = vadd.f32 0.0, %v2548
        %2550 = vmatmul.f32.gmra.mxu0 %v995
        %v2551 = vpop.f32.mrf.mxu0
        %v2552 = vadd.f32 0.0, %v2551
        %2553 = vmatmul.f32.gmra.mxu0 %v998
        %v2554 = vpop.f32.mrf.mxu0
        %v2555 = vadd.f32 0.0, %v2554
        %2556 = vmatmul.f32.gmra.mxu0 %v1001
        %v2557 = vpop.f32.mrf.mxu0
        %v2558 = vadd.f32 0.0, %v2557
        %2559 = vmatmul.f32.gmra.mxu0 %v1004
        %v2560 = vpop.f32.mrf.mxu0
        %v2561 = vadd.f32 0.0, %v2560
        %2562 = vmatmul.f32.gmra.mxu0 %v1007
        %v2563 = vpop.f32.mrf.mxu0
        %v2564 = vadd.f32 0.0, %v2563
        %2565 = vmatmul.f32.gmra.mxu0 %v1010
        %v2566 = vpop.f32.mrf.mxu0
        %v2567 = vadd.f32 0.0, %v2566
        %2568 = vmatmul.f32.gmra.mxu0 %v1013
        %v2569 = vpop.f32.mrf.mxu0
        %v2570 = vadd.f32 0.0, %v2569
        %2571 = vmatmul.f32.gmra.mxu0 %v1016
        %v2572 = vpop.f32.mrf.mxu0
        %v2573 = vadd.f32 0.0, %v2572
        %2574 = vmatmul.f32.gmra.mxu0 %v1019
        %v2575 = vpop.f32.mrf.mxu0
        %v2576 = vadd.f32 0.0, %v2575
        %2577 = vmatmul.f32.gmra.mxu0 %v1022
        %v2578 = vpop.f32.mrf.mxu0
        %v2579 = vadd.f32 0.0, %v2578
        %2580 = vmatmul.f32.gmra.mxu0 %v1025
        %v2581 = vpop.f32.mrf.mxu0
        %v2582 = vadd.f32 0.0, %v2581
        %2583 = vmatmul.f32.gmra.mxu0 %v1028
        %v2584 = vpop.f32.mrf.mxu0
        %v2585 = vadd.f32 0.0, %v2584
        %2586 = vmatmul.f32.gmra.mxu0 %v1031
        %v2587 = vpop.f32.mrf.mxu0
        %v2588 = vadd.f32 0.0, %v2587
        %2589 = vmatmul.f32.gmra.mxu0 %v1034
        %v2590 = vpop.f32.mrf.mxu0
        %v2591 = vadd.f32 0.0, %v2590
        %2592 = vmatmul.f32.gmra.mxu0 %v1037
        %v2593 = vpop.f32.mrf.mxu0
        %v2594 = vadd.f32 0.0, %v2593
        %2595 = vmatmul.f32.gmra.mxu0 %v1040
        %v2596 = vpop.f32.mrf.mxu0
        %v2597 = vadd.f32 0.0, %v2596
        %2598 = vmatmul.f32.gmra.mxu0 %v1043
        %v2599 = vpop.f32.mrf.mxu0
        %v2600 = vadd.f32 0.0, %v2599
        %2601 = vmatmul.f32.gmra.mxu0 %v1046
        %v2602 = vpop.f32.mrf.mxu0
        %v2603 = vadd.f32 0.0, %v2602
        %2604 = vmatmul.f32.gmra.mxu0 %v1049
        %v2605 = vpop.f32.mrf.mxu0
        %v2606 = vadd.f32 0.0, %v2605
        %2607 = vmatmul.f32.gmra.mxu0 %v1052
        %v2608 = vpop.f32.mrf.mxu0
        %v2609 = vadd.f32 0.0, %v2608
        %2610 = vmatmul.f32.gmra.mxu0 %v1055
        %v2611 = vpop.f32.mrf.mxu0
        %v2612 = vadd.f32 0.0, %v2611
        %2613 = vmatmul.f32.gmra.mxu0 %v1058
        %v2614 = vpop.f32.mrf.mxu0
        %v2615 = vadd.f32 0.0, %v2614
        %2616 = vmatmul.f32.gmra.mxu0 %v1061
        %v2617 = vpop.f32.mrf.mxu0
        %v2618 = vadd.f32 0.0, %v2617
        %2619 = vmatmul.f32.gmra.mxu0 %v1064
        %v2620 = vpop.f32.mrf.mxu0
        %v2621 = vadd.f32 0.0, %v2620
        %2622 = vmatmul.f32.gmra.mxu0 %v1067
        %v2623 = vpop.f32.mrf.mxu0
        %v2624 = vadd.f32 0.0, %v2623
        %2625 = vmatmul.f32.gmra.mxu0 %v1070
        %v2626 = vpop.f32.mrf.mxu0
        %v2627 = vadd.f32 0.0, %v2626
        %2628 = vmatmul.f32.gmra.mxu0 %v1073
        %v2629 = vpop.f32.mrf.mxu0
        %v2630 = vadd.f32 0.0, %v2629
        %2631 = vmatmul.f32.gmra.mxu0 %v1076
        %v2632 = vpop.f32.mrf.mxu0
        %v2633 = vadd.f32 0.0, %v2632
        %2634 = vmatmul.f32.gmra.mxu0 %v1079
        %v2635 = vpop.f32.mrf.mxu0
        %v2636 = vadd.f32 0.0, %v2635
        %2637 = vmatmul.f32.gmra.mxu0 %v1082
        %v2638 = vpop.f32.mrf.mxu0
        %v2639 = vadd.f32 0.0, %v2638
        %2640 = vmatmul.f32.gmra.mxu0 %v1085
        %v2641 = vpop.f32.mrf.mxu0
        %v2642 = vadd.f32 0.0, %v2641
        %2643 = vmatmul.f32.gmra.mxu0 %v1088
        %v2644 = vpop.f32.mrf.mxu0
        %v2645 = vadd.f32 0.0, %v2644
        %2646 = vmatmul.f32.gmra.mxu0 %v1091
        %v2647 = vpop.f32.mrf.mxu0
        %v2648 = vadd.f32 0.0, %v2647
        %2649 = vmatmul.f32.gmra.mxu0 %v1094
        %v2650 = vpop.f32.mrf.mxu0
        %v2651 = vadd.f32 0.0, %v2650
        %2652 = vmatmul.f32.gmra.mxu0 %v1097
        %v2653 = vpop.f32.mrf.mxu0
        %v2654 = vadd.f32 0.0, %v2653
        %2655 = vmatmul.f32.gmra.mxu0 %v1100
        %v2656 = vpop.f32.mrf.mxu0
        %v2657 = vadd.f32 0.0, %v2656
        %2658 = vmatmul.f32.gmra.mxu0 %v1103
        %v2659 = vpop.f32.mrf.mxu0
        %v2660 = vadd.f32 0.0, %v2659
        %2661 = vmatmul.f32.gmra.mxu0 %v1106
        %v2662 = vpop.f32.mrf.mxu0
        %v2663 = vadd.f32 0.0, %v2662
        %2664 = vmatmul.f32.gmra.mxu0 %v1109
        %v2665 = vpop.f32.mrf.mxu0
        %v2666 = vadd.f32 0.0, %v2665
        %2667 = vmatmul.f32.gmra.mxu0 %v1112
        %v2668 = vpop.f32.mrf.mxu0
        %v2669 = vadd.f32 0.0, %v2668
        %2670 = vmatmul.f32.gmra.mxu0 %v1115
        %v2671 = vpop.f32.mrf.mxu0
        %v2672 = vadd.f32 0.0, %v2671
        %2673 = vmatmul.f32.gmra.mxu0 %v1118
        %v2674 = vpop.f32.mrf.mxu0
        %v2675 = vadd.f32 0.0, %v2674
        %2676 = vmatmul.f32.gmra.mxu0 %v1121
        %v2677 = vpop.f32.mrf.mxu0
        %v2678 = vadd.f32 0.0, %v2677
        %2679 = vmatmul.f32.gmra.mxu0 %v1124
        %v2680 = vpop.f32.mrf.mxu0
        %v2681 = vadd.f32 0.0, %v2680
        %2682 = vmatmul.f32.gmra.mxu0 %v1127
        %v2683 = vpop.f32.mrf.mxu0
        %v2684 = vadd.f32 0.0, %v2683
        %2685 = vmatmul.f32.gmra.mxu0 %v1130
        %v2686 = vpop.f32.mrf.mxu0
        %v2687 = vadd.f32 0.0, %v2686
        %2688 = vmatmul.f32.gmra.mxu0 %v1133
        %v2689 = vpop.f32.mrf.mxu0
        %v2690 = vadd.f32 0.0, %v2689
        %2691 = vmatmul.f32.gmra.mxu0 %v1136
        %v2692 = vpop.f32.mrf.mxu0
        %v2693 = vadd.f32 0.0, %v2692
        %2694 = vmatmul.f32.gmra.mxu0 %v1139
        %v2695 = vpop.f32.mrf.mxu0
        %v2696 = vadd.f32 0.0, %v2695
        %2697 = vmatmul.f32.gmra.mxu0 %v1142
        %v2698 = vpop.f32.mrf.mxu0
        %v2699 = vadd.f32 0.0, %v2698
        %2700 = vmatmul.f32.gmra.mxu0 %v1145
        %v2701 = vpop.f32.mrf.mxu0
        %v2702 = vadd.f32 0.0, %v2701
        %2703 = vmatmul.f32.gmra.mxu0 %v1148
        %v2704 = vpop.f32.mrf.mxu0
        %v2705 = vadd.f32 0.0, %v2704
        %2706 = vmatmul.f32.gmra.mxu0 %v1151
        %v2707 = vpop.f32.mrf.mxu0
        %v2708 = vadd.f32 0.0, %v2707
        %2709 = vmatmul.f32.gmra.mxu0 %v1154
        %v2710 = vpop.f32.mrf.mxu0
        %v2711 = vadd.f32 0.0, %v2710
        %2712 = vmatmul.f32.gmra.mxu0 %v1157
        %v2713 = vpop.f32.mrf.mxu0
        %v2714 = vadd.f32 0.0, %v2713
        %2715 = vmatmul.f32.gmra.mxu0 %v1160
        %v2716 = vpop.f32.mrf.mxu0
        %v2717 = vadd.f32 0.0, %v2716
        %2718 = vmatmul.f32.gmra.mxu0 %v1163
        %v2719 = vpop.f32.mrf.mxu0
        %v2720 = vadd.f32 0.0, %v2719
        %2721 = vmatmul.f32.gmra.mxu0 %v1166
        %v2722 = vpop.f32.mrf.mxu0
        %v2723 = vadd.f32 0.0, %v2722
        %2724 = vmatmul.f32.gmra.mxu0 %v1169
        %v2725 = vpop.f32.mrf.mxu0
        %v2726 = vadd.f32 0.0, %v2725
        %2727 = vmatmul.f32.gmra.mxu0 %v1172
        %v2728 = vpop.f32.mrf.mxu0
        %v2729 = vadd.f32 0.0, %v2728
        %2730 = vmatmul.f32.gmra.mxu0 %v1175
        %v2731 = vpop.f32.mrf.mxu0
        %v2732 = vadd.f32 0.0, %v2731
        %2733 = vmatmul.f32.gmra.mxu0 %v1178
        %v2734 = vpop.f32.mrf.mxu0
        %v2735 = vadd.f32 0.0, %v2734
        %2736 = vmatmul.f32.gmra.mxu0 %v1181
        %v2737 = vpop.f32.mrf.mxu0
        %v2738 = vadd.f32 0.0, %v2737
        %2739 = vmatmul.f32.gmra.mxu0 %v1184
        %v2740 = vpop.f32.mrf.mxu0
        %v2741 = vadd.f32 0.0, %v2740
        %2742 = vmatmul.f32.gmra.mxu0 %v1187
        %v2743 = vpop.f32.mrf.mxu0
        %v2744 = vadd.f32 0.0, %v2743
        %2745 = vmatmul.f32.gmra.mxu0 %v1190
        %v2746 = vpop.f32.mrf.mxu0
        %v2747 = vadd.f32 0.0, %v2746
        %2748 = vmatmul.f32.gmra.mxu0 %v1193
        %v2749 = vpop.f32.mrf.mxu0
        %v2750 = vadd.f32 0.0, %v2749
        %2751 = vmatmul.f32.gmra.mxu0 %v1196
        %v2752 = vpop.f32.mrf.mxu0
        %v2753 = vadd.f32 0.0, %v2752
        %2754 = vmatmul.f32.gmra.mxu0 %v1199
        %v2755 = vpop.f32.mrf.mxu0
        %v2756 = vadd.f32 0.0, %v2755
        %2757 = vmatmul.f32.gmra.mxu0 %v1202
        %v2758 = vpop.f32.mrf.mxu0
        %v2759 = vadd.f32 0.0, %v2758
        %2760 = vmatmul.f32.gmra.mxu0 %v1205
        %v2761 = vpop.f32.mrf.mxu0
        %v2762 = vadd.f32 0.0, %v2761
        %2763 = vmatmul.f32.gmra.mxu0 %v1208
        %v2764 = vpop.f32.mrf.mxu0
        %v2765 = vadd.f32 0.0, %v2764
        %2766 = vmatmul.f32.gmra.mxu0 %v1211
        %v2767 = vpop.f32.mrf.mxu0
        %v2768 = vadd.f32 0.0, %v2767
        %2769 = vmatmul.f32.gmra.mxu0 %v1214
        %v2770 = vpop.f32.mrf.mxu0
        %v2771 = vadd.f32 0.0, %v2770
        %2772 = vmatmul.f32.gmra.mxu0 %v1217
        %v2773 = vpop.f32.mrf.mxu0
        %v2774 = vadd.f32 0.0, %v2773
        %2775 = vmatmul.f32.gmra.mxu0 %v1220
        %v2776 = vpop.f32.mrf.mxu0
        %v2777 = vadd.f32 0.0, %v2776
        %2778 = vmatmul.f32.gmra.mxu0 %v1223
        %v2779 = vpop.f32.mrf.mxu0
        %v2780 = vadd.f32 0.0, %v2779
        %2781 = vmatmul.f32.gmra.mxu0 %v1226
        %v2782 = vpop.f32.mrf.mxu0
        %v2783 = vadd.f32 0.0, %v2782
        %2784 = vmatmul.f32.gmra.mxu0 %v1229
        %v2785 = vpop.f32.mrf.mxu0
        %v2786 = vadd.f32 0.0, %v2785
        %2787 = vmatmul.f32.gmra.mxu0 %v1232
        %v2788 = vpop.f32.mrf.mxu0
        %v2789 = vadd.f32 0.0, %v2788
        %2790 = vmatmul.f32.gmra.mxu0 %v1235
        %v2791 = vpop.f32.mrf.mxu0
        %v2792 = vadd.f32 0.0, %v2791
        %2793 = vmatmul.f32.gmra.mxu0 %v1238
        %v2794 = vpop.f32.mrf.mxu0
        %v2795 = vadd.f32 0.0, %v2794
        %2796 = vmatmul.f32.gmra.mxu0 %v1241
        %v2797 = vpop.f32.mrf.mxu0
        %v2798 = vadd.f32 0.0, %v2797
        %2799 = vmatmul.f32.gmra.mxu0 %v1244
        %v2800 = vpop.f32.mrf.mxu0
        %v2801 = vadd.f32 0.0, %v2800
        %2802 = vmatmul.f32.gmra.mxu0 %v1247
        %v2803 = vpop.f32.mrf.mxu0
        %v2804 = vadd.f32 0.0, %v2803
        %2805 = vmatmul.f32.gmra.mxu0 %v1250
        %v2806 = vpop.f32.mrf.mxu0
        %v2807 = vadd.f32 0.0, %v2806
        %2808 = vmatmul.f32.gmra.mxu0 %v1253
        %v2809 = vpop.f32.mrf.mxu0
        %v2810 = vadd.f32 0.0, %v2809
        %2811 = vmatmul.f32.gmra.mxu0 %v1256
        %v2812 = vpop.f32.mrf.mxu0
        %v2813 = vadd.f32 0.0, %v2812
        %2814 = vmatmul.f32.gmra.mxu0 %v1259
        %v2815 = vpop.f32.mrf.mxu0
        %v2816 = vadd.f32 0.0, %v2815
        %2817 = vmatmul.f32.gmra.mxu0 %v1262
        %v2818 = vpop.f32.mrf.mxu0
        %v2819 = vadd.f32 0.0, %v2818
        %2820 = vmatmul.f32.gmra.mxu0 %v1265
        %v2821 = vpop.f32.mrf.mxu0
        %v2822 = vadd.f32 0.0, %v2821
        %2823 = vmatmul.f32.gmra.mxu0 %v1268
        %v2824 = vpop.f32.mrf.mxu0
        %v2825 = vadd.f32 0.0, %v2824
        %2826 = vmatmul.f32.gmra.mxu0 %v1271
        %v2827 = vpop.f32.mrf.mxu0
        %v2828 = vadd.f32 0.0, %v2827
        %2829 = vmatmul.f32.gmra.mxu0 %v1274
        %v2830 = vpop.f32.mrf.mxu0
        %v2831 = vadd.f32 0.0, %v2830
        %2832 = vmatmul.f32.gmra.mxu0 %v1277
        %v2833 = vpop.f32.mrf.mxu0
        %v2834 = vadd.f32 0.0, %v2833
        %2835 = vmatmul.f32.gmra.mxu0 %v1280
        %v2836 = vpop.f32.mrf.mxu0
        %v2837 = vadd.f32 0.0, %v2836
        %2838 = vmatmul.f32.gmra.mxu0 %v1283
        %v2839 = vpop.f32.mrf.mxu0
        %v2840 = vadd.f32 0.0, %v2839
        %2841 = vmatmul.f32.gmra.mxu0 %v1286
        %v2842 = vpop.f32.mrf.mxu0
        %v2843 = vadd.f32 0.0, %v2842
        %2844 = vmatmul.f32.gmra.mxu0 %v1289
        %v2845 = vpop.f32.mrf.mxu0
        %v2846 = vadd.f32 0.0, %v2845
        %2847 = vmatmul.f32.gmra.mxu0 %v1292
        %v2848 = vpop.f32.mrf.mxu0
        %v2849 = vadd.f32 0.0, %v2848
        %2850 = vmatmul.f32.gmra.mxu0 %v1295
        %v2851 = vpop.f32.mrf.mxu0
        %v2852 = vadd.f32 0.0, %v2851
        %2853 = vmatmul.f32.gmra.mxu0 %v1298
        %v2854 = vpop.f32.mrf.mxu0
        %v2855 = vadd.f32 0.0, %v2854
        %2856 = vmatmul.f32.gmra.mxu0 %v1301
        %v2857 = vpop.f32.mrf.mxu0
        %v2858 = vadd.f32 0.0, %v2857
        %2859 = vmatmul.f32.gmra.mxu0 %v1304
        %v2860 = vpop.f32.mrf.mxu0
        %v2861 = vadd.f32 0.0, %v2860
        %2862 = vmatmul.f32.gmra.mxu0 %v1307
        %v2863 = vpop.f32.mrf.mxu0
        %v2864 = vadd.f32 0.0, %v2863
        %2865 = vmatmul.f32.gmra.mxu0 %v1310
        %v2866 = vpop.f32.mrf.mxu0
        %v2867 = vadd.f32 0.0, %v2866
        %2868 = vmatmul.f32.gmra.mxu0 %v1313
        %v2869 = vpop.f32.mrf.mxu0
        %v2870 = vadd.f32 0.0, %v2869
        %2871 = vmatmul.f32.gmra.mxu0 %v1316
        %v2872 = vpop.f32.mrf.mxu0
        %v2873 = vadd.f32 0.0, %v2872
        %2874 = vmatmul.f32.gmra.mxu0 %v1319
        %v2875 = vpop.f32.mrf.mxu0
        %v2876 = vadd.f32 0.0, %v2875
        %2877 = vmatmul.f32.gmra.mxu0 %v1322
        %v2878 = vpop.f32.mrf.mxu0
        %v2879 = vadd.f32 0.0, %v2878
        %2880 = vmatmul.f32.gmra.mxu0 %v1325
        %v2881 = vpop.f32.mrf.mxu0
        %v2882 = vadd.f32 0.0, %v2881
        %2883 = vmatmul.f32.gmra.mxu0 %v1328
        %v2884 = vpop.f32.mrf.mxu0
        %v2885 = vadd.f32 0.0, %v2884
        %2886 = vmatmul.f32.gmra.mxu0 %v1331
        %v2887 = vpop.f32.mrf.mxu0
        %v2888 = vadd.f32 0.0, %v2887
        %2889 = vmatmul.f32.gmra.mxu0 %v1334
        %v2890 = vpop.f32.mrf.mxu0
        %v2891 = vadd.f32 0.0, %v2890
        %2892 = vmatmul.f32.gmra.mxu0 %v1337
        %v2893 = vpop.f32.mrf.mxu0
        %v2894 = vadd.f32 0.0, %v2893
        %2895 = vmatmul.f32.gmra.mxu0 %v1340
        %v2896 = vpop.f32.mrf.mxu0
        %v2897 = vadd.f32 0.0, %v2896
        %2898 = vmatmul.f32.gmra.mxu0 %v1343
        %v2899 = vpop.f32.mrf.mxu0
        %v2900 = vadd.f32 0.0, %v2899
        %2901 = vmatmul.f32.gmra.mxu0 %v1346
        %v2902 = vpop.f32.mrf.mxu0
        %v2903 = vadd.f32 0.0, %v2902
        %2904 = vmatmul.f32.gmra.mxu0 %v1349
        %v2905 = vpop.f32.mrf.mxu0
        %v2906 = vadd.f32 0.0, %v2905
        %2907 = vmatmul.f32.gmra.mxu0 %v1352
        %v2908 = vpop.f32.mrf.mxu0
        %v2909 = vadd.f32 0.0, %v2908
        %2910 = vmatmul.f32.gmra.mxu0 %v1355
        %v2911 = vpop.f32.mrf.mxu0
        %v2912 = vadd.f32 0.0, %v2911
        %2913 = vmatmul.f32.gmra.mxu0 %v1358
        %v2914 = vpop.f32.mrf.mxu0
        %v2915 = vadd.f32 0.0, %v2914
        %2916 = vmatmul.f32.gmra.mxu0 %v1361
        %v2917 = vpop.f32.mrf.mxu0
        %v2918 = vadd.f32 0.0, %v2917
        %2919 = vmatmul.f32.gmra.mxu0 %v1364
        %v2920 = vpop.f32.mrf.mxu0
        %v2921 = vadd.f32 0.0, %v2920
        %2922 = vmatmul.f32.gmra.mxu0 %v1367
        %v2923 = vpop.f32.mrf.mxu0
        %v2924 = vadd.f32 0.0, %v2923
        %2925 = vmatmul.f32.gmra.mxu0 %v1370
        %v2926 = vpop.f32.mrf.mxu0
        %v2927 = vadd.f32 0.0, %v2926
        %2928 = vmatmul.f32.gmra.mxu0 %v1373
        %v2929 = vpop.f32.mrf.mxu0
        %v2930 = vadd.f32 0.0, %v2929
        %2931 = vmatmul.f32.gmra.mxu0 %v1376
        %v2932 = vpop.f32.mrf.mxu0
        %v2933 = vadd.f32 0.0, %v2932
        %2934 = vmatmul.f32.gmra.mxu0 %v1379
        %v2935 = vpop.f32.mrf.mxu0
        %v2936 = vadd.f32 0.0, %v2935
        %2937 = vmatmul.f32.gmra.mxu0 %v1382
        %v2938 = vpop.f32.mrf.mxu0
        %v2939 = vadd.f32 0.0, %v2938
        %2940 = vmatmul.f32.gmra.mxu0 %v1385
        %v2941 = vpop.f32.mrf.mxu0
        %v2942 = vadd.f32 0.0, %v2941
        %2943 = vmatmul.f32.gmra.mxu0 %v1388
        %v2944 = vpop.f32.mrf.mxu0
        %v2945 = vadd.f32 0.0, %v2944
        %2946 = vmatmul.f32.gmra.mxu0 %v1391
        %v2947 = vpop.f32.mrf.mxu0
        %v2948 = vadd.f32 0.0, %v2947
        %2949 = vmatmul.f32.gmra.mxu0 %v1394
        %v2950 = vpop.f32.mrf.mxu0
        %v2951 = vadd.f32 0.0, %v2950
        %2952 = vmatmul.f32.gmra.mxu0 %v1397
        %v2953 = vpop.f32.mrf.mxu0
        %v2954 = vadd.f32 0.0, %v2953
        %2955 = vmatmul.f32.gmra.mxu0 %v1400
        %v2956 = vpop.f32.mrf.mxu0
        %v2957 = vadd.f32 0.0, %v2956
        %2958 = vmatmul.f32.gmra.mxu0 %v1403
        %v2959 = vpop.f32.mrf.mxu0
        %v2960 = vadd.f32 0.0, %v2959
        %2961 = vmatmul.f32.gmra.mxu0 %v1406
        %v2962 = vpop.f32.mrf.mxu0
        %v2963 = vadd.f32 0.0, %v2962
        %2964 = vmatmul.f32.gmra.mxu0 %v1409
        %v2965 = vpop.f32.mrf.mxu0
        %v2966 = vadd.f32 0.0, %v2965
        %2967 = vmatmul.f32.gmra.mxu0 %v1412
        %v2968 = vpop.f32.mrf.mxu0
        %v2969 = vadd.f32 0.0, %v2968
        %2970 = vmatmul.f32.gmra.mxu0 %v1415
        %v2971 = vpop.f32.mrf.mxu0
        %v2972 = vadd.f32 0.0, %v2971
        %2973 = vmatmul.f32.gmra.mxu0 %v1418
        %v2974 = vpop.f32.mrf.mxu0
        %v2975 = vadd.f32 0.0, %v2974
        %2976 = vmatmul.f32.gmra.mxu0 %v1421
        %v2977 = vpop.f32.mrf.mxu0
        %v2978 = vadd.f32 0.0, %v2977
        %2979 = vmatmul.f32.gmra.mxu0 %v1424
        %v2980 = vpop.f32.mrf.mxu0
        %v2981 = vadd.f32 0.0, %v2980
        %2982 = vmatmul.f32.gmra.mxu0 %v1427
        %v2983 = vpop.f32.mrf.mxu0
        %v2984 = vadd.f32 0.0, %v2983
        %2985 = vmatmul.f32.gmra.mxu0 %v1430
        %v2986 = vpop.f32.mrf.mxu0
        %v2987 = vadd.f32 0.0, %v2986
        %2988 = vmatmul.f32.gmra.mxu0 %v1433
        %v2989 = vpop.f32.mrf.mxu0
        %v2990 = vadd.f32 0.0, %v2989
        %2991 = vmatmul.f32.gmra.mxu0 %v1436
        %v2992 = vpop.f32.mrf.mxu0
        %v2993 = vadd.f32 0.0, %v2992
        %2994 = vmatmul.f32.gmra.mxu0 %v1439
        %v2995 = vpop.f32.mrf.mxu0
        %v2996 = vadd.f32 0.0, %v2995
        %2997 = vmatmul.f32.gmra.mxu0 %v1442
        %v2998 = vpop.f32.mrf.mxu0
        %v2999 = vadd.f32 0.0, %v2998
        %3000 = vmatmul.f32.gmra.mxu0 %v1445
        %v3001 = vpop.f32.mrf.mxu0
        %v3002 = vadd.f32 0.0, %v3001
        %3003 = vmatmul.f32.gmra.mxu0 %v1448
        %v3004 = vpop.f32.mrf.mxu0
        %v3005 = vadd.f32 0.0, %v3004
        %3006 = vmatmul.f32.gmra.mxu0 %v1451
        %v3007 = vpop.f32.mrf.mxu0
        %v3008 = vadd.f32 0.0, %v3007
        %3009 = vmatmul.f32.gmra.mxu0 %v1454
        %v3010 = vpop.f32.mrf.mxu0
        %v3011 = vadd.f32 0.0, %v3010
        %3012 = vmatmul.f32.gmra.mxu0 %v1457
        %v3013 = vpop.f32.mrf.mxu0
        %v3014 = vadd.f32 0.0, %v3013
        %3015 = vmatmul.f32.gmra.mxu0 %v1460
        %v3016 = vpop.f32.mrf.mxu0
        %v3017 = vadd.f32 0.0, %v3016
        %3018 = vmatmul.f32.gmra.mxu0 %v1463
        %v3019 = vpop.f32.mrf.mxu0
        %v3020 = vadd.f32 0.0, %v3019
        %3021 = vmatmul.f32.gmra.mxu0 %v1466
        %v3022 = vpop.f32.mrf.mxu0
        %v3023 = vadd.f32 0.0, %v3022
        %3024 = vmatmul.f32.gmra.mxu0 %v1469
        %v3025 = vpop.f32.mrf.mxu0
        %v3026 = vadd.f32 0.0, %v3025
        %3027 = vmatmul.f32.gmra.mxu0 %v1472
        %v3028 = vpop.f32.mrf.mxu0
        %v3029 = vadd.f32 0.0, %v3028
        %3030 = vmatmul.f32.gmra.mxu0 %v1475
        %v3031 = vpop.f32.mrf.mxu0
        %v3032 = vadd.f32 0.0, %v3031
        %3033 = vmatmul.f32.gmra.mxu0 %v1478
        %v3034 = vpop.f32.mrf.mxu0
        %v3035 = vadd.f32 0.0, %v3034
        %3036 = vmatmul.f32.gmra.mxu0 %v1481
        %v3037 = vpop.f32.mrf.mxu0
        %v3038 = vadd.f32 0.0, %v3037
        %3039 = vmatmul.f32.gmra.mxu0 %v1484
        %v3040 = vpop.f32.mrf.mxu0
        %v3041 = vadd.f32 0.0, %v3040
        %3042 = vmatmul.f32.gmra.mxu0 %v1487
        %v3043 = vpop.f32.mrf.mxu0
        %v3044 = vadd.f32 0.0, %v3043
        %3045 = vmatmul.f32.gmra.mxu0 %v1490
        %v3046 = vpop.f32.mrf.mxu0
        %v3047 = vadd.f32 0.0, %v3046
        %3048 = vmatmul.f32.gmra.mxu0 %v1493
        %v3049 = vpop.f32.mrf.mxu0
        %v3050 = vadd.f32 0.0, %v3049
        %3051 = vmatmul.f32.gmra.mxu0 %v1496
        %v3052 = vpop.f32.mrf.mxu0
        %v3053 = vadd.f32 0.0, %v3052
        %3054 = vmatmul.f32.gmra.mxu0 %v1499
        %v3055 = vpop.f32.mrf.mxu0
        %v3056 = vadd.f32 0.0, %v3055
        %3057 = vmatmul.f32.gmra.mxu0 %v1502
        %v3058 = vpop.f32.mrf.mxu0
        %v3059 = vadd.f32 0.0, %v3058
        %3060 = vmatmul.f32.gmra.mxu0 %v1505
        %v3061 = vpop.f32.mrf.mxu0
        %v3062 = vadd.f32 0.0, %v3061
        %3063 = vmatmul.f32.gmra.mxu0 %v1508
        %v3064 = vpop.f32.mrf.mxu0
        %v3065 = vadd.f32 0.0, %v3064
        %3066 = vmatmul.f32.gmra.mxu0 %v1511
        %v3067 = vpop.f32.mrf.mxu0
        %v3068 = vadd.f32 0.0, %v3067
        %3069 = vmatmul.f32.gmra.mxu0 %v1514
        %v3070 = vpop.f32.mrf.mxu0
        %v3071 = vadd.f32 0.0, %v3070
        %3072 = vmatmul.f32.gmra.mxu0 %v1517
        %v3073 = vpop.f32.mrf.mxu0
        %v3074 = vadd.f32 0.0, %v3073
        %3075 = vmatmul.f32.gmra.mxu0 %v1520
        %v3076 = vpop.f32.mrf.mxu0
        %v3077 = vadd.f32 0.0, %v3076
        %3078 = vmatmul.f32.gmra.mxu0 %v1523
        %v3079 = vpop.f32.mrf.mxu0
        %v3080 = vadd.f32 0.0, %v3079
        %3081 = vmatmul.f32.gmra.mxu0 %v1526
        %v3082 = vpop.f32.mrf.mxu0
        %v3083 = vadd.f32 0.0, %v3082
        %3084 = vmatmul.f32.gmra.mxu0 %v1529
        %v3085 = vpop.f32.mrf.mxu0
        %v3086 = vadd.f32 0.0, %v3085
        %3087 = vmatmul.f32.gmra.mxu0 %v1532
        %v3088 = vpop.f32.mrf.mxu0
        %v3089 = vadd.f32 0.0, %v3088
        %3090 = vmatmul.f32.gmra.mxu0 %v1535
        %v3091 = vpop.f32.mrf.mxu0
        %v3092 = vadd.f32 0.0, %v3091
        %3093 = vmatmul.f32.gmra.mxu0 %v1538
        %v3094 = vpop.f32.mrf.mxu0
        %v3095 = vadd.f32 0.0, %v3094
        %3096 = vmatmul.f32.gmra.mxu0 %v1541
        %v3097 = vpop.f32.mrf.mxu0
        %v3098 = vadd.f32 0.0, %v3097
        %3099 = vmatmul.f32.gmra.mxu0 %v1544
        %v3100 = vpop.f32.mrf.mxu0
        %v3101 = vadd.f32 0.0, %v3100
        %3102 = vmatmul.f32.gmra.mxu0 %v1547
        %v3103 = vpop.f32.mrf.mxu0
        %v3104 = vadd.f32 0.0, %v3103
        %3105 = vmatmul.f32.gmra.mxu0 %v1550
        %v3106 = vpop.f32.mrf.mxu0
        %v3107 = vadd.f32 0.0, %v3106
        %3108 = vmatmul.f32.gmra.mxu0 %v1553
        %v3109 = vpop.f32.mrf.mxu0
        %v3110 = vadd.f32 0.0, %v3109
        %3111 = vmatmul.f32.gmra.mxu0 %v1556
        %v3112 = vpop.f32.mrf.mxu0
        %v3113 = vadd.f32 0.0, %v3112
        %3114 = vmatmul.f32.gmra.mxu0 %v1559
        %v3115 = vpop.f32.mrf.mxu0
        %v3116 = vadd.f32 0.0, %v3115
        %3117 = vmatmul.f32.gmra.mxu0 %v1562
        %v3118 = vpop.f32.mrf.mxu0
        %v3119 = vadd.f32 0.0, %v3118
        %3120 = vmatmul.f32.gmra.mxu0 %v1565
        %v3121 = vpop.f32.mrf.mxu0
        %v3122 = vadd.f32 0.0, %v3121
        %3123 = vmatmul.f32.gmra.mxu0 %v1568
        %v3124 = vpop.f32.mrf.mxu0
        %v3125 = vadd.f32 0.0, %v3124
        %3126 = vmatmul.f32.gmra.mxu0 %v1571
        %v3127 = vpop.f32.mrf.mxu0
        %v3128 = vadd.f32 0.0, %v3127
        %3129 = vmatmul.f32.gmra.mxu0 %v1574
        %v3130 = vpop.f32.mrf.mxu0
        %v3131 = vadd.f32 0.0, %v3130
        %3132 = vmatmul.f32.gmra.mxu0 %v1577
        %v3133 = vpop.f32.mrf.mxu0
        %v3134 = vadd.f32 0.0, %v3133
        %3135 = vmatmul.f32.gmra.mxu0 %v1580
        %v3136 = vpop.f32.mrf.mxu0
        %v3137 = vadd.f32 0.0, %v3136
        %3138 = vmatmul.f32.gmra.mxu0 %v1583
        %v3139 = vpop.f32.mrf.mxu0
        %v3140 = vadd.f32 0.0, %v3139
        %3141 = vmatmul.f32.gmra.mxu0 %v1586
        %v3142 = vpop.f32.mrf.mxu0
        %v3143 = vadd.f32 0.0, %v3142
        %3144 = vmatmul.f32.gmra.mxu0 %v1589
        %v3145 = vpop.f32.mrf.mxu0
        %v3146 = vadd.f32 0.0, %v3145
        %3147 = vmatmul.f32.gmra.mxu0 %v1592
        %v3148 = vpop.f32.mrf.mxu0
        %v3149 = vadd.f32 0.0, %v3148
        %3150 = vmatmul.f32.gmra.mxu0 %v1595
        %v3151 = vpop.f32.mrf.mxu0
        %v3152 = vadd.f32 0.0, %v3151
        %3153 = vmatmul.f32.gmra.mxu0 %v1598
        %v3154 = vpop.f32.mrf.mxu0
        %v3155 = vadd.f32 0.0, %v3154
        %3156 = vmatmul.f32.gmra.mxu0 %v1601
        %v3157 = vpop.f32.mrf.mxu0
        %v3158 = vadd.f32 0.0, %v3157
        %3159 = vmatmul.f32.gmra.mxu0 %v1604
        %v3160 = vpop.f32.mrf.mxu0
        %v3161 = vadd.f32 0.0, %v3160
        %3162 = vmatmul.f32.gmra.mxu0 %v1607
        %v3163 = vpop.f32.mrf.mxu0
        %v3164 = vadd.f32 0.0, %v3163
        %3165 = vmatmul.f32.gmra.mxu0 %v1610
        %v3166 = vpop.f32.mrf.mxu0
        %v3167 = vadd.f32 0.0, %v3166
        %3168 = vmatmul.f32.gmra.mxu0 %v1613
        %v3169 = vpop.f32.mrf.mxu0
        %v3170 = vadd.f32 0.0, %v3169
        %3171 = vmatmul.f32.gmra.mxu0 %v1616
        %v3172 = vpop.f32.mrf.mxu0
        %v3173 = vadd.f32 0.0, %v3172
        %3174 = vmatmul.f32.gmra.mxu0 %v1619
        %v3175 = vpop.f32.mrf.mxu0
        %v3176 = vadd.f32 0.0, %v3175
        %3177 = vmatmul.f32.gmra.mxu0 %v1622
        %v3178 = vpop.f32.mrf.mxu0
        %v3179 = vadd.f32 0.0, %v3178
        %3180 = vmatmul.f32.gmra.mxu0 %v1625
        %v3181 = vpop.f32.mrf.mxu0
        %v3182 = vadd.f32 0.0, %v3181
        %3183 = vmatmul.f32.gmra.mxu0 %v1628
        %v3184 = vpop.f32.mrf.mxu0
        %v3185 = vadd.f32 0.0, %v3184
        %3186 = vmatmul.f32.gmra.mxu0 %v1631
        %v3187 = vpop.f32.mrf.mxu0
        %v3188 = vadd.f32 0.0, %v3187
        %3189 = vmatmul.f32.gmra.mxu0 %v1634
        %v3190 = vpop.f32.mrf.mxu0
        %v3191 = vadd.f32 0.0, %v3190
        %3192 = vmatmul.f32.gmra.mxu0 %v1637
        %v3193 = vpop.f32.mrf.mxu0
        %v3194 = vadd.f32 0.0, %v3193
        %3195 = vmatmul.f32.gmra.mxu0 %v1640
        %v3196 = vpop.f32.mrf.mxu0
        %v3197 = vadd.f32 0.0, %v3196
        %3198 = vmatmul.f32.gmra.mxu0 %v1643
        %v3199 = vpop.f32.mrf.mxu0
        %v3200 = vadd.f32 0.0, %v3199
        %3201 = vmatmul.f32.gmra.mxu0 %v1646
        %v3202 = vpop.f32.mrf.mxu0
        %v3203 = vadd.f32 0.0, %v3202
        %3204 = vmatmul.f32.gmra.mxu0 %v1649
        %v3205 = vpop.f32.mrf.mxu0
        %v3206 = vadd.f32 0.0, %v3205
        %3207 = vmatmul.f32.gmra.mxu0 %v1652
        %v3208 = vpop.f32.mrf.mxu0
        %v3209 = vadd.f32 0.0, %v3208
        %3210 = vmatmul.f32.gmra.mxu0 %v1655
        %v3211 = vpop.f32.mrf.mxu0
        %v3212 = vadd.f32 0.0, %v3211
        %3213 = vmatmul.f32.gmra.mxu0 %v1658
        %v3214 = vpop.f32.mrf.mxu0
        %v3215 = vadd.f32 0.0, %v3214
        %3216 = vmatmul.f32.gmra.mxu0 %v1661
        %v3217 = vpop.f32.mrf.mxu0
        %v3218 = vadd.f32 0.0, %v3217
        %3219 = vmatmul.f32.gmra.mxu0 %v1664
        %v3220 = vpop.f32.mrf.mxu0
        %v3221 = vadd.f32 0.0, %v3220
        %3222 = vmatmul.f32.gmra.mxu0 %v1667
        %v3223 = vpop.f32.mrf.mxu0
        %v3224 = vadd.f32 0.0, %v3223
        %3225 = vmatmul.f32.gmra.mxu0 %v1670
        %v3226 = vpop.f32.mrf.mxu0
        %v3227 = vadd.f32 0.0, %v3226
        %3228 = vmatmul.f32.gmra.mxu0 %v1673
        %v3229 = vpop.f32.mrf.mxu0
        %v3230 = vadd.f32 0.0, %v3229
        %3231 = vmatmul.f32.gmra.mxu0 %v1676
        %v3232 = vpop.f32.mrf.mxu0
        %v3233 = vadd.f32 0.0, %v3232
        %3234 = vmatmul.f32.gmra.mxu0 %v1679
        %v3235 = vpop.f32.mrf.mxu0
        %v3236 = vadd.f32 0.0, %v3235
        %3237 = vmatmul.f32.gmra.mxu0 %v1682
        %v3238 = vpop.f32.mrf.mxu0
        %v3239 = vadd.f32 0.0, %v3238
        %3240 = vmatmul.f32.gmra.mxu0 %v1685
        %v3241 = vpop.f32.mrf.mxu0
        %v3242 = vadd.f32 0.0, %v3241
        %3243 = vmatmul.f32.gmra.mxu0 %v1688
        %v3244 = vpop.f32.mrf.mxu0
        %v3245 = vadd.f32 0.0, %v3244
        %3246 = vmatmul.f32.gmra.mxu0 %v1691
        %v3247 = vpop.f32.mrf.mxu0
        %v3248 = vadd.f32 0.0, %v3247
        %3249 = vmatmul.f32.gmra.mxu0 %v1694
        %v3250 = vpop.f32.mrf.mxu0
        %v3251 = vadd.f32 0.0, %v3250
        %3252 = vmatmul.f32.gmra.mxu0 %v1697
        %v3253 = vpop.f32.mrf.mxu0
        %v3254 = vadd.f32 0.0, %v3253
        %3255 = vmatmul.f32.gmra.mxu0 %v1700
        %v3256 = vpop.f32.mrf.mxu0
        %v3257 = vadd.f32 0.0, %v3256
        %3258 = vmatmul.f32.gmra.mxu0 %v1703
        %v3259 = vpop.f32.mrf.mxu0
        %v3260 = vadd.f32 0.0, %v3259
        %3261 = vmatmul.f32.gmra.mxu0 %v1706
        %v3262 = vpop.f32.mrf.mxu0
        %v3263 = vadd.f32 0.0, %v3262
        %3264 = vmatmul.f32.gmra.mxu0 %v1709
        %v3265 = vpop.f32.mrf.mxu0
        %v3266 = vadd.f32 0.0, %v3265
        %3267 = vmatmul.f32.gmra.mxu0 %v1712
        %v3268 = vpop.f32.mrf.mxu0
        %v3269 = vadd.f32 0.0, %v3268
        %3270 = vmatmul.f32.gmra.mxu0 %v1715
        %v3271 = vpop.f32.mrf.mxu0
        %v3272 = vadd.f32 0.0, %v3271
        %3273 = vmatmul.f32.gmra.mxu0 %v1718
        %v3274 = vpop.f32.mrf.mxu0
        %v3275 = vadd.f32 0.0, %v3274
        %3276 = vmatmul.f32.gmra.mxu0 %v1721
        %v3277 = vpop.f32.mrf.mxu0
        %v3278 = vadd.f32 0.0, %v3277
        %3279 = vmatmul.f32.gmra.mxu0 %v1724
        %v3280 = vpop.f32.mrf.mxu0
        %v3281 = vadd.f32 0.0, %v3280
        %3282 = vmatmul.f32.gmra.mxu0 %v1727
        %v3283 = vpop.f32.mrf.mxu0
        %v3284 = vadd.f32 0.0, %v3283
        %3285 = vmatmul.f32.gmra.mxu0 %v1730
        %v3286 = vpop.f32.mrf.mxu0
        %v3287 = vadd.f32 0.0, %v3286
        %3288 = vmatmul.f32.gmra.mxu0 %v1733
        %v3289 = vpop.f32.mrf.mxu0
        %v3290 = vadd.f32 0.0, %v3289
        %3291 = vmatmul.f32.gmra.mxu0 %v1736
        %v3292 = vpop.f32.mrf.mxu0
        %v3293 = vadd.f32 0.0, %v3292
        %3294 = vmatmul.f32.gmra.mxu0 %v1739
        %v3295 = vpop.f32.mrf.mxu0
        %v3296 = vadd.f32 0.0, %v3295
        %3297 = vmatmul.f32.gmra.mxu0 %v1742
        %v3298 = vpop.f32.mrf.mxu0
        %v3299 = vadd.f32 0.0, %v3298
        %3300 = vmatmul.f32.gmra.mxu0 %v1745
        %v3301 = vpop.f32.mrf.mxu0
        %v3302 = vadd.f32 0.0, %v3301
        %3303 = vmatmul.f32.gmra.mxu0 %v1748
        %v3304 = vpop.f32.mrf.mxu0
        %v3305 = vadd.f32 0.0, %v3304
        %3306 = vmatmul.f32.gmra.mxu0 %v1751
        %v3307 = vpop.f32.mrf.mxu0
        %v3308 = vadd.f32 0.0, %v3307
        %3309 = vmatmul.f32.gmra.mxu0 %v1754
        %v3310 = vpop.f32.mrf.mxu0
        %v3311 = vadd.f32 0.0, %v3310
        %3312 = vmatmul.f32.gmra.mxu0 %v1757
        %v3313 = vpop.f32.mrf.mxu0
        %v3314 = vadd.f32 0.0, %v3313
        %3315 = vmatmul.f32.gmra.mxu0 %v1760
        %v3316 = vpop.f32.mrf.mxu0
        %v3317 = vadd.f32 0.0, %v3316
        %3318 = vmatmul.f32.gmra.mxu0 %v1763
        %v3319 = vpop.f32.mrf.mxu0
        %v3320 = vadd.f32 0.0, %v3319
        %3321 = vmatmul.f32.gmra.mxu0 %v1766
        %v3322 = vpop.f32.mrf.mxu0
        %v3323 = vadd.f32 0.0, %v3322
        %3324 = vmatmul.f32.gmra.mxu0 %v1769
        %v3325 = vpop.f32.mrf.mxu0
        %v3326 = vadd.f32 0.0, %v3325
        %3327 = vmatmul.f32.gmra.mxu0 %v1772
        %v3328 = vpop.f32.mrf.mxu0
        %v3329 = vadd.f32 0.0, %v3328
        %3330 = vmatmul.f32.gmra.mxu0 %v1775
        %v3331 = vpop.f32.mrf.mxu0
        %v3332 = vadd.f32 0.0, %v3331
        %3333 = vmatmul.f32.gmra.mxu0 %v1778
        %v3334 = vpop.f32.mrf.mxu0
        %v3335 = vadd.f32 0.0, %v3334
        %3336 = vmatmul.f32.gmra.mxu0 %v1781
        %v3337 = vpop.f32.mrf.mxu0
        %v3338 = vadd.f32 0.0, %v3337
        %3339 = vmatmul.f32.gmra.mxu0 %v1784
        %v3340 = vpop.f32.mrf.mxu0
        %v3341 = vadd.f32 0.0, %v3340
        %3342 = vmatmul.f32.gmra.mxu0 %v1787
        %v3343 = vpop.f32.mrf.mxu0
        %v3344 = vadd.f32 0.0, %v3343
        %3345 = vmatmul.f32.gmra.mxu0 %v1790
        %v3346 = vpop.f32.mrf.mxu0
        %v3347 = vadd.f32 0.0, %v3346
        %3348 = vmatmul.f32.gmra.mxu0 %v1793
        %v3349 = vpop.f32.mrf.mxu0
        %v3350 = vadd.f32 0.0, %v3349
        %3351 = vmatmul.f32.gmra.mxu0 %v1796
        %v3352 = vpop.f32.mrf.mxu0
        %v3353 = vadd.f32 0.0, %v3352
        %3354 = vmatmul.f32.gmra.mxu0 %v1799
        %v3355 = vpop.f32.mrf.mxu0
        %v3356 = vadd.f32 0.0, %v3355
        %3357 = vmatmul.f32.gmra.mxu0 %v1802
        %v3358 = vpop.f32.mrf.mxu0
        %v3359 = vadd.f32 0.0, %v3358
        %3360 = vmatmul.f32.gmra.mxu0 %v1805
        %v3361 = vpop.f32.mrf.mxu0
        %v3362 = vadd.f32 0.0, %v3361
        %3363 = vmatmul.f32.gmra.mxu0 %v1808
        %v3364 = vpop.f32.mrf.mxu0
        %v3365 = vadd.f32 0.0, %v3364
        %3366 = vmatmul.f32.gmra.mxu0 %v1811
        %v3367 = vpop.f32.mrf.mxu0
        %v3368 = vadd.f32 0.0, %v3367
        %3369 = vmatmul.f32.gmra.mxu0 %v1814
        %v3370 = vpop.f32.mrf.mxu0
        %v3371 = vadd.f32 0.0, %v3370
        %3372 = vmatmul.f32.gmra.mxu0 %v1817
        %v3373 = vpop.f32.mrf.mxu0
        %v3374 = vadd.f32 0.0, %v3373
        %3375 = vmatmul.f32.gmra.mxu0 %v1820
        %v3376 = vpop.f32.mrf.mxu0
        %v3377 = vadd.f32 0.0, %v3376
        %3378 = vmatmul.f32.gmra.mxu0 %v1823
        %v3379 = vpop.f32.mrf.mxu0
        %v3380 = vadd.f32 0.0, %v3379
        %3381 = vmatmul.f32.gmra.mxu0 %v1826
        %v3382 = vpop.f32.mrf.mxu0
        %v3383 = vadd.f32 0.0, %v3382
        %3384 = vmatmul.f32.gmra.mxu0 %v1829
        %v3385 = vpop.f32.mrf.mxu0
        %v3386 = vadd.f32 0.0, %v3385
        %3387 = vmatmul.f32.gmra.mxu0 %v1832
        %v3388 = vpop.f32.mrf.mxu0
        %v3389 = vadd.f32 0.0, %v3388
        %3390 = vmatmul.f32.gmra.mxu0 %v1835
        %v3391 = vpop.f32.mrf.mxu0
        %v3392 = vadd.f32 0.0, %v3391
        %3393 = vmatmul.f32.gmra.mxu0 %v1838
        %v3394 = vpop.f32.mrf.mxu0
        %v3395 = vadd.f32 0.0, %v3394
        %3396 = vmatmul.f32.gmra.mxu0 %v1841
        %v3397 = vpop.f32.mrf.mxu0
        %v3398 = vadd.f32 0.0, %v3397
        %3399 = vmatmul.f32.gmra.mxu0 %v1844
        %v3400 = vpop.f32.mrf.mxu0
        %v3401 = vadd.f32 0.0, %v3400
        %3402 = vmatmul.f32.gmra.mxu0 %v1847
        %v3403 = vpop.f32.mrf.mxu0
        %v3404 = vadd.f32 0.0, %v3403
        %3405 = vmatmul.f32.gmra.mxu0 %v1850
        %v3406 = vpop.f32.mrf.mxu0
        %v3407 = vadd.f32 0.0, %v3406
        %3408 = vmatmul.f32.gmra.mxu0 %v1853
        %v3409 = vpop.f32.mrf.mxu0
        %v3410 = vadd.f32 0.0, %v3409
        %3411 = vmatmul.f32.gmra.mxu0 %v1856
        %v3412 = vpop.f32.mrf.mxu0
        %v3413 = vadd.f32 0.0, %v3412
        %3414 = vmatmul.f32.gmra.mxu0 %v1859
        %v3415 = vpop.f32.mrf.mxu0
        %v3416 = vadd.f32 0.0, %v3415
        %3417 = vmatmul.f32.gmra.mxu0 %v1862
        %v3418 = vpop.f32.mrf.mxu0
        %v3419 = vadd.f32 0.0, %v3418
        %3420 = vmatmul.f32.gmra.mxu0 %v1865
        %v3421 = vpop.f32.mrf.mxu0
        %v3422 = vadd.f32 0.0, %v3421
        %3423 = vmatmul.f32.gmra.mxu0 %v1868
        %v3424 = vpop.f32.mrf.mxu0
        %v3425 = vadd.f32 0.0, %v3424
        %3426 = vmatmul.f32.gmra.mxu0 %v1871
        %v3427 = vpop.f32.mrf.mxu0
        %v3428 = vadd.f32 0.0, %v3427
        %3429 = vmatmul.f32.gmra.mxu0 %v1874
        %v3430 = vpop.f32.mrf.mxu0
        %v3431 = vadd.f32 0.0, %v3430
        %3432 = vmatmul.f32.gmra.mxu0 %v1877
        %v3433 = vpop.f32.mrf.mxu0
        %v3434 = vadd.f32 0.0, %v3433
        %3435 = vmatmul.f32.gmra.mxu0 %v1880
        %v3436 = vpop.f32.mrf.mxu0
        %v3437 = vadd.f32 0.0, %v3436
        %3438 = vmatmul.f32.gmra.mxu0 %v1883
        %v3439 = vpop.f32.mrf.mxu0
        %v3440 = vadd.f32 0.0, %v3439
        %3441 = vmatmul.f32.gmra.mxu0 %v1886
        %v3442 = vpop.f32.mrf.mxu0
        %v3443 = vadd.f32 0.0, %v3442
        %3444 = vmatmul.f32.gmra.mxu0 %v1889
        %v3445 = vpop.f32.mrf.mxu0
        %v3446 = vadd.f32 0.0, %v3445
        %3447 = vmatmul.f32.gmra.mxu0 %v1892
        %v3448 = vpop.f32.mrf.mxu0
        %v3449 = vadd.f32 0.0, %v3448
        %3450 = vmatmul.f32.gmra.mxu0 %v1895
        %v3451 = vpop.f32.mrf.mxu0
        %v3452 = vadd.f32 0.0, %v3451
        %3453 = vmatmul.f32.gmra.mxu0 %v1898
        %v3454 = vpop.f32.mrf.mxu0
        %v3455 = vadd.f32 0.0, %v3454
        %3456 = vmatmul.f32.gmra.mxu0 %v1901
        %v3457 = vpop.f32.mrf.mxu0
        %v3458 = vadd.f32 0.0, %v3457
        %3459 = vmatmul.f32.gmra.mxu0 %v1904
        %v3460 = vpop.f32.mrf.mxu0
        %v3461 = vadd.f32 0.0, %v3460
        %3462 = vmatmul.f32.gmra.mxu0 %v1907
        %v3463 = vpop.f32.mrf.mxu0
        %v3464 = vadd.f32 0.0, %v3463
        %3465 = vmatmul.f32.gmra.mxu0 %v1910
        %v3466 = vpop.f32.mrf.mxu0
        %v3467 = vadd.f32 0.0, %v3466
        %3468 = vmatmul.f32.gmra.mxu0 %v1913
        %v3469 = vpop.f32.mrf.mxu0
        %v3470 = vadd.f32 0.0, %v3469
        %3471 = vmatmul.f32.gmra.mxu0 %v1916
        %v3472 = vpop.f32.mrf.mxu0
        %v3473 = vadd.f32 0.0, %v3472
        %3474 = vmatmul.f32.gmra.mxu0 %v1919
        %v3475 = vpop.f32.mrf.mxu0
        %v3476 = vadd.f32 0.0, %v3475
        %3477 = vmatmul.f32.gmra.mxu0 %v1922
        %v3478 = vpop.f32.mrf.mxu0
        %v3479 = vadd.f32 0.0, %v3478
        %3480 = vmatmul.f32.gmra.mxu0 %v1925
        %v3481 = vpop.f32.mrf.mxu0
        %v3482 = vadd.f32 0.0, %v3481
        %3483 = vmatmul.f32.gmra.mxu0 %v1928
        %v3484 = vpop.f32.mrf.mxu0
        %v3485 = vadd.f32 0.0, %v3484
        %3486 = vmatmul.f32.gmra.mxu0 %v1931
        %v3487 = vpop.f32.mrf.mxu0
        %v3488 = vadd.f32 0.0, %v3487
        %3489 = vmatmul.f32.gmra.mxu0 %v1934
        %v3490 = vpop.f32.mrf.mxu0
        %v3491 = vadd.f32 0.0, %v3490
        %3492 = vmatmul.f32.gmra.mxu0 %v1937
        %v3493 = vpop.f32.mrf.mxu0
        %v3494 = vadd.f32 0.0, %v3493
        %3495 = vmatmul.f32.gmra.mxu0 %v1940
        %v3496 = vpop.f32.mrf.mxu0
        %v3497 = vadd.f32 0.0, %v3496
        %3498 = vmatmul.f32.gmra.mxu0 %v1943
        %v3499 = vpop.f32.mrf.mxu0
        %v3500 = vadd.f32 0.0, %v3499
        %3501 = vmatmul.f32.gmra.mxu0 %v1946
        %v3502 = vpop.f32.mrf.mxu0
        %v3503 = vadd.f32 0.0, %v3502
        %3504 = vmatmul.f32.gmra.mxu0 %v1949
        %v3505 = vpop.f32.mrf.mxu0
        %v3506 = vadd.f32 0.0, %v3505
        %3507 = vmatmul.f32.gmra.mxu0 %v1952
        %v3508 = vpop.f32.mrf.mxu0
        %v3509 = vadd.f32 0.0, %v3508
        %3510 = vmatmul.f32.gmra.mxu0 %v1955
        %v3511 = vpop.f32.mrf.mxu0
        %v3512 = vadd.f32 0.0, %v3511
        %3513 = vmatmul.f32.gmra.mxu0 %v1958
        %v3514 = vpop.f32.mrf.mxu0
        %v3515 = vadd.f32 0.0, %v3514
        %3516 = vmatmul.f32.gmra.mxu0 %v1961
        %v3517 = vpop.f32.mrf.mxu0
        %v3518 = vadd.f32 0.0, %v3517
        %3519 = vmatmul.f32.gmra.mxu0 %v1964
        %v3520 = vpop.f32.mrf.mxu0
        %v3521 = vadd.f32 0.0, %v3520
        %3522 = vmatmul.f32.gmra.mxu0 %v1967
        %v3523 = vpop.f32.mrf.mxu0
        %v3524 = vadd.f32 0.0, %v3523
        %3525 = vmatmul.f32.gmra.mxu0 %v1970
        %v3526 = vpop.f32.mrf.mxu0
        %v3527 = vadd.f32 0.0, %v3526
        %3528 = vmatmul.f32.gmra.mxu0 %v1973
        %v3529 = vpop.f32.mrf.mxu0
        %v3530 = vadd.f32 0.0, %v3529
        %3531 = vmatmul.f32.gmra.mxu0 %v1976
        %v3532 = vpop.f32.mrf.mxu0
        %v3533 = vadd.f32 0.0, %v3532
        %3534 = vmatmul.f32.gmra.mxu0 %v1979
        %v3535 = vpop.f32.mrf.mxu0
        %v3536 = vadd.f32 0.0, %v3535
        %3537 = vmatmul.f32.gmra.mxu0 %v1982
        %v3538 = vpop.f32.mrf.mxu0
        %v3539 = vadd.f32 0.0, %v3538
        %3540 = vmatmul.f32.gmra.mxu0 %v1985
        %v3541 = vpop.f32.mrf.mxu0
        %v3542 = vadd.f32 0.0, %v3541
        %3543 = vmatmul.f32.gmra.mxu0 %v1988
        %v3544 = vpop.f32.mrf.mxu0
        %v3545 = vadd.f32 0.0, %v3544
        %3546 = vmatmul.f32.gmra.mxu0 %v1991
        %v3547 = vpop.f32.mrf.mxu0
        %v3548 = vadd.f32 0.0, %v3547
        %3549 = vmatmul.f32.gmra.mxu0 %v1994
        %v3550 = vpop.f32.mrf.mxu0
        %v3551 = vadd.f32 0.0, %v3550
        %3552 = vmatmul.f32.gmra.mxu0 %v1997
        %v3553 = vpop.f32.mrf.mxu0
        %v3554 = vadd.f32 0.0, %v3553
        %3555 = vmatmul.f32.gmra.mxu0 %v2000
        %v3556 = vpop.f32.mrf.mxu0
        %v3557 = vadd.f32 0.0, %v3556
        %3558 = vmatmul.f32.gmra.mxu0 %v2003
        %v3559 = vpop.f32.mrf.mxu0
        %v3560 = vadd.f32 0.0, %v3559
        %3561 = vmatmul.f32.gmra.mxu0 %v2006
        %v3562 = vpop.f32.mrf.mxu0
        %v3563 = vadd.f32 0.0, %v3562
        %3564 = vmatmul.f32.gmra.mxu0 %v2009
        %v3565 = vpop.f32.mrf.mxu0
        %v3566 = vadd.f32 0.0, %v3565
        %3567 = vmatmul.f32.gmra.mxu0 %v2012
        %v3568 = vpop.f32.mrf.mxu0
        %v3569 = vadd.f32 0.0, %v3568
        %3570 = vmatmul.f32.gmra.mxu0 %v2015
        %v3571 = vpop.f32.mrf.mxu0
        %v3572 = vadd.f32 0.0, %v3571
        %3573 = vmatmul.f32.gmra.mxu0 %v2018
        %v3574 = vpop.f32.mrf.mxu0
        %v3575 = vadd.f32 0.0, %v3574
        %3576 = vmatmul.f32.gmra.mxu0 %v2021
        %v3577 = vpop.f32.mrf.mxu0
        %v3578 = vadd.f32 0.0, %v3577
        %3579 = vmatmul.f32.gmra.mxu0 %v2024
        %v3580 = vpop.f32.mrf.mxu0
        %v3581 = vadd.f32 0.0, %v3580
        %3582 = vmatmul.f32.gmra.mxu0 %v2027
        %v3583 = vpop.f32.mrf.mxu0
        %v3584 = vadd.f32 0.0, %v3583
        %3585 = vmatmul.f32.gmra.mxu0 %v2030
        %v3586 = vpop.f32.mrf.mxu0
        %v3587 = vadd.f32 0.0, %v3586
        %3588 = vmatmul.f32.gmra.mxu0 %v2033
        %v3589 = vpop.f32.mrf.mxu0
        %v3590 = vadd.f32 0.0, %v3589
        %3591 = vmatmul.f32.gmra.mxu0 %v2036
        %v3592 = vpop.f32.mrf.mxu0
        %v3593 = vadd.f32 0.0, %v3592
        %3594 = vmatmul.f32.gmra.mxu0 %v2039
        %v3595 = vpop.f32.mrf.mxu0
        %v3596 = vadd.f32 0.0, %v3595
        %3597 = vmatmul.f32.gmra.mxu0 %v2042
        %v3598 = vpop.f32.mrf.mxu0
        %v3599 = vadd.f32 0.0, %v3598
        %3600 = vmatmul.f32.gmra.mxu0 %v2045
        %v3601 = vpop.f32.mrf.mxu0
        %v3602 = vadd.f32 0.0, %v3601
        %3603 = vmatmul.f32.gmra.mxu0 %v2048
        %v3604 = vpop.f32.mrf.mxu0
        %v3605 = vadd.f32 0.0, %v3604
        %3606 = vmatmul.f32.gmra.mxu0 %v2051
        %v3607 = vpop.f32.mrf.mxu0
        %v3608 = vadd.f32 0.0, %v3607
        %3609 = vmatmul.f32.gmra.mxu0 %v2054
        %v3610 = vpop.f32.mrf.mxu0
        %v3611 = vadd.f32 0.0, %v3610
        %3612 = vmatmul.f32.gmra.mxu0 %v2057
        %v3613 = vpop.f32.mrf.mxu0
        %v3614 = vadd.f32 0.0, %v3613
        %3615 = vmatmul.f32.gmra.mxu0 %v2060
        %v3616 = vpop.f32.mrf.mxu0
        %v3617 = vadd.f32 0.0, %v3616
        %3618 = vmatmul.f32.gmra.mxu0 %v2063
        %v3619 = vpop.f32.mrf.mxu0
        %v3620 = vadd.f32 0.0, %v3619
        %3621 = vmatmul.f32.gmra.mxu0 %v2066
        %v3622 = vpop.f32.mrf.mxu0
        %v3623 = vadd.f32 0.0, %v3622
        %3624 = vmatmul.f32.gmra.mxu0 %v2069
        %v3625 = vpop.f32.mrf.mxu0
        %v3626 = vadd.f32 0.0, %v3625
        %3627 = vmatmul.f32.gmra.mxu0 %v2072
        %v3628 = vpop.f32.mrf.mxu0
        %v3629 = vadd.f32 0.0, %v3628
        %3630 = vmatmul.f32.gmra.mxu0 %v2075
        %v3631 = vpop.f32.mrf.mxu0
        %v3632 = vadd.f32 0.0, %v3631
        %3633 = vmatmul.f32.gmra.mxu0 %v2078
        %v3634 = vpop.f32.mrf.mxu0
        %v3635 = vadd.f32 0.0, %v3634
        %3636 = vmatmul.f32.gmra.mxu0 %v2081
        %v3637 = vpop.f32.mrf.mxu0
        %v3638 = vadd.f32 0.0, %v3637
        %3639 = vmatmul.f32.gmra.mxu0 %v2084
        %v3640 = vpop.f32.mrf.mxu0
        %v3641 = vadd.f32 0.0, %v3640
        %3642 = vmatmul.f32.gmra.mxu0 %v2087
        %v3643 = vpop.f32.mrf.mxu0
        %v3644 = vadd.f32 0.0, %v3643
        %3645 = vmatmul.f32.gmra.mxu0 %v2090
        %v3646 = vpop.f32.mrf.mxu0
        %v3647 = vadd.f32 0.0, %v3646
        %3648 = vmatmul.f32.gmra.mxu0 %v2093
        %v3649 = vpop.f32.mrf.mxu0
        %v3650 = vadd.f32 0.0, %v3649
        %3651 = vmatmul.f32.gmra.mxu0 %v2096
        %v3652 = vpop.f32.mrf.mxu0
        %v3653 = vadd.f32 0.0, %v3652
        %3654 = vmatmul.f32.gmra.mxu0 %v2099
        %v3655 = vpop.f32.mrf.mxu0
        %v3656 = vadd.f32 0.0, %v3655
        %3657 = vmatmul.f32.gmra.mxu0 %v2102
        %v3658 = vpop.f32.mrf.mxu0
        %v3659 = vadd.f32 0.0, %v3658
        %3660 = vmatmul.f32.gmra.mxu0 %v2105
        %v3661 = vpop.f32.mrf.mxu0
        %v3662 = vadd.f32 0.0, %v3661
        %3663 = vmatmul.f32.gmra.mxu0 %v2108
        %v3664 = vpop.f32.mrf.mxu0
        %v3665 = vadd.f32 0.0, %v3664
        %3666 = vmatmul.f32.gmra.mxu0 %v2111
        %v3667 = vpop.f32.mrf.mxu0
        %v3668 = vadd.f32 0.0, %v3667
        %3669 = vmatmul.f32.gmra.mxu0 %v2114
        %v3670 = vpop.f32.mrf.mxu0
        %v3671 = vadd.f32 0.0, %v3670
        %3672 = vmatmul.f32.gmra.mxu0 %v2117
        %v3673 = vpop.f32.mrf.mxu0
        %v3674 = vadd.f32 0.0, %v3673
        %3675 = vmatmul.f32.gmra.mxu0 %v2120
        %v3676 = vpop.f32.mrf.mxu0
        %v3677 = vadd.f32 0.0, %v3676
        %3678 = vmatmul.f32.gmra.mxu0 %v2123
        %v3679 = vpop.f32.mrf.mxu0
        %v3680 = vadd.f32 0.0, %v3679
        %3681 = vmatmul.f32.gmra.mxu0 %v2126
        %v3682 = vpop.f32.mrf.mxu0
        %v3683 = vadd.f32 0.0, %v3682
        %3684 = vmatmul.f32.gmra.mxu0 %v2129
        %v3685 = vpop.f32.mrf.mxu0
        %v3686 = vadd.f32 0.0, %v3685
        %3687 = vmatmul.f32.gmra.mxu0 %v2132
        %v3688 = vpop.f32.mrf.mxu0
        %v3689 = vadd.f32 0.0, %v3688
        %3690 = vmatmul.f32.gmra.mxu0 %v2135
        %v3691 = vpop.f32.mrf.mxu0
        %v3692 = vadd.f32 0.0, %v3691
        %3693 = vmatmul.f32.gmra.mxu0 %v2138
        %v3694 = vpop.f32.mrf.mxu0
        %v3695 = vadd.f32 0.0, %v3694
        %3696 = vmatmul.f32.gmra.mxu0 %v2141
        %v3697 = vpop.f32.mrf.mxu0
        %v3698 = vadd.f32 0.0, %v3697
        %3699 = vmatmul.f32.gmra.mxu0 %v2144
        %v3700 = vpop.f32.mrf.mxu0
        %v3701 = vadd.f32 0.0, %v3700
        %3702 = vmatmul.f32.gmra.mxu0 %v2147
        %v3703 = vpop.f32.mrf.mxu0
        %v3704 = vadd.f32 0.0, %v3703
        %3705 = vmatmul.f32.gmra.mxu0 %v2150
        %v3706 = vpop.f32.mrf.mxu0
        %v3707 = vadd.f32 0.0, %v3706
        %3708 = vmatmul.f32.gmra.mxu0 %v2153
        %v3709 = vpop.f32.mrf.mxu0
        %v3710 = vadd.f32 0.0, %v3709
        %3711 = vmatmul.f32.gmra.mxu0 %v2156
        %v3712 = vpop.f32.mrf.mxu0
        %v3713 = vadd.f32 0.0, %v3712
        %3714 = vmatmul.f32.gmra.mxu0 %v2159
        %v3715 = vpop.f32.mrf.mxu0
        %v3716 = vadd.f32 0.0, %v3715
        %3717 = vmatmul.f32.gmra.mxu0 %v2162
        %v3718 = vpop.f32.mrf.mxu0
        %v3719 = vadd.f32 0.0, %v3718
        %3720 = vmatmul.f32.gmra.mxu0 %v2165
        %v3721 = vpop.f32.mrf.mxu0
        %v3722 = vadd.f32 0.0, %v3721
        %3723 = vmatmul.f32.gmra.mxu0 %v2168
        %v3724 = vpop.f32.mrf.mxu0
        %v3725 = vadd.f32 0.0, %v3724
        %3726 = vmatmul.f32.gmra.mxu0 %v2171
        %v3727 = vpop.f32.mrf.mxu0
        %v3728 = vadd.f32 0.0, %v3727
        %3729 = vmatmul.f32.gmra.mxu0 %v2174
        %v3730 = vpop.f32.mrf.mxu0
        %v3731 = vadd.f32 0.0, %v3730
        %3732 = vmatmul.f32.gmra.mxu0 %v2177
        %v3733 = vpop.f32.mrf.mxu0
        %v3734 = vadd.f32 0.0, %v3733
        %3735 = vmatmul.f32.gmra.mxu0 %v2180
        %v3736 = vpop.f32.mrf.mxu0
        %v3737 = vadd.f32 0.0, %v3736
        %3738 = vmatmul.f32.gmra.mxu0 %v2183
        %v3739 = vpop.f32.mrf.mxu0
        %v3740 = vadd.f32 0.0, %v3739
        %3741 = vmatmul.f32.gmra.mxu0 %v2186
        %v3742 = vpop.f32.mrf.mxu0
        %v3743 = vadd.f32 0.0, %v3742
        %3744 = vmatmul.f32.gmra.mxu0 %v2189
        %v3745 = vpop.f32.mrf.mxu0
        %v3746 = vadd.f32 0.0, %v3745
        %3747 = vmatmul.f32.gmra.mxu0 %v2192
        %v3748 = vpop.f32.mrf.mxu0
        %v3749 = vadd.f32 0.0, %v3748
        %3750 = vmatmul.f32.gmra.mxu0 %v2195
        %v3751 = vpop.f32.mrf.mxu0
        %v3752 = vadd.f32 0.0, %v3751
        %3753 = vmatmul.f32.gmra.mxu0 %v2198
        %v3754 = vpop.f32.mrf.mxu0
        %v3755 = vadd.f32 0.0, %v3754
        %3756 = vmatmul.f32.gmra.mxu0 %v2201
        %v3757 = vpop.f32.mrf.mxu0
        %v3758 = vadd.f32 0.0, %v3757
        %3759 = vmatmul.f32.gmra.mxu0 %v2204
        %v3760 = vpop.f32.mrf.mxu0
        %v3761 = vadd.f32 0.0, %v3760
        %3762 = vmatmul.f32.gmra.mxu0 %v2207
        %v3763 = vpop.f32.mrf.mxu0
        %v3764 = vadd.f32 0.0, %v3763
        %3765 = vmatmul.f32.gmra.mxu0 %v2210
        %v3766 = vpop.f32.mrf.mxu0
        %v3767 = vadd.f32 0.0, %v3766
        %3768 = vmatmul.f32.gmra.mxu0 %v2213
        %v3769 = vpop.f32.mrf.mxu0
        %v3770 = vadd.f32 0.0, %v3769
        %3771 = vmatmul.f32.gmra.mxu0 %v2216
        %v3772 = vpop.f32.mrf.mxu0
        %v3773 = vadd.f32 0.0, %v3772
        %3774 = vmatmul.f32.gmra.mxu0 %v2219
        %v3775 = vpop.f32.mrf.mxu0
        %v3776 = vadd.f32 0.0, %v3775
        %3777 = vmatmul.f32.gmra.mxu0 %v2222
        %v3778 = vpop.f32.mrf.mxu0
        %v3779 = vadd.f32 0.0, %v3778
        %3780 = vmatmul.f32.gmra.mxu0 %v2225
        %v3781 = vpop.f32.mrf.mxu0
        %v3782 = vadd.f32 0.0, %v3781
        %3783 = vmatmul.f32.gmra.mxu0 %v2228
        %v3784 = vpop.f32.mrf.mxu0
        %v3785 = vadd.f32 0.0, %v3784
        %3786 = vmatmul.f32.gmra.mxu0 %v2231
        %v3787 = vpop.f32.mrf.mxu0
        %v3788 = vadd.f32 0.0, %v3787
        %3789 = vmatmul.f32.gmra.mxu0 %v2234
        %v3790 = vpop.f32.mrf.mxu0
        %v3791 = vadd.f32 0.0, %v3790
        %3792 = vmatmul.f32.gmra.mxu0 %v2237
        %v3793 = vpop.f32.mrf.mxu0
        %v3794 = vadd.f32 0.0, %v3793
        %3795 = vmatmul.f32.gmra.mxu0 %v2240
        %v3796 = vpop.f32.mrf.mxu0
        %v3797 = vadd.f32 0.0, %v3796
        %3798 = vmatmul.f32.gmra.mxu0 %v2243
        %v3799 = vpop.f32.mrf.mxu0
        %v3800 = vadd.f32 0.0, %v3799
        %3801 = vmatmul.f32.gmra.mxu0 %v2246
        %v3802 = vpop.f32.mrf.mxu0
        %v3803 = vadd.f32 0.0, %v3802
        %3804 = vmatmul.f32.gmra.mxu0 %v2249
        %v3805 = vpop.f32.mrf.mxu0
        %v3806 = vadd.f32 0.0, %v3805
        %3807 = vmatmul.f32.gmra.mxu0 %v2252
        %v3808 = vpop.f32.mrf.mxu0
        %v3809 = vadd.f32 0.0, %v3808
        %3810 = vmatmul.f32.gmra.mxu0 %v2255
        %v3811 = vpop.f32.mrf.mxu0
        %v3812 = vadd.f32 0.0, %v3811
        %3813 = vmatmul.f32.gmra.mxu0 %v2258
        %v3814 = vpop.f32.mrf.mxu0
        %v3815 = vadd.f32 0.0, %v3814
        %3816 = vmatmul.f32.gmra.mxu0 %v2261
        %v3817 = vpop.f32.mrf.mxu0
        %v3818 = vadd.f32 0.0, %v3817
        %3819 = vmatmul.f32.gmra.mxu0 %v2264
        %v3820 = vpop.f32.mrf.mxu0
        %v3821 = vadd.f32 0.0, %v3820
        %3822 = vmatmul.f32.gmra.mxu0 %v2267
        %v3823 = vpop.f32.mrf.mxu0
        %v3824 = vadd.f32 0.0, %v3823
        %3825 = vmatmul.f32.gmra.mxu0 %v2270
        %v3826 = vpop.f32.mrf.mxu0
        %v3827 = vadd.f32 0.0, %v3826
        %3828 = vmatmul.f32.gmra.mxu0 %v2273
        %v3829 = vpop.f32.mrf.mxu0
        %v3830 = vadd.f32 0.0, %v3829
        %3831 = vmatmul.f32.gmra.mxu0 %v2276
        %v3832 = vpop.f32.mrf.mxu0
        %v3833 = vadd.f32 0.0, %v3832
        %3834 = vmatmul.f32.gmra.mxu0 %v2279
        %v3835 = vpop.f32.mrf.mxu0
        %v3836 = vadd.f32 0.0, %v3835
        %3837 = vmatmul.f32.gmra.mxu0 %v2282
        %v3838 = vpop.f32.mrf.mxu0
        %v3839 = vadd.f32 0.0, %v3838
        %3840 = vmatmul.f32.gmra.mxu0 %v2285
        %v3841 = vpop.f32.mrf.mxu0
        %v3842 = vadd.f32 0.0, %v3841
        %3843 = vmatmul.f32.gmra.mxu0 %v2288
        %v3844 = vpop.f32.mrf.mxu0
        %v3845 = vadd.f32 0.0, %v3844
        %3846 = vdwg.mxu0
        %s3847 = smul.u32 %s19, 128
        %s3848 = ssub.s32 300, %s3847
        %p3849 = scmp.lt.s32.totalorder %s3848, 128
        %s3850 = scalar_select %p3849, %s3848, 128
        %s3851 = smul.u32 %s3850, 32
        %v3852 = vlaneseq
        %v3853 = vshrl.u32 %v3852, 7
        %v3854 = vadd.s32 %v3853, 8
        %v3855 = vadd.s32 %v3853, 16
        %v3856 = vadd.s32 %v3853, 24
        %v3857 = vadd.s32 %v3853, 32
        %v3858 = vadd.s32 %v3853, 40
        %v3859 = vadd.s32 %v3853, 48
        %v3860 = vadd.s32 %v3853, 56
        %v3861 = vadd.s32 %v3853, 64
        %v3862 = vadd.s32 %v3853, 72
        %v3863 = vadd.s32 %v3853, 80
        %v3864 = vadd.s32 %v3853, 88
        %v3865 = vadd.s32 %v3853, 96
        %v3866 = vadd.s32 %v3853, 104
        %v3867 = vadd.s32 %v3853, 112
        %v3868 = vadd.s32 %v3853, 120
        %v3869 = vadd.s32 %v3853, 128
        %v3870 = vadd.s32 %v3853, 136
        %v3871 = vadd.s32 %v3853, 144
        %v3872 = vadd.s32 %v3853, 152
        %v3873 = vadd.s32 %v3853, 160
        %v3874 = vadd.s32 %v3853, 168
        %v3875 = vadd.s32 %v3853, 176
        %v3876 = vadd.s32 %v3853, 184
        %v3877 = vadd.s32 %v3853, 192
        %v3878 = vadd.s32 %v3853, 200
        %v3879 = vadd.s32 %v3853, 208
        %v3880 = vadd.s32 %v3853, 216
        %v3881 = vadd.s32 %v3853, 224
        %v3882 = vadd.s32 %v3853, 232
        %v3883 = vadd.s32 %v3853, 240
        %v3884 = vadd.s32 %v3853, 248
        %v3885 = vadd.s32 %v3853, 256
        %v3886 = vadd.s32 %v3853, 264
        %v3887 = vadd.s32 %v3853, 272
        %v3888 = vadd.s32 %v3853, 280
        %v3889 = vadd.s32 %v3853, 288
        %v3890 = vadd.s32 %v3853, 296
        %v3891 = vadd.s32 %v3853, 304
        %v3892 = vadd.s32 %v3853, 312
        %v3893 = vadd.s32 %v3853, 320
        %v3894 = vadd.s32 %v3853, 328
        %v3895 = vadd.s32 %v3853, 336
        %v3896 = vadd.s32 %v3853, 344
        %v3897 = vadd.s32 %v3853, 352
        %v3898 = vadd.s32 %v3853, 360
        %v3899 = vadd.s32 %v3853, 368
        %v3900 = vadd.s32 %v3853, 376
        %v3901 = vadd.s32 %v3853, 384
        %v3902 = vadd.s32 %v3853, 392
        %v3903 = vadd.s32 %v3853, 400
        %v3904 = vadd.s32 %v3853, 408
        %v3905 = vadd.s32 %v3853, 416
        %v3906 = vadd.s32 %v3853, 424
        %v3907 = vadd.s32 %v3853, 432
        %v3908 = vadd.s32 %v3853, 440
        %v3909 = vadd.s32 %v3853, 448
        %v3910 = vadd.s32 %v3853, 456
        %v3911 = vadd.s32 %v3853, 464
        %v3912 = vadd.s32 %v3853, 472
        %v3913 = vadd.s32 %v3853, 480
        %v3914 = vadd.s32 %v3853, 488
        %v3915 = vadd.s32 %v3853, 496
        %v3916 = vadd.s32 %v3853, 504
        %v3917 = vadd.s32 %v3853, 512
        %v3918 = vadd.s32 %v3853, 520
        %v3919 = vadd.s32 %v3853, 528
        %v3920 = vadd.s32 %v3853, 536
        %v3921 = vadd.s32 %v3853, 544
        %v3922 = vadd.s32 %v3853, 552
        %v3923 = vadd.s32 %v3853, 560
        %v3924 = vadd.s32 %v3853, 568
        %v3925 = vadd.s32 %v3853, 576
        %v3926 = vadd.s32 %v3853, 584
        %v3927 = vadd.s32 %v3853, 592
        %v3928 = vadd.s32 %v3853, 600
        %v3929 = vadd.s32 %v3853, 608
        %v3930 = vadd.s32 %v3853, 616
        %v3931 = vadd.s32 %v3853, 624
        %v3932 = vadd.s32 %v3853, 632
        %v3933 = vadd.s32 %v3853, 640
        %v3934 = vadd.s32 %v3853, 648
        %v3935 = vadd.s32 %v3853, 656
        %v3936 = vadd.s32 %v3853, 664
        %v3937 = vadd.s32 %v3853, 672
        %v3938 = vadd.s32 %v3853, 680
        %v3939 = vadd.s32 %v3853, 688
        %v3940 = vadd.s32 %v3853, 696
        %v3941 = vadd.s32 %v3853, 704
        %v3942 = vadd.s32 %v3853, 712
        %v3943 = vadd.s32 %v3853, 720
        %v3944 = vadd.s32 %v3853, 728
        %v3945 = vadd.s32 %v3853, 736
        %v3946 = vadd.s32 %v3853, 744
        %v3947 = vadd.s32 %v3853, 752
        %v3948 = vadd.s32 %v3853, 760
        %v3949 = vadd.s32 %v3853, 768
        %v3950 = vadd.s32 %v3853, 776
        %v3951 = vadd.s32 %v3853, 784
        %v3952 = vadd.s32 %v3853, 792
        %v3953 = vadd.s32 %v3853, 800
        %v3954 = vadd.s32 %v3853, 808
        %v3955 = vadd.s32 %v3853, 816
        %v3956 = vadd.s32 %v3853, 824
        %v3957 = vadd.s32 %v3853, 832
        %v3958 = vadd.s32 %v3853, 840
        %v3959 = vadd.s32 %v3853, 848
        %v3960 = vadd.s32 %v3853, 856
        %v3961 = vadd.s32 %v3853, 864
        %v3962 = vadd.s32 %v3853, 872
        %v3963 = vadd.s32 %v3853, 880
        %v3964 = vadd.s32 %v3853, 888
        %v3965 = vadd.s32 %v3853, 896
        %v3966 = vadd.s32 %v3853, 904
        %v3967 = vadd.s32 %v3853, 912
        %v3968 = vadd.s32 %v3853, 920
        %v3969 = vadd.s32 %v3853, 928
        %v3970 = vadd.s32 %v3853, 936
        %v3971 = vadd.s32 %v3853, 944
        %v3972 = vadd.s32 %v3853, 952
        %v3973 = vadd.s32 %v3853, 960
        %v3974 = vadd.s32 %v3853, 968
        %v3975 = vadd.s32 %v3853, 976
        %v3976 = vadd.s32 %v3853, 984
        %v3977 = vadd.s32 %v3853, 992
        %v3978 = vadd.s32 %v3853, 1000
        %v3979 = vadd.s32 %v3853, 1008
        %v3980 = vadd.s32 %v3853, 1016
        %v3981 = vadd.s32 %v3853, 1024
        %v3982 = vadd.s32 %v3853, 1032
        %v3983 = vadd.s32 %v3853, 1040
        %v3984 = vadd.s32 %v3853, 1048
        %v3985 = vadd.s32 %v3853, 1056
        %v3986 = vadd.s32 %v3853, 1064
        %v3987 = vadd.s32 %v3853, 1072
        %v3988 = vadd.s32 %v3853, 1080
        %v3989 = vadd.s32 %v3853, 1088
        %v3990 = vadd.s32 %v3853, 1096
        %v3991 = vadd.s32 %v3853, 1104
        %v3992 = vadd.s32 %v3853, 1112
        %v3993 = vadd.s32 %v3853, 1120
        %v3994 = vadd.s32 %v3853, 1128
        %v3995 = vadd.s32 %v3853, 1136
        %v3996 = vadd.s32 %v3853, 1144
        %v3997 = vadd.s32 %v3853, 1152
        %v3998 = vadd.s32 %v3853, 1160
        %v3999 = vadd.s32 %v3853, 1168
        %v4000 = vadd.s32 %v3853, 1176
        %v4001 = vadd.s32 %v3853, 1184
        %v4002 = vadd.s32 %v3853, 1192
        %v4003 = vadd.s32 %v3853, 1200
        %v4004 = vadd.s32 %v3853, 1208
        %v4005 = vadd.s32 %v3853, 1216
        %v4006 = vadd.s32 %v3853, 1224
        %v4007 = vadd.s32 %v3853, 1232
        %v4008 = vadd.s32 %v3853, 1240
        %v4009 = vadd.s32 %v3853, 1248
        %v4010 = vadd.s32 %v3853, 1256
        %v4011 = vadd.s32 %v3853, 1264
        %v4012 = vadd.s32 %v3853, 1272
        %v4013 = vadd.s32 %v3853, 1280
        %v4014 = vadd.s32 %v3853, 1288
        %v4015 = vadd.s32 %v3853, 1296
        %v4016 = vadd.s32 %v3853, 1304
        %v4017 = vadd.s32 %v3853, 1312
        %v4018 = vadd.s32 %v3853, 1320
        %v4019 = vadd.s32 %v3853, 1328
        %v4020 = vadd.s32 %v3853, 1336
        %v4021 = vadd.s32 %v3853, 1344
        %v4022 = vadd.s32 %v3853, 1352
        %v4023 = vadd.s32 %v3853, 1360
        %v4024 = vadd.s32 %v3853, 1368
        %v4025 = vadd.s32 %v3853, 1376
        %v4026 = vadd.s32 %v3853, 1384
        %v4027 = vadd.s32 %v3853, 1392
        %v4028 = vadd.s32 %v3853, 1400
        %v4029 = vadd.s32 %v3853, 1408
        %v4030 = vadd.s32 %v3853, 1416
        %v4031 = vadd.s32 %v3853, 1424
        %v4032 = vadd.s32 %v3853, 1432
        %v4033 = vadd.s32 %v3853, 1440
        %v4034 = vadd.s32 %v3853, 1448
        %v4035 = vadd.s32 %v3853, 1456
        %v4036 = vadd.s32 %v3853, 1464
        %v4037 = vadd.s32 %v3853, 1472
        %v4038 = vadd.s32 %v3853, 1480
        %v4039 = vadd.s32 %v3853, 1488
        %v4040 = vadd.s32 %v3853, 1496
        %v4041 = vadd.s32 %v3853, 1504
        %v4042 = vadd.s32 %v3853, 1512
        %v4043 = vadd.s32 %v3853, 1520
        %v4044 = vadd.s32 %v3853, 1528
        %v4045 = vadd.s32 %v3853, 1536
        %v4046 = vadd.s32 %v3853, 1544
        %v4047 = vadd.s32 %v3853, 1552
        %v4048 = vadd.s32 %v3853, 1560
        %v4049 = vadd.s32 %v3853, 1568
        %v4050 = vadd.s32 %v3853, 1576
        %v4051 = vadd.s32 %v3853, 1584
        %v4052 = vadd.s32 %v3853, 1592
        %v4053 = vadd.s32 %v3853, 1600
        %v4054 = vadd.s32 %v3853, 1608
        %v4055 = vadd.s32 %v3853, 1616
        %v4056 = vadd.s32 %v3853, 1624
        %v4057 = vadd.s32 %v3853, 1632
        %v4058 = vadd.s32 %v3853, 1640
        %v4059 = vadd.s32 %v3853, 1648
        %v4060 = vadd.s32 %v3853, 1656
        %v4061 = vadd.s32 %v3853, 1664
        %v4062 = vadd.s32 %v3853, 1672
        %v4063 = vadd.s32 %v3853, 1680
        %v4064 = vadd.s32 %v3853, 1688
        %v4065 = vadd.s32 %v3853, 1696
        %v4066 = vadd.s32 %v3853, 1704
        %v4067 = vadd.s32 %v3853, 1712
        %v4068 = vadd.s32 %v3853, 1720
        %v4069 = vadd.s32 %v3853, 1728
        %v4070 = vadd.s32 %v3853, 1736
        %v4071 = vadd.s32 %v3853, 1744
        %v4072 = vadd.s32 %v3853, 1752
        %v4073 = vadd.s32 %v3853, 1760
        %v4074 = vadd.s32 %v3853, 1768
        %v4075 = vadd.s32 %v3853, 1776
        %v4076 = vadd.s32 %v3853, 1784
        %v4077 = vadd.s32 %v3853, 1792
        %v4078 = vadd.s32 %v3853, 1800
        %v4079 = vadd.s32 %v3853, 1808
        %v4080 = vadd.s32 %v3853, 1816
        %v4081 = vadd.s32 %v3853, 1824
        %v4082 = vadd.s32 %v3853, 1832
        %v4083 = vadd.s32 %v3853, 1840
        %v4084 = vadd.s32 %v3853, 1848
        %v4085 = vadd.s32 %v3853, 1856
        %v4086 = vadd.s32 %v3853, 1864
        %v4087 = vadd.s32 %v3853, 1872
        %v4088 = vadd.s32 %v3853, 1880
        %v4089 = vadd.s32 %v3853, 1888
        %v4090 = vadd.s32 %v3853, 1896
        %v4091 = vadd.s32 %v3853, 1904
        %v4092 = vadd.s32 %v3853, 1912
        %v4093 = vadd.s32 %v3853, 1920
        %v4094 = vadd.s32 %v3853, 1928
        %v4095 = vadd.s32 %v3853, 1936
        %v4096 = vadd.s32 %v3853, 1944
        %v4097 = vadd.s32 %v3853, 1952
        %v4098 = vadd.s32 %v3853, 1960
        %v4099 = vadd.s32 %v3853, 1968
        %v4100 = vadd.s32 %v3853, 1976
        %v4101 = vadd.s32 %v3853, 1984
        %v4102 = vadd.s32 %v3853, 1992
        %v4103 = vadd.s32 %v3853, 2000
        %v4104 = vadd.s32 %v3853, 2008
        %v4105 = vadd.s32 %v3853, 2016
        %v4106 = vadd.s32 %v3853, 2024
        %v4107 = vadd.s32 %v3853, 2032
        %v4108 = vadd.s32 %v3853, 2040
        %v4109 = vadd.s32 %v3853, 2048
        %v4110 = vadd.s32 %v3853, 2056
        %v4111 = vadd.s32 %v3853, 2064
        %v4112 = vadd.s32 %v3853, 2072
        %v4113 = vadd.s32 %v3853, 2080
        %v4114 = vadd.s32 %v3853, 2088
        %v4115 = vadd.s32 %v3853, 2096
        %v4116 = vadd.s32 %v3853, 2104
        %v4117 = vadd.s32 %v3853, 2112
        %v4118 = vadd.s32 %v3853, 2120
        %v4119 = vadd.s32 %v3853, 2128
        %v4120 = vadd.s32 %v3853, 2136
        %v4121 = vadd.s32 %v3853, 2144
        %v4122 = vadd.s32 %v3853, 2152
        %v4123 = vadd.s32 %v3853, 2160
        %v4124 = vadd.s32 %v3853, 2168
        %v4125 = vadd.s32 %v3853, 2176
        %v4126 = vadd.s32 %v3853, 2184
        %v4127 = vadd.s32 %v3853, 2192
        %v4128 = vadd.s32 %v3853, 2200
        %v4129 = vadd.s32 %v3853, 2208
        %v4130 = vadd.s32 %v3853, 2216
        %v4131 = vadd.s32 %v3853, 2224
        %v4132 = vadd.s32 %v3853, 2232
        %v4133 = vadd.s32 %v3853, 2240
        %v4134 = vadd.s32 %v3853, 2248
        %v4135 = vadd.s32 %v3853, 2256
        %v4136 = vadd.s32 %v3853, 2264
        %v4137 = vadd.s32 %v3853, 2272
        %v4138 = vadd.s32 %v3853, 2280
        %v4139 = vadd.s32 %v3853, 2288
        %v4140 = vadd.s32 %v3853, 2296
        %v4141 = vadd.s32 %v3853, 2304
        %v4142 = vadd.s32 %v3853, 2312
        %v4143 = vadd.s32 %v3853, 2320
        %v4144 = vadd.s32 %v3853, 2328
        %v4145 = vadd.s32 %v3853, 2336
        %v4146 = vadd.s32 %v3853, 2344
        %v4147 = vadd.s32 %v3853, 2352
        %v4148 = vadd.s32 %v3853, 2360
        %v4149 = vadd.s32 %v3853, 2368
        %v4150 = vadd.s32 %v3853, 2376
        %v4151 = vadd.s32 %v3853, 2384
        %v4152 = vadd.s32 %v3853, 2392
        %v4153 = vadd.s32 %v3853, 2400
        %v4154 = vadd.s32 %v3853, 2408
        %v4155 = vadd.s32 %v3853, 2416
        %v4156 = vadd.s32 %v3853, 2424
        %v4157 = vadd.s32 %v3853, 2432
        %v4158 = vadd.s32 %v3853, 2440
        %v4159 = vadd.s32 %v3853, 2448
        %v4160 = vadd.s32 %v3853, 2456
        %v4161 = vadd.s32 %v3853, 2464
        %v4162 = vadd.s32 %v3853, 2472
        %v4163 = vadd.s32 %v3853, 2480
        %v4164 = vadd.s32 %v3853, 2488
        %v4165 = vadd.s32 %v3853, 2496
        %v4166 = vadd.s32 %v3853, 2504
        %v4167 = vadd.s32 %v3853, 2512
        %v4168 = vadd.s32 %v3853, 2520
        %v4169 = vadd.s32 %v3853, 2528
        %v4170 = vadd.s32 %v3853, 2536
        %v4171 = vadd.s32 %v3853, 2544
        %v4172 = vadd.s32 %v3853, 2552
        %v4173 = vadd.s32 %v3853, 2560
        %v4174 = vadd.s32 %v3853, 2568
        %v4175 = vadd.s32 %v3853, 2576
        %v4176 = vadd.s32 %v3853, 2584
        %v4177 = vadd.s32 %v3853, 2592
        %v4178 = vadd.s32 %v3853, 2600
        %v4179 = vadd.s32 %v3853, 2608
        %v4180 = vadd.s32 %v3853, 2616
        %v4181 = vadd.s32 %v3853, 2624
        %v4182 = vadd.s32 %v3853, 2632
        %v4183 = vadd.s32 %v3853, 2640
        %v4184 = vadd.s32 %v3853, 2648
        %v4185 = vadd.s32 %v3853, 2656
        %v4186 = vadd.s32 %v3853, 2664
        %v4187 = vadd.s32 %v3853, 2672
        %v4188 = vadd.s32 %v3853, 2680
        %v4189 = vadd.s32 %v3853, 2688
        %v4190 = vadd.s32 %v3853, 2696
        %v4191 = vadd.s32 %v3853, 2704
        %v4192 = vadd.s32 %v3853, 2712
        %v4193 = vadd.s32 %v3853, 2720
        %v4194 = vadd.s32 %v3853, 2728
        %v4195 = vadd.s32 %v3853, 2736
        %v4196 = vadd.s32 %v3853, 2744
        %v4197 = vadd.s32 %v3853, 2752
        %v4198 = vadd.s32 %v3853, 2760
        %v4199 = vadd.s32 %v3853, 2768
        %v4200 = vadd.s32 %v3853, 2776
        %v4201 = vadd.s32 %v3853, 2784
        %v4202 = vadd.s32 %v3853, 2792
        %v4203 = vadd.s32 %v3853, 2800
        %v4204 = vadd.s32 %v3853, 2808
        %v4205 = vadd.s32 %v3853, 2816
        %v4206 = vadd.s32 %v3853, 2824
        %v4207 = vadd.s32 %v3853, 2832
        %v4208 = vadd.s32 %v3853, 2840
        %v4209 = vadd.s32 %v3853, 2848
        %v4210 = vadd.s32 %v3853, 2856
        %v4211 = vadd.s32 %v3853, 2864
        %v4212 = vadd.s32 %v3853, 2872
        %v4213 = vadd.s32 %v3853, 2880
        %v4214 = vadd.s32 %v3853, 2888
        %v4215 = vadd.s32 %v3853, 2896
        %v4216 = vadd.s32 %v3853, 2904
        %v4217 = vadd.s32 %v3853, 2912
        %v4218 = vadd.s32 %v3853, 2920
        %v4219 = vadd.s32 %v3853, 2928
        %v4220 = vadd.s32 %v3853, 2936
        %v4221 = vadd.s32 %v3853, 2944
        %v4222 = vadd.s32 %v3853, 2952
        %v4223 = vadd.s32 %v3853, 2960
        %v4224 = vadd.s32 %v3853, 2968
        %v4225 = vadd.s32 %v3853, 2976
        %v4226 = vadd.s32 %v3853, 2984
        %v4227 = vadd.s32 %v3853, 2992
        %v4228 = vadd.s32 %v3853, 3000
        %v4229 = vadd.s32 %v3853, 3008
        %v4230 = vadd.s32 %v3853, 3016
        %v4231 = vadd.s32 %v3853, 3024
        %v4232 = vadd.s32 %v3853, 3032
        %v4233 = vadd.s32 %v3853, 3040
        %v4234 = vadd.s32 %v3853, 3048
        %v4235 = vadd.s32 %v3853, 3056
        %v4236 = vadd.s32 %v3853, 3064
        %v4237 = vadd.s32 %v3853, 3072
        %v4238 = vadd.s32 %v3853, 3080
        %v4239 = vadd.s32 %v3853, 3088
        %v4240 = vadd.s32 %v3853, 3096
        %v4241 = vadd.s32 %v3853, 3104
        %v4242 = vadd.s32 %v3853, 3112
        %v4243 = vadd.s32 %v3853, 3120
        %v4244 = vadd.s32 %v3853, 3128
        %v4245 = vadd.s32 %v3853, 3136
        %v4246 = vadd.s32 %v3853, 3144
        %v4247 = vadd.s32 %v3853, 3152
        %v4248 = vadd.s32 %v3853, 3160
        %v4249 = vadd.s32 %v3853, 3168
        %v4250 = vadd.s32 %v3853, 3176
        %v4251 = vadd.s32 %v3853, 3184
        %v4252 = vadd.s32 %v3853, 3192
        %v4253 = vadd.s32 %v3853, 3200
        %v4254 = vadd.s32 %v3853, 3208
        %v4255 = vadd.s32 %v3853, 3216
        %v4256 = vadd.s32 %v3853, 3224
        %v4257 = vadd.s32 %v3853, 3232
        %v4258 = vadd.s32 %v3853, 3240
        %v4259 = vadd.s32 %v3853, 3248
        %v4260 = vadd.s32 %v3853, 3256
        %v4261 = vadd.s32 %v3853, 3264
        %v4262 = vadd.s32 %v3853, 3272
        %v4263 = vadd.s32 %v3853, 3280
        %v4264 = vadd.s32 %v3853, 3288
        %v4265 = vadd.s32 %v3853, 3296
        %v4266 = vadd.s32 %v3853, 3304
        %v4267 = vadd.s32 %v3853, 3312
        %v4268 = vadd.s32 %v3853, 3320
        %v4269 = vadd.s32 %v3853, 3328
        %v4270 = vadd.s32 %v3853, 3336
        %v4271 = vadd.s32 %v3853, 3344
        %v4272 = vadd.s32 %v3853, 3352
        %v4273 = vadd.s32 %v3853, 3360
        %v4274 = vadd.s32 %v3853, 3368
        %v4275 = vadd.s32 %v3853, 3376
        %v4276 = vadd.s32 %v3853, 3384
        %v4277 = vadd.s32 %v3853, 3392
        %v4278 = vadd.s32 %v3853, 3400
        %v4279 = vadd.s32 %v3853, 3408
        %v4280 = vadd.s32 %v3853, 3416
        %v4281 = vadd.s32 %v3853, 3424
        %v4282 = vadd.s32 %v3853, 3432
        %v4283 = vadd.s32 %v3853, 3440
        %v4284 = vadd.s32 %v3853, 3448
        %v4285 = vadd.s32 %v3853, 3456
        %v4286 = vadd.s32 %v3853, 3464
        %v4287 = vadd.s32 %v3853, 3472
        %v4288 = vadd.s32 %v3853, 3480
        %v4289 = vadd.s32 %v3853, 3488
        %v4290 = vadd.s32 %v3853, 3496
        %v4291 = vadd.s32 %v3853, 3504
        %v4292 = vadd.s32 %v3853, 3512
        %v4293 = vadd.s32 %v3853, 3520
        %v4294 = vadd.s32 %v3853, 3528
        %v4295 = vadd.s32 %v3853, 3536
        %v4296 = vadd.s32 %v3853, 3544
        %v4297 = vadd.s32 %v3853, 3552
        %v4298 = vadd.s32 %v3853, 3560
        %v4299 = vadd.s32 %v3853, 3568
        %v4300 = vadd.s32 %v3853, 3576
        %v4301 = vadd.s32 %v3853, 3584
        %v4302 = vadd.s32 %v3853, 3592
        %v4303 = vadd.s32 %v3853, 3600
        %v4304 = vadd.s32 %v3853, 3608
        %v4305 = vadd.s32 %v3853, 3616
        %v4306 = vadd.s32 %v3853, 3624
        %v4307 = vadd.s32 %v3853, 3632
        %v4308 = vadd.s32 %v3853, 3640
        %v4309 = vadd.s32 %v3853, 3648
        %v4310 = vadd.s32 %v3853, 3656
        %v4311 = vadd.s32 %v3853, 3664
        %v4312 = vadd.s32 %v3853, 3672
        %v4313 = vadd.s32 %v3853, 3680
        %v4314 = vadd.s32 %v3853, 3688
        %v4315 = vadd.s32 %v3853, 3696
        %v4316 = vadd.s32 %v3853, 3704
        %v4317 = vadd.s32 %v3853, 3712
        %v4318 = vadd.s32 %v3853, 3720
        %v4319 = vadd.s32 %v3853, 3728
        %v4320 = vadd.s32 %v3853, 3736
        %v4321 = vadd.s32 %v3853, 3744
        %v4322 = vadd.s32 %v3853, 3752
        %v4323 = vadd.s32 %v3853, 3760
        %v4324 = vadd.s32 %v3853, 3768
        %v4325 = vadd.s32 %v3853, 3776
        %v4326 = vadd.s32 %v3853, 3784
        %v4327 = vadd.s32 %v3853, 3792
        %v4328 = vadd.s32 %v3853, 3800
        %v4329 = vadd.s32 %v3853, 3808
        %v4330 = vadd.s32 %v3853, 3816
        %v4331 = vadd.s32 %v3853, 3824
        %v4332 = vadd.s32 %v3853, 3832
        %v4333 = vadd.s32 %v3853, 3840
        %v4334 = vadd.s32 %v3853, 3848
        %v4335 = vadd.s32 %v3853, 3856
        %v4336 = vadd.s32 %v3853, 3864
        %v4337 = vadd.s32 %v3853, 3872
        %v4338 = vadd.s32 %v3853, 3880
        %v4339 = vadd.s32 %v3853, 3888
        %v4340 = vadd.s32 %v3853, 3896
        %v4341 = vadd.s32 %v3853, 3904
        %v4342 = vadd.s32 %v3853, 3912
        %v4343 = vadd.s32 %v3853, 3920
        %v4344 = vadd.s32 %v3853, 3928
        %v4345 = vadd.s32 %v3853, 3936
        %v4346 = vadd.s32 %v3853, 3944
        %v4347 = vadd.s32 %v3853, 3952
        %v4348 = vadd.s32 %v3853, 3960
        %v4349 = vadd.s32 %v3853, 3968
        %v4350 = vadd.s32 %v3853, 3976
        %v4351 = vadd.s32 %v3853, 3984
        %v4352 = vadd.s32 %v3853, 3992
        %v4353 = vadd.s32 %v3853, 4000
        %v4354 = vadd.s32 %v3853, 4008
        %v4355 = vadd.s32 %v3853, 4016
        %v4356 = vadd.s32 %v3853, 4024
        %v4357 = vadd.s32 %v3853, 4032
        %v4358 = vadd.s32 %v3853, 4040
        %v4359 = vadd.s32 %v3853, 4048
        %v4360 = vadd.s32 %v3853, 4056
        %v4361 = vadd.s32 %v3853, 4064
        %v4362 = vadd.s32 %v3853, 4072
        %v4363 = vadd.s32 %v3853, 4080
        %v4364 = vadd.s32 %v3853, 4088
        %v4365 = vstv %s3851
        %vm4366 = vcmp.lt.s32.totalorder %v3853, %v4365
        %vm4367 = vcmp.lt.s32.totalorder %v3854, %v4365
        %vm4368 = vcmp.lt.s32.totalorder %v3855, %v4365
        %vm4369 = vcmp.lt.s32.totalorder %v3856, %v4365
        %vm4370 = vcmp.lt.s32.totalorder %v3857, %v4365
        %vm4371 = vcmp.lt.s32.totalorder %v3858, %v4365
        %vm4372 = vcmp.lt.s32.totalorder %v3859, %v4365
        %vm4373 = vcmp.lt.s32.totalorder %v3860, %v4365
        %vm4374 = vcmp.lt.s32.totalorder %v3861, %v4365
        %vm4375 = vcmp.lt.s32.totalorder %v3862, %v4365
        %vm4376 = vcmp.lt.s32.totalorder %v3863, %v4365
        %vm4377 = vcmp.lt.s32.totalorder %v3864, %v4365
        %vm4378 = vcmp.lt.s32.totalorder %v3865, %v4365
        %vm4379 = vcmp.lt.s32.totalorder %v3866, %v4365
        %vm4380 = vcmp.lt.s32.totalorder %v3867, %v4365
        %vm4381 = vcmp.lt.s32.totalorder %v3868, %v4365
        %vm4382 = vcmp.lt.s32.totalorder %v3869, %v4365
        %vm4383 = vcmp.lt.s32.totalorder %v3870, %v4365
        %vm4384 = vcmp.lt.s32.totalorder %v3871, %v4365
        %vm4385 = vcmp.lt.s32.totalorder %v3872, %v4365
        %vm4386 = vcmp.lt.s32.totalorder %v3873, %v4365
        %vm4387 = vcmp.lt.s32.totalorder %v3874, %v4365
        %vm4388 = vcmp.lt.s32.totalorder %v3875, %v4365
        %vm4389 = vcmp.lt.s32.totalorder %v3876, %v4365
        %vm4390 = vcmp.lt.s32.totalorder %v3877, %v4365
        %vm4391 = vcmp.lt.s32.totalorder %v3878, %v4365
        %vm4392 = vcmp.lt.s32.totalorder %v3879, %v4365
        %vm4393 = vcmp.lt.s32.totalorder %v3880, %v4365
        %vm4394 = vcmp.lt.s32.totalorder %v3881, %v4365
        %vm4395 = vcmp.lt.s32.totalorder %v3882, %v4365
        %vm4396 = vcmp.lt.s32.totalorder %v3883, %v4365
        %vm4397 = vcmp.lt.s32.totalorder %v3884, %v4365
        %vm4398 = vcmp.lt.s32.totalorder %v3885, %v4365
        %vm4399 = vcmp.lt.s32.totalorder %v3886, %v4365
        %vm4400 = vcmp.lt.s32.totalorder %v3887, %v4365
        %vm4401 = vcmp.lt.s32.totalorder %v3888, %v4365
        %vm4402 = vcmp.lt.s32.totalorder %v3889, %v4365
        %vm4403 = vcmp.lt.s32.totalorder %v3890, %v4365
        %vm4404 = vcmp.lt.s32.totalorder %v3891, %v4365
        %vm4405 = vcmp.lt.s32.totalorder %v3892, %v4365
        %vm4406 = vcmp.lt.s32.totalorder %v3893, %v4365
        %vm4407 = vcmp.lt.s32.totalorder %v3894, %v4365
        %vm4408 = vcmp.lt.s32.totalorder %v3895, %v4365
        %vm4409 = vcmp.lt.s32.totalorder %v3896, %v4365
        %vm4410 = vcmp.lt.s32.totalorder %v3897, %v4365
        %vm4411 = vcmp.lt.s32.totalorder %v3898, %v4365
        %vm4412 = vcmp.lt.s32.totalorder %v3899, %v4365
        %vm4413 = vcmp.lt.s32.totalorder %v3900, %v4365
        %vm4414 = vcmp.lt.s32.totalorder %v3901, %v4365
        %vm4415 = vcmp.lt.s32.totalorder %v3902, %v4365
        %vm4416 = vcmp.lt.s32.totalorder %v3903, %v4365
        %vm4417 = vcmp.lt.s32.totalorder %v3904, %v4365
        %vm4418 = vcmp.lt.s32.totalorder %v3905, %v4365
        %vm4419 = vcmp.lt.s32.totalorder %v3906, %v4365
        %vm4420 = vcmp.lt.s32.totalorder %v3907, %v4365
        %vm4421 = vcmp.lt.s32.totalorder %v3908, %v4365
        %vm4422 = vcmp.lt.s32.totalorder %v3909, %v4365
        %vm4423 = vcmp.lt.s32.totalorder %v3910, %v4365
        %vm4424 = vcmp.lt.s32.totalorder %v3911, %v4365
        %vm4425 = vcmp.lt.s32.totalorder %v3912, %v4365
        %vm4426 = vcmp.lt.s32.totalorder %v3913, %v4365
        %vm4427 = vcmp.lt.s32.totalorder %v3914, %v4365
        %vm4428 = vcmp.lt.s32.totalorder %v3915, %v4365
        %vm4429 = vcmp.lt.s32.totalorder %v3916, %v4365
        %vm4430 = vcmp.lt.s32.totalorder %v3917, %v4365
        %vm4431 = vcmp.lt.s32.totalorder %v3918, %v4365
        %vm4432 = vcmp.lt.s32.totalorder %v3919, %v4365
        %vm4433 = vcmp.lt.s32.totalorder %v3920, %v4365
        %vm4434 = vcmp.lt.s32.totalorder %v3921, %v4365
        %vm4435 = vcmp.lt.s32.totalorder %v3922, %v4365
        %vm4436 = vcmp.lt.s32.totalorder %v3923, %v4365
        %vm4437 = vcmp.lt.s32.totalorder %v3924, %v4365
        %vm4438 = vcmp.lt.s32.totalorder %v3925, %v4365
        %vm4439 = vcmp.lt.s32.totalorder %v3926, %v4365
        %vm4440 = vcmp.lt.s32.totalorder %v3927, %v4365
        %vm4441 = vcmp.lt.s32.totalorder %v3928, %v4365
        %vm4442 = vcmp.lt.s32.totalorder %v3929, %v4365
        %vm4443 = vcmp.lt.s32.totalorder %v3930, %v4365
        %vm4444 = vcmp.lt.s32.totalorder %v3931, %v4365
        %vm4445 = vcmp.lt.s32.totalorder %v3932, %v4365
        %vm4446 = vcmp.lt.s32.totalorder %v3933, %v4365
        %vm4447 = vcmp.lt.s32.totalorder %v3934, %v4365
        %vm4448 = vcmp.lt.s32.totalorder %v3935, %v4365
        %vm4449 = vcmp.lt.s32.totalorder %v3936, %v4365
        %vm4450 = vcmp.lt.s32.totalorder %v3937, %v4365
        %vm4451 = vcmp.lt.s32.totalorder %v3938, %v4365
        %vm4452 = vcmp.lt.s32.totalorder %v3939, %v4365
        %vm4453 = vcmp.lt.s32.totalorder %v3940, %v4365
        %vm4454 = vcmp.lt.s32.totalorder %v3941, %v4365
        %vm4455 = vcmp.lt.s32.totalorder %v3942, %v4365
        %vm4456 = vcmp.lt.s32.totalorder %v3943, %v4365
        %vm4457 = vcmp.lt.s32.totalorder %v3944, %v4365
        %vm4458 = vcmp.lt.s32.totalorder %v3945, %v4365
        %vm4459 = vcmp.lt.s32.totalorder %v3946, %v4365
        %vm4460 = vcmp.lt.s32.totalorder %v3947, %v4365
        %vm4461 = vcmp.lt.s32.totalorder %v3948, %v4365
        %vm4462 = vcmp.lt.s32.totalorder %v3949, %v4365
        %vm4463 = vcmp.lt.s32.totalorder %v3950, %v4365
        %vm4464 = vcmp.lt.s32.totalorder %v3951, %v4365
        %vm4465 = vcmp.lt.s32.totalorder %v3952, %v4365
        %vm4466 = vcmp.lt.s32.totalorder %v3953, %v4365
        %vm4467 = vcmp.lt.s32.totalorder %v3954, %v4365
        %vm4468 = vcmp.lt.s32.totalorder %v3955, %v4365
        %vm4469 = vcmp.lt.s32.totalorder %v3956, %v4365
        %vm4470 = vcmp.lt.s32.totalorder %v3957, %v4365
        %vm4471 = vcmp.lt.s32.totalorder %v3958, %v4365
        %vm4472 = vcmp.lt.s32.totalorder %v3959, %v4365
        %vm4473 = vcmp.lt.s32.totalorder %v3960, %v4365
        %vm4474 = vcmp.lt.s32.totalorder %v3961, %v4365
        %vm4475 = vcmp.lt.s32.totalorder %v3962, %v4365
        %vm4476 = vcmp.lt.s32.totalorder %v3963, %v4365
        %vm4477 = vcmp.lt.s32.totalorder %v3964, %v4365
        %vm4478 = vcmp.lt.s32.totalorder %v3965, %v4365
        %vm4479 = vcmp.lt.s32.totalorder %v3966, %v4365
        %vm4480 = vcmp.lt.s32.totalorder %v3967, %v4365
        %vm4481 = vcmp.lt.s32.totalorder %v3968, %v4365
        %vm4482 = vcmp.lt.s32.totalorder %v3969, %v4365
        %vm4483 = vcmp.lt.s32.totalorder %v3970, %v4365
        %vm4484 = vcmp.lt.s32.totalorder %v3971, %v4365
        %vm4485 = vcmp.lt.s32.totalorder %v3972, %v4365
        %vm4486 = vcmp.lt.s32.totalorder %v3973, %v4365
        %vm4487 = vcmp.lt.s32.totalorder %v3974, %v4365
        %vm4488 = vcmp.lt.s32.totalorder %v3975, %v4365
        %vm4489 = vcmp.lt.s32.totalorder %v3976, %v4365
        %vm4490 = vcmp.lt.s32.totalorder %v3977, %v4365
        %vm4491 = vcmp.lt.s32.totalorder %v3978, %v4365
        %vm4492 = vcmp.lt.s32.totalorder %v3979, %v4365
        %vm4493 = vcmp.lt.s32.totalorder %v3980, %v4365
        %vm4494 = vcmp.lt.s32.totalorder %v3981, %v4365
        %vm4495 = vcmp.lt.s32.totalorder %v3982, %v4365
        %vm4496 = vcmp.lt.s32.totalorder %v3983, %v4365
        %vm4497 = vcmp.lt.s32.totalorder %v3984, %v4365
        %vm4498 = vcmp.lt.s32.totalorder %v3985, %v4365
        %vm4499 = vcmp.lt.s32.totalorder %v3986, %v4365
        %vm4500 = vcmp.lt.s32.totalorder %v3987, %v4365
        %vm4501 = vcmp.lt.s32.totalorder %v3988, %v4365
        %vm4502 = vcmp.lt.s32.totalorder %v3989, %v4365
        %vm4503 = vcmp.lt.s32.totalorder %v3990, %v4365
        %vm4504 = vcmp.lt.s32.totalorder %v3991, %v4365
        %vm4505 = vcmp.lt.s32.totalorder %v3992, %v4365
        %vm4506 = vcmp.lt.s32.totalorder %v3993, %v4365
        %vm4507 = vcmp.lt.s32.totalorder %v3994, %v4365
        %vm4508 = vcmp.lt.s32.totalorder %v3995, %v4365
        %vm4509 = vcmp.lt.s32.totalorder %v3996, %v4365
        %vm4510 = vcmp.lt.s32.totalorder %v3997, %v4365
        %vm4511 = vcmp.lt.s32.totalorder %v3998, %v4365
        %vm4512 = vcmp.lt.s32.totalorder %v3999, %v4365
        %vm4513 = vcmp.lt.s32.totalorder %v4000, %v4365
        %vm4514 = vcmp.lt.s32.totalorder %v4001, %v4365
        %vm4515 = vcmp.lt.s32.totalorder %v4002, %v4365
        %vm4516 = vcmp.lt.s32.totalorder %v4003, %v4365
        %vm4517 = vcmp.lt.s32.totalorder %v4004, %v4365
        %vm4518 = vcmp.lt.s32.totalorder %v4005, %v4365
        %vm4519 = vcmp.lt.s32.totalorder %v4006, %v4365
        %vm4520 = vcmp.lt.s32.totalorder %v4007, %v4365
        %vm4521 = vcmp.lt.s32.totalorder %v4008, %v4365
        %vm4522 = vcmp.lt.s32.totalorder %v4009, %v4365
        %vm4523 = vcmp.lt.s32.totalorder %v4010, %v4365
        %vm4524 = vcmp.lt.s32.totalorder %v4011, %v4365
        %vm4525 = vcmp.lt.s32.totalorder %v4012, %v4365
        %vm4526 = vcmp.lt.s32.totalorder %v4013, %v4365
        %vm4527 = vcmp.lt.s32.totalorder %v4014, %v4365
        %vm4528 = vcmp.lt.s32.totalorder %v4015, %v4365
        %vm4529 = vcmp.lt.s32.totalorder %v4016, %v4365
        %vm4530 = vcmp.lt.s32.totalorder %v4017, %v4365
        %vm4531 = vcmp.lt.s32.totalorder %v4018, %v4365
        %vm4532 = vcmp.lt.s32.totalorder %v4019, %v4365
        %vm4533 = vcmp.lt.s32.totalorder %v4020, %v4365
        %vm4534 = vcmp.lt.s32.totalorder %v4021, %v4365
        %vm4535 = vcmp.lt.s32.totalorder %v4022, %v4365
        %vm4536 = vcmp.lt.s32.totalorder %v4023, %v4365
        %vm4537 = vcmp.lt.s32.totalorder %v4024, %v4365
        %vm4538 = vcmp.lt.s32.totalorder %v4025, %v4365
        %vm4539 = vcmp.lt.s32.totalorder %v4026, %v4365
        %vm4540 = vcmp.lt.s32.totalorder %v4027, %v4365
        %vm4541 = vcmp.lt.s32.totalorder %v4028, %v4365
        %vm4542 = vcmp.lt.s32.totalorder %v4029, %v4365
        %vm4543 = vcmp.lt.s32.totalorder %v4030, %v4365
        %vm4544 = vcmp.lt.s32.totalorder %v4031, %v4365
        %vm4545 = vcmp.lt.s32.totalorder %v4032, %v4365
        %vm4546 = vcmp.lt.s32.totalorder %v4033, %v4365
        %vm4547 = vcmp.lt.s32.totalorder %v4034, %v4365
        %vm4548 = vcmp.lt.s32.totalorder %v4035, %v4365
        %vm4549 = vcmp.lt.s32.totalorder %v4036, %v4365
        %vm4550 = vcmp.lt.s32.totalorder %v4037, %v4365
        %vm4551 = vcmp.lt.s32.totalorder %v4038, %v4365
        %vm4552 = vcmp.lt.s32.totalorder %v4039, %v4365
        %vm4553 = vcmp.lt.s32.totalorder %v4040, %v4365
        %vm4554 = vcmp.lt.s32.totalorder %v4041, %v4365
        %vm4555 = vcmp.lt.s32.totalorder %v4042, %v4365
        %vm4556 = vcmp.lt.s32.totalorder %v4043, %v4365
        %vm4557 = vcmp.lt.s32.totalorder %v4044, %v4365
        %vm4558 = vcmp.lt.s32.totalorder %v4045, %v4365
        %vm4559 = vcmp.lt.s32.totalorder %v4046, %v4365
        %vm4560 = vcmp.lt.s32.totalorder %v4047, %v4365
        %vm4561 = vcmp.lt.s32.totalorder %v4048, %v4365
        %vm4562 = vcmp.lt.s32.totalorder %v4049, %v4365
        %vm4563 = vcmp.lt.s32.totalorder %v4050, %v4365
        %vm4564 = vcmp.lt.s32.totalorder %v4051, %v4365
        %vm4565 = vcmp.lt.s32.totalorder %v4052, %v4365
        %vm4566 = vcmp.lt.s32.totalorder %v4053, %v4365
        %vm4567 = vcmp.lt.s32.totalorder %v4054, %v4365
        %vm4568 = vcmp.lt.s32.totalorder %v4055, %v4365
        %vm4569 = vcmp.lt.s32.totalorder %v4056, %v4365
        %vm4570 = vcmp.lt.s32.totalorder %v4057, %v4365
        %vm4571 = vcmp.lt.s32.totalorder %v4058, %v4365
        %vm4572 = vcmp.lt.s32.totalorder %v4059, %v4365
        %vm4573 = vcmp.lt.s32.totalorder %v4060, %v4365
        %vm4574 = vcmp.lt.s32.totalorder %v4061, %v4365
        %vm4575 = vcmp.lt.s32.totalorder %v4062, %v4365
        %vm4576 = vcmp.lt.s32.totalorder %v4063, %v4365
        %vm4577 = vcmp.lt.s32.totalorder %v4064, %v4365
        %vm4578 = vcmp.lt.s32.totalorder %v4065, %v4365
        %vm4579 = vcmp.lt.s32.totalorder %v4066, %v4365
        %vm4580 = vcmp.lt.s32.totalorder %v4067, %v4365
        %vm4581 = vcmp.lt.s32.totalorder %v4068, %v4365
        %vm4582 = vcmp.lt.s32.totalorder %v4069, %v4365
        %vm4583 = vcmp.lt.s32.totalorder %v4070, %v4365
        %vm4584 = vcmp.lt.s32.totalorder %v4071, %v4365
        %vm4585 = vcmp.lt.s32.totalorder %v4072, %v4365
        %vm4586 = vcmp.lt.s32.totalorder %v4073, %v4365
        %vm4587 = vcmp.lt.s32.totalorder %v4074, %v4365
        %vm4588 = vcmp.lt.s32.totalorder %v4075, %v4365
        %vm4589 = vcmp.lt.s32.totalorder %v4076, %v4365
        %vm4590 = vcmp.lt.s32.totalorder %v4077, %v4365
        %vm4591 = vcmp.lt.s32.totalorder %v4078, %v4365
        %vm4592 = vcmp.lt.s32.totalorder %v4079, %v4365
        %vm4593 = vcmp.lt.s32.totalorder %v4080, %v4365
        %vm4594 = vcmp.lt.s32.totalorder %v4081, %v4365
        %vm4595 = vcmp.lt.s32.totalorder %v4082, %v4365
        %vm4596 = vcmp.lt.s32.totalorder %v4083, %v4365
        %vm4597 = vcmp.lt.s32.totalorder %v4084, %v4365
        %vm4598 = vcmp.lt.s32.totalorder %v4085, %v4365
        %vm4599 = vcmp.lt.s32.totalorder %v4086, %v4365
        %vm4600 = vcmp.lt.s32.totalorder %v4087, %v4365
        %vm4601 = vcmp.lt.s32.totalorder %v4088, %v4365
        %vm4602 = vcmp.lt.s32.totalorder %v4089, %v4365
        %vm4603 = vcmp.lt.s32.totalorder %v4090, %v4365
        %vm4604 = vcmp.lt.s32.totalorder %v4091, %v4365
        %vm4605 = vcmp.lt.s32.totalorder %v4092, %v4365
        %vm4606 = vcmp.lt.s32.totalorder %v4093, %v4365
        %vm4607 = vcmp.lt.s32.totalorder %v4094, %v4365
        %vm4608 = vcmp.lt.s32.totalorder %v4095, %v4365
        %vm4609 = vcmp.lt.s32.totalorder %v4096, %v4365
        %vm4610 = vcmp.lt.s32.totalorder %v4097, %v4365
        %vm4611 = vcmp.lt.s32.totalorder %v4098, %v4365
        %vm4612 = vcmp.lt.s32.totalorder %v4099, %v4365
        %vm4613 = vcmp.lt.s32.totalorder %v4100, %v4365
        %vm4614 = vcmp.lt.s32.totalorder %v4101, %v4365
        %vm4615 = vcmp.lt.s32.totalorder %v4102, %v4365
        %vm4616 = vcmp.lt.s32.totalorder %v4103, %v4365
        %vm4617 = vcmp.lt.s32.totalorder %v4104, %v4365
        %vm4618 = vcmp.lt.s32.totalorder %v4105, %v4365
        %vm4619 = vcmp.lt.s32.totalorder %v4106, %v4365
        %vm4620 = vcmp.lt.s32.totalorder %v4107, %v4365
        %vm4621 = vcmp.lt.s32.totalorder %v4108, %v4365
        %vm4622 = vcmp.lt.s32.totalorder %v4109, %v4365
        %vm4623 = vcmp.lt.s32.totalorder %v4110, %v4365
        %vm4624 = vcmp.lt.s32.totalorder %v4111, %v4365
        %vm4625 = vcmp.lt.s32.totalorder %v4112, %v4365
        %vm4626 = vcmp.lt.s32.totalorder %v4113, %v4365
        %vm4627 = vcmp.lt.s32.totalorder %v4114, %v4365
        %vm4628 = vcmp.lt.s32.totalorder %v4115, %v4365
        %vm4629 = vcmp.lt.s32.totalorder %v4116, %v4365
        %vm4630 = vcmp.lt.s32.totalorder %v4117, %v4365
        %vm4631 = vcmp.lt.s32.totalorder %v4118, %v4365
        %vm4632 = vcmp.lt.s32.totalorder %v4119, %v4365
        %vm4633 = vcmp.lt.s32.totalorder %v4120, %v4365
        %vm4634 = vcmp.lt.s32.totalorder %v4121, %v4365
        %vm4635 = vcmp.lt.s32.totalorder %v4122, %v4365
        %vm4636 = vcmp.lt.s32.totalorder %v4123, %v4365
        %vm4637 = vcmp.lt.s32.totalorder %v4124, %v4365
        %vm4638 = vcmp.lt.s32.totalorder %v4125, %v4365
        %vm4639 = vcmp.lt.s32.totalorder %v4126, %v4365
        %vm4640 = vcmp.lt.s32.totalorder %v4127, %v4365
        %vm4641 = vcmp.lt.s32.totalorder %v4128, %v4365
        %vm4642 = vcmp.lt.s32.totalorder %v4129, %v4365
        %vm4643 = vcmp.lt.s32.totalorder %v4130, %v4365
        %vm4644 = vcmp.lt.s32.totalorder %v4131, %v4365
        %vm4645 = vcmp.lt.s32.totalorder %v4132, %v4365
        %vm4646 = vcmp.lt.s32.totalorder %v4133, %v4365
        %vm4647 = vcmp.lt.s32.totalorder %v4134, %v4365
        %vm4648 = vcmp.lt.s32.totalorder %v4135, %v4365
        %vm4649 = vcmp.lt.s32.totalorder %v4136, %v4365
        %vm4650 = vcmp.lt.s32.totalorder %v4137, %v4365
        %vm4651 = vcmp.lt.s32.totalorder %v4138, %v4365
        %vm4652 = vcmp.lt.s32.totalorder %v4139, %v4365
        %vm4653 = vcmp.lt.s32.totalorder %v4140, %v4365
        %vm4654 = vcmp.lt.s32.totalorder %v4141, %v4365
        %vm4655 = vcmp.lt.s32.totalorder %v4142, %v4365
        %vm4656 = vcmp.lt.s32.totalorder %v4143, %v4365
        %vm4657 = vcmp.lt.s32.totalorder %v4144, %v4365
        %vm4658 = vcmp.lt.s32.totalorder %v4145, %v4365
        %vm4659 = vcmp.lt.s32.totalorder %v4146, %v4365
        %vm4660 = vcmp.lt.s32.totalorder %v4147, %v4365
        %vm4661 = vcmp.lt.s32.totalorder %v4148, %v4365
        %vm4662 = vcmp.lt.s32.totalorder %v4149, %v4365
        %vm4663 = vcmp.lt.s32.totalorder %v4150, %v4365
        %vm4664 = vcmp.lt.s32.totalorder %v4151, %v4365
        %vm4665 = vcmp.lt.s32.totalorder %v4152, %v4365
        %vm4666 = vcmp.lt.s32.totalorder %v4153, %v4365
        %vm4667 = vcmp.lt.s32.totalorder %v4154, %v4365
        %vm4668 = vcmp.lt.s32.totalorder %v4155, %v4365
        %vm4669 = vcmp.lt.s32.totalorder %v4156, %v4365
        %vm4670 = vcmp.lt.s32.totalorder %v4157, %v4365
        %vm4671 = vcmp.lt.s32.totalorder %v4158, %v4365
        %vm4672 = vcmp.lt.s32.totalorder %v4159, %v4365
        %vm4673 = vcmp.lt.s32.totalorder %v4160, %v4365
        %vm4674 = vcmp.lt.s32.totalorder %v4161, %v4365
        %vm4675 = vcmp.lt.s32.totalorder %v4162, %v4365
        %vm4676 = vcmp.lt.s32.totalorder %v4163, %v4365
        %vm4677 = vcmp.lt.s32.totalorder %v4164, %v4365
        %vm4678 = vcmp.lt.s32.totalorder %v4165, %v4365
        %vm4679 = vcmp.lt.s32.totalorder %v4166, %v4365
        %vm4680 = vcmp.lt.s32.totalorder %v4167, %v4365
        %vm4681 = vcmp.lt.s32.totalorder %v4168, %v4365
        %vm4682 = vcmp.lt.s32.totalorder %v4169, %v4365
        %vm4683 = vcmp.lt.s32.totalorder %v4170, %v4365
        %vm4684 = vcmp.lt.s32.totalorder %v4171, %v4365
        %vm4685 = vcmp.lt.s32.totalorder %v4172, %v4365
        %vm4686 = vcmp.lt.s32.totalorder %v4173, %v4365
        %vm4687 = vcmp.lt.s32.totalorder %v4174, %v4365
        %vm4688 = vcmp.lt.s32.totalorder %v4175, %v4365
        %vm4689 = vcmp.lt.s32.totalorder %v4176, %v4365
        %vm4690 = vcmp.lt.s32.totalorder %v4177, %v4365
        %vm4691 = vcmp.lt.s32.totalorder %v4178, %v4365
        %vm4692 = vcmp.lt.s32.totalorder %v4179, %v4365
        %vm4693 = vcmp.lt.s32.totalorder %v4180, %v4365
        %vm4694 = vcmp.lt.s32.totalorder %v4181, %v4365
        %vm4695 = vcmp.lt.s32.totalorder %v4182, %v4365
        %vm4696 = vcmp.lt.s32.totalorder %v4183, %v4365
        %vm4697 = vcmp.lt.s32.totalorder %v4184, %v4365
        %vm4698 = vcmp.lt.s32.totalorder %v4185, %v4365
        %vm4699 = vcmp.lt.s32.totalorder %v4186, %v4365
        %vm4700 = vcmp.lt.s32.totalorder %v4187, %v4365
        %vm4701 = vcmp.lt.s32.totalorder %v4188, %v4365
        %vm4702 = vcmp.lt.s32.totalorder %v4189, %v4365
        %vm4703 = vcmp.lt.s32.totalorder %v4190, %v4365
        %vm4704 = vcmp.lt.s32.totalorder %v4191, %v4365
        %vm4705 = vcmp.lt.s32.totalorder %v4192, %v4365
        %vm4706 = vcmp.lt.s32.totalorder %v4193, %v4365
        %vm4707 = vcmp.lt.s32.totalorder %v4194, %v4365
        %vm4708 = vcmp.lt.s32.totalorder %v4195, %v4365
        %vm4709 = vcmp.lt.s32.totalorder %v4196, %v4365
        %vm4710 = vcmp.lt.s32.totalorder %v4197, %v4365
        %vm4711 = vcmp.lt.s32.totalorder %v4198, %v4365
        %vm4712 = vcmp.lt.s32.totalorder %v4199, %v4365
        %vm4713 = vcmp.lt.s32.totalorder %v4200, %v4365
        %vm4714 = vcmp.lt.s32.totalorder %v4201, %v4365
        %vm4715 = vcmp.lt.s32.totalorder %v4202, %v4365
        %vm4716 = vcmp.lt.s32.totalorder %v4203, %v4365
        %vm4717 = vcmp.lt.s32.totalorder %v4204, %v4365
        %vm4718 = vcmp.lt.s32.totalorder %v4205, %v4365
        %vm4719 = vcmp.lt.s32.totalorder %v4206, %v4365
        %vm4720 = vcmp.lt.s32.totalorder %v4207, %v4365
        %vm4721 = vcmp.lt.s32.totalorder %v4208, %v4365
        %vm4722 = vcmp.lt.s32.totalorder %v4209, %v4365
        %vm4723 = vcmp.lt.s32.totalorder %v4210, %v4365
        %vm4724 = vcmp.lt.s32.totalorder %v4211, %v4365
        %vm4725 = vcmp.lt.s32.totalorder %v4212, %v4365
        %vm4726 = vcmp.lt.s32.totalorder %v4213, %v4365
        %vm4727 = vcmp.lt.s32.totalorder %v4214, %v4365
        %vm4728 = vcmp.lt.s32.totalorder %v4215, %v4365
        %vm4729 = vcmp.lt.s32.totalorder %v4216, %v4365
        %vm4730 = vcmp.lt.s32.totalorder %v4217, %v4365
        %vm4731 = vcmp.lt.s32.totalorder %v4218, %v4365
        %vm4732 = vcmp.lt.s32.totalorder %v4219, %v4365
        %vm4733 = vcmp.lt.s32.totalorder %v4220, %v4365
        %vm4734 = vcmp.lt.s32.totalorder %v4221, %v4365
        %vm4735 = vcmp.lt.s32.totalorder %v4222, %v4365
        %vm4736 = vcmp.lt.s32.totalorder %v4223, %v4365
        %vm4737 = vcmp.lt.s32.totalorder %v4224, %v4365
        %vm4738 = vcmp.lt.s32.totalorder %v4225, %v4365
        %vm4739 = vcmp.lt.s32.totalorder %v4226, %v4365
        %vm4740 = vcmp.lt.s32.totalorder %v4227, %v4365
        %vm4741 = vcmp.lt.s32.totalorder %v4228, %v4365
        %vm4742 = vcmp.lt.s32.totalorder %v4229, %v4365
        %vm4743 = vcmp.lt.s32.totalorder %v4230, %v4365
        %vm4744 = vcmp.lt.s32.totalorder %v4231, %v4365
        %vm4745 = vcmp.lt.s32.totalorder %v4232, %v4365
        %vm4746 = vcmp.lt.s32.totalorder %v4233, %v4365
        %vm4747 = vcmp.lt.s32.totalorder %v4234, %v4365
        %vm4748 = vcmp.lt.s32.totalorder %v4235, %v4365
        %vm4749 = vcmp.lt.s32.totalorder %v4236, %v4365
        %vm4750 = vcmp.lt.s32.totalorder %v4237, %v4365
        %vm4751 = vcmp.lt.s32.totalorder %v4238, %v4365
        %vm4752 = vcmp.lt.s32.totalorder %v4239, %v4365
        %vm4753 = vcmp.lt.s32.totalorder %v4240, %v4365
        %vm4754 = vcmp.lt.s32.totalorder %v4241, %v4365
        %vm4755 = vcmp.lt.s32.totalorder %v4242, %v4365
        %vm4756 = vcmp.lt.s32.totalorder %v4243, %v4365
        %vm4757 = vcmp.lt.s32.totalorder %v4244, %v4365
        %vm4758 = vcmp.lt.s32.totalorder %v4245, %v4365
        %vm4759 = vcmp.lt.s32.totalorder %v4246, %v4365
        %vm4760 = vcmp.lt.s32.totalorder %v4247, %v4365
        %vm4761 = vcmp.lt.s32.totalorder %v4248, %v4365
        %vm4762 = vcmp.lt.s32.totalorder %v4249, %v4365
        %vm4763 = vcmp.lt.s32.totalorder %v4250, %v4365
        %vm4764 = vcmp.lt.s32.totalorder %v4251, %v4365
        %vm4765 = vcmp.lt.s32.totalorder %v4252, %v4365
        %vm4766 = vcmp.lt.s32.totalorder %v4253, %v4365
        %vm4767 = vcmp.lt.s32.totalorder %v4254, %v4365
        %vm4768 = vcmp.lt.s32.totalorder %v4255, %v4365
        %vm4769 = vcmp.lt.s32.totalorder %v4256, %v4365
        %vm4770 = vcmp.lt.s32.totalorder %v4257, %v4365
        %vm4771 = vcmp.lt.s32.totalorder %v4258, %v4365
        %vm4772 = vcmp.lt.s32.totalorder %v4259, %v4365
        %vm4773 = vcmp.lt.s32.totalorder %v4260, %v4365
        %vm4774 = vcmp.lt.s32.totalorder %v4261, %v4365
        %vm4775 = vcmp.lt.s32.totalorder %v4262, %v4365
        %vm4776 = vcmp.lt.s32.totalorder %v4263, %v4365
        %vm4777 = vcmp.lt.s32.totalorder %v4264, %v4365
        %vm4778 = vcmp.lt.s32.totalorder %v4265, %v4365
        %vm4779 = vcmp.lt.s32.totalorder %v4266, %v4365
        %vm4780 = vcmp.lt.s32.totalorder %v4267, %v4365
        %vm4781 = vcmp.lt.s32.totalorder %v4268, %v4365
        %vm4782 = vcmp.lt.s32.totalorder %v4269, %v4365
        %vm4783 = vcmp.lt.s32.totalorder %v4270, %v4365
        %vm4784 = vcmp.lt.s32.totalorder %v4271, %v4365
        %vm4785 = vcmp.lt.s32.totalorder %v4272, %v4365
        %vm4786 = vcmp.lt.s32.totalorder %v4273, %v4365
        %vm4787 = vcmp.lt.s32.totalorder %v4274, %v4365
        %vm4788 = vcmp.lt.s32.totalorder %v4275, %v4365
        %vm4789 = vcmp.lt.s32.totalorder %v4276, %v4365
        %vm4790 = vcmp.lt.s32.totalorder %v4277, %v4365
        %vm4791 = vcmp.lt.s32.totalorder %v4278, %v4365
        %vm4792 = vcmp.lt.s32.totalorder %v4279, %v4365
        %vm4793 = vcmp.lt.s32.totalorder %v4280, %v4365
        %vm4794 = vcmp.lt.s32.totalorder %v4281, %v4365
        %vm4795 = vcmp.lt.s32.totalorder %v4282, %v4365
        %vm4796 = vcmp.lt.s32.totalorder %v4283, %v4365
        %vm4797 = vcmp.lt.s32.totalorder %v4284, %v4365
        %vm4798 = vcmp.lt.s32.totalorder %v4285, %v4365
        %vm4799 = vcmp.lt.s32.totalorder %v4286, %v4365
        %vm4800 = vcmp.lt.s32.totalorder %v4287, %v4365
        %vm4801 = vcmp.lt.s32.totalorder %v4288, %v4365
        %vm4802 = vcmp.lt.s32.totalorder %v4289, %v4365
        %vm4803 = vcmp.lt.s32.totalorder %v4290, %v4365
        %vm4804 = vcmp.lt.s32.totalorder %v4291, %v4365
        %vm4805 = vcmp.lt.s32.totalorder %v4292, %v4365
        %vm4806 = vcmp.lt.s32.totalorder %v4293, %v4365
        %vm4807 = vcmp.lt.s32.totalorder %v4294, %v4365
        %vm4808 = vcmp.lt.s32.totalorder %v4295, %v4365
        %vm4809 = vcmp.lt.s32.totalorder %v4296, %v4365
        %vm4810 = vcmp.lt.s32.totalorder %v4297, %v4365
        %vm4811 = vcmp.lt.s32.totalorder %v4298, %v4365
        %vm4812 = vcmp.lt.s32.totalorder %v4299, %v4365
        %vm4813 = vcmp.lt.s32.totalorder %v4300, %v4365
        %vm4814 = vcmp.lt.s32.totalorder %v4301, %v4365
        %vm4815 = vcmp.lt.s32.totalorder %v4302, %v4365
        %vm4816 = vcmp.lt.s32.totalorder %v4303, %v4365
        %vm4817 = vcmp.lt.s32.totalorder %v4304, %v4365
        %vm4818 = vcmp.lt.s32.totalorder %v4305, %v4365
        %vm4819 = vcmp.lt.s32.totalorder %v4306, %v4365
        %vm4820 = vcmp.lt.s32.totalorder %v4307, %v4365
        %vm4821 = vcmp.lt.s32.totalorder %v4308, %v4365
        %vm4822 = vcmp.lt.s32.totalorder %v4309, %v4365
        %vm4823 = vcmp.lt.s32.totalorder %v4310, %v4365
        %vm4824 = vcmp.lt.s32.totalorder %v4311, %v4365
        %vm4825 = vcmp.lt.s32.totalorder %v4312, %v4365
        %vm4826 = vcmp.lt.s32.totalorder %v4313, %v4365
        %vm4827 = vcmp.lt.s32.totalorder %v4314, %v4365
        %vm4828 = vcmp.lt.s32.totalorder %v4315, %v4365
        %vm4829 = vcmp.lt.s32.totalorder %v4316, %v4365
        %vm4830 = vcmp.lt.s32.totalorder %v4317, %v4365
        %vm4831 = vcmp.lt.s32.totalorder %v4318, %v4365
        %vm4832 = vcmp.lt.s32.totalorder %v4319, %v4365
        %vm4833 = vcmp.lt.s32.totalorder %v4320, %v4365
        %vm4834 = vcmp.lt.s32.totalorder %v4321, %v4365
        %vm4835 = vcmp.lt.s32.totalorder %v4322, %v4365
        %vm4836 = vcmp.lt.s32.totalorder %v4323, %v4365
        %vm4837 = vcmp.lt.s32.totalorder %v4324, %v4365
        %vm4838 = vcmp.lt.s32.totalorder %v4325, %v4365
        %vm4839 = vcmp.lt.s32.totalorder %v4326, %v4365
        %vm4840 = vcmp.lt.s32.totalorder %v4327, %v4365
        %vm4841 = vcmp.lt.s32.totalorder %v4328, %v4365
        %vm4842 = vcmp.lt.s32.totalorder %v4329, %v4365
        %vm4843 = vcmp.lt.s32.totalorder %v4330, %v4365
        %vm4844 = vcmp.lt.s32.totalorder %v4331, %v4365
        %vm4845 = vcmp.lt.s32.totalorder %v4332, %v4365
        %vm4846 = vcmp.lt.s32.totalorder %v4333, %v4365
        %vm4847 = vcmp.lt.s32.totalorder %v4334, %v4365
        %vm4848 = vcmp.lt.s32.totalorder %v4335, %v4365
        %vm4849 = vcmp.lt.s32.totalorder %v4336, %v4365
        %vm4850 = vcmp.lt.s32.totalorder %v4337, %v4365
        %vm4851 = vcmp.lt.s32.totalorder %v4338, %v4365
        %vm4852 = vcmp.lt.s32.totalorder %v4339, %v4365
        %vm4853 = vcmp.lt.s32.totalorder %v4340, %v4365
        %vm4854 = vcmp.lt.s32.totalorder %v4341, %v4365
        %vm4855 = vcmp.lt.s32.totalorder %v4342, %v4365
        %vm4856 = vcmp.lt.s32.totalorder %v4343, %v4365
        %vm4857 = vcmp.lt.s32.totalorder %v4344, %v4365
        %vm4858 = vcmp.lt.s32.totalorder %v4345, %v4365
        %vm4859 = vcmp.lt.s32.totalorder %v4346, %v4365
        %vm4860 = vcmp.lt.s32.totalorder %v4347, %v4365
        %vm4861 = vcmp.lt.s32.totalorder %v4348, %v4365
        %vm4862 = vcmp.lt.s32.totalorder %v4349, %v4365
        %vm4863 = vcmp.lt.s32.totalorder %v4350, %v4365
        %vm4864 = vcmp.lt.s32.totalorder %v4351, %v4365
        %vm4865 = vcmp.lt.s32.totalorder %v4352, %v4365
        %vm4866 = vcmp.lt.s32.totalorder %v4353, %v4365
        %vm4867 = vcmp.lt.s32.totalorder %v4354, %v4365
        %vm4868 = vcmp.lt.s32.totalorder %v4355, %v4365
        %vm4869 = vcmp.lt.s32.totalorder %v4356, %v4365
        %vm4870 = vcmp.lt.s32.totalorder %v4357, %v4365
        %vm4871 = vcmp.lt.s32.totalorder %v4358, %v4365
        %vm4872 = vcmp.lt.s32.totalorder %v4359, %v4365
        %vm4873 = vcmp.lt.s32.totalorder %v4360, %v4365
        %vm4874 = vcmp.lt.s32.totalorder %v4361, %v4365
        %vm4875 = vcmp.lt.s32.totalorder %v4362, %v4365
        %vm4876 = vcmp.lt.s32.totalorder %v4363, %v4365
        %vm4877 = vcmp.lt.s32.totalorder %v4364, %v4365
        %v4878 = vsel %vm4366, 1, 0
        %v4879 = vsel %vm4367, 1, 0
        %v4880 = vsel %vm4368, 1, 0
        %v4881 = vsel %vm4369, 1, 0
        %v4882 = vsel %vm4370, 1, 0
        %v4883 = vsel %vm4371, 1, 0
        %v4884 = vsel %vm4372, 1, 0
        %v4885 = vsel %vm4373, 1, 0
        %v4886 = vsel %vm4374, 1, 0
        %v4887 = vsel %vm4375, 1, 0
        %v4888 = vsel %vm4376, 1, 0
        %v4889 = vsel %vm4377, 1, 0
        %v4890 = vsel %vm4378, 1, 0
        %v4891 = vsel %vm4379, 1, 0
        %v4892 = vsel %vm4380, 1, 0
        %v4893 = vsel %vm4381, 1, 0
        %v4894 = vsel %vm4382, 1, 0
        %v4895 = vsel %vm4383, 1, 0
        %v4896 = vsel %vm4384, 1, 0
        %v4897 = vsel %vm4385, 1, 0
        %v4898 = vsel %vm4386, 1, 0
        %v4899 = vsel %vm4387, 1, 0
        %v4900 = vsel %vm4388, 1, 0
        %v4901 = vsel %vm4389, 1, 0
        %v4902 = vsel %vm4390, 1, 0
        %v4903 = vsel %vm4391, 1, 0
        %v4904 = vsel %vm4392, 1, 0
        %v4905 = vsel %vm4393, 1, 0
        %v4906 = vsel %vm4394, 1, 0
        %v4907 = vsel %vm4395, 1, 0
        %v4908 = vsel %vm4396, 1, 0
        %v4909 = vsel %vm4397, 1, 0
        %v4910 = vsel %vm4398, 1, 0
        %v4911 = vsel %vm4399, 1, 0
        %v4912 = vsel %vm4400, 1, 0
        %v4913 = vsel %vm4401, 1, 0
        %v4914 = vsel %vm4402, 1, 0
        %v4915 = vsel %vm4403, 1, 0
        %v4916 = vsel %vm4404, 1, 0
        %v4917 = vsel %vm4405, 1, 0
        %v4918 = vsel %vm4406, 1, 0
        %v4919 = vsel %vm4407, 1, 0
        %v4920 = vsel %vm4408, 1, 0
        %v4921 = vsel %vm4409, 1, 0
        %v4922 = vsel %vm4410, 1, 0
        %v4923 = vsel %vm4411, 1, 0
        %v4924 = vsel %vm4412, 1, 0
        %v4925 = vsel %vm4413, 1, 0
        %v4926 = vsel %vm4414, 1, 0
        %v4927 = vsel %vm4415, 1, 0
        %v4928 = vsel %vm4416, 1, 0
        %v4929 = vsel %vm4417, 1, 0
        %v4930 = vsel %vm4418, 1, 0
        %v4931 = vsel %vm4419, 1, 0
        %v4932 = vsel %vm4420, 1, 0
        %v4933 = vsel %vm4421, 1, 0
        %v4934 = vsel %vm4422, 1, 0
        %v4935 = vsel %vm4423, 1, 0
        %v4936 = vsel %vm4424, 1, 0
        %v4937 = vsel %vm4425, 1, 0
        %v4938 = vsel %vm4426, 1, 0
        %v4939 = vsel %vm4427, 1, 0
        %v4940 = vsel %vm4428, 1, 0
        %v4941 = vsel %vm4429, 1, 0
        %v4942 = vsel %vm4430, 1, 0
        %v4943 = vsel %vm4431, 1, 0
        %v4944 = vsel %vm4432, 1, 0
        %v4945 = vsel %vm4433, 1, 0
        %v4946 = vsel %vm4434, 1, 0
        %v4947 = vsel %vm4435, 1, 0
        %v4948 = vsel %vm4436, 1, 0
        %v4949 = vsel %vm4437, 1, 0
        %v4950 = vsel %vm4438, 1, 0
        %v4951 = vsel %vm4439, 1, 0
        %v4952 = vsel %vm4440, 1, 0
        %v4953 = vsel %vm4441, 1, 0
        %v4954 = vsel %vm4442, 1, 0
        %v4955 = vsel %vm4443, 1, 0
        %v4956 = vsel %vm4444, 1, 0
        %v4957 = vsel %vm4445, 1, 0
        %v4958 = vsel %vm4446, 1, 0
        %v4959 = vsel %vm4447, 1, 0
        %v4960 = vsel %vm4448, 1, 0
        %v4961 = vsel %vm4449, 1, 0
        %v4962 = vsel %vm4450, 1, 0
        %v4963 = vsel %vm4451, 1, 0
        %v4964 = vsel %vm4452, 1, 0
        %v4965 = vsel %vm4453, 1, 0
        %v4966 = vsel %vm4454, 1, 0
        %v4967 = vsel %vm4455, 1, 0
        %v4968 = vsel %vm4456, 1, 0
        %v4969 = vsel %vm4457, 1, 0
        %v4970 = vsel %vm4458, 1, 0
        %v4971 = vsel %vm4459, 1, 0
        %v4972 = vsel %vm4460, 1, 0
        %v4973 = vsel %vm4461, 1, 0
        %v4974 = vsel %vm4462, 1, 0
        %v4975 = vsel %vm4463, 1, 0
        %v4976 = vsel %vm4464, 1, 0
        %v4977 = vsel %vm4465, 1, 0
        %v4978 = vsel %vm4466, 1, 0
        %v4979 = vsel %vm4467, 1, 0
        %v4980 = vsel %vm4468, 1, 0
        %v4981 = vsel %vm4469, 1, 0
        %v4982 = vsel %vm4470, 1, 0
        %v4983 = vsel %vm4471, 1, 0
        %v4984 = vsel %vm4472, 1, 0
        %v4985 = vsel %vm4473, 1, 0
        %v4986 = vsel %vm4474, 1, 0
        %v4987 = vsel %vm4475, 1, 0
        %v4988 = vsel %vm4476, 1, 0
        %v4989 = vsel %vm4477, 1, 0
        %v4990 = vsel %vm4478, 1, 0
        %v4991 = vsel %vm4479, 1, 0
        %v4992 = vsel %vm4480, 1, 0
        %v4993 = vsel %vm4481, 1, 0
        %v4994 = vsel %vm4482, 1, 0
        %v4995 = vsel %vm4483, 1, 0
        %v4996 = vsel %vm4484, 1, 0
        %v4997 = vsel %vm4485, 1, 0
        %v4998 = vsel %vm4486, 1, 0
        %v4999 = vsel %vm4487, 1, 0
        %v5000 = vsel %vm4488, 1, 0
        %v5001 = vsel %vm4489, 1, 0
        %v5002 = vsel %vm4490, 1, 0
        %v5003 = vsel %vm4491, 1, 0
        %v5004 = vsel %vm4492, 1, 0
        %v5005 = vsel %vm4493, 1, 0
        %v5006 = vsel %vm4494, 1, 0
        %v5007 = vsel %vm4495, 1, 0
        %v5008 = vsel %vm4496, 1, 0
        %v5009 = vsel %vm4497, 1, 0
        %v5010 = vsel %vm4498, 1, 0
        %v5011 = vsel %vm4499, 1, 0
        %v5012 = vsel %vm4500, 1, 0
        %v5013 = vsel %vm4501, 1, 0
        %v5014 = vsel %vm4502, 1, 0
        %v5015 = vsel %vm4503, 1, 0
        %v5016 = vsel %vm4504, 1, 0
        %v5017 = vsel %vm4505, 1, 0
        %v5018 = vsel %vm4506, 1, 0
        %v5019 = vsel %vm4507, 1, 0
        %v5020 = vsel %vm4508, 1, 0
        %v5021 = vsel %vm4509, 1, 0
        %v5022 = vsel %vm4510, 1, 0
        %v5023 = vsel %vm4511, 1, 0
        %v5024 = vsel %vm4512, 1, 0
        %v5025 = vsel %vm4513, 1, 0
        %v5026 = vsel %vm4514, 1, 0
        %v5027 = vsel %vm4515, 1, 0
        %v5028 = vsel %vm4516, 1, 0
        %v5029 = vsel %vm4517, 1, 0
        %v5030 = vsel %vm4518, 1, 0
        %v5031 = vsel %vm4519, 1, 0
        %v5032 = vsel %vm4520, 1, 0
        %v5033 = vsel %vm4521, 1, 0
        %v5034 = vsel %vm4522, 1, 0
        %v5035 = vsel %vm4523, 1, 0
        %v5036 = vsel %vm4524, 1, 0
        %v5037 = vsel %vm4525, 1, 0
        %v5038 = vsel %vm4526, 1, 0
        %v5039 = vsel %vm4527, 1, 0
        %v5040 = vsel %vm4528, 1, 0
        %v5041 = vsel %vm4529, 1, 0
        %v5042 = vsel %vm4530, 1, 0
        %v5043 = vsel %vm4531, 1, 0
        %v5044 = vsel %vm4532, 1, 0
        %v5045 = vsel %vm4533, 1, 0
        %v5046 = vsel %vm4534, 1, 0
        %v5047 = vsel %vm4535, 1, 0
        %v5048 = vsel %vm4536, 1, 0
        %v5049 = vsel %vm4537, 1, 0
        %v5050 = vsel %vm4538, 1, 0
        %v5051 = vsel %vm4539, 1, 0
        %v5052 = vsel %vm4540, 1, 0
        %v5053 = vsel %vm4541, 1, 0
        %v5054 = vsel %vm4542, 1, 0
        %v5055 = vsel %vm4543, 1, 0
        %v5056 = vsel %vm4544, 1, 0
        %v5057 = vsel %vm4545, 1, 0
        %v5058 = vsel %vm4546, 1, 0
        %v5059 = vsel %vm4547, 1, 0
        %v5060 = vsel %vm4548, 1, 0
        %v5061 = vsel %vm4549, 1, 0
        %v5062 = vsel %vm4550, 1, 0
        %v5063 = vsel %vm4551, 1, 0
        %v5064 = vsel %vm4552, 1, 0
        %v5065 = vsel %vm4553, 1, 0
        %v5066 = vsel %vm4554, 1, 0
        %v5067 = vsel %vm4555, 1, 0
        %v5068 = vsel %vm4556, 1, 0
        %v5069 = vsel %vm4557, 1, 0
        %v5070 = vsel %vm4558, 1, 0
        %v5071 = vsel %vm4559, 1, 0
        %v5072 = vsel %vm4560, 1, 0
        %v5073 = vsel %vm4561, 1, 0
        %v5074 = vsel %vm4562, 1, 0
        %v5075 = vsel %vm4563, 1, 0
        %v5076 = vsel %vm4564, 1, 0
        %v5077 = vsel %vm4565, 1, 0
        %v5078 = vsel %vm4566, 1, 0
        %v5079 = vsel %vm4567, 1, 0
        %v5080 = vsel %vm4568, 1, 0
        %v5081 = vsel %vm4569, 1, 0
        %v5082 = vsel %vm4570, 1, 0
        %v5083 = vsel %vm4571, 1, 0
        %v5084 = vsel %vm4572, 1, 0
        %v5085 = vsel %vm4573, 1, 0
        %v5086 = vsel %vm4574, 1, 0
        %v5087 = vsel %vm4575, 1, 0
        %v5088 = vsel %vm4576, 1, 0
        %v5089 = vsel %vm4577, 1, 0
        %v5090 = vsel %vm4578, 1, 0
        %v5091 = vsel %vm4579, 1, 0
        %v5092 = vsel %vm4580, 1, 0
        %v5093 = vsel %vm4581, 1, 0
        %v5094 = vsel %vm4582, 1, 0
        %v5095 = vsel %vm4583, 1, 0
        %v5096 = vsel %vm4584, 1, 0
        %v5097 = vsel %vm4585, 1, 0
        %v5098 = vsel %vm4586, 1, 0
        %v5099 = vsel %vm4587, 1, 0
        %v5100 = vsel %vm4588, 1, 0
        %v5101 = vsel %vm4589, 1, 0
        %v5102 = vsel %vm4590, 1, 0
        %v5103 = vsel %vm4591, 1, 0
        %v5104 = vsel %vm4592, 1, 0
        %v5105 = vsel %vm4593, 1, 0
        %v5106 = vsel %vm4594, 1, 0
        %v5107 = vsel %vm4595, 1, 0
        %v5108 = vsel %vm4596, 1, 0
        %v5109 = vsel %vm4597, 1, 0
        %v5110 = vsel %vm4598, 1, 0
        %v5111 = vsel %vm4599, 1, 0
        %v5112 = vsel %vm4600, 1, 0
        %v5113 = vsel %vm4601, 1, 0
        %v5114 = vsel %vm4602, 1, 0
        %v5115 = vsel %vm4603, 1, 0
        %v5116 = vsel %vm4604, 1, 0
        %v5117 = vsel %vm4605, 1, 0
        %v5118 = vsel %vm4606, 1, 0
        %v5119 = vsel %vm4607, 1, 0
        %v5120 = vsel %vm4608, 1, 0
        %v5121 = vsel %vm4609, 1, 0
        %v5122 = vsel %vm4610, 1, 0
        %v5123 = vsel %vm4611, 1, 0
        %v5124 = vsel %vm4612, 1, 0
        %v5125 = vsel %vm4613, 1, 0
        %v5126 = vsel %vm4614, 1, 0
        %v5127 = vsel %vm4615, 1, 0
        %v5128 = vsel %vm4616, 1, 0
        %v5129 = vsel %vm4617, 1, 0
        %v5130 = vsel %vm4618, 1, 0
        %v5131 = vsel %vm4619, 1, 0
        %v5132 = vsel %vm4620, 1, 0
        %v5133 = vsel %vm4621, 1, 0
        %v5134 = vsel %vm4622, 1, 0
        %v5135 = vsel %vm4623, 1, 0
        %v5136 = vsel %vm4624, 1, 0
        %v5137 = vsel %vm4625, 1, 0
        %v5138 = vsel %vm4626, 1, 0
        %v5139 = vsel %vm4627, 1, 0
        %v5140 = vsel %vm4628, 1, 0
        %v5141 = vsel %vm4629, 1, 0
        %v5142 = vsel %vm4630, 1, 0
        %v5143 = vsel %vm4631, 1, 0
        %v5144 = vsel %vm4632, 1, 0
        %v5145 = vsel %vm4633, 1, 0
        %v5146 = vsel %vm4634, 1, 0
        %v5147 = vsel %vm4635, 1, 0
        %v5148 = vsel %vm4636, 1, 0
        %v5149 = vsel %vm4637, 1, 0
        %v5150 = vsel %vm4638, 1, 0
        %v5151 = vsel %vm4639, 1, 0
        %v5152 = vsel %vm4640, 1, 0
        %v5153 = vsel %vm4641, 1, 0
        %v5154 = vsel %vm4642, 1, 0
        %v5155 = vsel %vm4643, 1, 0
        %v5156 = vsel %vm4644, 1, 0
        %v5157 = vsel %vm4645, 1, 0
        %v5158 = vsel %vm4646, 1, 0
        %v5159 = vsel %vm4647, 1, 0
        %v5160 = vsel %vm4648, 1, 0
        %v5161 = vsel %vm4649, 1, 0
        %v5162 = vsel %vm4650, 1, 0
        %v5163 = vsel %vm4651, 1, 0
        %v5164 = vsel %vm4652, 1, 0
        %v5165 = vsel %vm4653, 1, 0
        %v5166 = vsel %vm4654, 1, 0
        %v5167 = vsel %vm4655, 1, 0
        %v5168 = vsel %vm4656, 1, 0
        %v5169 = vsel %vm4657, 1, 0
        %v5170 = vsel %vm4658, 1, 0
        %v5171 = vsel %vm4659, 1, 0
        %v5172 = vsel %vm4660, 1, 0
        %v5173 = vsel %vm4661, 1, 0
        %v5174 = vsel %vm4662, 1, 0
        %v5175 = vsel %vm4663, 1, 0
        %v5176 = vsel %vm4664, 1, 0
        %v5177 = vsel %vm4665, 1, 0
        %v5178 = vsel %vm4666, 1, 0
        %v5179 = vsel %vm4667, 1, 0
        %v5180 = vsel %vm4668, 1, 0
        %v5181 = vsel %vm4669, 1, 0
        %v5182 = vsel %vm4670, 1, 0
        %v5183 = vsel %vm4671, 1, 0
        %v5184 = vsel %vm4672, 1, 0
        %v5185 = vsel %vm4673, 1, 0
        %v5186 = vsel %vm4674, 1, 0
        %v5187 = vsel %vm4675, 1, 0
        %v5188 = vsel %vm4676, 1, 0
        %v5189 = vsel %vm4677, 1, 0
        %v5190 = vsel %vm4678, 1, 0
        %v5191 = vsel %vm4679, 1, 0
        %v5192 = vsel %vm4680, 1, 0
        %v5193 = vsel %vm4681, 1, 0
        %v5194 = vsel %vm4682, 1, 0
        %v5195 = vsel %vm4683, 1, 0
        %v5196 = vsel %vm4684, 1, 0
        %v5197 = vsel %vm4685, 1, 0
        %v5198 = vsel %vm4686, 1, 0
        %v5199 = vsel %vm4687, 1, 0
        %v5200 = vsel %vm4688, 1, 0
        %v5201 = vsel %vm4689, 1, 0
        %v5202 = vsel %vm4690, 1, 0
        %v5203 = vsel %vm4691, 1, 0
        %v5204 = vsel %vm4692, 1, 0
        %v5205 = vsel %vm4693, 1, 0
        %v5206 = vsel %vm4694, 1, 0
        %v5207 = vsel %vm4695, 1, 0
        %v5208 = vsel %vm4696, 1, 0
        %v5209 = vsel %vm4697, 1, 0
        %v5210 = vsel %vm4698, 1, 0
        %v5211 = vsel %vm4699, 1, 0
        %v5212 = vsel %vm4700, 1, 0
        %v5213 = vsel %vm4701, 1, 0
        %v5214 = vsel %vm4702, 1, 0
        %v5215 = vsel %vm4703, 1, 0
        %v5216 = vsel %vm4704, 1, 0
        %v5217 = vsel %vm4705, 1, 0
        %v5218 = vsel %vm4706, 1, 0
        %v5219 = vsel %vm4707, 1, 0
        %v5220 = vsel %vm4708, 1, 0
        %v5221 = vsel %vm4709, 1, 0
        %v5222 = vsel %vm4710, 1, 0
        %v5223 = vsel %vm4711, 1, 0
        %v5224 = vsel %vm4712, 1, 0
        %v5225 = vsel %vm4713, 1, 0
        %v5226 = vsel %vm4714, 1, 0
        %v5227 = vsel %vm4715, 1, 0
        %v5228 = vsel %vm4716, 1, 0
        %v5229 = vsel %vm4717, 1, 0
        %v5230 = vsel %vm4718, 1, 0
        %v5231 = vsel %vm4719, 1, 0
        %v5232 = vsel %vm4720, 1, 0
        %v5233 = vsel %vm4721, 1, 0
        %v5234 = vsel %vm4722, 1, 0
        %v5235 = vsel %vm4723, 1, 0
        %v5236 = vsel %vm4724, 1, 0
        %v5237 = vsel %vm4725, 1, 0
        %v5238 = vsel %vm4726, 1, 0
        %v5239 = vsel %vm4727, 1, 0
        %v5240 = vsel %vm4728, 1, 0
        %v5241 = vsel %vm4729, 1, 0
        %v5242 = vsel %vm4730, 1, 0
        %v5243 = vsel %vm4731, 1, 0
        %v5244 = vsel %vm4732, 1, 0
        %v5245 = vsel %vm4733, 1, 0
        %v5246 = vsel %vm4734, 1, 0
        %v5247 = vsel %vm4735, 1, 0
        %v5248 = vsel %vm4736, 1, 0
        %v5249 = vsel %vm4737, 1, 0
        %v5250 = vsel %vm4738, 1, 0
        %v5251 = vsel %vm4739, 1, 0
        %v5252 = vsel %vm4740, 1, 0
        %v5253 = vsel %vm4741, 1, 0
        %v5254 = vsel %vm4742, 1, 0
        %v5255 = vsel %vm4743, 1, 0
        %v5256 = vsel %vm4744, 1, 0
        %v5257 = vsel %vm4745, 1, 0
        %v5258 = vsel %vm4746, 1, 0
        %v5259 = vsel %vm4747, 1, 0
        %v5260 = vsel %vm4748, 1, 0
        %v5261 = vsel %vm4749, 1, 0
        %v5262 = vsel %vm4750, 1, 0
        %v5263 = vsel %vm4751, 1, 0
        %v5264 = vsel %vm4752, 1, 0
        %v5265 = vsel %vm4753, 1, 0
        %v5266 = vsel %vm4754, 1, 0
        %v5267 = vsel %vm4755, 1, 0
        %v5268 = vsel %vm4756, 1, 0
        %v5269 = vsel %vm4757, 1, 0
        %v5270 = vsel %vm4758, 1, 0
        %v5271 = vsel %vm4759, 1, 0
        %v5272 = vsel %vm4760, 1, 0
        %v5273 = vsel %vm4761, 1, 0
        %v5274 = vsel %vm4762, 1, 0
        %v5275 = vsel %vm4763, 1, 0
        %v5276 = vsel %vm4764, 1, 0
        %v5277 = vsel %vm4765, 1, 0
        %v5278 = vsel %vm4766, 1, 0
        %v5279 = vsel %vm4767, 1, 0
        %v5280 = vsel %vm4768, 1, 0
        %v5281 = vsel %vm4769, 1, 0
        %v5282 = vsel %vm4770, 1, 0
        %v5283 = vsel %vm4771, 1, 0
        %v5284 = vsel %vm4772, 1, 0
        %v5285 = vsel %vm4773, 1, 0
        %v5286 = vsel %vm4774, 1, 0
        %v5287 = vsel %vm4775, 1, 0
        %v5288 = vsel %vm4776, 1, 0
        %v5289 = vsel %vm4777, 1, 0
        %v5290 = vsel %vm4778, 1, 0
        %v5291 = vsel %vm4779, 1, 0
        %v5292 = vsel %vm4780, 1, 0
        %v5293 = vsel %vm4781, 1, 0
        %v5294 = vsel %vm4782, 1, 0
        %v5295 = vsel %vm4783, 1, 0
        %v5296 = vsel %vm4784, 1, 0
        %v5297 = vsel %vm4785, 1, 0
        %v5298 = vsel %vm4786, 1, 0
        %v5299 = vsel %vm4787, 1, 0
        %v5300 = vsel %vm4788, 1, 0
        %v5301 = vsel %vm4789, 1, 0
        %v5302 = vsel %vm4790, 1, 0
        %v5303 = vsel %vm4791, 1, 0
        %v5304 = vsel %vm4792, 1, 0
        %v5305 = vsel %vm4793, 1, 0
        %v5306 = vsel %vm4794, 1, 0
        %v5307 = vsel %vm4795, 1, 0
        %v5308 = vsel %vm4796, 1, 0
        %v5309 = vsel %vm4797, 1, 0
        %v5310 = vsel %vm4798, 1, 0
        %v5311 = vsel %vm4799, 1, 0
        %v5312 = vsel %vm4800, 1, 0
        %v5313 = vsel %vm4801, 1, 0
        %v5314 = vsel %vm4802, 1, 0
        %v5315 = vsel %vm4803, 1, 0
        %v5316 = vsel %vm4804, 1, 0
        %v5317 = vsel %vm4805, 1, 0
        %v5318 = vsel %vm4806, 1, 0
        %v5319 = vsel %vm4807, 1, 0
        %v5320 = vsel %vm4808, 1, 0
        %v5321 = vsel %vm4809, 1, 0
        %v5322 = vsel %vm4810, 1, 0
        %v5323 = vsel %vm4811, 1, 0
        %v5324 = vsel %vm4812, 1, 0
        %v5325 = vsel %vm4813, 1, 0
        %v5326 = vsel %vm4814, 1, 0
        %v5327 = vsel %vm4815, 1, 0
        %v5328 = vsel %vm4816, 1, 0
        %v5329 = vsel %vm4817, 1, 0
        %v5330 = vsel %vm4818, 1, 0
        %v5331 = vsel %vm4819, 1, 0
        %v5332 = vsel %vm4820, 1, 0
        %v5333 = vsel %vm4821, 1, 0
        %v5334 = vsel %vm4822, 1, 0
        %v5335 = vsel %vm4823, 1, 0
        %v5336 = vsel %vm4824, 1, 0
        %v5337 = vsel %vm4825, 1, 0
        %v5338 = vsel %vm4826, 1, 0
        %v5339 = vsel %vm4827, 1, 0
        %v5340 = vsel %vm4828, 1, 0
        %v5341 = vsel %vm4829, 1, 0
        %v5342 = vsel %vm4830, 1, 0
        %v5343 = vsel %vm4831, 1, 0
        %v5344 = vsel %vm4832, 1, 0
        %v5345 = vsel %vm4833, 1, 0
        %v5346 = vsel %vm4834, 1, 0
        %v5347 = vsel %vm4835, 1, 0
        %v5348 = vsel %vm4836, 1, 0
        %v5349 = vsel %vm4837, 1, 0
        %v5350 = vsel %vm4838, 1, 0
        %v5351 = vsel %vm4839, 1, 0
        %v5352 = vsel %vm4840, 1, 0
        %v5353 = vsel %vm4841, 1, 0
        %v5354 = vsel %vm4842, 1, 0
        %v5355 = vsel %vm4843, 1, 0
        %v5356 = vsel %vm4844, 1, 0
        %v5357 = vsel %vm4845, 1, 0
        %v5358 = vsel %vm4846, 1, 0
        %v5359 = vsel %vm4847, 1, 0
        %v5360 = vsel %vm4848, 1, 0
        %v5361 = vsel %vm4849, 1, 0
        %v5362 = vsel %vm4850, 1, 0
        %v5363 = vsel %vm4851, 1, 0
        %v5364 = vsel %vm4852, 1, 0
        %v5365 = vsel %vm4853, 1, 0
        %v5366 = vsel %vm4854, 1, 0
        %v5367 = vsel %vm4855, 1, 0
        %v5368 = vsel %vm4856, 1, 0
        %v5369 = vsel %vm4857, 1, 0
        %v5370 = vsel %vm4858, 1, 0
        %v5371 = vsel %vm4859, 1, 0
        %v5372 = vsel %vm4860, 1, 0
        %v5373 = vsel %vm4861, 1, 0
        %v5374 = vsel %vm4862, 1, 0
        %v5375 = vsel %vm4863, 1, 0
        %v5376 = vsel %vm4864, 1, 0
        %v5377 = vsel %vm4865, 1, 0
        %v5378 = vsel %vm4866, 1, 0
        %v5379 = vsel %vm4867, 1, 0
        %v5380 = vsel %vm4868, 1, 0
        %v5381 = vsel %vm4869, 1, 0
        %v5382 = vsel %vm4870, 1, 0
        %v5383 = vsel %vm4871, 1, 0
        %v5384 = vsel %vm4872, 1, 0
        %v5385 = vsel %vm4873, 1, 0
        %v5386 = vsel %vm4874, 1, 0
        %v5387 = vsel %vm4875, 1, 0
        %v5388 = vsel %vm4876, 1, 0
        %v5389 = vsel %vm4877, 1, 0
        %vm5390 = vcmp.eq.s32.totalorder %v4878, 1
        %vm5391 = vcmp.eq.s32.totalorder %v4879, 1
        %vm5392 = vcmp.eq.s32.totalorder %v4880, 1
        %vm5393 = vcmp.eq.s32.totalorder %v4881, 1
        %vm5394 = vcmp.eq.s32.totalorder %v4882, 1
        %vm5395 = vcmp.eq.s32.totalorder %v4883, 1
        %vm5396 = vcmp.eq.s32.totalorder %v4884, 1
        %vm5397 = vcmp.eq.s32.totalorder %v4885, 1
        %vm5398 = vcmp.eq.s32.totalorder %v4886, 1
        %vm5399 = vcmp.eq.s32.totalorder %v4887, 1
        %vm5400 = vcmp.eq.s32.totalorder %v4888, 1
        %vm5401 = vcmp.eq.s32.totalorder %v4889, 1
        %vm5402 = vcmp.eq.s32.totalorder %v4890, 1
        %vm5403 = vcmp.eq.s32.totalorder %v4891, 1
        %vm5404 = vcmp.eq.s32.totalorder %v4892, 1
        %vm5405 = vcmp.eq.s32.totalorder %v4893, 1
        %vm5406 = vcmp.eq.s32.totalorder %v4894, 1
        %vm5407 = vcmp.eq.s32.totalorder %v4895, 1
        %vm5408 = vcmp.eq.s32.totalorder %v4896, 1
        %vm5409 = vcmp.eq.s32.totalorder %v4897, 1
        %vm5410 = vcmp.eq.s32.totalorder %v4898, 1
        %vm5411 = vcmp.eq.s32.totalorder %v4899, 1
        %vm5412 = vcmp.eq.s32.totalorder %v4900, 1
        %vm5413 = vcmp.eq.s32.totalorder %v4901, 1
        %vm5414 = vcmp.eq.s32.totalorder %v4902, 1
        %vm5415 = vcmp.eq.s32.totalorder %v4903, 1
        %vm5416 = vcmp.eq.s32.totalorder %v4904, 1
        %vm5417 = vcmp.eq.s32.totalorder %v4905, 1
        %vm5418 = vcmp.eq.s32.totalorder %v4906, 1
        %vm5419 = vcmp.eq.s32.totalorder %v4907, 1
        %vm5420 = vcmp.eq.s32.totalorder %v4908, 1
        %vm5421 = vcmp.eq.s32.totalorder %v4909, 1
        %vm5422 = vcmp.eq.s32.totalorder %v4910, 1
        %vm5423 = vcmp.eq.s32.totalorder %v4911, 1
        %vm5424 = vcmp.eq.s32.totalorder %v4912, 1
        %vm5425 = vcmp.eq.s32.totalorder %v4913, 1
        %vm5426 = vcmp.eq.s32.totalorder %v4914, 1
        %vm5427 = vcmp.eq.s32.totalorder %v4915, 1
        %vm5428 = vcmp.eq.s32.totalorder %v4916, 1
        %vm5429 = vcmp.eq.s32.totalorder %v4917, 1
        %vm5430 = vcmp.eq.s32.totalorder %v4918, 1
        %vm5431 = vcmp.eq.s32.totalorder %v4919, 1
        %vm5432 = vcmp.eq.s32.totalorder %v4920, 1
        %vm5433 = vcmp.eq.s32.totalorder %v4921, 1
        %vm5434 = vcmp.eq.s32.totalorder %v4922, 1
        %vm5435 = vcmp.eq.s32.totalorder %v4923, 1
        %vm5436 = vcmp.eq.s32.totalorder %v4924, 1
        %vm5437 = vcmp.eq.s32.totalorder %v4925, 1
        %vm5438 = vcmp.eq.s32.totalorder %v4926, 1
        %vm5439 = vcmp.eq.s32.totalorder %v4927, 1
        %vm5440 = vcmp.eq.s32.totalorder %v4928, 1
        %vm5441 = vcmp.eq.s32.totalorder %v4929, 1
        %vm5442 = vcmp.eq.s32.totalorder %v4930, 1
        %vm5443 = vcmp.eq.s32.totalorder %v4931, 1
        %vm5444 = vcmp.eq.s32.totalorder %v4932, 1
        %vm5445 = vcmp.eq.s32.totalorder %v4933, 1
        %vm5446 = vcmp.eq.s32.totalorder %v4934, 1
        %vm5447 = vcmp.eq.s32.totalorder %v4935, 1
        %vm5448 = vcmp.eq.s32.totalorder %v4936, 1
        %vm5449 = vcmp.eq.s32.totalorder %v4937, 1
        %vm5450 = vcmp.eq.s32.totalorder %v4938, 1
        %vm5451 = vcmp.eq.s32.totalorder %v4939, 1
        %vm5452 = vcmp.eq.s32.totalorder %v4940, 1
        %vm5453 = vcmp.eq.s32.totalorder %v4941, 1
        %vm5454 = vcmp.eq.s32.totalorder %v4942, 1
        %vm5455 = vcmp.eq.s32.totalorder %v4943, 1
        %vm5456 = vcmp.eq.s32.totalorder %v4944, 1
        %vm5457 = vcmp.eq.s32.totalorder %v4945, 1
        %vm5458 = vcmp.eq.s32.totalorder %v4946, 1
        %vm5459 = vcmp.eq.s32.totalorder %v4947, 1
        %vm5460 = vcmp.eq.s32.totalorder %v4948, 1
        %vm5461 = vcmp.eq.s32.totalorder %v4949, 1
        %vm5462 = vcmp.eq.s32.totalorder %v4950, 1
        %vm5463 = vcmp.eq.s32.totalorder %v4951, 1
        %vm5464 = vcmp.eq.s32.totalorder %v4952, 1
        %vm5465 = vcmp.eq.s32.totalorder %v4953, 1
        %vm5466 = vcmp.eq.s32.totalorder %v4954, 1
        %vm5467 = vcmp.eq.s32.totalorder %v4955, 1
        %vm5468 = vcmp.eq.s32.totalorder %v4956, 1
        %vm5469 = vcmp.eq.s32.totalorder %v4957, 1
        %vm5470 = vcmp.eq.s32.totalorder %v4958, 1
        %vm5471 = vcmp.eq.s32.totalorder %v4959, 1
        %vm5472 = vcmp.eq.s32.totalorder %v4960, 1
        %vm5473 = vcmp.eq.s32.totalorder %v4961, 1
        %vm5474 = vcmp.eq.s32.totalorder %v4962, 1
        %vm5475 = vcmp.eq.s32.totalorder %v4963, 1
        %vm5476 = vcmp.eq.s32.totalorder %v4964, 1
        %vm5477 = vcmp.eq.s32.totalorder %v4965, 1
        %vm5478 = vcmp.eq.s32.totalorder %v4966, 1
        %vm5479 = vcmp.eq.s32.totalorder %v4967, 1
        %vm5480 = vcmp.eq.s32.totalorder %v4968, 1
        %vm5481 = vcmp.eq.s32.totalorder %v4969, 1
        %vm5482 = vcmp.eq.s32.totalorder %v4970, 1
        %vm5483 = vcmp.eq.s32.totalorder %v4971, 1
        %vm5484 = vcmp.eq.s32.totalorder %v4972, 1
        %vm5485 = vcmp.eq.s32.totalorder %v4973, 1
        %vm5486 = vcmp.eq.s32.totalorder %v4974, 1
        %vm5487 = vcmp.eq.s32.totalorder %v4975, 1
        %vm5488 = vcmp.eq.s32.totalorder %v4976, 1
        %vm5489 = vcmp.eq.s32.totalorder %v4977, 1
        %vm5490 = vcmp.eq.s32.totalorder %v4978, 1
        %vm5491 = vcmp.eq.s32.totalorder %v4979, 1
        %vm5492 = vcmp.eq.s32.totalorder %v4980, 1
        %vm5493 = vcmp.eq.s32.totalorder %v4981, 1
        %vm5494 = vcmp.eq.s32.totalorder %v4982, 1
        %vm5495 = vcmp.eq.s32.totalorder %v4983, 1
        %vm5496 = vcmp.eq.s32.totalorder %v4984, 1
        %vm5497 = vcmp.eq.s32.totalorder %v4985, 1
        %vm5498 = vcmp.eq.s32.totalorder %v4986, 1
        %vm5499 = vcmp.eq.s32.totalorder %v4987, 1
        %vm5500 = vcmp.eq.s32.totalorder %v4988, 1
        %vm5501 = vcmp.eq.s32.totalorder %v4989, 1
        %vm5502 = vcmp.eq.s32.totalorder %v4990, 1
        %vm5503 = vcmp.eq.s32.totalorder %v4991, 1
        %vm5504 = vcmp.eq.s32.totalorder %v4992, 1
        %vm5505 = vcmp.eq.s32.totalorder %v4993, 1
        %vm5506 = vcmp.eq.s32.totalorder %v4994, 1
        %vm5507 = vcmp.eq.s32.totalorder %v4995, 1
        %vm5508 = vcmp.eq.s32.totalorder %v4996, 1
        %vm5509 = vcmp.eq.s32.totalorder %v4997, 1
        %vm5510 = vcmp.eq.s32.totalorder %v4998, 1
        %vm5511 = vcmp.eq.s32.totalorder %v4999, 1
        %vm5512 = vcmp.eq.s32.totalorder %v5000, 1
        %vm5513 = vcmp.eq.s32.totalorder %v5001, 1
        %vm5514 = vcmp.eq.s32.totalorder %v5002, 1
        %vm5515 = vcmp.eq.s32.totalorder %v5003, 1
        %vm5516 = vcmp.eq.s32.totalorder %v5004, 1
        %vm5517 = vcmp.eq.s32.totalorder %v5005, 1
        %vm5518 = vcmp.eq.s32.totalorder %v5006, 1
        %vm5519 = vcmp.eq.s32.totalorder %v5007, 1
        %vm5520 = vcmp.eq.s32.totalorder %v5008, 1
        %vm5521 = vcmp.eq.s32.totalorder %v5009, 1
        %vm5522 = vcmp.eq.s32.totalorder %v5010, 1
        %vm5523 = vcmp.eq.s32.totalorder %v5011, 1
        %vm5524 = vcmp.eq.s32.totalorder %v5012, 1
        %vm5525 = vcmp.eq.s32.totalorder %v5013, 1
        %vm5526 = vcmp.eq.s32.totalorder %v5014, 1
        %vm5527 = vcmp.eq.s32.totalorder %v5015, 1
        %vm5528 = vcmp.eq.s32.totalorder %v5016, 1
        %vm5529 = vcmp.eq.s32.totalorder %v5017, 1
        %vm5530 = vcmp.eq.s32.totalorder %v5018, 1
        %vm5531 = vcmp.eq.s32.totalorder %v5019, 1
        %vm5532 = vcmp.eq.s32.totalorder %v5020, 1
        %vm5533 = vcmp.eq.s32.totalorder %v5021, 1
        %vm5534 = vcmp.eq.s32.totalorder %v5022, 1
        %vm5535 = vcmp.eq.s32.totalorder %v5023, 1
        %vm5536 = vcmp.eq.s32.totalorder %v5024, 1
        %vm5537 = vcmp.eq.s32.totalorder %v5025, 1
        %vm5538 = vcmp.eq.s32.totalorder %v5026, 1
        %vm5539 = vcmp.eq.s32.totalorder %v5027, 1
        %vm5540 = vcmp.eq.s32.totalorder %v5028, 1
        %vm5541 = vcmp.eq.s32.totalorder %v5029, 1
        %vm5542 = vcmp.eq.s32.totalorder %v5030, 1
        %vm5543 = vcmp.eq.s32.totalorder %v5031, 1
        %vm5544 = vcmp.eq.s32.totalorder %v5032, 1
        %vm5545 = vcmp.eq.s32.totalorder %v5033, 1
        %vm5546 = vcmp.eq.s32.totalorder %v5034, 1
        %vm5547 = vcmp.eq.s32.totalorder %v5035, 1
        %vm5548 = vcmp.eq.s32.totalorder %v5036, 1
        %vm5549 = vcmp.eq.s32.totalorder %v5037, 1
        %vm5550 = vcmp.eq.s32.totalorder %v5038, 1
        %vm5551 = vcmp.eq.s32.totalorder %v5039, 1
        %vm5552 = vcmp.eq.s32.totalorder %v5040, 1
        %vm5553 = vcmp.eq.s32.totalorder %v5041, 1
        %vm5554 = vcmp.eq.s32.totalorder %v5042, 1
        %vm5555 = vcmp.eq.s32.totalorder %v5043, 1
        %vm5556 = vcmp.eq.s32.totalorder %v5044, 1
        %vm5557 = vcmp.eq.s32.totalorder %v5045, 1
        %vm5558 = vcmp.eq.s32.totalorder %v5046, 1
        %vm5559 = vcmp.eq.s32.totalorder %v5047, 1
        %vm5560 = vcmp.eq.s32.totalorder %v5048, 1
        %vm5561 = vcmp.eq.s32.totalorder %v5049, 1
        %vm5562 = vcmp.eq.s32.totalorder %v5050, 1
        %vm5563 = vcmp.eq.s32.totalorder %v5051, 1
        %vm5564 = vcmp.eq.s32.totalorder %v5052, 1
        %vm5565 = vcmp.eq.s32.totalorder %v5053, 1
        %vm5566 = vcmp.eq.s32.totalorder %v5054, 1
        %vm5567 = vcmp.eq.s32.totalorder %v5055, 1
        %vm5568 = vcmp.eq.s32.totalorder %v5056, 1
        %vm5569 = vcmp.eq.s32.totalorder %v5057, 1
        %vm5570 = vcmp.eq.s32.totalorder %v5058, 1
        %vm5571 = vcmp.eq.s32.totalorder %v5059, 1
        %vm5572 = vcmp.eq.s32.totalorder %v5060, 1
        %vm5573 = vcmp.eq.s32.totalorder %v5061, 1
        %vm5574 = vcmp.eq.s32.totalorder %v5062, 1
        %vm5575 = vcmp.eq.s32.totalorder %v5063, 1
        %vm5576 = vcmp.eq.s32.totalorder %v5064, 1
        %vm5577 = vcmp.eq.s32.totalorder %v5065, 1
        %vm5578 = vcmp.eq.s32.totalorder %v5066, 1
        %vm5579 = vcmp.eq.s32.totalorder %v5067, 1
        %vm5580 = vcmp.eq.s32.totalorder %v5068, 1
        %vm5581 = vcmp.eq.s32.totalorder %v5069, 1
        %vm5582 = vcmp.eq.s32.totalorder %v5070, 1
        %vm5583 = vcmp.eq.s32.totalorder %v5071, 1
        %vm5584 = vcmp.eq.s32.totalorder %v5072, 1
        %vm5585 = vcmp.eq.s32.totalorder %v5073, 1
        %vm5586 = vcmp.eq.s32.totalorder %v5074, 1
        %vm5587 = vcmp.eq.s32.totalorder %v5075, 1
        %vm5588 = vcmp.eq.s32.totalorder %v5076, 1
        %vm5589 = vcmp.eq.s32.totalorder %v5077, 1
        %vm5590 = vcmp.eq.s32.totalorder %v5078, 1
        %vm5591 = vcmp.eq.s32.totalorder %v5079, 1
        %vm5592 = vcmp.eq.s32.totalorder %v5080, 1
        %vm5593 = vcmp.eq.s32.totalorder %v5081, 1
        %vm5594 = vcmp.eq.s32.totalorder %v5082, 1
        %vm5595 = vcmp.eq.s32.totalorder %v5083, 1
        %vm5596 = vcmp.eq.s32.totalorder %v5084, 1
        %vm5597 = vcmp.eq.s32.totalorder %v5085, 1
        %vm5598 = vcmp.eq.s32.totalorder %v5086, 1
        %vm5599 = vcmp.eq.s32.totalorder %v5087, 1
        %vm5600 = vcmp.eq.s32.totalorder %v5088, 1
        %vm5601 = vcmp.eq.s32.totalorder %v5089, 1
        %vm5602 = vcmp.eq.s32.totalorder %v5090, 1
        %vm5603 = vcmp.eq.s32.totalorder %v5091, 1
        %vm5604 = vcmp.eq.s32.totalorder %v5092, 1
        %vm5605 = vcmp.eq.s32.totalorder %v5093, 1
        %vm5606 = vcmp.eq.s32.totalorder %v5094, 1
        %vm5607 = vcmp.eq.s32.totalorder %v5095, 1
        %vm5608 = vcmp.eq.s32.totalorder %v5096, 1
        %vm5609 = vcmp.eq.s32.totalorder %v5097, 1
        %vm5610 = vcmp.eq.s32.totalorder %v5098, 1
        %vm5611 = vcmp.eq.s32.totalorder %v5099, 1
        %vm5612 = vcmp.eq.s32.totalorder %v5100, 1
        %vm5613 = vcmp.eq.s32.totalorder %v5101, 1
        %vm5614 = vcmp.eq.s32.totalorder %v5102, 1
        %vm5615 = vcmp.eq.s32.totalorder %v5103, 1
        %vm5616 = vcmp.eq.s32.totalorder %v5104, 1
        %vm5617 = vcmp.eq.s32.totalorder %v5105, 1
        %vm5618 = vcmp.eq.s32.totalorder %v5106, 1
        %vm5619 = vcmp.eq.s32.totalorder %v5107, 1
        %vm5620 = vcmp.eq.s32.totalorder %v5108, 1
        %vm5621 = vcmp.eq.s32.totalorder %v5109, 1
        %vm5622 = vcmp.eq.s32.totalorder %v5110, 1
        %vm5623 = vcmp.eq.s32.totalorder %v5111, 1
        %vm5624 = vcmp.eq.s32.totalorder %v5112, 1
        %vm5625 = vcmp.eq.s32.totalorder %v5113, 1
        %vm5626 = vcmp.eq.s32.totalorder %v5114, 1
        %vm5627 = vcmp.eq.s32.totalorder %v5115, 1
        %vm5628 = vcmp.eq.s32.totalorder %v5116, 1
        %vm5629 = vcmp.eq.s32.totalorder %v5117, 1
        %vm5630 = vcmp.eq.s32.totalorder %v5118, 1
        %vm5631 = vcmp.eq.s32.totalorder %v5119, 1
        %vm5632 = vcmp.eq.s32.totalorder %v5120, 1
        %vm5633 = vcmp.eq.s32.totalorder %v5121, 1
        %vm5634 = vcmp.eq.s32.totalorder %v5122, 1
        %vm5635 = vcmp.eq.s32.totalorder %v5123, 1
        %vm5636 = vcmp.eq.s32.totalorder %v5124, 1
        %vm5637 = vcmp.eq.s32.totalorder %v5125, 1
        %vm5638 = vcmp.eq.s32.totalorder %v5126, 1
        %vm5639 = vcmp.eq.s32.totalorder %v5127, 1
        %vm5640 = vcmp.eq.s32.totalorder %v5128, 1
        %vm5641 = vcmp.eq.s32.totalorder %v5129, 1
        %vm5642 = vcmp.eq.s32.totalorder %v5130, 1
        %vm5643 = vcmp.eq.s32.totalorder %v5131, 1
        %vm5644 = vcmp.eq.s32.totalorder %v5132, 1
        %vm5645 = vcmp.eq.s32.totalorder %v5133, 1
        %vm5646 = vcmp.eq.s32.totalorder %v5134, 1
        %vm5647 = vcmp.eq.s32.totalorder %v5135, 1
        %vm5648 = vcmp.eq.s32.totalorder %v5136, 1
        %vm5649 = vcmp.eq.s32.totalorder %v5137, 1
        %vm5650 = vcmp.eq.s32.totalorder %v5138, 1
        %vm5651 = vcmp.eq.s32.totalorder %v5139, 1
        %vm5652 = vcmp.eq.s32.totalorder %v5140, 1
        %vm5653 = vcmp.eq.s32.totalorder %v5141, 1
        %vm5654 = vcmp.eq.s32.totalorder %v5142, 1
        %vm5655 = vcmp.eq.s32.totalorder %v5143, 1
        %vm5656 = vcmp.eq.s32.totalorder %v5144, 1
        %vm5657 = vcmp.eq.s32.totalorder %v5145, 1
        %vm5658 = vcmp.eq.s32.totalorder %v5146, 1
        %vm5659 = vcmp.eq.s32.totalorder %v5147, 1
        %vm5660 = vcmp.eq.s32.totalorder %v5148, 1
        %vm5661 = vcmp.eq.s32.totalorder %v5149, 1
        %vm5662 = vcmp.eq.s32.totalorder %v5150, 1
        %vm5663 = vcmp.eq.s32.totalorder %v5151, 1
        %vm5664 = vcmp.eq.s32.totalorder %v5152, 1
        %vm5665 = vcmp.eq.s32.totalorder %v5153, 1
        %vm5666 = vcmp.eq.s32.totalorder %v5154, 1
        %vm5667 = vcmp.eq.s32.totalorder %v5155, 1
        %vm5668 = vcmp.eq.s32.totalorder %v5156, 1
        %vm5669 = vcmp.eq.s32.totalorder %v5157, 1
        %vm5670 = vcmp.eq.s32.totalorder %v5158, 1
        %vm5671 = vcmp.eq.s32.totalorder %v5159, 1
        %vm5672 = vcmp.eq.s32.totalorder %v5160, 1
        %vm5673 = vcmp.eq.s32.totalorder %v5161, 1
        %vm5674 = vcmp.eq.s32.totalorder %v5162, 1
        %vm5675 = vcmp.eq.s32.totalorder %v5163, 1
        %vm5676 = vcmp.eq.s32.totalorder %v5164, 1
        %vm5677 = vcmp.eq.s32.totalorder %v5165, 1
        %vm5678 = vcmp.eq.s32.totalorder %v5166, 1
        %vm5679 = vcmp.eq.s32.totalorder %v5167, 1
        %vm5680 = vcmp.eq.s32.totalorder %v5168, 1
        %vm5681 = vcmp.eq.s32.totalorder %v5169, 1
        %vm5682 = vcmp.eq.s32.totalorder %v5170, 1
        %vm5683 = vcmp.eq.s32.totalorder %v5171, 1
        %vm5684 = vcmp.eq.s32.totalorder %v5172, 1
        %vm5685 = vcmp.eq.s32.totalorder %v5173, 1
        %vm5686 = vcmp.eq.s32.totalorder %v5174, 1
        %vm5687 = vcmp.eq.s32.totalorder %v5175, 1
        %vm5688 = vcmp.eq.s32.totalorder %v5176, 1
        %vm5689 = vcmp.eq.s32.totalorder %v5177, 1
        %vm5690 = vcmp.eq.s32.totalorder %v5178, 1
        %vm5691 = vcmp.eq.s32.totalorder %v5179, 1
        %vm5692 = vcmp.eq.s32.totalorder %v5180, 1
        %vm5693 = vcmp.eq.s32.totalorder %v5181, 1
        %vm5694 = vcmp.eq.s32.totalorder %v5182, 1
        %vm5695 = vcmp.eq.s32.totalorder %v5183, 1
        %vm5696 = vcmp.eq.s32.totalorder %v5184, 1
        %vm5697 = vcmp.eq.s32.totalorder %v5185, 1
        %vm5698 = vcmp.eq.s32.totalorder %v5186, 1
        %vm5699 = vcmp.eq.s32.totalorder %v5187, 1
        %vm5700 = vcmp.eq.s32.totalorder %v5188, 1
        %vm5701 = vcmp.eq.s32.totalorder %v5189, 1
        %vm5702 = vcmp.eq.s32.totalorder %v5190, 1
        %vm5703 = vcmp.eq.s32.totalorder %v5191, 1
        %vm5704 = vcmp.eq.s32.totalorder %v5192, 1
        %vm5705 = vcmp.eq.s32.totalorder %v5193, 1
        %vm5706 = vcmp.eq.s32.totalorder %v5194, 1
        %vm5707 = vcmp.eq.s32.totalorder %v5195, 1
        %vm5708 = vcmp.eq.s32.totalorder %v5196, 1
        %vm5709 = vcmp.eq.s32.totalorder %v5197, 1
        %vm5710 = vcmp.eq.s32.totalorder %v5198, 1
        %vm5711 = vcmp.eq.s32.totalorder %v5199, 1
        %vm5712 = vcmp.eq.s32.totalorder %v5200, 1
        %vm5713 = vcmp.eq.s32.totalorder %v5201, 1
        %vm5714 = vcmp.eq.s32.totalorder %v5202, 1
        %vm5715 = vcmp.eq.s32.totalorder %v5203, 1
        %vm5716 = vcmp.eq.s32.totalorder %v5204, 1
        %vm5717 = vcmp.eq.s32.totalorder %v5205, 1
        %vm5718 = vcmp.eq.s32.totalorder %v5206, 1
        %vm5719 = vcmp.eq.s32.totalorder %v5207, 1
        %vm5720 = vcmp.eq.s32.totalorder %v5208, 1
        %vm5721 = vcmp.eq.s32.totalorder %v5209, 1
        %vm5722 = vcmp.eq.s32.totalorder %v5210, 1
        %vm5723 = vcmp.eq.s32.totalorder %v5211, 1
        %vm5724 = vcmp.eq.s32.totalorder %v5212, 1
        %vm5725 = vcmp.eq.s32.totalorder %v5213, 1
        %vm5726 = vcmp.eq.s32.totalorder %v5214, 1
        %vm5727 = vcmp.eq.s32.totalorder %v5215, 1
        %vm5728 = vcmp.eq.s32.totalorder %v5216, 1
        %vm5729 = vcmp.eq.s32.totalorder %v5217, 1
        %vm5730 = vcmp.eq.s32.totalorder %v5218, 1
        %vm5731 = vcmp.eq.s32.totalorder %v5219, 1
        %vm5732 = vcmp.eq.s32.totalorder %v5220, 1
        %vm5733 = vcmp.eq.s32.totalorder %v5221, 1
        %vm5734 = vcmp.eq.s32.totalorder %v5222, 1
        %vm5735 = vcmp.eq.s32.totalorder %v5223, 1
        %vm5736 = vcmp.eq.s32.totalorder %v5224, 1
        %vm5737 = vcmp.eq.s32.totalorder %v5225, 1
        %vm5738 = vcmp.eq.s32.totalorder %v5226, 1
        %vm5739 = vcmp.eq.s32.totalorder %v5227, 1
        %vm5740 = vcmp.eq.s32.totalorder %v5228, 1
        %vm5741 = vcmp.eq.s32.totalorder %v5229, 1
        %vm5742 = vcmp.eq.s32.totalorder %v5230, 1
        %vm5743 = vcmp.eq.s32.totalorder %v5231, 1
        %vm5744 = vcmp.eq.s32.totalorder %v5232, 1
        %vm5745 = vcmp.eq.s32.totalorder %v5233, 1
        %vm5746 = vcmp.eq.s32.totalorder %v5234, 1
        %vm5747 = vcmp.eq.s32.totalorder %v5235, 1
        %vm5748 = vcmp.eq.s32.totalorder %v5236, 1
        %vm5749 = vcmp.eq.s32.totalorder %v5237, 1
        %vm5750 = vcmp.eq.s32.totalorder %v5238, 1
        %vm5751 = vcmp.eq.s32.totalorder %v5239, 1
        %vm5752 = vcmp.eq.s32.totalorder %v5240, 1
        %vm5753 = vcmp.eq.s32.totalorder %v5241, 1
        %vm5754 = vcmp.eq.s32.totalorder %v5242, 1
        %vm5755 = vcmp.eq.s32.totalorder %v5243, 1
        %vm5756 = vcmp.eq.s32.totalorder %v5244, 1
        %vm5757 = vcmp.eq.s32.totalorder %v5245, 1
        %vm5758 = vcmp.eq.s32.totalorder %v5246, 1
        %vm5759 = vcmp.eq.s32.totalorder %v5247, 1
        %vm5760 = vcmp.eq.s32.totalorder %v5248, 1
        %vm5761 = vcmp.eq.s32.totalorder %v5249, 1
        %vm5762 = vcmp.eq.s32.totalorder %v5250, 1
        %vm5763 = vcmp.eq.s32.totalorder %v5251, 1
        %vm5764 = vcmp.eq.s32.totalorder %v5252, 1
        %vm5765 = vcmp.eq.s32.totalorder %v5253, 1
        %vm5766 = vcmp.eq.s32.totalorder %v5254, 1
        %vm5767 = vcmp.eq.s32.totalorder %v5255, 1
        %vm5768 = vcmp.eq.s32.totalorder %v5256, 1
        %vm5769 = vcmp.eq.s32.totalorder %v5257, 1
        %vm5770 = vcmp.eq.s32.totalorder %v5258, 1
        %vm5771 = vcmp.eq.s32.totalorder %v5259, 1
        %vm5772 = vcmp.eq.s32.totalorder %v5260, 1
        %vm5773 = vcmp.eq.s32.totalorder %v5261, 1
        %vm5774 = vcmp.eq.s32.totalorder %v5262, 1
        %vm5775 = vcmp.eq.s32.totalorder %v5263, 1
        %vm5776 = vcmp.eq.s32.totalorder %v5264, 1
        %vm5777 = vcmp.eq.s32.totalorder %v5265, 1
        %vm5778 = vcmp.eq.s32.totalorder %v5266, 1
        %vm5779 = vcmp.eq.s32.totalorder %v5267, 1
        %vm5780 = vcmp.eq.s32.totalorder %v5268, 1
        %vm5781 = vcmp.eq.s32.totalorder %v5269, 1
        %vm5782 = vcmp.eq.s32.totalorder %v5270, 1
        %vm5783 = vcmp.eq.s32.totalorder %v5271, 1
        %vm5784 = vcmp.eq.s32.totalorder %v5272, 1
        %vm5785 = vcmp.eq.s32.totalorder %v5273, 1
        %vm5786 = vcmp.eq.s32.totalorder %v5274, 1
        %vm5787 = vcmp.eq.s32.totalorder %v5275, 1
        %vm5788 = vcmp.eq.s32.totalorder %v5276, 1
        %vm5789 = vcmp.eq.s32.totalorder %v5277, 1
        %vm5790 = vcmp.eq.s32.totalorder %v5278, 1
        %vm5791 = vcmp.eq.s32.totalorder %v5279, 1
        %vm5792 = vcmp.eq.s32.totalorder %v5280, 1
        %vm5793 = vcmp.eq.s32.totalorder %v5281, 1
        %vm5794 = vcmp.eq.s32.totalorder %v5282, 1
        %vm5795 = vcmp.eq.s32.totalorder %v5283, 1
        %vm5796 = vcmp.eq.s32.totalorder %v5284, 1
        %vm5797 = vcmp.eq.s32.totalorder %v5285, 1
        %vm5798 = vcmp.eq.s32.totalorder %v5286, 1
        %vm5799 = vcmp.eq.s32.totalorder %v5287, 1
        %vm5800 = vcmp.eq.s32.totalorder %v5288, 1
        %vm5801 = vcmp.eq.s32.totalorder %v5289, 1
        %vm5802 = vcmp.eq.s32.totalorder %v5290, 1
        %vm5803 = vcmp.eq.s32.totalorder %v5291, 1
        %vm5804 = vcmp.eq.s32.totalorder %v5292, 1
        %vm5805 = vcmp.eq.s32.totalorder %v5293, 1
        %vm5806 = vcmp.eq.s32.totalorder %v5294, 1
        %vm5807 = vcmp.eq.s32.totalorder %v5295, 1
        %vm5808 = vcmp.eq.s32.totalorder %v5296, 1
        %vm5809 = vcmp.eq.s32.totalorder %v5297, 1
        %vm5810 = vcmp.eq.s32.totalorder %v5298, 1
        %vm5811 = vcmp.eq.s32.totalorder %v5299, 1
        %vm5812 = vcmp.eq.s32.totalorder %v5300, 1
        %vm5813 = vcmp.eq.s32.totalorder %v5301, 1
        %vm5814 = vcmp.eq.s32.totalorder %v5302, 1
        %vm5815 = vcmp.eq.s32.totalorder %v5303, 1
        %vm5816 = vcmp.eq.s32.totalorder %v5304, 1
        %vm5817 = vcmp.eq.s32.totalorder %v5305, 1
        %vm5818 = vcmp.eq.s32.totalorder %v5306, 1
        %vm5819 = vcmp.eq.s32.totalorder %v5307, 1
        %vm5820 = vcmp.eq.s32.totalorder %v5308, 1
        %vm5821 = vcmp.eq.s32.totalorder %v5309, 1
        %vm5822 = vcmp.eq.s32.totalorder %v5310, 1
        %vm5823 = vcmp.eq.s32.totalorder %v5311, 1
        %vm5824 = vcmp.eq.s32.totalorder %v5312, 1
        %vm5825 = vcmp.eq.s32.totalorder %v5313, 1
        %vm5826 = vcmp.eq.s32.totalorder %v5314, 1
        %vm5827 = vcmp.eq.s32.totalorder %v5315, 1
        %vm5828 = vcmp.eq.s32.totalorder %v5316, 1
        %vm5829 = vcmp.eq.s32.totalorder %v5317, 1
        %vm5830 = vcmp.eq.s32.totalorder %v5318, 1
        %vm5831 = vcmp.eq.s32.totalorder %v5319, 1
        %vm5832 = vcmp.eq.s32.totalorder %v5320, 1
        %vm5833 = vcmp.eq.s32.totalorder %v5321, 1
        %vm5834 = vcmp.eq.s32.totalorder %v5322, 1
        %vm5835 = vcmp.eq.s32.totalorder %v5323, 1
        %vm5836 = vcmp.eq.s32.totalorder %v5324, 1
        %vm5837 = vcmp.eq.s32.totalorder %v5325, 1
        %vm5838 = vcmp.eq.s32.totalorder %v5326, 1
        %vm5839 = vcmp.eq.s32.totalorder %v5327, 1
        %vm5840 = vcmp.eq.s32.totalorder %v5328, 1
        %vm5841 = vcmp.eq.s32.totalorder %v5329, 1
        %vm5842 = vcmp.eq.s32.totalorder %v5330, 1
        %vm5843 = vcmp.eq.s32.totalorder %v5331, 1
        %vm5844 = vcmp.eq.s32.totalorder %v5332, 1
        %vm5845 = vcmp.eq.s32.totalorder %v5333, 1
        %vm5846 = vcmp.eq.s32.totalorder %v5334, 1
        %vm5847 = vcmp.eq.s32.totalorder %v5335, 1
        %vm5848 = vcmp.eq.s32.totalorder %v5336, 1
        %vm5849 = vcmp.eq.s32.totalorder %v5337, 1
        %vm5850 = vcmp.eq.s32.totalorder %v5338, 1
        %vm5851 = vcmp.eq.s32.totalorder %v5339, 1
        %vm5852 = vcmp.eq.s32.totalorder %v5340, 1
        %vm5853 = vcmp.eq.s32.totalorder %v5341, 1
        %vm5854 = vcmp.eq.s32.totalorder %v5342, 1
        %vm5855 = vcmp.eq.s32.totalorder %v5343, 1
        %vm5856 = vcmp.eq.s32.totalorder %v5344, 1
        %vm5857 = vcmp.eq.s32.totalorder %v5345, 1
        %vm5858 = vcmp.eq.s32.totalorder %v5346, 1
        %vm5859 = vcmp.eq.s32.totalorder %v5347, 1
        %vm5860 = vcmp.eq.s32.totalorder %v5348, 1
        %vm5861 = vcmp.eq.s32.totalorder %v5349, 1
        %vm5862 = vcmp.eq.s32.totalorder %v5350, 1
        %vm5863 = vcmp.eq.s32.totalorder %v5351, 1
        %vm5864 = vcmp.eq.s32.totalorder %v5352, 1
        %vm5865 = vcmp.eq.s32.totalorder %v5353, 1
        %vm5866 = vcmp.eq.s32.totalorder %v5354, 1
        %vm5867 = vcmp.eq.s32.totalorder %v5355, 1
        %vm5868 = vcmp.eq.s32.totalorder %v5356, 1
        %vm5869 = vcmp.eq.s32.totalorder %v5357, 1
        %vm5870 = vcmp.eq.s32.totalorder %v5358, 1
        %vm5871 = vcmp.eq.s32.totalorder %v5359, 1
        %vm5872 = vcmp.eq.s32.totalorder %v5360, 1
        %vm5873 = vcmp.eq.s32.totalorder %v5361, 1
        %vm5874 = vcmp.eq.s32.totalorder %v5362, 1
        %vm5875 = vcmp.eq.s32.totalorder %v5363, 1
        %vm5876 = vcmp.eq.s32.totalorder %v5364, 1
        %vm5877 = vcmp.eq.s32.totalorder %v5365, 1
        %vm5878 = vcmp.eq.s32.totalorder %v5366, 1
        %vm5879 = vcmp.eq.s32.totalorder %v5367, 1
        %vm5880 = vcmp.eq.s32.totalorder %v5368, 1
        %vm5881 = vcmp.eq.s32.totalorder %v5369, 1
        %vm5882 = vcmp.eq.s32.totalorder %v5370, 1
        %vm5883 = vcmp.eq.s32.totalorder %v5371, 1
        %vm5884 = vcmp.eq.s32.totalorder %v5372, 1
        %vm5885 = vcmp.eq.s32.totalorder %v5373, 1
        %vm5886 = vcmp.eq.s32.totalorder %v5374, 1
        %vm5887 = vcmp.eq.s32.totalorder %v5375, 1
        %vm5888 = vcmp.eq.s32.totalorder %v5376, 1
        %vm5889 = vcmp.eq.s32.totalorder %v5377, 1
        %vm5890 = vcmp.eq.s32.totalorder %v5378, 1
        %vm5891 = vcmp.eq.s32.totalorder %v5379, 1
        %vm5892 = vcmp.eq.s32.totalorder %v5380, 1
        %vm5893 = vcmp.eq.s32.totalorder %v5381, 1
        %vm5894 = vcmp.eq.s32.totalorder %v5382, 1
        %vm5895 = vcmp.eq.s32.totalorder %v5383, 1
        %vm5896 = vcmp.eq.s32.totalorder %v5384, 1
        %vm5897 = vcmp.eq.s32.totalorder %v5385, 1
        %vm5898 = vcmp.eq.s32.totalorder %v5386, 1
        %vm5899 = vcmp.eq.s32.totalorder %v5387, 1
        %vm5900 = vcmp.eq.s32.totalorder %v5388, 1
        %vm5901 = vcmp.eq.s32.totalorder %v5389, 1
        %v5902 = vsel %vm5390, %v2312, 0.0
        %v5903 = vsel %vm5391, %v2315, 0.0
        %v5904 = vsel %vm5392, %v2318, 0.0
        %v5905 = vsel %vm5393, %v2321, 0.0
        %v5906 = vsel %vm5394, %v2324, 0.0
        %v5907 = vsel %vm5395, %v2327, 0.0
        %v5908 = vsel %vm5396, %v2330, 0.0
        %v5909 = vsel %vm5397, %v2333, 0.0
        %v5910 = vsel %vm5398, %v2336, 0.0
        %v5911 = vsel %vm5399, %v2339, 0.0
        %v5912 = vsel %vm5400, %v2342, 0.0
        %v5913 = vsel %vm5401, %v2345, 0.0
        %v5914 = vsel %vm5402, %v2348, 0.0
        %v5915 = vsel %vm5403, %v2351, 0.0
        %v5916 = vsel %vm5404, %v2354, 0.0
        %v5917 = vsel %vm5405, %v2357, 0.0
        %v5918 = vsel %vm5406, %v2360, 0.0
        %v5919 = vsel %vm5407, %v2363, 0.0
        %v5920 = vsel %vm5408, %v2366, 0.0
        %v5921 = vsel %vm5409, %v2369, 0.0
        %v5922 = vsel %vm5410, %v2372, 0.0
        %v5923 = vsel %vm5411, %v2375, 0.0
        %v5924 = vsel %vm5412, %v2378, 0.0
        %v5925 = vsel %vm5413, %v2381, 0.0
        %v5926 = vsel %vm5414, %v2384, 0.0
        %v5927 = vsel %vm5415, %v2387, 0.0
        %v5928 = vsel %vm5416, %v2390, 0.0
        %v5929 = vsel %vm5417, %v2393, 0.0
        %v5930 = vsel %vm5418, %v2396, 0.0
        %v5931 = vsel %vm5419, %v2399, 0.0
        %v5932 = vsel %vm5420, %v2402, 0.0
        %v5933 = vsel %vm5421, %v2405, 0.0
        %v5934 = vsel %vm5422, %v2408, 0.0
        %v5935 = vsel %vm5423, %v2411, 0.0
        %v5936 = vsel %vm5424, %v2414, 0.0
        %v5937 = vsel %vm5425, %v2417, 0.0
        %v5938 = vsel %vm5426, %v2420, 0.0
        %v5939 = vsel %vm5427, %v2423, 0.0
        %v5940 = vsel %vm5428, %v2426, 0.0
        %v5941 = vsel %vm5429, %v2429, 0.0
        %v5942 = vsel %vm5430, %v2432, 0.0
        %v5943 = vsel %vm5431, %v2435, 0.0
        %v5944 = vsel %vm5432, %v2438, 0.0
        %v5945 = vsel %vm5433, %v2441, 0.0
        %v5946 = vsel %vm5434, %v2444, 0.0
        %v5947 = vsel %vm5435, %v2447, 0.0
        %v5948 = vsel %vm5436, %v2450, 0.0
        %v5949 = vsel %vm5437, %v2453, 0.0
        %v5950 = vsel %vm5438, %v2456, 0.0
        %v5951 = vsel %vm5439, %v2459, 0.0
        %v5952 = vsel %vm5440, %v2462, 0.0
        %v5953 = vsel %vm5441, %v2465, 0.0
        %v5954 = vsel %vm5442, %v2468, 0.0
        %v5955 = vsel %vm5443, %v2471, 0.0
        %v5956 = vsel %vm5444, %v2474, 0.0
        %v5957 = vsel %vm5445, %v2477, 0.0
        %v5958 = vsel %vm5446, %v2480, 0.0
        %v5959 = vsel %vm5447, %v2483, 0.0
        %v5960 = vsel %vm5448, %v2486, 0.0
        %v5961 = vsel %vm5449, %v2489, 0.0
        %v5962 = vsel %vm5450, %v2492, 0.0
        %v5963 = vsel %vm5451, %v2495, 0.0
        %v5964 = vsel %vm5452, %v2498, 0.0
        %v5965 = vsel %vm5453, %v2501, 0.0
        %v5966 = vsel %vm5454, %v2504, 0.0
        %v5967 = vsel %vm5455, %v2507, 0.0
        %v5968 = vsel %vm5456, %v2510, 0.0
        %v5969 = vsel %vm5457, %v2513, 0.0
        %v5970 = vsel %vm5458, %v2516, 0.0
        %v5971 = vsel %vm5459, %v2519, 0.0
        %v5972 = vsel %vm5460, %v2522, 0.0
        %v5973 = vsel %vm5461, %v2525, 0.0
        %v5974 = vsel %vm5462, %v2528, 0.0
        %v5975 = vsel %vm5463, %v2531, 0.0
        %v5976 = vsel %vm5464, %v2534, 0.0
        %v5977 = vsel %vm5465, %v2537, 0.0
        %v5978 = vsel %vm5466, %v2540, 0.0
        %v5979 = vsel %vm5467, %v2543, 0.0
        %v5980 = vsel %vm5468, %v2546, 0.0
        %v5981 = vsel %vm5469, %v2549, 0.0
        %v5982 = vsel %vm5470, %v2552, 0.0
        %v5983 = vsel %vm5471, %v2555, 0.0
        %v5984 = vsel %vm5472, %v2558, 0.0
        %v5985 = vsel %vm5473, %v2561, 0.0
        %v5986 = vsel %vm5474, %v2564, 0.0
        %v5987 = vsel %vm5475, %v2567, 0.0
        %v5988 = vsel %vm5476, %v2570, 0.0
        %v5989 = vsel %vm5477, %v2573, 0.0
        %v5990 = vsel %vm5478, %v2576, 0.0
        %v5991 = vsel %vm5479, %v2579, 0.0
        %v5992 = vsel %vm5480, %v2582, 0.0
        %v5993 = vsel %vm5481, %v2585, 0.0
        %v5994 = vsel %vm5482, %v2588, 0.0
        %v5995 = vsel %vm5483, %v2591, 0.0
        %v5996 = vsel %vm5484, %v2594, 0.0
        %v5997 = vsel %vm5485, %v2597, 0.0
        %v5998 = vsel %vm5486, %v2600, 0.0
        %v5999 = vsel %vm5487, %v2603, 0.0
        %v6000 = vsel %vm5488, %v2606, 0.0
        %v6001 = vsel %vm5489, %v2609, 0.0
        %v6002 = vsel %vm5490, %v2612, 0.0
        %v6003 = vsel %vm5491, %v2615, 0.0
        %v6004 = vsel %vm5492, %v2618, 0.0
        %v6005 = vsel %vm5493, %v2621, 0.0
        %v6006 = vsel %vm5494, %v2624, 0.0
        %v6007 = vsel %vm5495, %v2627, 0.0
        %v6008 = vsel %vm5496, %v2630, 0.0
        %v6009 = vsel %vm5497, %v2633, 0.0
        %v6010 = vsel %vm5498, %v2636, 0.0
        %v6011 = vsel %vm5499, %v2639, 0.0
        %v6012 = vsel %vm5500, %v2642, 0.0
        %v6013 = vsel %vm5501, %v2645, 0.0
        %v6014 = vsel %vm5502, %v2648, 0.0
        %v6015 = vsel %vm5503, %v2651, 0.0
        %v6016 = vsel %vm5504, %v2654, 0.0
        %v6017 = vsel %vm5505, %v2657, 0.0
        %v6018 = vsel %vm5506, %v2660, 0.0
        %v6019 = vsel %vm5507, %v2663, 0.0
        %v6020 = vsel %vm5508, %v2666, 0.0
        %v6021 = vsel %vm5509, %v2669, 0.0
        %v6022 = vsel %vm5510, %v2672, 0.0
        %v6023 = vsel %vm5511, %v2675, 0.0
        %v6024 = vsel %vm5512, %v2678, 0.0
        %v6025 = vsel %vm5513, %v2681, 0.0
        %v6026 = vsel %vm5514, %v2684, 0.0
        %v6027 = vsel %vm5515, %v2687, 0.0
        %v6028 = vsel %vm5516, %v2690, 0.0
        %v6029 = vsel %vm5517, %v2693, 0.0
        %v6030 = vsel %vm5518, %v2696, 0.0
        %v6031 = vsel %vm5519, %v2699, 0.0
        %v6032 = vsel %vm5520, %v2702, 0.0
        %v6033 = vsel %vm5521, %v2705, 0.0
        %v6034 = vsel %vm5522, %v2708, 0.0
        %v6035 = vsel %vm5523, %v2711, 0.0
        %v6036 = vsel %vm5524, %v2714, 0.0
        %v6037 = vsel %vm5525, %v2717, 0.0
        %v6038 = vsel %vm5526, %v2720, 0.0
        %v6039 = vsel %vm5527, %v2723, 0.0
        %v6040 = vsel %vm5528, %v2726, 0.0
        %v6041 = vsel %vm5529, %v2729, 0.0
        %v6042 = vsel %vm5530, %v2732, 0.0
        %v6043 = vsel %vm5531, %v2735, 0.0
        %v6044 = vsel %vm5532, %v2738, 0.0
        %v6045 = vsel %vm5533, %v2741, 0.0
        %v6046 = vsel %vm5534, %v2744, 0.0
        %v6047 = vsel %vm5535, %v2747, 0.0
        %v6048 = vsel %vm5536, %v2750, 0.0
        %v6049 = vsel %vm5537, %v2753, 0.0
        %v6050 = vsel %vm5538, %v2756, 0.0
        %v6051 = vsel %vm5539, %v2759, 0.0
        %v6052 = vsel %vm5540, %v2762, 0.0
        %v6053 = vsel %vm5541, %v2765, 0.0
        %v6054 = vsel %vm5542, %v2768, 0.0
        %v6055 = vsel %vm5543, %v2771, 0.0
        %v6056 = vsel %vm5544, %v2774, 0.0
        %v6057 = vsel %vm5545, %v2777, 0.0
        %v6058 = vsel %vm5546, %v2780, 0.0
        %v6059 = vsel %vm5547, %v2783, 0.0
        %v6060 = vsel %vm5548, %v2786, 0.0
        %v6061 = vsel %vm5549, %v2789, 0.0
        %v6062 = vsel %vm5550, %v2792, 0.0
        %v6063 = vsel %vm5551, %v2795, 0.0
        %v6064 = vsel %vm5552, %v2798, 0.0
        %v6065 = vsel %vm5553, %v2801, 0.0
        %v6066 = vsel %vm5554, %v2804, 0.0
        %v6067 = vsel %vm5555, %v2807, 0.0
        %v6068 = vsel %vm5556, %v2810, 0.0
        %v6069 = vsel %vm5557, %v2813, 0.0
        %v6070 = vsel %vm5558, %v2816, 0.0
        %v6071 = vsel %vm5559, %v2819, 0.0
        %v6072 = vsel %vm5560, %v2822, 0.0
        %v6073 = vsel %vm5561, %v2825, 0.0
        %v6074 = vsel %vm5562, %v2828, 0.0
        %v6075 = vsel %vm5563, %v2831, 0.0
        %v6076 = vsel %vm5564, %v2834, 0.0
        %v6077 = vsel %vm5565, %v2837, 0.0
        %v6078 = vsel %vm5566, %v2840, 0.0
        %v6079 = vsel %vm5567, %v2843, 0.0
        %v6080 = vsel %vm5568, %v2846, 0.0
        %v6081 = vsel %vm5569, %v2849, 0.0
        %v6082 = vsel %vm5570, %v2852, 0.0
        %v6083 = vsel %vm5571, %v2855, 0.0
        %v6084 = vsel %vm5572, %v2858, 0.0
        %v6085 = vsel %vm5573, %v2861, 0.0
        %v6086 = vsel %vm5574, %v2864, 0.0
        %v6087 = vsel %vm5575, %v2867, 0.0
        %v6088 = vsel %vm5576, %v2870, 0.0
        %v6089 = vsel %vm5577, %v2873, 0.0
        %v6090 = vsel %vm5578, %v2876, 0.0
        %v6091 = vsel %vm5579, %v2879, 0.0
        %v6092 = vsel %vm5580, %v2882, 0.0
        %v6093 = vsel %vm5581, %v2885, 0.0
        %v6094 = vsel %vm5582, %v2888, 0.0
        %v6095 = vsel %vm5583, %v2891, 0.0
        %v6096 = vsel %vm5584, %v2894, 0.0
        %v6097 = vsel %vm5585, %v2897, 0.0
        %v6098 = vsel %vm5586, %v2900, 0.0
        %v6099 = vsel %vm5587, %v2903, 0.0
        %v6100 = vsel %vm5588, %v2906, 0.0
        %v6101 = vsel %vm5589, %v2909, 0.0
        %v6102 = vsel %vm5590, %v2912, 0.0
        %v6103 = vsel %vm5591, %v2915, 0.0
        %v6104 = vsel %vm5592, %v2918, 0.0
        %v6105 = vsel %vm5593, %v2921, 0.0
        %v6106 = vsel %vm5594, %v2924, 0.0
        %v6107 = vsel %vm5595, %v2927, 0.0
        %v6108 = vsel %vm5596, %v2930, 0.0
        %v6109 = vsel %vm5597, %v2933, 0.0
        %v6110 = vsel %vm5598, %v2936, 0.0
        %v6111 = vsel %vm5599, %v2939, 0.0
        %v6112 = vsel %vm5600, %v2942, 0.0
        %v6113 = vsel %vm5601, %v2945, 0.0
        %v6114 = vsel %vm5602, %v2948, 0.0
        %v6115 = vsel %vm5603, %v2951, 0.0
        %v6116 = vsel %vm5604, %v2954, 0.0
        %v6117 = vsel %vm5605, %v2957, 0.0
        %v6118 = vsel %vm5606, %v2960, 0.0
        %v6119 = vsel %vm5607, %v2963, 0.0
        %v6120 = vsel %vm5608, %v2966, 0.0
        %v6121 = vsel %vm5609, %v2969, 0.0
        %v6122 = vsel %vm5610, %v2972, 0.0
        %v6123 = vsel %vm5611, %v2975, 0.0
        %v6124 = vsel %vm5612, %v2978, 0.0
        %v6125 = vsel %vm5613, %v2981, 0.0
        %v6126 = vsel %vm5614, %v2984, 0.0
        %v6127 = vsel %vm5615, %v2987, 0.0
        %v6128 = vsel %vm5616, %v2990, 0.0
        %v6129 = vsel %vm5617, %v2993, 0.0
        %v6130 = vsel %vm5618, %v2996, 0.0
        %v6131 = vsel %vm5619, %v2999, 0.0
        %v6132 = vsel %vm5620, %v3002, 0.0
        %v6133 = vsel %vm5621, %v3005, 0.0
        %v6134 = vsel %vm5622, %v3008, 0.0
        %v6135 = vsel %vm5623, %v3011, 0.0
        %v6136 = vsel %vm5624, %v3014, 0.0
        %v6137 = vsel %vm5625, %v3017, 0.0
        %v6138 = vsel %vm5626, %v3020, 0.0
        %v6139 = vsel %vm5627, %v3023, 0.0
        %v6140 = vsel %vm5628, %v3026, 0.0
        %v6141 = vsel %vm5629, %v3029, 0.0
        %v6142 = vsel %vm5630, %v3032, 0.0
        %v6143 = vsel %vm5631, %v3035, 0.0
        %v6144 = vsel %vm5632, %v3038, 0.0
        %v6145 = vsel %vm5633, %v3041, 0.0
        %v6146 = vsel %vm5634, %v3044, 0.0
        %v6147 = vsel %vm5635, %v3047, 0.0
        %v6148 = vsel %vm5636, %v3050, 0.0
        %v6149 = vsel %vm5637, %v3053, 0.0
        %v6150 = vsel %vm5638, %v3056, 0.0
        %v6151 = vsel %vm5639, %v3059, 0.0
        %v6152 = vsel %vm5640, %v3062, 0.0
        %v6153 = vsel %vm5641, %v3065, 0.0
        %v6154 = vsel %vm5642, %v3068, 0.0
        %v6155 = vsel %vm5643, %v3071, 0.0
        %v6156 = vsel %vm5644, %v3074, 0.0
        %v6157 = vsel %vm5645, %v3077, 0.0
        %v6158 = vsel %vm5646, %v3080, 0.0
        %v6159 = vsel %vm5647, %v3083, 0.0
        %v6160 = vsel %vm5648, %v3086, 0.0
        %v6161 = vsel %vm5649, %v3089, 0.0
        %v6162 = vsel %vm5650, %v3092, 0.0
        %v6163 = vsel %vm5651, %v3095, 0.0
        %v6164 = vsel %vm5652, %v3098, 0.0
        %v6165 = vsel %vm5653, %v3101, 0.0
        %v6166 = vsel %vm5654, %v3104, 0.0
        %v6167 = vsel %vm5655, %v3107, 0.0
        %v6168 = vsel %vm5656, %v3110, 0.0
        %v6169 = vsel %vm5657, %v3113, 0.0
        %v6170 = vsel %vm5658, %v3116, 0.0
        %v6171 = vsel %vm5659, %v3119, 0.0
        %v6172 = vsel %vm5660, %v3122, 0.0
        %v6173 = vsel %vm5661, %v3125, 0.0
        %v6174 = vsel %vm5662, %v3128, 0.0
        %v6175 = vsel %vm5663, %v3131, 0.0
        %v6176 = vsel %vm5664, %v3134, 0.0
        %v6177 = vsel %vm5665, %v3137, 0.0
        %v6178 = vsel %vm5666, %v3140, 0.0
        %v6179 = vsel %vm5667, %v3143, 0.0
        %v6180 = vsel %vm5668, %v3146, 0.0
        %v6181 = vsel %vm5669, %v3149, 0.0
        %v6182 = vsel %vm5670, %v3152, 0.0
        %v6183 = vsel %vm5671, %v3155, 0.0
        %v6184 = vsel %vm5672, %v3158, 0.0
        %v6185 = vsel %vm5673, %v3161, 0.0
        %v6186 = vsel %vm5674, %v3164, 0.0
        %v6187 = vsel %vm5675, %v3167, 0.0
        %v6188 = vsel %vm5676, %v3170, 0.0
        %v6189 = vsel %vm5677, %v3173, 0.0
        %v6190 = vsel %vm5678, %v3176, 0.0
        %v6191 = vsel %vm5679, %v3179, 0.0
        %v6192 = vsel %vm5680, %v3182, 0.0
        %v6193 = vsel %vm5681, %v3185, 0.0
        %v6194 = vsel %vm5682, %v3188, 0.0
        %v6195 = vsel %vm5683, %v3191, 0.0
        %v6196 = vsel %vm5684, %v3194, 0.0
        %v6197 = vsel %vm5685, %v3197, 0.0
        %v6198 = vsel %vm5686, %v3200, 0.0
        %v6199 = vsel %vm5687, %v3203, 0.0
        %v6200 = vsel %vm5688, %v3206, 0.0
        %v6201 = vsel %vm5689, %v3209, 0.0
        %v6202 = vsel %vm5690, %v3212, 0.0
        %v6203 = vsel %vm5691, %v3215, 0.0
        %v6204 = vsel %vm5692, %v3218, 0.0
        %v6205 = vsel %vm5693, %v3221, 0.0
        %v6206 = vsel %vm5694, %v3224, 0.0
        %v6207 = vsel %vm5695, %v3227, 0.0
        %v6208 = vsel %vm5696, %v3230, 0.0
        %v6209 = vsel %vm5697, %v3233, 0.0
        %v6210 = vsel %vm5698, %v3236, 0.0
        %v6211 = vsel %vm5699, %v3239, 0.0
        %v6212 = vsel %vm5700, %v3242, 0.0
        %v6213 = vsel %vm5701, %v3245, 0.0
        %v6214 = vsel %vm5702, %v3248, 0.0
        %v6215 = vsel %vm5703, %v3251, 0.0
        %v6216 = vsel %vm5704, %v3254, 0.0
        %v6217 = vsel %vm5705, %v3257, 0.0
        %v6218 = vsel %vm5706, %v3260, 0.0
        %v6219 = vsel %vm5707, %v3263, 0.0
        %v6220 = vsel %vm5708, %v3266, 0.0
        %v6221 = vsel %vm5709, %v3269, 0.0
        %v6222 = vsel %vm5710, %v3272, 0.0
        %v6223 = vsel %vm5711, %v3275, 0.0
        %v6224 = vsel %vm5712, %v3278, 0.0
        %v6225 = vsel %vm5713, %v3281, 0.0
        %v6226 = vsel %vm5714, %v3284, 0.0
        %v6227 = vsel %vm5715, %v3287, 0.0
        %v6228 = vsel %vm5716, %v3290, 0.0
        %v6229 = vsel %vm5717, %v3293, 0.0
        %v6230 = vsel %vm5718, %v3296, 0.0
        %v6231 = vsel %vm5719, %v3299, 0.0
        %v6232 = vsel %vm5720, %v3302, 0.0
        %v6233 = vsel %vm5721, %v3305, 0.0
        %v6234 = vsel %vm5722, %v3308, 0.0
        %v6235 = vsel %vm5723, %v3311, 0.0
        %v6236 = vsel %vm5724, %v3314, 0.0
        %v6237 = vsel %vm5725, %v3317, 0.0
        %v6238 = vsel %vm5726, %v3320, 0.0
        %v6239 = vsel %vm5727, %v3323, 0.0
        %v6240 = vsel %vm5728, %v3326, 0.0
        %v6241 = vsel %vm5729, %v3329, 0.0
        %v6242 = vsel %vm5730, %v3332, 0.0
        %v6243 = vsel %vm5731, %v3335, 0.0
        %v6244 = vsel %vm5732, %v3338, 0.0
        %v6245 = vsel %vm5733, %v3341, 0.0
        %v6246 = vsel %vm5734, %v3344, 0.0
        %v6247 = vsel %vm5735, %v3347, 0.0
        %v6248 = vsel %vm5736, %v3350, 0.0
        %v6249 = vsel %vm5737, %v3353, 0.0
        %v6250 = vsel %vm5738, %v3356, 0.0
        %v6251 = vsel %vm5739, %v3359, 0.0
        %v6252 = vsel %vm5740, %v3362, 0.0
        %v6253 = vsel %vm5741, %v3365, 0.0
        %v6254 = vsel %vm5742, %v3368, 0.0
        %v6255 = vsel %vm5743, %v3371, 0.0
        %v6256 = vsel %vm5744, %v3374, 0.0
        %v6257 = vsel %vm5745, %v3377, 0.0
        %v6258 = vsel %vm5746, %v3380, 0.0
        %v6259 = vsel %vm5747, %v3383, 0.0
        %v6260 = vsel %vm5748, %v3386, 0.0
        %v6261 = vsel %vm5749, %v3389, 0.0
        %v6262 = vsel %vm5750, %v3392, 0.0
        %v6263 = vsel %vm5751, %v3395, 0.0
        %v6264 = vsel %vm5752, %v3398, 0.0
        %v6265 = vsel %vm5753, %v3401, 0.0
        %v6266 = vsel %vm5754, %v3404, 0.0
        %v6267 = vsel %vm5755, %v3407, 0.0
        %v6268 = vsel %vm5756, %v3410, 0.0
        %v6269 = vsel %vm5757, %v3413, 0.0
        %v6270 = vsel %vm5758, %v3416, 0.0
        %v6271 = vsel %vm5759, %v3419, 0.0
        %v6272 = vsel %vm5760, %v3422, 0.0
        %v6273 = vsel %vm5761, %v3425, 0.0
        %v6274 = vsel %vm5762, %v3428, 0.0
        %v6275 = vsel %vm5763, %v3431, 0.0
        %v6276 = vsel %vm5764, %v3434, 0.0
        %v6277 = vsel %vm5765, %v3437, 0.0
        %v6278 = vsel %vm5766, %v3440, 0.0
        %v6279 = vsel %vm5767, %v3443, 0.0
        %v6280 = vsel %vm5768, %v3446, 0.0
        %v6281 = vsel %vm5769, %v3449, 0.0
        %v6282 = vsel %vm5770, %v3452, 0.0
        %v6283 = vsel %vm5771, %v3455, 0.0
        %v6284 = vsel %vm5772, %v3458, 0.0
        %v6285 = vsel %vm5773, %v3461, 0.0
        %v6286 = vsel %vm5774, %v3464, 0.0
        %v6287 = vsel %vm5775, %v3467, 0.0
        %v6288 = vsel %vm5776, %v3470, 0.0
        %v6289 = vsel %vm5777, %v3473, 0.0
        %v6290 = vsel %vm5778, %v3476, 0.0
        %v6291 = vsel %vm5779, %v3479, 0.0
        %v6292 = vsel %vm5780, %v3482, 0.0
        %v6293 = vsel %vm5781, %v3485, 0.0
        %v6294 = vsel %vm5782, %v3488, 0.0
        %v6295 = vsel %vm5783, %v3491, 0.0
        %v6296 = vsel %vm5784, %v3494, 0.0
        %v6297 = vsel %vm5785, %v3497, 0.0
        %v6298 = vsel %vm5786, %v3500, 0.0
        %v6299 = vsel %vm5787, %v3503, 0.0
        %v6300 = vsel %vm5788, %v3506, 0.0
        %v6301 = vsel %vm5789, %v3509, 0.0
        %v6302 = vsel %vm5790, %v3512, 0.0
        %v6303 = vsel %vm5791, %v3515, 0.0
        %v6304 = vsel %vm5792, %v3518, 0.0
        %v6305 = vsel %vm5793, %v3521, 0.0
        %v6306 = vsel %vm5794, %v3524, 0.0
        %v6307 = vsel %vm5795, %v3527, 0.0
        %v6308 = vsel %vm5796, %v3530, 0.0
        %v6309 = vsel %vm5797, %v3533, 0.0
        %v6310 = vsel %vm5798, %v3536, 0.0
        %v6311 = vsel %vm5799, %v3539, 0.0
        %v6312 = vsel %vm5800, %v3542, 0.0
        %v6313 = vsel %vm5801, %v3545, 0.0
        %v6314 = vsel %vm5802, %v3548, 0.0
        %v6315 = vsel %vm5803, %v3551, 0.0
        %v6316 = vsel %vm5804, %v3554, 0.0
        %v6317 = vsel %vm5805, %v3557, 0.0
        %v6318 = vsel %vm5806, %v3560, 0.0
        %v6319 = vsel %vm5807, %v3563, 0.0
        %v6320 = vsel %vm5808, %v3566, 0.0
        %v6321 = vsel %vm5809, %v3569, 0.0
        %v6322 = vsel %vm5810, %v3572, 0.0
        %v6323 = vsel %vm5811, %v3575, 0.0
        %v6324 = vsel %vm5812, %v3578, 0.0
        %v6325 = vsel %vm5813, %v3581, 0.0
        %v6326 = vsel %vm5814, %v3584, 0.0
        %v6327 = vsel %vm5815, %v3587, 0.0
        %v6328 = vsel %vm5816, %v3590, 0.0
        %v6329 = vsel %vm5817, %v3593, 0.0
        %v6330 = vsel %vm5818, %v3596, 0.0
        %v6331 = vsel %vm5819, %v3599, 0.0
        %v6332 = vsel %vm5820, %v3602, 0.0
        %v6333 = vsel %vm5821, %v3605, 0.0
        %v6334 = vsel %vm5822, %v3608, 0.0
        %v6335 = vsel %vm5823, %v3611, 0.0
        %v6336 = vsel %vm5824, %v3614, 0.0
        %v6337 = vsel %vm5825, %v3617, 0.0
        %v6338 = vsel %vm5826, %v3620, 0.0
        %v6339 = vsel %vm5827, %v3623, 0.0
        %v6340 = vsel %vm5828, %v3626, 0.0
        %v6341 = vsel %vm5829, %v3629, 0.0
        %v6342 = vsel %vm5830, %v3632, 0.0
        %v6343 = vsel %vm5831, %v3635, 0.0
        %v6344 = vsel %vm5832, %v3638, 0.0
        %v6345 = vsel %vm5833, %v3641, 0.0
        %v6346 = vsel %vm5834, %v3644, 0.0
        %v6347 = vsel %vm5835, %v3647, 0.0
        %v6348 = vsel %vm5836, %v3650, 0.0
        %v6349 = vsel %vm5837, %v3653, 0.0
        %v6350 = vsel %vm5838, %v3656, 0.0
        %v6351 = vsel %vm5839, %v3659, 0.0
        %v6352 = vsel %vm5840, %v3662, 0.0
        %v6353 = vsel %vm5841, %v3665, 0.0
        %v6354 = vsel %vm5842, %v3668, 0.0
        %v6355 = vsel %vm5843, %v3671, 0.0
        %v6356 = vsel %vm5844, %v3674, 0.0
        %v6357 = vsel %vm5845, %v3677, 0.0
        %v6358 = vsel %vm5846, %v3680, 0.0
        %v6359 = vsel %vm5847, %v3683, 0.0
        %v6360 = vsel %vm5848, %v3686, 0.0
        %v6361 = vsel %vm5849, %v3689, 0.0
        %v6362 = vsel %vm5850, %v3692, 0.0
        %v6363 = vsel %vm5851, %v3695, 0.0
        %v6364 = vsel %vm5852, %v3698, 0.0
        %v6365 = vsel %vm5853, %v3701, 0.0
        %v6366 = vsel %vm5854, %v3704, 0.0
        %v6367 = vsel %vm5855, %v3707, 0.0
        %v6368 = vsel %vm5856, %v3710, 0.0
        %v6369 = vsel %vm5857, %v3713, 0.0
        %v6370 = vsel %vm5858, %v3716, 0.0
        %v6371 = vsel %vm5859, %v3719, 0.0
        %v6372 = vsel %vm5860, %v3722, 0.0
        %v6373 = vsel %vm5861, %v3725, 0.0
        %v6374 = vsel %vm5862, %v3728, 0.0
        %v6375 = vsel %vm5863, %v3731, 0.0
        %v6376 = vsel %vm5864, %v3734, 0.0
        %v6377 = vsel %vm5865, %v3737, 0.0
        %v6378 = vsel %vm5866, %v3740, 0.0
        %v6379 = vsel %vm5867, %v3743, 0.0
        %v6380 = vsel %vm5868, %v3746, 0.0
        %v6381 = vsel %vm5869, %v3749, 0.0
        %v6382 = vsel %vm5870, %v3752, 0.0
        %v6383 = vsel %vm5871, %v3755, 0.0
        %v6384 = vsel %vm5872, %v3758, 0.0
        %v6385 = vsel %vm5873, %v3761, 0.0
        %v6386 = vsel %vm5874, %v3764, 0.0
        %v6387 = vsel %vm5875, %v3767, 0.0
        %v6388 = vsel %vm5876, %v3770, 0.0
        %v6389 = vsel %vm5877, %v3773, 0.0
        %v6390 = vsel %vm5878, %v3776, 0.0
        %v6391 = vsel %vm5879, %v3779, 0.0
        %v6392 = vsel %vm5880, %v3782, 0.0
        %v6393 = vsel %vm5881, %v3785, 0.0
        %v6394 = vsel %vm5882, %v3788, 0.0
        %v6395 = vsel %vm5883, %v3791, 0.0
        %v6396 = vsel %vm5884, %v3794, 0.0
        %v6397 = vsel %vm5885, %v3797, 0.0
        %v6398 = vsel %vm5886, %v3800, 0.0
        %v6399 = vsel %vm5887, %v3803, 0.0
        %v6400 = vsel %vm5888, %v3806, 0.0
        %v6401 = vsel %vm5889, %v3809, 0.0
        %v6402 = vsel %vm5890, %v3812, 0.0
        %v6403 = vsel %vm5891, %v3815, 0.0
        %v6404 = vsel %vm5892, %v3818, 0.0
        %v6405 = vsel %vm5893, %v3821, 0.0
        %v6406 = vsel %vm5894, %v3824, 0.0
        %v6407 = vsel %vm5895, %v3827, 0.0
        %v6408 = vsel %vm5896, %v3830, 0.0
        %v6409 = vsel %vm5897, %v3833, 0.0
        %v6410 = vsel %vm5898, %v3836, 0.0
        %v6411 = vsel %vm5899, %v3839, 0.0
        %v6412 = vsel %vm5900, %v3842, 0.0
        %v6413 = vsel %vm5901, %v3845, 0.0
        %s6414 = scvt.s32.f32 %s3851
        %vm6415 = vcmask 261120
        %v6416 = vsel %vm6415, %v5902, 0.0
        %v6417 = vsel %vm6415, %v5903, 0.0
        %v6418 = vadd.f32 %v6416, %v6417
        %v6419 = vsel %vm6415, %v5904, 0.0
        %v6420 = vadd.f32 %v6418, %v6419
        %v6421 = vsel %vm6415, %v5905, 0.0
        %v6422 = vadd.f32 %v6420, %v6421
        %v6423 = vsel %vm6415, %v5906, 0.0
        %v6424 = vadd.f32 %v6422, %v6423
        %v6425 = vsel %vm6415, %v5907, 0.0
        %v6426 = vadd.f32 %v6424, %v6425
        %v6427 = vsel %vm6415, %v5908, 0.0
        %v6428 = vadd.f32 %v6426, %v6427
        %v6429 = vsel %vm6415, %v5909, 0.0
        %v6430 = vadd.f32 %v6428, %v6429
        %v6431 = vsel %vm6415, %v5910, 0.0
        %v6432 = vadd.f32 %v6430, %v6431
        %v6433 = vsel %vm6415, %v5911, 0.0
        %v6434 = vadd.f32 %v6432, %v6433
        %v6435 = vsel %vm6415, %v5912, 0.0
        %v6436 = vadd.f32 %v6434, %v6435
        %v6437 = vsel %vm6415, %v5913, 0.0
        %v6438 = vadd.f32 %v6436, %v6437
        %v6439 = vsel %vm6415, %v5914, 0.0
        %v6440 = vadd.f32 %v6438, %v6439
        %v6441 = vsel %vm6415, %v5915, 0.0
        %v6442 = vadd.f32 %v6440, %v6441
        %v6443 = vsel %vm6415, %v5916, 0.0
        %v6444 = vadd.f32 %v6442, %v6443
        %v6445 = vsel %vm6415, %v5917, 0.0
        %v6446 = vadd.f32 %v6444, %v6445
        %v6447 = vsel %vm6415, %v5918, 0.0
        %v6448 = vadd.f32 %v6446, %v6447
        %v6449 = vsel %vm6415, %v5919, 0.0
        %v6450 = vadd.f32 %v6448, %v6449
        %v6451 = vsel %vm6415, %v5920, 0.0
        %v6452 = vadd.f32 %v6450, %v6451
        %v6453 = vsel %vm6415, %v5921, 0.0
        %v6454 = vadd.f32 %v6452, %v6453
        %v6455 = vsel %vm6415, %v5922, 0.0
        %v6456 = vadd.f32 %v6454, %v6455
        %v6457 = vsel %vm6415, %v5923, 0.0
        %v6458 = vadd.f32 %v6456, %v6457
        %v6459 = vsel %vm6415, %v5924, 0.0
        %v6460 = vadd.f32 %v6458, %v6459
        %v6461 = vsel %vm6415, %v5925, 0.0
        %v6462 = vadd.f32 %v6460, %v6461
        %v6463 = vsel %vm6415, %v5926, 0.0
        %v6464 = vadd.f32 %v6462, %v6463
        %v6465 = vsel %vm6415, %v5927, 0.0
        %v6466 = vadd.f32 %v6464, %v6465
        %v6467 = vsel %vm6415, %v5928, 0.0
        %v6468 = vadd.f32 %v6466, %v6467
        %v6469 = vsel %vm6415, %v5929, 0.0
        %v6470 = vadd.f32 %v6468, %v6469
        %v6471 = vsel %vm6415, %v5930, 0.0
        %v6472 = vadd.f32 %v6470, %v6471
        %v6473 = vsel %vm6415, %v5931, 0.0
        %v6474 = vadd.f32 %v6472, %v6473
        %v6475 = vsel %vm6415, %v5932, 0.0
        %v6476 = vadd.f32 %v6474, %v6475
        %v6477 = vsel %vm6415, %v5933, 0.0
        %v6478 = vadd.f32 %v6476, %v6477
        %v6479 = vsel %vm6415, %v5934, 0.0
        %v6480 = vadd.f32 %v6478, %v6479
        %v6481 = vsel %vm6415, %v5935, 0.0
        %v6482 = vadd.f32 %v6480, %v6481
        %v6483 = vsel %vm6415, %v5936, 0.0
        %v6484 = vadd.f32 %v6482, %v6483
        %v6485 = vsel %vm6415, %v5937, 0.0
        %v6486 = vadd.f32 %v6484, %v6485
        %v6487 = vsel %vm6415, %v5938, 0.0
        %v6488 = vadd.f32 %v6486, %v6487
        %v6489 = vsel %vm6415, %v5939, 0.0
        %v6490 = vadd.f32 %v6488, %v6489
        %v6491 = vsel %vm6415, %v5940, 0.0
        %v6492 = vadd.f32 %v6490, %v6491
        %v6493 = vsel %vm6415, %v5941, 0.0
        %v6494 = vadd.f32 %v6492, %v6493
        %v6495 = vsel %vm6415, %v5942, 0.0
        %v6496 = vadd.f32 %v6494, %v6495
        %v6497 = vsel %vm6415, %v5943, 0.0
        %v6498 = vadd.f32 %v6496, %v6497
        %v6499 = vsel %vm6415, %v5944, 0.0
        %v6500 = vadd.f32 %v6498, %v6499
        %v6501 = vsel %vm6415, %v5945, 0.0
        %v6502 = vadd.f32 %v6500, %v6501
        %v6503 = vsel %vm6415, %v5946, 0.0
        %v6504 = vadd.f32 %v6502, %v6503
        %v6505 = vsel %vm6415, %v5947, 0.0
        %v6506 = vadd.f32 %v6504, %v6505
        %v6507 = vsel %vm6415, %v5948, 0.0
        %v6508 = vadd.f32 %v6506, %v6507
        %v6509 = vsel %vm6415, %v5949, 0.0
        %v6510 = vadd.f32 %v6508, %v6509
        %v6511 = vsel %vm6415, %v5950, 0.0
        %v6512 = vadd.f32 %v6510, %v6511
        %v6513 = vsel %vm6415, %v5951, 0.0
        %v6514 = vadd.f32 %v6512, %v6513
        %v6515 = vsel %vm6415, %v5952, 0.0
        %v6516 = vadd.f32 %v6514, %v6515
        %v6517 = vsel %vm6415, %v5953, 0.0
        %v6518 = vadd.f32 %v6516, %v6517
        %v6519 = vsel %vm6415, %v5954, 0.0
        %v6520 = vadd.f32 %v6518, %v6519
        %v6521 = vsel %vm6415, %v5955, 0.0
        %v6522 = vadd.f32 %v6520, %v6521
        %v6523 = vsel %vm6415, %v5956, 0.0
        %v6524 = vadd.f32 %v6522, %v6523
        %v6525 = vsel %vm6415, %v5957, 0.0
        %v6526 = vadd.f32 %v6524, %v6525
        %v6527 = vsel %vm6415, %v5958, 0.0
        %v6528 = vadd.f32 %v6526, %v6527
        %v6529 = vsel %vm6415, %v5959, 0.0
        %v6530 = vadd.f32 %v6528, %v6529
        %v6531 = vsel %vm6415, %v5960, 0.0
        %v6532 = vadd.f32 %v6530, %v6531
        %v6533 = vsel %vm6415, %v5961, 0.0
        %v6534 = vadd.f32 %v6532, %v6533
        %v6535 = vsel %vm6415, %v5962, 0.0
        %v6536 = vadd.f32 %v6534, %v6535
        %v6537 = vsel %vm6415, %v5963, 0.0
        %v6538 = vadd.f32 %v6536, %v6537
        %v6539 = vsel %vm6415, %v5964, 0.0
        %v6540 = vadd.f32 %v6538, %v6539
        %v6541 = vsel %vm6415, %v5965, 0.0
        %v6542 = vadd.f32 %v6540, %v6541
        %v6543 = vsel %vm6415, %v5966, 0.0
        %v6544 = vadd.f32 %v6542, %v6543
        %v6545 = vsel %vm6415, %v5967, 0.0
        %v6546 = vadd.f32 %v6544, %v6545
        %v6547 = vsel %vm6415, %v5968, 0.0
        %v6548 = vadd.f32 %v6546, %v6547
        %v6549 = vsel %vm6415, %v5969, 0.0
        %v6550 = vadd.f32 %v6548, %v6549
        %v6551 = vsel %vm6415, %v5970, 0.0
        %v6552 = vadd.f32 %v6550, %v6551
        %v6553 = vsel %vm6415, %v5971, 0.0
        %v6554 = vadd.f32 %v6552, %v6553
        %v6555 = vsel %vm6415, %v5972, 0.0
        %v6556 = vadd.f32 %v6554, %v6555
        %v6557 = vsel %vm6415, %v5973, 0.0
        %v6558 = vadd.f32 %v6556, %v6557
        %v6559 = vsel %vm6415, %v5974, 0.0
        %v6560 = vadd.f32 %v6558, %v6559
        %v6561 = vsel %vm6415, %v5975, 0.0
        %v6562 = vadd.f32 %v6560, %v6561
        %v6563 = vsel %vm6415, %v5976, 0.0
        %v6564 = vadd.f32 %v6562, %v6563
        %v6565 = vsel %vm6415, %v5977, 0.0
        %v6566 = vadd.f32 %v6564, %v6565
        %v6567 = vsel %vm6415, %v5978, 0.0
        %v6568 = vadd.f32 %v6566, %v6567
        %v6569 = vsel %vm6415, %v5979, 0.0
        %v6570 = vadd.f32 %v6568, %v6569
        %v6571 = vsel %vm6415, %v5980, 0.0
        %v6572 = vadd.f32 %v6570, %v6571
        %v6573 = vsel %vm6415, %v5981, 0.0
        %v6574 = vadd.f32 %v6572, %v6573
        %v6575 = vsel %vm6415, %v5982, 0.0
        %v6576 = vadd.f32 %v6574, %v6575
        %v6577 = vsel %vm6415, %v5983, 0.0
        %v6578 = vadd.f32 %v6576, %v6577
        %v6579 = vsel %vm6415, %v5984, 0.0
        %v6580 = vadd.f32 %v6578, %v6579
        %v6581 = vsel %vm6415, %v5985, 0.0
        %v6582 = vadd.f32 %v6580, %v6581
        %v6583 = vsel %vm6415, %v5986, 0.0
        %v6584 = vadd.f32 %v6582, %v6583
        %v6585 = vsel %vm6415, %v5987, 0.0
        %v6586 = vadd.f32 %v6584, %v6585
        %v6587 = vsel %vm6415, %v5988, 0.0
        %v6588 = vadd.f32 %v6586, %v6587
        %v6589 = vsel %vm6415, %v5989, 0.0
        %v6590 = vadd.f32 %v6588, %v6589
        %v6591 = vsel %vm6415, %v5990, 0.0
        %v6592 = vadd.f32 %v6590, %v6591
        %v6593 = vsel %vm6415, %v5991, 0.0
        %v6594 = vadd.f32 %v6592, %v6593
        %v6595 = vsel %vm6415, %v5992, 0.0
        %v6596 = vadd.f32 %v6594, %v6595
        %v6597 = vsel %vm6415, %v5993, 0.0
        %v6598 = vadd.f32 %v6596, %v6597
        %v6599 = vsel %vm6415, %v5994, 0.0
        %v6600 = vadd.f32 %v6598, %v6599
        %v6601 = vsel %vm6415, %v5995, 0.0
        %v6602 = vadd.f32 %v6600, %v6601
        %v6603 = vsel %vm6415, %v5996, 0.0
        %v6604 = vadd.f32 %v6602, %v6603
        %v6605 = vsel %vm6415, %v5997, 0.0
        %v6606 = vadd.f32 %v6604, %v6605
        %v6607 = vsel %vm6415, %v5998, 0.0
        %v6608 = vadd.f32 %v6606, %v6607
        %v6609 = vsel %vm6415, %v5999, 0.0
        %v6610 = vadd.f32 %v6608, %v6609
        %v6611 = vsel %vm6415, %v6000, 0.0
        %v6612 = vadd.f32 %v6610, %v6611
        %v6613 = vsel %vm6415, %v6001, 0.0
        %v6614 = vadd.f32 %v6612, %v6613
        %v6615 = vsel %vm6415, %v6002, 0.0
        %v6616 = vadd.f32 %v6614, %v6615
        %v6617 = vsel %vm6415, %v6003, 0.0
        %v6618 = vadd.f32 %v6616, %v6617
        %v6619 = vsel %vm6415, %v6004, 0.0
        %v6620 = vadd.f32 %v6618, %v6619
        %v6621 = vsel %vm6415, %v6005, 0.0
        %v6622 = vadd.f32 %v6620, %v6621
        %v6623 = vsel %vm6415, %v6006, 0.0
        %v6624 = vadd.f32 %v6622, %v6623
        %v6625 = vsel %vm6415, %v6007, 0.0
        %v6626 = vadd.f32 %v6624, %v6625
        %v6627 = vsel %vm6415, %v6008, 0.0
        %v6628 = vadd.f32 %v6626, %v6627
        %v6629 = vsel %vm6415, %v6009, 0.0
        %v6630 = vadd.f32 %v6628, %v6629
        %v6631 = vsel %vm6415, %v6010, 0.0
        %v6632 = vadd.f32 %v6630, %v6631
        %v6633 = vsel %vm6415, %v6011, 0.0
        %v6634 = vadd.f32 %v6632, %v6633
        %v6635 = vsel %vm6415, %v6012, 0.0
        %v6636 = vadd.f32 %v6634, %v6635
        %v6637 = vsel %vm6415, %v6013, 0.0
        %v6638 = vadd.f32 %v6636, %v6637
        %v6639 = vsel %vm6415, %v6014, 0.0
        %v6640 = vadd.f32 %v6638, %v6639
        %v6641 = vsel %vm6415, %v6015, 0.0
        %v6642 = vadd.f32 %v6640, %v6641
        %v6643 = vsel %vm6415, %v6016, 0.0
        %v6644 = vadd.f32 %v6642, %v6643
        %v6645 = vsel %vm6415, %v6017, 0.0
        %v6646 = vadd.f32 %v6644, %v6645
        %v6647 = vsel %vm6415, %v6018, 0.0
        %v6648 = vadd.f32 %v6646, %v6647
        %v6649 = vsel %vm6415, %v6019, 0.0
        %v6650 = vadd.f32 %v6648, %v6649
        %v6651 = vsel %vm6415, %v6020, 0.0
        %v6652 = vadd.f32 %v6650, %v6651
        %v6653 = vsel %vm6415, %v6021, 0.0
        %v6654 = vadd.f32 %v6652, %v6653
        %v6655 = vsel %vm6415, %v6022, 0.0
        %v6656 = vadd.f32 %v6654, %v6655
        %v6657 = vsel %vm6415, %v6023, 0.0
        %v6658 = vadd.f32 %v6656, %v6657
        %v6659 = vsel %vm6415, %v6024, 0.0
        %v6660 = vadd.f32 %v6658, %v6659
        %v6661 = vsel %vm6415, %v6025, 0.0
        %v6662 = vadd.f32 %v6660, %v6661
        %v6663 = vsel %vm6415, %v6026, 0.0
        %v6664 = vadd.f32 %v6662, %v6663
        %v6665 = vsel %vm6415, %v6027, 0.0
        %v6666 = vadd.f32 %v6664, %v6665
        %v6667 = vsel %vm6415, %v6028, 0.0
        %v6668 = vadd.f32 %v6666, %v6667
        %v6669 = vsel %vm6415, %v6029, 0.0
        %v6670 = vadd.f32 %v6668, %v6669
        %v6671 = vsel %vm6415, %v6030, 0.0
        %v6672 = vadd.f32 %v6670, %v6671
        %v6673 = vsel %vm6415, %v6031, 0.0
        %v6674 = vadd.f32 %v6672, %v6673
        %v6675 = vsel %vm6415, %v6032, 0.0
        %v6676 = vadd.f32 %v6674, %v6675
        %v6677 = vsel %vm6415, %v6033, 0.0
        %v6678 = vadd.f32 %v6676, %v6677
        %v6679 = vsel %vm6415, %v6034, 0.0
        %v6680 = vadd.f32 %v6678, %v6679
        %v6681 = vsel %vm6415, %v6035, 0.0
        %v6682 = vadd.f32 %v6680, %v6681
        %v6683 = vsel %vm6415, %v6036, 0.0
        %v6684 = vadd.f32 %v6682, %v6683
        %v6685 = vsel %vm6415, %v6037, 0.0
        %v6686 = vadd.f32 %v6684, %v6685
        %v6687 = vsel %vm6415, %v6038, 0.0
        %v6688 = vadd.f32 %v6686, %v6687
        %v6689 = vsel %vm6415, %v6039, 0.0
        %v6690 = vadd.f32 %v6688, %v6689
        %v6691 = vsel %vm6415, %v6040, 0.0
        %v6692 = vadd.f32 %v6690, %v6691
        %v6693 = vsel %vm6415, %v6041, 0.0
        %v6694 = vadd.f32 %v6692, %v6693
        %v6695 = vsel %vm6415, %v6042, 0.0
        %v6696 = vadd.f32 %v6694, %v6695
        %v6697 = vsel %vm6415, %v6043, 0.0
        %v6698 = vadd.f32 %v6696, %v6697
        %v6699 = vsel %vm6415, %v6044, 0.0
        %v6700 = vadd.f32 %v6698, %v6699
        %v6701 = vsel %vm6415, %v6045, 0.0
        %v6702 = vadd.f32 %v6700, %v6701
        %v6703 = vsel %vm6415, %v6046, 0.0
        %v6704 = vadd.f32 %v6702, %v6703
        %v6705 = vsel %vm6415, %v6047, 0.0
        %v6706 = vadd.f32 %v6704, %v6705
        %v6707 = vsel %vm6415, %v6048, 0.0
        %v6708 = vadd.f32 %v6706, %v6707
        %v6709 = vsel %vm6415, %v6049, 0.0
        %v6710 = vadd.f32 %v6708, %v6709
        %v6711 = vsel %vm6415, %v6050, 0.0
        %v6712 = vadd.f32 %v6710, %v6711
        %v6713 = vsel %vm6415, %v6051, 0.0
        %v6714 = vadd.f32 %v6712, %v6713
        %v6715 = vsel %vm6415, %v6052, 0.0
        %v6716 = vadd.f32 %v6714, %v6715
        %v6717 = vsel %vm6415, %v6053, 0.0
        %v6718 = vadd.f32 %v6716, %v6717
        %v6719 = vsel %vm6415, %v6054, 0.0
        %v6720 = vadd.f32 %v6718, %v6719
        %v6721 = vsel %vm6415, %v6055, 0.0
        %v6722 = vadd.f32 %v6720, %v6721
        %v6723 = vsel %vm6415, %v6056, 0.0
        %v6724 = vadd.f32 %v6722, %v6723
        %v6725 = vsel %vm6415, %v6057, 0.0
        %v6726 = vadd.f32 %v6724, %v6725
        %v6727 = vsel %vm6415, %v6058, 0.0
        %v6728 = vadd.f32 %v6726, %v6727
        %v6729 = vsel %vm6415, %v6059, 0.0
        %v6730 = vadd.f32 %v6728, %v6729
        %v6731 = vsel %vm6415, %v6060, 0.0
        %v6732 = vadd.f32 %v6730, %v6731
        %v6733 = vsel %vm6415, %v6061, 0.0
        %v6734 = vadd.f32 %v6732, %v6733
        %v6735 = vsel %vm6415, %v6062, 0.0
        %v6736 = vadd.f32 %v6734, %v6735
        %v6737 = vsel %vm6415, %v6063, 0.0
        %v6738 = vadd.f32 %v6736, %v6737
        %v6739 = vsel %vm6415, %v6064, 0.0
        %v6740 = vadd.f32 %v6738, %v6739
        %v6741 = vsel %vm6415, %v6065, 0.0
        %v6742 = vadd.f32 %v6740, %v6741
        %v6743 = vsel %vm6415, %v6066, 0.0
        %v6744 = vadd.f32 %v6742, %v6743
        %v6745 = vsel %vm6415, %v6067, 0.0
        %v6746 = vadd.f32 %v6744, %v6745
        %v6747 = vsel %vm6415, %v6068, 0.0
        %v6748 = vadd.f32 %v6746, %v6747
        %v6749 = vsel %vm6415, %v6069, 0.0
        %v6750 = vadd.f32 %v6748, %v6749
        %v6751 = vsel %vm6415, %v6070, 0.0
        %v6752 = vadd.f32 %v6750, %v6751
        %v6753 = vsel %vm6415, %v6071, 0.0
        %v6754 = vadd.f32 %v6752, %v6753
        %v6755 = vsel %vm6415, %v6072, 0.0
        %v6756 = vadd.f32 %v6754, %v6755
        %v6757 = vsel %vm6415, %v6073, 0.0
        %v6758 = vadd.f32 %v6756, %v6757
        %v6759 = vsel %vm6415, %v6074, 0.0
        %v6760 = vadd.f32 %v6758, %v6759
        %v6761 = vsel %vm6415, %v6075, 0.0
        %v6762 = vadd.f32 %v6760, %v6761
        %v6763 = vsel %vm6415, %v6076, 0.0
        %v6764 = vadd.f32 %v6762, %v6763
        %v6765 = vsel %vm6415, %v6077, 0.0
        %v6766 = vadd.f32 %v6764, %v6765
        %v6767 = vsel %vm6415, %v6078, 0.0
        %v6768 = vadd.f32 %v6766, %v6767
        %v6769 = vsel %vm6415, %v6079, 0.0
        %v6770 = vadd.f32 %v6768, %v6769
        %v6771 = vsel %vm6415, %v6080, 0.0
        %v6772 = vadd.f32 %v6770, %v6771
        %v6773 = vsel %vm6415, %v6081, 0.0
        %v6774 = vadd.f32 %v6772, %v6773
        %v6775 = vsel %vm6415, %v6082, 0.0
        %v6776 = vadd.f32 %v6774, %v6775
        %v6777 = vsel %vm6415, %v6083, 0.0
        %v6778 = vadd.f32 %v6776, %v6777
        %v6779 = vsel %vm6415, %v6084, 0.0
        %v6780 = vadd.f32 %v6778, %v6779
        %v6781 = vsel %vm6415, %v6085, 0.0
        %v6782 = vadd.f32 %v6780, %v6781
        %v6783 = vsel %vm6415, %v6086, 0.0
        %v6784 = vadd.f32 %v6782, %v6783
        %v6785 = vsel %vm6415, %v6087, 0.0
        %v6786 = vadd.f32 %v6784, %v6785
        %v6787 = vsel %vm6415, %v6088, 0.0
        %v6788 = vadd.f32 %v6786, %v6787
        %v6789 = vsel %vm6415, %v6089, 0.0
        %v6790 = vadd.f32 %v6788, %v6789
        %v6791 = vsel %vm6415, %v6090, 0.0
        %v6792 = vadd.f32 %v6790, %v6791
        %v6793 = vsel %vm6415, %v6091, 0.0
        %v6794 = vadd.f32 %v6792, %v6793
        %v6795 = vsel %vm6415, %v6092, 0.0
        %v6796 = vadd.f32 %v6794, %v6795
        %v6797 = vsel %vm6415, %v6093, 0.0
        %v6798 = vadd.f32 %v6796, %v6797
        %v6799 = vsel %vm6415, %v6094, 0.0
        %v6800 = vadd.f32 %v6798, %v6799
        %v6801 = vsel %vm6415, %v6095, 0.0
        %v6802 = vadd.f32 %v6800, %v6801
        %v6803 = vsel %vm6415, %v6096, 0.0
        %v6804 = vadd.f32 %v6802, %v6803
        %v6805 = vsel %vm6415, %v6097, 0.0
        %v6806 = vadd.f32 %v6804, %v6805
        %v6807 = vsel %vm6415, %v6098, 0.0
        %v6808 = vadd.f32 %v6806, %v6807
        %v6809 = vsel %vm6415, %v6099, 0.0
        %v6810 = vadd.f32 %v6808, %v6809
        %v6811 = vsel %vm6415, %v6100, 0.0
        %v6812 = vadd.f32 %v6810, %v6811
        %v6813 = vsel %vm6415, %v6101, 0.0
        %v6814 = vadd.f32 %v6812, %v6813
        %v6815 = vsel %vm6415, %v6102, 0.0
        %v6816 = vadd.f32 %v6814, %v6815
        %v6817 = vsel %vm6415, %v6103, 0.0
        %v6818 = vadd.f32 %v6816, %v6817
        %v6819 = vsel %vm6415, %v6104, 0.0
        %v6820 = vadd.f32 %v6818, %v6819
        %v6821 = vsel %vm6415, %v6105, 0.0
        %v6822 = vadd.f32 %v6820, %v6821
        %v6823 = vsel %vm6415, %v6106, 0.0
        %v6824 = vadd.f32 %v6822, %v6823
        %v6825 = vsel %vm6415, %v6107, 0.0
        %v6826 = vadd.f32 %v6824, %v6825
        %v6827 = vsel %vm6415, %v6108, 0.0
        %v6828 = vadd.f32 %v6826, %v6827
        %v6829 = vsel %vm6415, %v6109, 0.0
        %v6830 = vadd.f32 %v6828, %v6829
        %v6831 = vsel %vm6415, %v6110, 0.0
        %v6832 = vadd.f32 %v6830, %v6831
        %v6833 = vsel %vm6415, %v6111, 0.0
        %v6834 = vadd.f32 %v6832, %v6833
        %v6835 = vsel %vm6415, %v6112, 0.0
        %v6836 = vadd.f32 %v6834, %v6835
        %v6837 = vsel %vm6415, %v6113, 0.0
        %v6838 = vadd.f32 %v6836, %v6837
        %v6839 = vsel %vm6415, %v6114, 0.0
        %v6840 = vadd.f32 %v6838, %v6839
        %v6841 = vsel %vm6415, %v6115, 0.0
        %v6842 = vadd.f32 %v6840, %v6841
        %v6843 = vsel %vm6415, %v6116, 0.0
        %v6844 = vadd.f32 %v6842, %v6843
        %v6845 = vsel %vm6415, %v6117, 0.0
        %v6846 = vadd.f32 %v6844, %v6845
        %v6847 = vsel %vm6415, %v6118, 0.0
        %v6848 = vadd.f32 %v6846, %v6847
        %v6849 = vsel %vm6415, %v6119, 0.0
        %v6850 = vadd.f32 %v6848, %v6849
        %v6851 = vsel %vm6415, %v6120, 0.0
        %v6852 = vadd.f32 %v6850, %v6851
        %v6853 = vsel %vm6415, %v6121, 0.0
        %v6854 = vadd.f32 %v6852, %v6853
        %v6855 = vsel %vm6415, %v6122, 0.0
        %v6856 = vadd.f32 %v6854, %v6855
        %v6857 = vsel %vm6415, %v6123, 0.0
        %v6858 = vadd.f32 %v6856, %v6857
        %v6859 = vsel %vm6415, %v6124, 0.0
        %v6860 = vadd.f32 %v6858, %v6859
        %v6861 = vsel %vm6415, %v6125, 0.0
        %v6862 = vadd.f32 %v6860, %v6861
        %v6863 = vsel %vm6415, %v6126, 0.0
        %v6864 = vadd.f32 %v6862, %v6863
        %v6865 = vsel %vm6415, %v6127, 0.0
        %v6866 = vadd.f32 %v6864, %v6865
        %v6867 = vsel %vm6415, %v6128, 0.0
        %v6868 = vadd.f32 %v6866, %v6867
        %v6869 = vsel %vm6415, %v6129, 0.0
        %v6870 = vadd.f32 %v6868, %v6869
        %v6871 = vsel %vm6415, %v6130, 0.0
        %v6872 = vadd.f32 %v6870, %v6871
        %v6873 = vsel %vm6415, %v6131, 0.0
        %v6874 = vadd.f32 %v6872, %v6873
        %v6875 = vsel %vm6415, %v6132, 0.0
        %v6876 = vadd.f32 %v6874, %v6875
        %v6877 = vsel %vm6415, %v6133, 0.0
        %v6878 = vadd.f32 %v6876, %v6877
        %v6879 = vsel %vm6415, %v6134, 0.0
        %v6880 = vadd.f32 %v6878, %v6879
        %v6881 = vsel %vm6415, %v6135, 0.0
        %v6882 = vadd.f32 %v6880, %v6881
        %v6883 = vsel %vm6415, %v6136, 0.0
        %v6884 = vadd.f32 %v6882, %v6883
        %v6885 = vsel %vm6415, %v6137, 0.0
        %v6886 = vadd.f32 %v6884, %v6885
        %v6887 = vsel %vm6415, %v6138, 0.0
        %v6888 = vadd.f32 %v6886, %v6887
        %v6889 = vsel %vm6415, %v6139, 0.0
        %v6890 = vadd.f32 %v6888, %v6889
        %v6891 = vsel %vm6415, %v6140, 0.0
        %v6892 = vadd.f32 %v6890, %v6891
        %v6893 = vsel %vm6415, %v6141, 0.0
        %v6894 = vadd.f32 %v6892, %v6893
        %v6895 = vsel %vm6415, %v6142, 0.0
        %v6896 = vadd.f32 %v6894, %v6895
        %v6897 = vsel %vm6415, %v6143, 0.0
        %v6898 = vadd.f32 %v6896, %v6897
        %v6899 = vsel %vm6415, %v6144, 0.0
        %v6900 = vadd.f32 %v6898, %v6899
        %v6901 = vsel %vm6415, %v6145, 0.0
        %v6902 = vadd.f32 %v6900, %v6901
        %v6903 = vsel %vm6415, %v6146, 0.0
        %v6904 = vadd.f32 %v6902, %v6903
        %v6905 = vsel %vm6415, %v6147, 0.0
        %v6906 = vadd.f32 %v6904, %v6905
        %v6907 = vsel %vm6415, %v6148, 0.0
        %v6908 = vadd.f32 %v6906, %v6907
        %v6909 = vsel %vm6415, %v6149, 0.0
        %v6910 = vadd.f32 %v6908, %v6909
        %v6911 = vsel %vm6415, %v6150, 0.0
        %v6912 = vadd.f32 %v6910, %v6911
        %v6913 = vsel %vm6415, %v6151, 0.0
        %v6914 = vadd.f32 %v6912, %v6913
        %v6915 = vsel %vm6415, %v6152, 0.0
        %v6916 = vadd.f32 %v6914, %v6915
        %v6917 = vsel %vm6415, %v6153, 0.0
        %v6918 = vadd.f32 %v6916, %v6917
        %v6919 = vsel %vm6415, %v6154, 0.0
        %v6920 = vadd.f32 %v6918, %v6919
        %v6921 = vsel %vm6415, %v6155, 0.0
        %v6922 = vadd.f32 %v6920, %v6921
        %v6923 = vsel %vm6415, %v6156, 0.0
        %v6924 = vadd.f32 %v6922, %v6923
        %v6925 = vsel %vm6415, %v6157, 0.0
        %v6926 = vadd.f32 %v6924, %v6925
        %v6927 = vsel %vm6415, %v6158, 0.0
        %v6928 = vadd.f32 %v6926, %v6927
        %v6929 = vsel %vm6415, %v6159, 0.0
        %v6930 = vadd.f32 %v6928, %v6929
        %v6931 = vsel %vm6415, %v6160, 0.0
        %v6932 = vadd.f32 %v6930, %v6931
        %v6933 = vsel %vm6415, %v6161, 0.0
        %v6934 = vadd.f32 %v6932, %v6933
        %v6935 = vsel %vm6415, %v6162, 0.0
        %v6936 = vadd.f32 %v6934, %v6935
        %v6937 = vsel %vm6415, %v6163, 0.0
        %v6938 = vadd.f32 %v6936, %v6937
        %v6939 = vsel %vm6415, %v6164, 0.0
        %v6940 = vadd.f32 %v6938, %v6939
        %v6941 = vsel %vm6415, %v6165, 0.0
        %v6942 = vadd.f32 %v6940, %v6941
        %v6943 = vsel %vm6415, %v6166, 0.0
        %v6944 = vadd.f32 %v6942, %v6943
        %v6945 = vsel %vm6415, %v6167, 0.0
        %v6946 = vadd.f32 %v6944, %v6945
        %v6947 = vsel %vm6415, %v6168, 0.0
        %v6948 = vadd.f32 %v6946, %v6947
        %v6949 = vsel %vm6415, %v6169, 0.0
        %v6950 = vadd.f32 %v6948, %v6949
        %v6951 = vsel %vm6415, %v6170, 0.0
        %v6952 = vadd.f32 %v6950, %v6951
        %v6953 = vsel %vm6415, %v6171, 0.0
        %v6954 = vadd.f32 %v6952, %v6953
        %v6955 = vsel %vm6415, %v6172, 0.0
        %v6956 = vadd.f32 %v6954, %v6955
        %v6957 = vsel %vm6415, %v6173, 0.0
        %v6958 = vadd.f32 %v6956, %v6957
        %v6959 = vsel %vm6415, %v6174, 0.0
        %v6960 = vadd.f32 %v6958, %v6959
        %v6961 = vsel %vm6415, %v6175, 0.0
        %v6962 = vadd.f32 %v6960, %v6961
        %v6963 = vsel %vm6415, %v6176, 0.0
        %v6964 = vadd.f32 %v6962, %v6963
        %v6965 = vsel %vm6415, %v6177, 0.0
        %v6966 = vadd.f32 %v6964, %v6965
        %v6967 = vsel %vm6415, %v6178, 0.0
        %v6968 = vadd.f32 %v6966, %v6967
        %v6969 = vsel %vm6415, %v6179, 0.0
        %v6970 = vadd.f32 %v6968, %v6969
        %v6971 = vsel %vm6415, %v6180, 0.0
        %v6972 = vadd.f32 %v6970, %v6971
        %v6973 = vsel %vm6415, %v6181, 0.0
        %v6974 = vadd.f32 %v6972, %v6973
        %v6975 = vsel %vm6415, %v6182, 0.0
        %v6976 = vadd.f32 %v6974, %v6975
        %v6977 = vsel %vm6415, %v6183, 0.0
        %v6978 = vadd.f32 %v6976, %v6977
        %v6979 = vsel %vm6415, %v6184, 0.0
        %v6980 = vadd.f32 %v6978, %v6979
        %v6981 = vsel %vm6415, %v6185, 0.0
        %v6982 = vadd.f32 %v6980, %v6981
        %v6983 = vsel %vm6415, %v6186, 0.0
        %v6984 = vadd.f32 %v6982, %v6983
        %v6985 = vsel %vm6415, %v6187, 0.0
        %v6986 = vadd.f32 %v6984, %v6985
        %v6987 = vsel %vm6415, %v6188, 0.0
        %v6988 = vadd.f32 %v6986, %v6987
        %v6989 = vsel %vm6415, %v6189, 0.0
        %v6990 = vadd.f32 %v6988, %v6989
        %v6991 = vsel %vm6415, %v6190, 0.0
        %v6992 = vadd.f32 %v6990, %v6991
        %v6993 = vsel %vm6415, %v6191, 0.0
        %v6994 = vadd.f32 %v6992, %v6993
        %v6995 = vsel %vm6415, %v6192, 0.0
        %v6996 = vadd.f32 %v6994, %v6995
        %v6997 = vsel %vm6415, %v6193, 0.0
        %v6998 = vadd.f32 %v6996, %v6997
        %v6999 = vsel %vm6415, %v6194, 0.0
        %v7000 = vadd.f32 %v6998, %v6999
        %v7001 = vsel %vm6415, %v6195, 0.0
        %v7002 = vadd.f32 %v7000, %v7001
        %v7003 = vsel %vm6415, %v6196, 0.0
        %v7004 = vadd.f32 %v7002, %v7003
        %v7005 = vsel %vm6415, %v6197, 0.0
        %v7006 = vadd.f32 %v7004, %v7005
        %v7007 = vsel %vm6415, %v6198, 0.0
        %v7008 = vadd.f32 %v7006, %v7007
        %v7009 = vsel %vm6415, %v6199, 0.0
        %v7010 = vadd.f32 %v7008, %v7009
        %v7011 = vsel %vm6415, %v6200, 0.0
        %v7012 = vadd.f32 %v7010, %v7011
        %v7013 = vsel %vm6415, %v6201, 0.0
        %v7014 = vadd.f32 %v7012, %v7013
        %v7015 = vsel %vm6415, %v6202, 0.0
        %v7016 = vadd.f32 %v7014, %v7015
        %v7017 = vsel %vm6415, %v6203, 0.0
        %v7018 = vadd.f32 %v7016, %v7017
        %v7019 = vsel %vm6415, %v6204, 0.0
        %v7020 = vadd.f32 %v7018, %v7019
        %v7021 = vsel %vm6415, %v6205, 0.0
        %v7022 = vadd.f32 %v7020, %v7021
        %v7023 = vsel %vm6415, %v6206, 0.0
        %v7024 = vadd.f32 %v7022, %v7023
        %v7025 = vsel %vm6415, %v6207, 0.0
        %v7026 = vadd.f32 %v7024, %v7025
        %v7027 = vsel %vm6415, %v6208, 0.0
        %v7028 = vadd.f32 %v7026, %v7027
        %v7029 = vsel %vm6415, %v6209, 0.0
        %v7030 = vadd.f32 %v7028, %v7029
        %v7031 = vsel %vm6415, %v6210, 0.0
        %v7032 = vadd.f32 %v7030, %v7031
        %v7033 = vsel %vm6415, %v6211, 0.0
        %v7034 = vadd.f32 %v7032, %v7033
        %v7035 = vsel %vm6415, %v6212, 0.0
        %v7036 = vadd.f32 %v7034, %v7035
        %v7037 = vsel %vm6415, %v6213, 0.0
        %v7038 = vadd.f32 %v7036, %v7037
        %v7039 = vsel %vm6415, %v6214, 0.0
        %v7040 = vadd.f32 %v7038, %v7039
        %v7041 = vsel %vm6415, %v6215, 0.0
        %v7042 = vadd.f32 %v7040, %v7041
        %v7043 = vsel %vm6415, %v6216, 0.0
        %v7044 = vadd.f32 %v7042, %v7043
        %v7045 = vsel %vm6415, %v6217, 0.0
        %v7046 = vadd.f32 %v7044, %v7045
        %v7047 = vsel %vm6415, %v6218, 0.0
        %v7048 = vadd.f32 %v7046, %v7047
        %v7049 = vsel %vm6415, %v6219, 0.0
        %v7050 = vadd.f32 %v7048, %v7049
        %v7051 = vsel %vm6415, %v6220, 0.0
        %v7052 = vadd.f32 %v7050, %v7051
        %v7053 = vsel %vm6415, %v6221, 0.0
        %v7054 = vadd.f32 %v7052, %v7053
        %v7055 = vsel %vm6415, %v6222, 0.0
        %v7056 = vadd.f32 %v7054, %v7055
        %v7057 = vsel %vm6415, %v6223, 0.0
        %v7058 = vadd.f32 %v7056, %v7057
        %v7059 = vsel %vm6415, %v6224, 0.0
        %v7060 = vadd.f32 %v7058, %v7059
        %v7061 = vsel %vm6415, %v6225, 0.0
        %v7062 = vadd.f32 %v7060, %v7061
        %v7063 = vsel %vm6415, %v6226, 0.0
        %v7064 = vadd.f32 %v7062, %v7063
        %v7065 = vsel %vm6415, %v6227, 0.0
        %v7066 = vadd.f32 %v7064, %v7065
        %v7067 = vsel %vm6415, %v6228, 0.0
        %v7068 = vadd.f32 %v7066, %v7067
        %v7069 = vsel %vm6415, %v6229, 0.0
        %v7070 = vadd.f32 %v7068, %v7069
        %v7071 = vsel %vm6415, %v6230, 0.0
        %v7072 = vadd.f32 %v7070, %v7071
        %v7073 = vsel %vm6415, %v6231, 0.0
        %v7074 = vadd.f32 %v7072, %v7073
        %v7075 = vsel %vm6415, %v6232, 0.0
        %v7076 = vadd.f32 %v7074, %v7075
        %v7077 = vsel %vm6415, %v6233, 0.0
        %v7078 = vadd.f32 %v7076, %v7077
        %v7079 = vsel %vm6415, %v6234, 0.0
        %v7080 = vadd.f32 %v7078, %v7079
        %v7081 = vsel %vm6415, %v6235, 0.0
        %v7082 = vadd.f32 %v7080, %v7081
        %v7083 = vsel %vm6415, %v6236, 0.0
        %v7084 = vadd.f32 %v7082, %v7083
        %v7085 = vsel %vm6415, %v6237, 0.0
        %v7086 = vadd.f32 %v7084, %v7085
        %v7087 = vsel %vm6415, %v6238, 0.0
        %v7088 = vadd.f32 %v7086, %v7087
        %v7089 = vsel %vm6415, %v6239, 0.0
        %v7090 = vadd.f32 %v7088, %v7089
        %v7091 = vsel %vm6415, %v6240, 0.0
        %v7092 = vadd.f32 %v7090, %v7091
        %v7093 = vsel %vm6415, %v6241, 0.0
        %v7094 = vadd.f32 %v7092, %v7093
        %v7095 = vsel %vm6415, %v6242, 0.0
        %v7096 = vadd.f32 %v7094, %v7095
        %v7097 = vsel %vm6415, %v6243, 0.0
        %v7098 = vadd.f32 %v7096, %v7097
        %v7099 = vsel %vm6415, %v6244, 0.0
        %v7100 = vadd.f32 %v7098, %v7099
        %v7101 = vsel %vm6415, %v6245, 0.0
        %v7102 = vadd.f32 %v7100, %v7101
        %v7103 = vsel %vm6415, %v6246, 0.0
        %v7104 = vadd.f32 %v7102, %v7103
        %v7105 = vsel %vm6415, %v6247, 0.0
        %v7106 = vadd.f32 %v7104, %v7105
        %v7107 = vsel %vm6415, %v6248, 0.0
        %v7108 = vadd.f32 %v7106, %v7107
        %v7109 = vsel %vm6415, %v6249, 0.0
        %v7110 = vadd.f32 %v7108, %v7109
        %v7111 = vsel %vm6415, %v6250, 0.0
        %v7112 = vadd.f32 %v7110, %v7111
        %v7113 = vsel %vm6415, %v6251, 0.0
        %v7114 = vadd.f32 %v7112, %v7113
        %v7115 = vsel %vm6415, %v6252, 0.0
        %v7116 = vadd.f32 %v7114, %v7115
        %v7117 = vsel %vm6415, %v6253, 0.0
        %v7118 = vadd.f32 %v7116, %v7117
        %v7119 = vsel %vm6415, %v6254, 0.0
        %v7120 = vadd.f32 %v7118, %v7119
        %v7121 = vsel %vm6415, %v6255, 0.0
        %v7122 = vadd.f32 %v7120, %v7121
        %v7123 = vsel %vm6415, %v6256, 0.0
        %v7124 = vadd.f32 %v7122, %v7123
        %v7125 = vsel %vm6415, %v6257, 0.0
        %v7126 = vadd.f32 %v7124, %v7125
        %v7127 = vsel %vm6415, %v6258, 0.0
        %v7128 = vadd.f32 %v7126, %v7127
        %v7129 = vsel %vm6415, %v6259, 0.0
        %v7130 = vadd.f32 %v7128, %v7129
        %v7131 = vsel %vm6415, %v6260, 0.0
        %v7132 = vadd.f32 %v7130, %v7131
        %v7133 = vsel %vm6415, %v6261, 0.0
        %v7134 = vadd.f32 %v7132, %v7133
        %v7135 = vsel %vm6415, %v6262, 0.0
        %v7136 = vadd.f32 %v7134, %v7135
        %v7137 = vsel %vm6415, %v6263, 0.0
        %v7138 = vadd.f32 %v7136, %v7137
        %v7139 = vsel %vm6415, %v6264, 0.0
        %v7140 = vadd.f32 %v7138, %v7139
        %v7141 = vsel %vm6415, %v6265, 0.0
        %v7142 = vadd.f32 %v7140, %v7141
        %v7143 = vsel %vm6415, %v6266, 0.0
        %v7144 = vadd.f32 %v7142, %v7143
        %v7145 = vsel %vm6415, %v6267, 0.0
        %v7146 = vadd.f32 %v7144, %v7145
        %v7147 = vsel %vm6415, %v6268, 0.0
        %v7148 = vadd.f32 %v7146, %v7147
        %v7149 = vsel %vm6415, %v6269, 0.0
        %v7150 = vadd.f32 %v7148, %v7149
        %v7151 = vsel %vm6415, %v6270, 0.0
        %v7152 = vadd.f32 %v7150, %v7151
        %v7153 = vsel %vm6415, %v6271, 0.0
        %v7154 = vadd.f32 %v7152, %v7153
        %v7155 = vsel %vm6415, %v6272, 0.0
        %v7156 = vadd.f32 %v7154, %v7155
        %v7157 = vsel %vm6415, %v6273, 0.0
        %v7158 = vadd.f32 %v7156, %v7157
        %v7159 = vsel %vm6415, %v6274, 0.0
        %v7160 = vadd.f32 %v7158, %v7159
        %v7161 = vsel %vm6415, %v6275, 0.0
        %v7162 = vadd.f32 %v7160, %v7161
        %v7163 = vsel %vm6415, %v6276, 0.0
        %v7164 = vadd.f32 %v7162, %v7163
        %v7165 = vsel %vm6415, %v6277, 0.0
        %v7166 = vadd.f32 %v7164, %v7165
        %v7167 = vsel %vm6415, %v6278, 0.0
        %v7168 = vadd.f32 %v7166, %v7167
        %v7169 = vsel %vm6415, %v6279, 0.0
        %v7170 = vadd.f32 %v7168, %v7169
        %v7171 = vsel %vm6415, %v6280, 0.0
        %v7172 = vadd.f32 %v7170, %v7171
        %v7173 = vsel %vm6415, %v6281, 0.0
        %v7174 = vadd.f32 %v7172, %v7173
        %v7175 = vsel %vm6415, %v6282, 0.0
        %v7176 = vadd.f32 %v7174, %v7175
        %v7177 = vsel %vm6415, %v6283, 0.0
        %v7178 = vadd.f32 %v7176, %v7177
        %v7179 = vsel %vm6415, %v6284, 0.0
        %v7180 = vadd.f32 %v7178, %v7179
        %v7181 = vsel %vm6415, %v6285, 0.0
        %v7182 = vadd.f32 %v7180, %v7181
        %v7183 = vsel %vm6415, %v6286, 0.0
        %v7184 = vadd.f32 %v7182, %v7183
        %v7185 = vsel %vm6415, %v6287, 0.0
        %v7186 = vadd.f32 %v7184, %v7185
        %v7187 = vsel %vm6415, %v6288, 0.0
        %v7188 = vadd.f32 %v7186, %v7187
        %v7189 = vsel %vm6415, %v6289, 0.0
        %v7190 = vadd.f32 %v7188, %v7189
        %v7191 = vsel %vm6415, %v6290, 0.0
        %v7192 = vadd.f32 %v7190, %v7191
        %v7193 = vsel %vm6415, %v6291, 0.0
        %v7194 = vadd.f32 %v7192, %v7193
        %v7195 = vsel %vm6415, %v6292, 0.0
        %v7196 = vadd.f32 %v7194, %v7195
        %v7197 = vsel %vm6415, %v6293, 0.0
        %v7198 = vadd.f32 %v7196, %v7197
        %v7199 = vsel %vm6415, %v6294, 0.0
        %v7200 = vadd.f32 %v7198, %v7199
        %v7201 = vsel %vm6415, %v6295, 0.0
        %v7202 = vadd.f32 %v7200, %v7201
        %v7203 = vsel %vm6415, %v6296, 0.0
        %v7204 = vadd.f32 %v7202, %v7203
        %v7205 = vsel %vm6415, %v6297, 0.0
        %v7206 = vadd.f32 %v7204, %v7205
        %v7207 = vsel %vm6415, %v6298, 0.0
        %v7208 = vadd.f32 %v7206, %v7207
        %v7209 = vsel %vm6415, %v6299, 0.0
        %v7210 = vadd.f32 %v7208, %v7209
        %v7211 = vsel %vm6415, %v6300, 0.0
        %v7212 = vadd.f32 %v7210, %v7211
        %v7213 = vsel %vm6415, %v6301, 0.0
        %v7214 = vadd.f32 %v7212, %v7213
        %v7215 = vsel %vm6415, %v6302, 0.0
        %v7216 = vadd.f32 %v7214, %v7215
        %v7217 = vsel %vm6415, %v6303, 0.0
        %v7218 = vadd.f32 %v7216, %v7217
        %v7219 = vsel %vm6415, %v6304, 0.0
        %v7220 = vadd.f32 %v7218, %v7219
        %v7221 = vsel %vm6415, %v6305, 0.0
        %v7222 = vadd.f32 %v7220, %v7221
        %v7223 = vsel %vm6415, %v6306, 0.0
        %v7224 = vadd.f32 %v7222, %v7223
        %v7225 = vsel %vm6415, %v6307, 0.0
        %v7226 = vadd.f32 %v7224, %v7225
        %v7227 = vsel %vm6415, %v6308, 0.0
        %v7228 = vadd.f32 %v7226, %v7227
        %v7229 = vsel %vm6415, %v6309, 0.0
        %v7230 = vadd.f32 %v7228, %v7229
        %v7231 = vsel %vm6415, %v6310, 0.0
        %v7232 = vadd.f32 %v7230, %v7231
        %v7233 = vsel %vm6415, %v6311, 0.0
        %v7234 = vadd.f32 %v7232, %v7233
        %v7235 = vsel %vm6415, %v6312, 0.0
        %v7236 = vadd.f32 %v7234, %v7235
        %v7237 = vsel %vm6415, %v6313, 0.0
        %v7238 = vadd.f32 %v7236, %v7237
        %v7239 = vsel %vm6415, %v6314, 0.0
        %v7240 = vadd.f32 %v7238, %v7239
        %v7241 = vsel %vm6415, %v6315, 0.0
        %v7242 = vadd.f32 %v7240, %v7241
        %v7243 = vsel %vm6415, %v6316, 0.0
        %v7244 = vadd.f32 %v7242, %v7243
        %v7245 = vsel %vm6415, %v6317, 0.0
        %v7246 = vadd.f32 %v7244, %v7245
        %v7247 = vsel %vm6415, %v6318, 0.0
        %v7248 = vadd.f32 %v7246, %v7247
        %v7249 = vsel %vm6415, %v6319, 0.0
        %v7250 = vadd.f32 %v7248, %v7249
        %v7251 = vsel %vm6415, %v6320, 0.0
        %v7252 = vadd.f32 %v7250, %v7251
        %v7253 = vsel %vm6415, %v6321, 0.0
        %v7254 = vadd.f32 %v7252, %v7253
        %v7255 = vsel %vm6415, %v6322, 0.0
        %v7256 = vadd.f32 %v7254, %v7255
        %v7257 = vsel %vm6415, %v6323, 0.0
        %v7258 = vadd.f32 %v7256, %v7257
        %v7259 = vsel %vm6415, %v6324, 0.0
        %v7260 = vadd.f32 %v7258, %v7259
        %v7261 = vsel %vm6415, %v6325, 0.0
        %v7262 = vadd.f32 %v7260, %v7261
        %v7263 = vsel %vm6415, %v6326, 0.0
        %v7264 = vadd.f32 %v7262, %v7263
        %v7265 = vsel %vm6415, %v6327, 0.0
        %v7266 = vadd.f32 %v7264, %v7265
        %v7267 = vsel %vm6415, %v6328, 0.0
        %v7268 = vadd.f32 %v7266, %v7267
        %v7269 = vsel %vm6415, %v6329, 0.0
        %v7270 = vadd.f32 %v7268, %v7269
        %v7271 = vsel %vm6415, %v6330, 0.0
        %v7272 = vadd.f32 %v7270, %v7271
        %v7273 = vsel %vm6415, %v6331, 0.0
        %v7274 = vadd.f32 %v7272, %v7273
        %v7275 = vsel %vm6415, %v6332, 0.0
        %v7276 = vadd.f32 %v7274, %v7275
        %v7277 = vsel %vm6415, %v6333, 0.0
        %v7278 = vadd.f32 %v7276, %v7277
        %v7279 = vsel %vm6415, %v6334, 0.0
        %v7280 = vadd.f32 %v7278, %v7279
        %v7281 = vsel %vm6415, %v6335, 0.0
        %v7282 = vadd.f32 %v7280, %v7281
        %v7283 = vsel %vm6415, %v6336, 0.0
        %v7284 = vadd.f32 %v7282, %v7283
        %v7285 = vsel %vm6415, %v6337, 0.0
        %v7286 = vadd.f32 %v7284, %v7285
        %v7287 = vsel %vm6415, %v6338, 0.0
        %v7288 = vadd.f32 %v7286, %v7287
        %v7289 = vsel %vm6415, %v6339, 0.0
        %v7290 = vadd.f32 %v7288, %v7289
        %v7291 = vsel %vm6415, %v6340, 0.0
        %v7292 = vadd.f32 %v7290, %v7291
        %v7293 = vsel %vm6415, %v6341, 0.0
        %v7294 = vadd.f32 %v7292, %v7293
        %v7295 = vsel %vm6415, %v6342, 0.0
        %v7296 = vadd.f32 %v7294, %v7295
        %v7297 = vsel %vm6415, %v6343, 0.0
        %v7298 = vadd.f32 %v7296, %v7297
        %v7299 = vsel %vm6415, %v6344, 0.0
        %v7300 = vadd.f32 %v7298, %v7299
        %v7301 = vsel %vm6415, %v6345, 0.0
        %v7302 = vadd.f32 %v7300, %v7301
        %v7303 = vsel %vm6415, %v6346, 0.0
        %v7304 = vadd.f32 %v7302, %v7303
        %v7305 = vsel %vm6415, %v6347, 0.0
        %v7306 = vadd.f32 %v7304, %v7305
        %v7307 = vsel %vm6415, %v6348, 0.0
        %v7308 = vadd.f32 %v7306, %v7307
        %v7309 = vsel %vm6415, %v6349, 0.0
        %v7310 = vadd.f32 %v7308, %v7309
        %v7311 = vsel %vm6415, %v6350, 0.0
        %v7312 = vadd.f32 %v7310, %v7311
        %v7313 = vsel %vm6415, %v6351, 0.0
        %v7314 = vadd.f32 %v7312, %v7313
        %v7315 = vsel %vm6415, %v6352, 0.0
        %v7316 = vadd.f32 %v7314, %v7315
        %v7317 = vsel %vm6415, %v6353, 0.0
        %v7318 = vadd.f32 %v7316, %v7317
        %v7319 = vsel %vm6415, %v6354, 0.0
        %v7320 = vadd.f32 %v7318, %v7319
        %v7321 = vsel %vm6415, %v6355, 0.0
        %v7322 = vadd.f32 %v7320, %v7321
        %v7323 = vsel %vm6415, %v6356, 0.0
        %v7324 = vadd.f32 %v7322, %v7323
        %v7325 = vsel %vm6415, %v6357, 0.0
        %v7326 = vadd.f32 %v7324, %v7325
        %v7327 = vsel %vm6415, %v6358, 0.0
        %v7328 = vadd.f32 %v7326, %v7327
        %v7329 = vsel %vm6415, %v6359, 0.0
        %v7330 = vadd.f32 %v7328, %v7329
        %v7331 = vsel %vm6415, %v6360, 0.0
        %v7332 = vadd.f32 %v7330, %v7331
        %v7333 = vsel %vm6415, %v6361, 0.0
        %v7334 = vadd.f32 %v7332, %v7333
        %v7335 = vsel %vm6415, %v6362, 0.0
        %v7336 = vadd.f32 %v7334, %v7335
        %v7337 = vsel %vm6415, %v6363, 0.0
        %v7338 = vadd.f32 %v7336, %v7337
        %v7339 = vsel %vm6415, %v6364, 0.0
        %v7340 = vadd.f32 %v7338, %v7339
        %v7341 = vsel %vm6415, %v6365, 0.0
        %v7342 = vadd.f32 %v7340, %v7341
        %v7343 = vsel %vm6415, %v6366, 0.0
        %v7344 = vadd.f32 %v7342, %v7343
        %v7345 = vsel %vm6415, %v6367, 0.0
        %v7346 = vadd.f32 %v7344, %v7345
        %v7347 = vsel %vm6415, %v6368, 0.0
        %v7348 = vadd.f32 %v7346, %v7347
        %v7349 = vsel %vm6415, %v6369, 0.0
        %v7350 = vadd.f32 %v7348, %v7349
        %v7351 = vsel %vm6415, %v6370, 0.0
        %v7352 = vadd.f32 %v7350, %v7351
        %v7353 = vsel %vm6415, %v6371, 0.0
        %v7354 = vadd.f32 %v7352, %v7353
        %v7355 = vsel %vm6415, %v6372, 0.0
        %v7356 = vadd.f32 %v7354, %v7355
        %v7357 = vsel %vm6415, %v6373, 0.0
        %v7358 = vadd.f32 %v7356, %v7357
        %v7359 = vsel %vm6415, %v6374, 0.0
        %v7360 = vadd.f32 %v7358, %v7359
        %v7361 = vsel %vm6415, %v6375, 0.0
        %v7362 = vadd.f32 %v7360, %v7361
        %v7363 = vsel %vm6415, %v6376, 0.0
        %v7364 = vadd.f32 %v7362, %v7363
        %v7365 = vsel %vm6415, %v6377, 0.0
        %v7366 = vadd.f32 %v7364, %v7365
        %v7367 = vsel %vm6415, %v6378, 0.0
        %v7368 = vadd.f32 %v7366, %v7367
        %v7369 = vsel %vm6415, %v6379, 0.0
        %v7370 = vadd.f32 %v7368, %v7369
        %v7371 = vsel %vm6415, %v6380, 0.0
        %v7372 = vadd.f32 %v7370, %v7371
        %v7373 = vsel %vm6415, %v6381, 0.0
        %v7374 = vadd.f32 %v7372, %v7373
        %v7375 = vsel %vm6415, %v6382, 0.0
        %v7376 = vadd.f32 %v7374, %v7375
        %v7377 = vsel %vm6415, %v6383, 0.0
        %v7378 = vadd.f32 %v7376, %v7377
        %v7379 = vsel %vm6415, %v6384, 0.0
        %v7380 = vadd.f32 %v7378, %v7379
        %v7381 = vsel %vm6415, %v6385, 0.0
        %v7382 = vadd.f32 %v7380, %v7381
        %v7383 = vsel %vm6415, %v6386, 0.0
        %v7384 = vadd.f32 %v7382, %v7383
        %v7385 = vsel %vm6415, %v6387, 0.0
        %v7386 = vadd.f32 %v7384, %v7385
        %v7387 = vsel %vm6415, %v6388, 0.0
        %v7388 = vadd.f32 %v7386, %v7387
        %v7389 = vsel %vm6415, %v6389, 0.0
        %v7390 = vadd.f32 %v7388, %v7389
        %v7391 = vsel %vm6415, %v6390, 0.0
        %v7392 = vadd.f32 %v7390, %v7391
        %v7393 = vsel %vm6415, %v6391, 0.0
        %v7394 = vadd.f32 %v7392, %v7393
        %v7395 = vsel %vm6415, %v6392, 0.0
        %v7396 = vadd.f32 %v7394, %v7395
        %v7397 = vsel %vm6415, %v6393, 0.0
        %v7398 = vadd.f32 %v7396, %v7397
        %v7399 = vsel %vm6415, %v6394, 0.0
        %v7400 = vadd.f32 %v7398, %v7399
        %v7401 = vsel %vm6415, %v6395, 0.0
        %v7402 = vadd.f32 %v7400, %v7401
        %v7403 = vsel %vm6415, %v6396, 0.0
        %v7404 = vadd.f32 %v7402, %v7403
        %v7405 = vsel %vm6415, %v6397, 0.0
        %v7406 = vadd.f32 %v7404, %v7405
        %v7407 = vsel %vm6415, %v6398, 0.0
        %v7408 = vadd.f32 %v7406, %v7407
        %v7409 = vsel %vm6415, %v6399, 0.0
        %v7410 = vadd.f32 %v7408, %v7409
        %v7411 = vsel %vm6415, %v6400, 0.0
        %v7412 = vadd.f32 %v7410, %v7411
        %v7413 = vsel %vm6415, %v6401, 0.0
        %v7414 = vadd.f32 %v7412, %v7413
        %v7415 = vsel %vm6415, %v6402, 0.0
        %v7416 = vadd.f32 %v7414, %v7415
        %v7417 = vsel %vm6415, %v6403, 0.0
        %v7418 = vadd.f32 %v7416, %v7417
        %v7419 = vsel %vm6415, %v6404, 0.0
        %v7420 = vadd.f32 %v7418, %v7419
        %v7421 = vsel %vm6415, %v6405, 0.0
        %v7422 = vadd.f32 %v7420, %v7421
        %v7423 = vsel %vm6415, %v6406, 0.0
        %v7424 = vadd.f32 %v7422, %v7423
        %v7425 = vsel %vm6415, %v6407, 0.0
        %v7426 = vadd.f32 %v7424, %v7425
        %v7427 = vsel %vm6415, %v6408, 0.0
        %v7428 = vadd.f32 %v7426, %v7427
        %v7429 = vsel %vm6415, %v6409, 0.0
        %v7430 = vadd.f32 %v7428, %v7429
        %v7431 = vsel %vm6415, %v6410, 0.0
        %v7432 = vadd.f32 %v7430, %v7431
        %v7433 = vsel %vm6415, %v6411, 0.0
        %v7434 = vadd.f32 %v7432, %v7433
        %v7435 = vsel %vm6415, %v6412, 0.0
        %v7436 = vadd.f32 %v7434, %v7435
        %v7437 = vsel %vm6415, %v6413, 0.0
        %v7438 = vadd.f32 %v7436, %v7437
        %v7439 = vrot.slane %v7438, 4
        %v7440 = vadd.f32 %v7438, %v7439
        %v7441 = vrot.slane %v7440, 2
        %v7442 = vadd.f32 %v7440, %v7441
        %v7443 = vrot.slane %v7442, 1
        %v7444 = vadd.f32 %v7442, %v7443
        %v7445 = vmul.f32 %v5902, %v5902
        %v7446 = vmul.f32 %v5903, %v5903
        %v7447 = vmul.f32 %v5904, %v5904
        %v7448 = vmul.f32 %v5905, %v5905
        %v7449 = vmul.f32 %v5906, %v5906
        %v7450 = vmul.f32 %v5907, %v5907
        %v7451 = vmul.f32 %v5908, %v5908
        %v7452 = vmul.f32 %v5909, %v5909
        %v7453 = vmul.f32 %v5910, %v5910
        %v7454 = vmul.f32 %v5911, %v5911
        %v7455 = vmul.f32 %v5912, %v5912
        %v7456 = vmul.f32 %v5913, %v5913
        %v7457 = vmul.f32 %v5914, %v5914
        %v7458 = vmul.f32 %v5915, %v5915
        %v7459 = vmul.f32 %v5916, %v5916
        %v7460 = vmul.f32 %v5917, %v5917
        %v7461 = vmul.f32 %v5918, %v5918
        %v7462 = vmul.f32 %v5919, %v5919
        %v7463 = vmul.f32 %v5920, %v5920
        %v7464 = vmul.f32 %v5921, %v5921
        %v7465 = vmul.f32 %v5922, %v5922
        %v7466 = vmul.f32 %v5923, %v5923
        %v7467 = vmul.f32 %v5924, %v5924
        %v7468 = vmul.f32 %v5925, %v5925
        %v7469 = vmul.f32 %v5926, %v5926
        %v7470 = vmul.f32 %v5927, %v5927
        %v7471 = vmul.f32 %v5928, %v5928
        %v7472 = vmul.f32 %v5929, %v5929
        %v7473 = vmul.f32 %v5930, %v5930
        %v7474 = vmul.f32 %v5931, %v5931
        %v7475 = vmul.f32 %v5932, %v5932
        %v7476 = vmul.f32 %v5933, %v5933
        %v7477 = vmul.f32 %v5934, %v5934
        %v7478 = vmul.f32 %v5935, %v5935
        %v7479 = vmul.f32 %v5936, %v5936
        %v7480 = vmul.f32 %v5937, %v5937
        %v7481 = vmul.f32 %v5938, %v5938
        %v7482 = vmul.f32 %v5939, %v5939
        %v7483 = vmul.f32 %v5940, %v5940
        %v7484 = vmul.f32 %v5941, %v5941
        %v7485 = vmul.f32 %v5942, %v5942
        %v7486 = vmul.f32 %v5943, %v5943
        %v7487 = vmul.f32 %v5944, %v5944
        %v7488 = vmul.f32 %v5945, %v5945
        %v7489 = vmul.f32 %v5946, %v5946
        %v7490 = vmul.f32 %v5947, %v5947
        %v7491 = vmul.f32 %v5948, %v5948
        %v7492 = vmul.f32 %v5949, %v5949
        %v7493 = vmul.f32 %v5950, %v5950
        %v7494 = vmul.f32 %v5951, %v5951
        %v7495 = vmul.f32 %v5952, %v5952
        %v7496 = vmul.f32 %v5953, %v5953
        %v7497 = vmul.f32 %v5954, %v5954
        %v7498 = vmul.f32 %v5955, %v5955
        %v7499 = vmul.f32 %v5956, %v5956
        %v7500 = vmul.f32 %v5957, %v5957
        %v7501 = vmul.f32 %v5958, %v5958
        %v7502 = vmul.f32 %v5959, %v5959
        %v7503 = vmul.f32 %v5960, %v5960
        %v7504 = vmul.f32 %v5961, %v5961
        %v7505 = vmul.f32 %v5962, %v5962
        %v7506 = vmul.f32 %v5963, %v5963
        %v7507 = vmul.f32 %v5964, %v5964
        %v7508 = vmul.f32 %v5965, %v5965
        %v7509 = vmul.f32 %v5966, %v5966
        %v7510 = vmul.f32 %v5967, %v5967
        %v7511 = vmul.f32 %v5968, %v5968
        %v7512 = vmul.f32 %v5969, %v5969
        %v7513 = vmul.f32 %v5970, %v5970
        %v7514 = vmul.f32 %v5971, %v5971
        %v7515 = vmul.f32 %v5972, %v5972
        %v7516 = vmul.f32 %v5973, %v5973
        %v7517 = vmul.f32 %v5974, %v5974
        %v7518 = vmul.f32 %v5975, %v5975
        %v7519 = vmul.f32 %v5976, %v5976
        %v7520 = vmul.f32 %v5977, %v5977
        %v7521 = vmul.f32 %v5978, %v5978
        %v7522 = vmul.f32 %v5979, %v5979
        %v7523 = vmul.f32 %v5980, %v5980
        %v7524 = vmul.f32 %v5981, %v5981
        %v7525 = vmul.f32 %v5982, %v5982
        %v7526 = vmul.f32 %v5983, %v5983
        %v7527 = vmul.f32 %v5984, %v5984
        %v7528 = vmul.f32 %v5985, %v5985
        %v7529 = vmul.f32 %v5986, %v5986
        %v7530 = vmul.f32 %v5987, %v5987
        %v7531 = vmul.f32 %v5988, %v5988
        %v7532 = vmul.f32 %v5989, %v5989
        %v7533 = vmul.f32 %v5990, %v5990
        %v7534 = vmul.f32 %v5991, %v5991
        %v7535 = vmul.f32 %v5992, %v5992
        %v7536 = vmul.f32 %v5993, %v5993
        %v7537 = vmul.f32 %v5994, %v5994
        %v7538 = vmul.f32 %v5995, %v5995
        %v7539 = vmul.f32 %v5996, %v5996
        %v7540 = vmul.f32 %v5997, %v5997
        %v7541 = vmul.f32 %v5998, %v5998
        %v7542 = vmul.f32 %v5999, %v5999
        %v7543 = vmul.f32 %v6000, %v6000
        %v7544 = vmul.f32 %v6001, %v6001
        %v7545 = vmul.f32 %v6002, %v6002
        %v7546 = vmul.f32 %v6003, %v6003
        %v7547 = vmul.f32 %v6004, %v6004
        %v7548 = vmul.f32 %v6005, %v6005
        %v7549 = vmul.f32 %v6006, %v6006
        %v7550 = vmul.f32 %v6007, %v6007
        %v7551 = vmul.f32 %v6008, %v6008
        %v7552 = vmul.f32 %v6009, %v6009
        %v7553 = vmul.f32 %v6010, %v6010
        %v7554 = vmul.f32 %v6011, %v6011
        %v7555 = vmul.f32 %v6012, %v6012
        %v7556 = vmul.f32 %v6013, %v6013
        %v7557 = vmul.f32 %v6014, %v6014
        %v7558 = vmul.f32 %v6015, %v6015
        %v7559 = vmul.f32 %v6016, %v6016
        %v7560 = vmul.f32 %v6017, %v6017
        %v7561 = vmul.f32 %v6018, %v6018
        %v7562 = vmul.f32 %v6019, %v6019
        %v7563 = vmul.f32 %v6020, %v6020
        %v7564 = vmul.f32 %v6021, %v6021
        %v7565 = vmul.f32 %v6022, %v6022
        %v7566 = vmul.f32 %v6023, %v6023
        %v7567 = vmul.f32 %v6024, %v6024
        %v7568 = vmul.f32 %v6025, %v6025
        %v7569 = vmul.f32 %v6026, %v6026
        %v7570 = vmul.f32 %v6027, %v6027
        %v7571 = vmul.f32 %v6028, %v6028
        %v7572 = vmul.f32 %v6029, %v6029
        %v7573 = vmul.f32 %v6030, %v6030
        %v7574 = vmul.f32 %v6031, %v6031
        %v7575 = vmul.f32 %v6032, %v6032
        %v7576 = vmul.f32 %v6033, %v6033
        %v7577 = vmul.f32 %v6034, %v6034
        %v7578 = vmul.f32 %v6035, %v6035
        %v7579 = vmul.f32 %v6036, %v6036
        %v7580 = vmul.f32 %v6037, %v6037
        %v7581 = vmul.f32 %v6038, %v6038
        %v7582 = vmul.f32 %v6039, %v6039
        %v7583 = vmul.f32 %v6040, %v6040
        %v7584 = vmul.f32 %v6041, %v6041
        %v7585 = vmul.f32 %v6042, %v6042
        %v7586 = vmul.f32 %v6043, %v6043
        %v7587 = vmul.f32 %v6044, %v6044
        %v7588 = vmul.f32 %v6045, %v6045
        %v7589 = vmul.f32 %v6046, %v6046
        %v7590 = vmul.f32 %v6047, %v6047
        %v7591 = vmul.f32 %v6048, %v6048
        %v7592 = vmul.f32 %v6049, %v6049
        %v7593 = vmul.f32 %v6050, %v6050
        %v7594 = vmul.f32 %v6051, %v6051
        %v7595 = vmul.f32 %v6052, %v6052
        %v7596 = vmul.f32 %v6053, %v6053
        %v7597 = vmul.f32 %v6054, %v6054
        %v7598 = vmul.f32 %v6055, %v6055
        %v7599 = vmul.f32 %v6056, %v6056
        %v7600 = vmul.f32 %v6057, %v6057
        %v7601 = vmul.f32 %v6058, %v6058
        %v7602 = vmul.f32 %v6059, %v6059
        %v7603 = vmul.f32 %v6060, %v6060
        %v7604 = vmul.f32 %v6061, %v6061
        %v7605 = vmul.f32 %v6062, %v6062
        %v7606 = vmul.f32 %v6063, %v6063
        %v7607 = vmul.f32 %v6064, %v6064
        %v7608 = vmul.f32 %v6065, %v6065
        %v7609 = vmul.f32 %v6066, %v6066
        %v7610 = vmul.f32 %v6067, %v6067
        %v7611 = vmul.f32 %v6068, %v6068
        %v7612 = vmul.f32 %v6069, %v6069
        %v7613 = vmul.f32 %v6070, %v6070
        %v7614 = vmul.f32 %v6071, %v6071
        %v7615 = vmul.f32 %v6072, %v6072
        %v7616 = vmul.f32 %v6073, %v6073
        %v7617 = vmul.f32 %v6074, %v6074
        %v7618 = vmul.f32 %v6075, %v6075
        %v7619 = vmul.f32 %v6076, %v6076
        %v7620 = vmul.f32 %v6077, %v6077
        %v7621 = vmul.f32 %v6078, %v6078
        %v7622 = vmul.f32 %v6079, %v6079
        %v7623 = vmul.f32 %v6080, %v6080
        %v7624 = vmul.f32 %v6081, %v6081
        %v7625 = vmul.f32 %v6082, %v6082
        %v7626 = vmul.f32 %v6083, %v6083
        %v7627 = vmul.f32 %v6084, %v6084
        %v7628 = vmul.f32 %v6085, %v6085
        %v7629 = vmul.f32 %v6086, %v6086
        %v7630 = vmul.f32 %v6087, %v6087
        %v7631 = vmul.f32 %v6088, %v6088
        %v7632 = vmul.f32 %v6089, %v6089
        %v7633 = vmul.f32 %v6090, %v6090
        %v7634 = vmul.f32 %v6091, %v6091
        %v7635 = vmul.f32 %v6092, %v6092
        %v7636 = vmul.f32 %v6093, %v6093
        %v7637 = vmul.f32 %v6094, %v6094
        %v7638 = vmul.f32 %v6095, %v6095
        %v7639 = vmul.f32 %v6096, %v6096
        %v7640 = vmul.f32 %v6097, %v6097
        %v7641 = vmul.f32 %v6098, %v6098
        %v7642 = vmul.f32 %v6099, %v6099
        %v7643 = vmul.f32 %v6100, %v6100
        %v7644 = vmul.f32 %v6101, %v6101
        %v7645 = vmul.f32 %v6102, %v6102
        %v7646 = vmul.f32 %v6103, %v6103
        %v7647 = vmul.f32 %v6104, %v6104
        %v7648 = vmul.f32 %v6105, %v6105
        %v7649 = vmul.f32 %v6106, %v6106
        %v7650 = vmul.f32 %v6107, %v6107
        %v7651 = vmul.f32 %v6108, %v6108
        %v7652 = vmul.f32 %v6109, %v6109
        %v7653 = vmul.f32 %v6110, %v6110
        %v7654 = vmul.f32 %v6111, %v6111
        %v7655 = vmul.f32 %v6112, %v6112
        %v7656 = vmul.f32 %v6113, %v6113
        %v7657 = vmul.f32 %v6114, %v6114
        %v7658 = vmul.f32 %v6115, %v6115
        %v7659 = vmul.f32 %v6116, %v6116
        %v7660 = vmul.f32 %v6117, %v6117
        %v7661 = vmul.f32 %v6118, %v6118
        %v7662 = vmul.f32 %v6119, %v6119
        %v7663 = vmul.f32 %v6120, %v6120
        %v7664 = vmul.f32 %v6121, %v6121
        %v7665 = vmul.f32 %v6122, %v6122
        %v7666 = vmul.f32 %v6123, %v6123
        %v7667 = vmul.f32 %v6124, %v6124
        %v7668 = vmul.f32 %v6125, %v6125
        %v7669 = vmul.f32 %v6126, %v6126
        %v7670 = vmul.f32 %v6127, %v6127
        %v7671 = vmul.f32 %v6128, %v6128
        %v7672 = vmul.f32 %v6129, %v6129
        %v7673 = vmul.f32 %v6130, %v6130
        %v7674 = vmul.f32 %v6131, %v6131
        %v7675 = vmul.f32 %v6132, %v6132
        %v7676 = vmul.f32 %v6133, %v6133
        %v7677 = vmul.f32 %v6134, %v6134
        %v7678 = vmul.f32 %v6135, %v6135
        %v7679 = vmul.f32 %v6136, %v6136
        %v7680 = vmul.f32 %v6137, %v6137
        %v7681 = vmul.f32 %v6138, %v6138
        %v7682 = vmul.f32 %v6139, %v6139
        %v7683 = vmul.f32 %v6140, %v6140
        %v7684 = vmul.f32 %v6141, %v6141
        %v7685 = vmul.f32 %v6142, %v6142
        %v7686 = vmul.f32 %v6143, %v6143
        %v7687 = vmul.f32 %v6144, %v6144
        %v7688 = vmul.f32 %v6145, %v6145
        %v7689 = vmul.f32 %v6146, %v6146
        %v7690 = vmul.f32 %v6147, %v6147
        %v7691 = vmul.f32 %v6148, %v6148
        %v7692 = vmul.f32 %v6149, %v6149
        %v7693 = vmul.f32 %v6150, %v6150
        %v7694 = vmul.f32 %v6151, %v6151
        %v7695 = vmul.f32 %v6152, %v6152
        %v7696 = vmul.f32 %v6153, %v6153
        %v7697 = vmul.f32 %v6154, %v6154
        %v7698 = vmul.f32 %v6155, %v6155
        %v7699 = vmul.f32 %v6156, %v6156
        %v7700 = vmul.f32 %v6157, %v6157
        %v7701 = vmul.f32 %v6158, %v6158
        %v7702 = vmul.f32 %v6159, %v6159
        %v7703 = vmul.f32 %v6160, %v6160
        %v7704 = vmul.f32 %v6161, %v6161
        %v7705 = vmul.f32 %v6162, %v6162
        %v7706 = vmul.f32 %v6163, %v6163
        %v7707 = vmul.f32 %v6164, %v6164
        %v7708 = vmul.f32 %v6165, %v6165
        %v7709 = vmul.f32 %v6166, %v6166
        %v7710 = vmul.f32 %v6167, %v6167
        %v7711 = vmul.f32 %v6168, %v6168
        %v7712 = vmul.f32 %v6169, %v6169
        %v7713 = vmul.f32 %v6170, %v6170
        %v7714 = vmul.f32 %v6171, %v6171
        %v7715 = vmul.f32 %v6172, %v6172
        %v7716 = vmul.f32 %v6173, %v6173
        %v7717 = vmul.f32 %v6174, %v6174
        %v7718 = vmul.f32 %v6175, %v6175
        %v7719 = vmul.f32 %v6176, %v6176
        %v7720 = vmul.f32 %v6177, %v6177
        %v7721 = vmul.f32 %v6178, %v6178
        %v7722 = vmul.f32 %v6179, %v6179
        %v7723 = vmul.f32 %v6180, %v6180
        %v7724 = vmul.f32 %v6181, %v6181
        %v7725 = vmul.f32 %v6182, %v6182
        %v7726 = vmul.f32 %v6183, %v6183
        %v7727 = vmul.f32 %v6184, %v6184
        %v7728 = vmul.f32 %v6185, %v6185
        %v7729 = vmul.f32 %v6186, %v6186
        %v7730 = vmul.f32 %v6187, %v6187
        %v7731 = vmul.f32 %v6188, %v6188
        %v7732 = vmul.f32 %v6189, %v6189
        %v7733 = vmul.f32 %v6190, %v6190
        %v7734 = vmul.f32 %v6191, %v6191
        %v7735 = vmul.f32 %v6192, %v6192
        %v7736 = vmul.f32 %v6193, %v6193
        %v7737 = vmul.f32 %v6194, %v6194
        %v7738 = vmul.f32 %v6195, %v6195
        %v7739 = vmul.f32 %v6196, %v6196
        %v7740 = vmul.f32 %v6197, %v6197
        %v7741 = vmul.f32 %v6198, %v6198
        %v7742 = vmul.f32 %v6199, %v6199
        %v7743 = vmul.f32 %v6200, %v6200
        %v7744 = vmul.f32 %v6201, %v6201
        %v7745 = vmul.f32 %v6202, %v6202
        %v7746 = vmul.f32 %v6203, %v6203
        %v7747 = vmul.f32 %v6204, %v6204
        %v7748 = vmul.f32 %v6205, %v6205
        %v7749 = vmul.f32 %v6206, %v6206
        %v7750 = vmul.f32 %v6207, %v6207
        %v7751 = vmul.f32 %v6208, %v6208
        %v7752 = vmul.f32 %v6209, %v6209
        %v7753 = vmul.f32 %v6210, %v6210
        %v7754 = vmul.f32 %v6211, %v6211
        %v7755 = vmul.f32 %v6212, %v6212
        %v7756 = vmul.f32 %v6213, %v6213
        %v7757 = vmul.f32 %v6214, %v6214
        %v7758 = vmul.f32 %v6215, %v6215
        %v7759 = vmul.f32 %v6216, %v6216
        %v7760 = vmul.f32 %v6217, %v6217
        %v7761 = vmul.f32 %v6218, %v6218
        %v7762 = vmul.f32 %v6219, %v6219
        %v7763 = vmul.f32 %v6220, %v6220
        %v7764 = vmul.f32 %v6221, %v6221
        %v7765 = vmul.f32 %v6222, %v6222
        %v7766 = vmul.f32 %v6223, %v6223
        %v7767 = vmul.f32 %v6224, %v6224
        %v7768 = vmul.f32 %v6225, %v6225
        %v7769 = vmul.f32 %v6226, %v6226
        %v7770 = vmul.f32 %v6227, %v6227
        %v7771 = vmul.f32 %v6228, %v6228
        %v7772 = vmul.f32 %v6229, %v6229
        %v7773 = vmul.f32 %v6230, %v6230
        %v7774 = vmul.f32 %v6231, %v6231
        %v7775 = vmul.f32 %v6232, %v6232
        %v7776 = vmul.f32 %v6233, %v6233
        %v7777 = vmul.f32 %v6234, %v6234
        %v7778 = vmul.f32 %v6235, %v6235
        %v7779 = vmul.f32 %v6236, %v6236
        %v7780 = vmul.f32 %v6237, %v6237
        %v7781 = vmul.f32 %v6238, %v6238
        %v7782 = vmul.f32 %v6239, %v6239
        %v7783 = vmul.f32 %v6240, %v6240
        %v7784 = vmul.f32 %v6241, %v6241
        %v7785 = vmul.f32 %v6242, %v6242
        %v7786 = vmul.f32 %v6243, %v6243
        %v7787 = vmul.f32 %v6244, %v6244
        %v7788 = vmul.f32 %v6245, %v6245
        %v7789 = vmul.f32 %v6246, %v6246
        %v7790 = vmul.f32 %v6247, %v6247
        %v7791 = vmul.f32 %v6248, %v6248
        %v7792 = vmul.f32 %v6249, %v6249
        %v7793 = vmul.f32 %v6250, %v6250
        %v7794 = vmul.f32 %v6251, %v6251
        %v7795 = vmul.f32 %v6252, %v6252
        %v7796 = vmul.f32 %v6253, %v6253
        %v7797 = vmul.f32 %v6254, %v6254
        %v7798 = vmul.f32 %v6255, %v6255
        %v7799 = vmul.f32 %v6256, %v6256
        %v7800 = vmul.f32 %v6257, %v6257
        %v7801 = vmul.f32 %v6258, %v6258
        %v7802 = vmul.f32 %v6259, %v6259
        %v7803 = vmul.f32 %v6260, %v6260
        %v7804 = vmul.f32 %v6261, %v6261
        %v7805 = vmul.f32 %v6262, %v6262
        %v7806 = vmul.f32 %v6263, %v6263
        %v7807 = vmul.f32 %v6264, %v6264
        %v7808 = vmul.f32 %v6265, %v6265
        %v7809 = vmul.f32 %v6266, %v6266
        %v7810 = vmul.f32 %v6267, %v6267
        %v7811 = vmul.f32 %v6268, %v6268
        %v7812 = vmul.f32 %v6269, %v6269
        %v7813 = vmul.f32 %v6270, %v6270
        %v7814 = vmul.f32 %v6271, %v6271
        %v7815 = vmul.f32 %v6272, %v6272
        %v7816 = vmul.f32 %v6273, %v6273
        %v7817 = vmul.f32 %v6274, %v6274
        %v7818 = vmul.f32 %v6275, %v6275
        %v7819 = vmul.f32 %v6276, %v6276
        %v7820 = vmul.f32 %v6277, %v6277
        %v7821 = vmul.f32 %v6278, %v6278
        %v7822 = vmul.f32 %v6279, %v6279
        %v7823 = vmul.f32 %v6280, %v6280
        %v7824 = vmul.f32 %v6281, %v6281
        %v7825 = vmul.f32 %v6282, %v6282
        %v7826 = vmul.f32 %v6283, %v6283
        %v7827 = vmul.f32 %v6284, %v6284
        %v7828 = vmul.f32 %v6285, %v6285
        %v7829 = vmul.f32 %v6286, %v6286
        %v7830 = vmul.f32 %v6287, %v6287
        %v7831 = vmul.f32 %v6288, %v6288
        %v7832 = vmul.f32 %v6289, %v6289
        %v7833 = vmul.f32 %v6290, %v6290
        %v7834 = vmul.f32 %v6291, %v6291
        %v7835 = vmul.f32 %v6292, %v6292
        %v7836 = vmul.f32 %v6293, %v6293
        %v7837 = vmul.f32 %v6294, %v6294
        %v7838 = vmul.f32 %v6295, %v6295
        %v7839 = vmul.f32 %v6296, %v6296
        %v7840 = vmul.f32 %v6297, %v6297
        %v7841 = vmul.f32 %v6298, %v6298
        %v7842 = vmul.f32 %v6299, %v6299
        %v7843 = vmul.f32 %v6300, %v6300
        %v7844 = vmul.f32 %v6301, %v6301
        %v7845 = vmul.f32 %v6302, %v6302
        %v7846 = vmul.f32 %v6303, %v6303
        %v7847 = vmul.f32 %v6304, %v6304
        %v7848 = vmul.f32 %v6305, %v6305
        %v7849 = vmul.f32 %v6306, %v6306
        %v7850 = vmul.f32 %v6307, %v6307
        %v7851 = vmul.f32 %v6308, %v6308
        %v7852 = vmul.f32 %v6309, %v6309
        %v7853 = vmul.f32 %v6310, %v6310
        %v7854 = vmul.f32 %v6311, %v6311
        %v7855 = vmul.f32 %v6312, %v6312
        %v7856 = vmul.f32 %v6313, %v6313
        %v7857 = vmul.f32 %v6314, %v6314
        %v7858 = vmul.f32 %v6315, %v6315
        %v7859 = vmul.f32 %v6316, %v6316
        %v7860 = vmul.f32 %v6317, %v6317
        %v7861 = vmul.f32 %v6318, %v6318
        %v7862 = vmul.f32 %v6319, %v6319
        %v7863 = vmul.f32 %v6320, %v6320
        %v7864 = vmul.f32 %v6321, %v6321
        %v7865 = vmul.f32 %v6322, %v6322
        %v7866 = vmul.f32 %v6323, %v6323
        %v7867 = vmul.f32 %v6324, %v6324
        %v7868 = vmul.f32 %v6325, %v6325
        %v7869 = vmul.f32 %v6326, %v6326
        %v7870 = vmul.f32 %v6327, %v6327
        %v7871 = vmul.f32 %v6328, %v6328
        %v7872 = vmul.f32 %v6329, %v6329
        %v7873 = vmul.f32 %v6330, %v6330
        %v7874 = vmul.f32 %v6331, %v6331
        %v7875 = vmul.f32 %v6332, %v6332
        %v7876 = vmul.f32 %v6333, %v6333
        %v7877 = vmul.f32 %v6334, %v6334
        %v7878 = vmul.f32 %v6335, %v6335
        %v7879 = vmul.f32 %v6336, %v6336
        %v7880 = vmul.f32 %v6337, %v6337
        %v7881 = vmul.f32 %v6338, %v6338
        %v7882 = vmul.f32 %v6339, %v6339
        %v7883 = vmul.f32 %v6340, %v6340
        %v7884 = vmul.f32 %v6341, %v6341
        %v7885 = vmul.f32 %v6342, %v6342
        %v7886 = vmul.f32 %v6343, %v6343
        %v7887 = vmul.f32 %v6344, %v6344
        %v7888 = vmul.f32 %v6345, %v6345
        %v7889 = vmul.f32 %v6346, %v6346
        %v7890 = vmul.f32 %v6347, %v6347
        %v7891 = vmul.f32 %v6348, %v6348
        %v7892 = vmul.f32 %v6349, %v6349
        %v7893 = vmul.f32 %v6350, %v6350
        %v7894 = vmul.f32 %v6351, %v6351
        %v7895 = vmul.f32 %v6352, %v6352
        %v7896 = vmul.f32 %v6353, %v6353
        %v7897 = vmul.f32 %v6354, %v6354
        %v7898 = vmul.f32 %v6355, %v6355
        %v7899 = vmul.f32 %v6356, %v6356
        %v7900 = vmul.f32 %v6357, %v6357
        %v7901 = vmul.f32 %v6358, %v6358
        %v7902 = vmul.f32 %v6359, %v6359
        %v7903 = vmul.f32 %v6360, %v6360
        %v7904 = vmul.f32 %v6361, %v6361
        %v7905 = vmul.f32 %v6362, %v6362
        %v7906 = vmul.f32 %v6363, %v6363
        %v7907 = vmul.f32 %v6364, %v6364
        %v7908 = vmul.f32 %v6365, %v6365
        %v7909 = vmul.f32 %v6366, %v6366
        %v7910 = vmul.f32 %v6367, %v6367
        %v7911 = vmul.f32 %v6368, %v6368
        %v7912 = vmul.f32 %v6369, %v6369
        %v7913 = vmul.f32 %v6370, %v6370
        %v7914 = vmul.f32 %v6371, %v6371
        %v7915 = vmul.f32 %v6372, %v6372
        %v7916 = vmul.f32 %v6373, %v6373
        %v7917 = vmul.f32 %v6374, %v6374
        %v7918 = vmul.f32 %v6375, %v6375
        %v7919 = vmul.f32 %v6376, %v6376
        %v7920 = vmul.f32 %v6377, %v6377
        %v7921 = vmul.f32 %v6378, %v6378
        %v7922 = vmul.f32 %v6379, %v6379
        %v7923 = vmul.f32 %v6380, %v6380
        %v7924 = vmul.f32 %v6381, %v6381
        %v7925 = vmul.f32 %v6382, %v6382
        %v7926 = vmul.f32 %v6383, %v6383
        %v7927 = vmul.f32 %v6384, %v6384
        %v7928 = vmul.f32 %v6385, %v6385
        %v7929 = vmul.f32 %v6386, %v6386
        %v7930 = vmul.f32 %v6387, %v6387
        %v7931 = vmul.f32 %v6388, %v6388
        %v7932 = vmul.f32 %v6389, %v6389
        %v7933 = vmul.f32 %v6390, %v6390
        %v7934 = vmul.f32 %v6391, %v6391
        %v7935 = vmul.f32 %v6392, %v6392
        %v7936 = vmul.f32 %v6393, %v6393
        %v7937 = vmul.f32 %v6394, %v6394
        %v7938 = vmul.f32 %v6395, %v6395
        %v7939 = vmul.f32 %v6396, %v6396
        %v7940 = vmul.f32 %v6397, %v6397
        %v7941 = vmul.f32 %v6398, %v6398
        %v7942 = vmul.f32 %v6399, %v6399
        %v7943 = vmul.f32 %v6400, %v6400
        %v7944 = vmul.f32 %v6401, %v6401
        %v7945 = vmul.f32 %v6402, %v6402
        %v7946 = vmul.f32 %v6403, %v6403
        %v7947 = vmul.f32 %v6404, %v6404
        %v7948 = vmul.f32 %v6405, %v6405
        %v7949 = vmul.f32 %v6406, %v6406
        %v7950 = vmul.f32 %v6407, %v6407
        %v7951 = vmul.f32 %v6408, %v6408
        %v7952 = vmul.f32 %v6409, %v6409
        %v7953 = vmul.f32 %v6410, %v6410
        %v7954 = vmul.f32 %v6411, %v6411
        %v7955 = vmul.f32 %v6412, %v6412
        %v7956 = vmul.f32 %v6413, %v6413
        %v7957 = vsel %vm6415, %v7445, 0.0
        %v7958 = vsel %vm6415, %v7446, 0.0
        %v7959 = vadd.f32 %v7957, %v7958
        %v7960 = vsel %vm6415, %v7447, 0.0
        %v7961 = vadd.f32 %v7959, %v7960
        %v7962 = vsel %vm6415, %v7448, 0.0
        %v7963 = vadd.f32 %v7961, %v7962
        %v7964 = vsel %vm6415, %v7449, 0.0
        %v7965 = vadd.f32 %v7963, %v7964
        %v7966 = vsel %vm6415, %v7450, 0.0
        %v7967 = vadd.f32 %v7965, %v7966
        %v7968 = vsel %vm6415, %v7451, 0.0
        %v7969 = vadd.f32 %v7967, %v7968
        %v7970 = vsel %vm6415, %v7452, 0.0
        %v7971 = vadd.f32 %v7969, %v7970
        %v7972 = vsel %vm6415, %v7453, 0.0
        %v7973 = vadd.f32 %v7971, %v7972
        %v7974 = vsel %vm6415, %v7454, 0.0
        %v7975 = vadd.f32 %v7973, %v7974
        %v7976 = vsel %vm6415, %v7455, 0.0
        %v7977 = vadd.f32 %v7975, %v7976
        %v7978 = vsel %vm6415, %v7456, 0.0
        %v7979 = vadd.f32 %v7977, %v7978
        %v7980 = vsel %vm6415, %v7457, 0.0
        %v7981 = vadd.f32 %v7979, %v7980
        %v7982 = vsel %vm6415, %v7458, 0.0
        %v7983 = vadd.f32 %v7981, %v7982
        %v7984 = vsel %vm6415, %v7459, 0.0
        %v7985 = vadd.f32 %v7983, %v7984
        %v7986 = vsel %vm6415, %v7460, 0.0
        %v7987 = vadd.f32 %v7985, %v7986
        %v7988 = vsel %vm6415, %v7461, 0.0
        %v7989 = vadd.f32 %v7987, %v7988
        %v7990 = vsel %vm6415, %v7462, 0.0
        %v7991 = vadd.f32 %v7989, %v7990
        %v7992 = vsel %vm6415, %v7463, 0.0
        %v7993 = vadd.f32 %v7991, %v7992
        %v7994 = vsel %vm6415, %v7464, 0.0
        %v7995 = vadd.f32 %v7993, %v7994
        %v7996 = vsel %vm6415, %v7465, 0.0
        %v7997 = vadd.f32 %v7995, %v7996
        %v7998 = vsel %vm6415, %v7466, 0.0
        %v7999 = vadd.f32 %v7997, %v7998
        %v8000 = vsel %vm6415, %v7467, 0.0
        %v8001 = vadd.f32 %v7999, %v8000
        %v8002 = vsel %vm6415, %v7468, 0.0
        %v8003 = vadd.f32 %v8001, %v8002
        %v8004 = vsel %vm6415, %v7469, 0.0
        %v8005 = vadd.f32 %v8003, %v8004
        %v8006 = vsel %vm6415, %v7470, 0.0
        %v8007 = vadd.f32 %v8005, %v8006
        %v8008 = vsel %vm6415, %v7471, 0.0
        %v8009 = vadd.f32 %v8007, %v8008
        %v8010 = vsel %vm6415, %v7472, 0.0
        %v8011 = vadd.f32 %v8009, %v8010
        %v8012 = vsel %vm6415, %v7473, 0.0
        %v8013 = vadd.f32 %v8011, %v8012
        %v8014 = vsel %vm6415, %v7474, 0.0
        %v8015 = vadd.f32 %v8013, %v8014
        %v8016 = vsel %vm6415, %v7475, 0.0
        %v8017 = vadd.f32 %v8015, %v8016
        %v8018 = vsel %vm6415, %v7476, 0.0
        %v8019 = vadd.f32 %v8017, %v8018
        %v8020 = vsel %vm6415, %v7477, 0.0
        %v8021 = vadd.f32 %v8019, %v8020
        %v8022 = vsel %vm6415, %v7478, 0.0
        %v8023 = vadd.f32 %v8021, %v8022
        %v8024 = vsel %vm6415, %v7479, 0.0
        %v8025 = vadd.f32 %v8023, %v8024
        %v8026 = vsel %vm6415, %v7480, 0.0
        %v8027 = vadd.f32 %v8025, %v8026
        %v8028 = vsel %vm6415, %v7481, 0.0
        %v8029 = vadd.f32 %v8027, %v8028
        %v8030 = vsel %vm6415, %v7482, 0.0
        %v8031 = vadd.f32 %v8029, %v8030
        %v8032 = vsel %vm6415, %v7483, 0.0
        %v8033 = vadd.f32 %v8031, %v8032
        %v8034 = vsel %vm6415, %v7484, 0.0
        %v8035 = vadd.f32 %v8033, %v8034
        %v8036 = vsel %vm6415, %v7485, 0.0
        %v8037 = vadd.f32 %v8035, %v8036
        %v8038 = vsel %vm6415, %v7486, 0.0
        %v8039 = vadd.f32 %v8037, %v8038
        %v8040 = vsel %vm6415, %v7487, 0.0
        %v8041 = vadd.f32 %v8039, %v8040
        %v8042 = vsel %vm6415, %v7488, 0.0
        %v8043 = vadd.f32 %v8041, %v8042
        %v8044 = vsel %vm6415, %v7489, 0.0
        %v8045 = vadd.f32 %v8043, %v8044
        %v8046 = vsel %vm6415, %v7490, 0.0
        %v8047 = vadd.f32 %v8045, %v8046
        %v8048 = vsel %vm6415, %v7491, 0.0
        %v8049 = vadd.f32 %v8047, %v8048
        %v8050 = vsel %vm6415, %v7492, 0.0
        %v8051 = vadd.f32 %v8049, %v8050
        %v8052 = vsel %vm6415, %v7493, 0.0
        %v8053 = vadd.f32 %v8051, %v8052
        %v8054 = vsel %vm6415, %v7494, 0.0
        %v8055 = vadd.f32 %v8053, %v8054
        %v8056 = vsel %vm6415, %v7495, 0.0
        %v8057 = vadd.f32 %v8055, %v8056
        %v8058 = vsel %vm6415, %v7496, 0.0
        %v8059 = vadd.f32 %v8057, %v8058
        %v8060 = vsel %vm6415, %v7497, 0.0
        %v8061 = vadd.f32 %v8059, %v8060
        %v8062 = vsel %vm6415, %v7498, 0.0
        %v8063 = vadd.f32 %v8061, %v8062
        %v8064 = vsel %vm6415, %v7499, 0.0
        %v8065 = vadd.f32 %v8063, %v8064
        %v8066 = vsel %vm6415, %v7500, 0.0
        %v8067 = vadd.f32 %v8065, %v8066
        %v8068 = vsel %vm6415, %v7501, 0.0
        %v8069 = vadd.f32 %v8067, %v8068
        %v8070 = vsel %vm6415, %v7502, 0.0
        %v8071 = vadd.f32 %v8069, %v8070
        %v8072 = vsel %vm6415, %v7503, 0.0
        %v8073 = vadd.f32 %v8071, %v8072
        %v8074 = vsel %vm6415, %v7504, 0.0
        %v8075 = vadd.f32 %v8073, %v8074
        %v8076 = vsel %vm6415, %v7505, 0.0
        %v8077 = vadd.f32 %v8075, %v8076
        %v8078 = vsel %vm6415, %v7506, 0.0
        %v8079 = vadd.f32 %v8077, %v8078
        %v8080 = vsel %vm6415, %v7507, 0.0
        %v8081 = vadd.f32 %v8079, %v8080
        %v8082 = vsel %vm6415, %v7508, 0.0
        %v8083 = vadd.f32 %v8081, %v8082
        %v8084 = vsel %vm6415, %v7509, 0.0
        %v8085 = vadd.f32 %v8083, %v8084
        %v8086 = vsel %vm6415, %v7510, 0.0
        %v8087 = vadd.f32 %v8085, %v8086
        %v8088 = vsel %vm6415, %v7511, 0.0
        %v8089 = vadd.f32 %v8087, %v8088
        %v8090 = vsel %vm6415, %v7512, 0.0
        %v8091 = vadd.f32 %v8089, %v8090
        %v8092 = vsel %vm6415, %v7513, 0.0
        %v8093 = vadd.f32 %v8091, %v8092
        %v8094 = vsel %vm6415, %v7514, 0.0
        %v8095 = vadd.f32 %v8093, %v8094
        %v8096 = vsel %vm6415, %v7515, 0.0
        %v8097 = vadd.f32 %v8095, %v8096
        %v8098 = vsel %vm6415, %v7516, 0.0
        %v8099 = vadd.f32 %v8097, %v8098
        %v8100 = vsel %vm6415, %v7517, 0.0
        %v8101 = vadd.f32 %v8099, %v8100
        %v8102 = vsel %vm6415, %v7518, 0.0
        %v8103 = vadd.f32 %v8101, %v8102
        %v8104 = vsel %vm6415, %v7519, 0.0
        %v8105 = vadd.f32 %v8103, %v8104
        %v8106 = vsel %vm6415, %v7520, 0.0
        %v8107 = vadd.f32 %v8105, %v8106
        %v8108 = vsel %vm6415, %v7521, 0.0
        %v8109 = vadd.f32 %v8107, %v8108
        %v8110 = vsel %vm6415, %v7522, 0.0
        %v8111 = vadd.f32 %v8109, %v8110
        %v8112 = vsel %vm6415, %v7523, 0.0
        %v8113 = vadd.f32 %v8111, %v8112
        %v8114 = vsel %vm6415, %v7524, 0.0
        %v8115 = vadd.f32 %v8113, %v8114
        %v8116 = vsel %vm6415, %v7525, 0.0
        %v8117 = vadd.f32 %v8115, %v8116
        %v8118 = vsel %vm6415, %v7526, 0.0
        %v8119 = vadd.f32 %v8117, %v8118
        %v8120 = vsel %vm6415, %v7527, 0.0
        %v8121 = vadd.f32 %v8119, %v8120
        %v8122 = vsel %vm6415, %v7528, 0.0
        %v8123 = vadd.f32 %v8121, %v8122
        %v8124 = vsel %vm6415, %v7529, 0.0
        %v8125 = vadd.f32 %v8123, %v8124
        %v8126 = vsel %vm6415, %v7530, 0.0
        %v8127 = vadd.f32 %v8125, %v8126
        %v8128 = vsel %vm6415, %v7531, 0.0
        %v8129 = vadd.f32 %v8127, %v8128
        %v8130 = vsel %vm6415, %v7532, 0.0
        %v8131 = vadd.f32 %v8129, %v8130
        %v8132 = vsel %vm6415, %v7533, 0.0
        %v8133 = vadd.f32 %v8131, %v8132
        %v8134 = vsel %vm6415, %v7534, 0.0
        %v8135 = vadd.f32 %v8133, %v8134
        %v8136 = vsel %vm6415, %v7535, 0.0
        %v8137 = vadd.f32 %v8135, %v8136
        %v8138 = vsel %vm6415, %v7536, 0.0
        %v8139 = vadd.f32 %v8137, %v8138
        %v8140 = vsel %vm6415, %v7537, 0.0
        %v8141 = vadd.f32 %v8139, %v8140
        %v8142 = vsel %vm6415, %v7538, 0.0
        %v8143 = vadd.f32 %v8141, %v8142
        %v8144 = vsel %vm6415, %v7539, 0.0
        %v8145 = vadd.f32 %v8143, %v8144
        %v8146 = vsel %vm6415, %v7540, 0.0
        %v8147 = vadd.f32 %v8145, %v8146
        %v8148 = vsel %vm6415, %v7541, 0.0
        %v8149 = vadd.f32 %v8147, %v8148
        %v8150 = vsel %vm6415, %v7542, 0.0
        %v8151 = vadd.f32 %v8149, %v8150
        %v8152 = vsel %vm6415, %v7543, 0.0
        %v8153 = vadd.f32 %v8151, %v8152
        %v8154 = vsel %vm6415, %v7544, 0.0
        %v8155 = vadd.f32 %v8153, %v8154
        %v8156 = vsel %vm6415, %v7545, 0.0
        %v8157 = vadd.f32 %v8155, %v8156
        %v8158 = vsel %vm6415, %v7546, 0.0
        %v8159 = vadd.f32 %v8157, %v8158
        %v8160 = vsel %vm6415, %v7547, 0.0
        %v8161 = vadd.f32 %v8159, %v8160
        %v8162 = vsel %vm6415, %v7548, 0.0
        %v8163 = vadd.f32 %v8161, %v8162
        %v8164 = vsel %vm6415, %v7549, 0.0
        %v8165 = vadd.f32 %v8163, %v8164
        %v8166 = vsel %vm6415, %v7550, 0.0
        %v8167 = vadd.f32 %v8165, %v8166
        %v8168 = vsel %vm6415, %v7551, 0.0
        %v8169 = vadd.f32 %v8167, %v8168
        %v8170 = vsel %vm6415, %v7552, 0.0
        %v8171 = vadd.f32 %v8169, %v8170
        %v8172 = vsel %vm6415, %v7553, 0.0
        %v8173 = vadd.f32 %v8171, %v8172
        %v8174 = vsel %vm6415, %v7554, 0.0
        %v8175 = vadd.f32 %v8173, %v8174
        %v8176 = vsel %vm6415, %v7555, 0.0
        %v8177 = vadd.f32 %v8175, %v8176
        %v8178 = vsel %vm6415, %v7556, 0.0
        %v8179 = vadd.f32 %v8177, %v8178
        %v8180 = vsel %vm6415, %v7557, 0.0
        %v8181 = vadd.f32 %v8179, %v8180
        %v8182 = vsel %vm6415, %v7558, 0.0
        %v8183 = vadd.f32 %v8181, %v8182
        %v8184 = vsel %vm6415, %v7559, 0.0
        %v8185 = vadd.f32 %v8183, %v8184
        %v8186 = vsel %vm6415, %v7560, 0.0
        %v8187 = vadd.f32 %v8185, %v8186
        %v8188 = vsel %vm6415, %v7561, 0.0
        %v8189 = vadd.f32 %v8187, %v8188
        %v8190 = vsel %vm6415, %v7562, 0.0
        %v8191 = vadd.f32 %v8189, %v8190
        %v8192 = vsel %vm6415, %v7563, 0.0
        %v8193 = vadd.f32 %v8191, %v8192
        %v8194 = vsel %vm6415, %v7564, 0.0
        %v8195 = vadd.f32 %v8193, %v8194
        %v8196 = vsel %vm6415, %v7565, 0.0
        %v8197 = vadd.f32 %v8195, %v8196
        %v8198 = vsel %vm6415, %v7566, 0.0
        %v8199 = vadd.f32 %v8197, %v8198
        %v8200 = vsel %vm6415, %v7567, 0.0
        %v8201 = vadd.f32 %v8199, %v8200
        %v8202 = vsel %vm6415, %v7568, 0.0
        %v8203 = vadd.f32 %v8201, %v8202
        %v8204 = vsel %vm6415, %v7569, 0.0
        %v8205 = vadd.f32 %v8203, %v8204
        %v8206 = vsel %vm6415, %v7570, 0.0
        %v8207 = vadd.f32 %v8205, %v8206
        %v8208 = vsel %vm6415, %v7571, 0.0
        %v8209 = vadd.f32 %v8207, %v8208
        %v8210 = vsel %vm6415, %v7572, 0.0
        %v8211 = vadd.f32 %v8209, %v8210
        %v8212 = vsel %vm6415, %v7573, 0.0
        %v8213 = vadd.f32 %v8211, %v8212
        %v8214 = vsel %vm6415, %v7574, 0.0
        %v8215 = vadd.f32 %v8213, %v8214
        %v8216 = vsel %vm6415, %v7575, 0.0
        %v8217 = vadd.f32 %v8215, %v8216
        %v8218 = vsel %vm6415, %v7576, 0.0
        %v8219 = vadd.f32 %v8217, %v8218
        %v8220 = vsel %vm6415, %v7577, 0.0
        %v8221 = vadd.f32 %v8219, %v8220
        %v8222 = vsel %vm6415, %v7578, 0.0
        %v8223 = vadd.f32 %v8221, %v8222
        %v8224 = vsel %vm6415, %v7579, 0.0
        %v8225 = vadd.f32 %v8223, %v8224
        %v8226 = vsel %vm6415, %v7580, 0.0
        %v8227 = vadd.f32 %v8225, %v8226
        %v8228 = vsel %vm6415, %v7581, 0.0
        %v8229 = vadd.f32 %v8227, %v8228
        %v8230 = vsel %vm6415, %v7582, 0.0
        %v8231 = vadd.f32 %v8229, %v8230
        %v8232 = vsel %vm6415, %v7583, 0.0
        %v8233 = vadd.f32 %v8231, %v8232
        %v8234 = vsel %vm6415, %v7584, 0.0
        %v8235 = vadd.f32 %v8233, %v8234
        %v8236 = vsel %vm6415, %v7585, 0.0
        %v8237 = vadd.f32 %v8235, %v8236
        %v8238 = vsel %vm6415, %v7586, 0.0
        %v8239 = vadd.f32 %v8237, %v8238
        %v8240 = vsel %vm6415, %v7587, 0.0
        %v8241 = vadd.f32 %v8239, %v8240
        %v8242 = vsel %vm6415, %v7588, 0.0
        %v8243 = vadd.f32 %v8241, %v8242
        %v8244 = vsel %vm6415, %v7589, 0.0
        %v8245 = vadd.f32 %v8243, %v8244
        %v8246 = vsel %vm6415, %v7590, 0.0
        %v8247 = vadd.f32 %v8245, %v8246
        %v8248 = vsel %vm6415, %v7591, 0.0
        %v8249 = vadd.f32 %v8247, %v8248
        %v8250 = vsel %vm6415, %v7592, 0.0
        %v8251 = vadd.f32 %v8249, %v8250
        %v8252 = vsel %vm6415, %v7593, 0.0
        %v8253 = vadd.f32 %v8251, %v8252
        %v8254 = vsel %vm6415, %v7594, 0.0
        %v8255 = vadd.f32 %v8253, %v8254
        %v8256 = vsel %vm6415, %v7595, 0.0
        %v8257 = vadd.f32 %v8255, %v8256
        %v8258 = vsel %vm6415, %v7596, 0.0
        %v8259 = vadd.f32 %v8257, %v8258
        %v8260 = vsel %vm6415, %v7597, 0.0
        %v8261 = vadd.f32 %v8259, %v8260
        %v8262 = vsel %vm6415, %v7598, 0.0
        %v8263 = vadd.f32 %v8261, %v8262
        %v8264 = vsel %vm6415, %v7599, 0.0
        %v8265 = vadd.f32 %v8263, %v8264
        %v8266 = vsel %vm6415, %v7600, 0.0
        %v8267 = vadd.f32 %v8265, %v8266
        %v8268 = vsel %vm6415, %v7601, 0.0
        %v8269 = vadd.f32 %v8267, %v8268
        %v8270 = vsel %vm6415, %v7602, 0.0
        %v8271 = vadd.f32 %v8269, %v8270
        %v8272 = vsel %vm6415, %v7603, 0.0
        %v8273 = vadd.f32 %v8271, %v8272
        %v8274 = vsel %vm6415, %v7604, 0.0
        %v8275 = vadd.f32 %v8273, %v8274
        %v8276 = vsel %vm6415, %v7605, 0.0
        %v8277 = vadd.f32 %v8275, %v8276
        %v8278 = vsel %vm6415, %v7606, 0.0
        %v8279 = vadd.f32 %v8277, %v8278
        %v8280 = vsel %vm6415, %v7607, 0.0
        %v8281 = vadd.f32 %v8279, %v8280
        %v8282 = vsel %vm6415, %v7608, 0.0
        %v8283 = vadd.f32 %v8281, %v8282
        %v8284 = vsel %vm6415, %v7609, 0.0
        %v8285 = vadd.f32 %v8283, %v8284
        %v8286 = vsel %vm6415, %v7610, 0.0
        %v8287 = vadd.f32 %v8285, %v8286
        %v8288 = vsel %vm6415, %v7611, 0.0
        %v8289 = vadd.f32 %v8287, %v8288
        %v8290 = vsel %vm6415, %v7612, 0.0
        %v8291 = vadd.f32 %v8289, %v8290
        %v8292 = vsel %vm6415, %v7613, 0.0
        %v8293 = vadd.f32 %v8291, %v8292
        %v8294 = vsel %vm6415, %v7614, 0.0
        %v8295 = vadd.f32 %v8293, %v8294
        %v8296 = vsel %vm6415, %v7615, 0.0
        %v8297 = vadd.f32 %v8295, %v8296
        %v8298 = vsel %vm6415, %v7616, 0.0
        %v8299 = vadd.f32 %v8297, %v8298
        %v8300 = vsel %vm6415, %v7617, 0.0
        %v8301 = vadd.f32 %v8299, %v8300
        %v8302 = vsel %vm6415, %v7618, 0.0
        %v8303 = vadd.f32 %v8301, %v8302
        %v8304 = vsel %vm6415, %v7619, 0.0
        %v8305 = vadd.f32 %v8303, %v8304
        %v8306 = vsel %vm6415, %v7620, 0.0
        %v8307 = vadd.f32 %v8305, %v8306
        %v8308 = vsel %vm6415, %v7621, 0.0
        %v8309 = vadd.f32 %v8307, %v8308
        %v8310 = vsel %vm6415, %v7622, 0.0
        %v8311 = vadd.f32 %v8309, %v8310
        %v8312 = vsel %vm6415, %v7623, 0.0
        %v8313 = vadd.f32 %v8311, %v8312
        %v8314 = vsel %vm6415, %v7624, 0.0
        %v8315 = vadd.f32 %v8313, %v8314
        %v8316 = vsel %vm6415, %v7625, 0.0
        %v8317 = vadd.f32 %v8315, %v8316
        %v8318 = vsel %vm6415, %v7626, 0.0
        %v8319 = vadd.f32 %v8317, %v8318
        %v8320 = vsel %vm6415, %v7627, 0.0
        %v8321 = vadd.f32 %v8319, %v8320
        %v8322 = vsel %vm6415, %v7628, 0.0
        %v8323 = vadd.f32 %v8321, %v8322
        %v8324 = vsel %vm6415, %v7629, 0.0
        %v8325 = vadd.f32 %v8323, %v8324
        %v8326 = vsel %vm6415, %v7630, 0.0
        %v8327 = vadd.f32 %v8325, %v8326
        %v8328 = vsel %vm6415, %v7631, 0.0
        %v8329 = vadd.f32 %v8327, %v8328
        %v8330 = vsel %vm6415, %v7632, 0.0
        %v8331 = vadd.f32 %v8329, %v8330
        %v8332 = vsel %vm6415, %v7633, 0.0
        %v8333 = vadd.f32 %v8331, %v8332
        %v8334 = vsel %vm6415, %v7634, 0.0
        %v8335 = vadd.f32 %v8333, %v8334
        %v8336 = vsel %vm6415, %v7635, 0.0
        %v8337 = vadd.f32 %v8335, %v8336
        %v8338 = vsel %vm6415, %v7636, 0.0
        %v8339 = vadd.f32 %v8337, %v8338
        %v8340 = vsel %vm6415, %v7637, 0.0
        %v8341 = vadd.f32 %v8339, %v8340
        %v8342 = vsel %vm6415, %v7638, 0.0
        %v8343 = vadd.f32 %v8341, %v8342
        %v8344 = vsel %vm6415, %v7639, 0.0
        %v8345 = vadd.f32 %v8343, %v8344
        %v8346 = vsel %vm6415, %v7640, 0.0
        %v8347 = vadd.f32 %v8345, %v8346
        %v8348 = vsel %vm6415, %v7641, 0.0
        %v8349 = vadd.f32 %v8347, %v8348
        %v8350 = vsel %vm6415, %v7642, 0.0
        %v8351 = vadd.f32 %v8349, %v8350
        %v8352 = vsel %vm6415, %v7643, 0.0
        %v8353 = vadd.f32 %v8351, %v8352
        %v8354 = vsel %vm6415, %v7644, 0.0
        %v8355 = vadd.f32 %v8353, %v8354
        %v8356 = vsel %vm6415, %v7645, 0.0
        %v8357 = vadd.f32 %v8355, %v8356
        %v8358 = vsel %vm6415, %v7646, 0.0
        %v8359 = vadd.f32 %v8357, %v8358
        %v8360 = vsel %vm6415, %v7647, 0.0
        %v8361 = vadd.f32 %v8359, %v8360
        %v8362 = vsel %vm6415, %v7648, 0.0
        %v8363 = vadd.f32 %v8361, %v8362
        %v8364 = vsel %vm6415, %v7649, 0.0
        %v8365 = vadd.f32 %v8363, %v8364
        %v8366 = vsel %vm6415, %v7650, 0.0
        %v8367 = vadd.f32 %v8365, %v8366
        %v8368 = vsel %vm6415, %v7651, 0.0
        %v8369 = vadd.f32 %v8367, %v8368
        %v8370 = vsel %vm6415, %v7652, 0.0
        %v8371 = vadd.f32 %v8369, %v8370
        %v8372 = vsel %vm6415, %v7653, 0.0
        %v8373 = vadd.f32 %v8371, %v8372
        %v8374 = vsel %vm6415, %v7654, 0.0
        %v8375 = vadd.f32 %v8373, %v8374
        %v8376 = vsel %vm6415, %v7655, 0.0
        %v8377 = vadd.f32 %v8375, %v8376
        %v8378 = vsel %vm6415, %v7656, 0.0
        %v8379 = vadd.f32 %v8377, %v8378
        %v8380 = vsel %vm6415, %v7657, 0.0
        %v8381 = vadd.f32 %v8379, %v8380
        %v8382 = vsel %vm6415, %v7658, 0.0
        %v8383 = vadd.f32 %v8381, %v8382
        %v8384 = vsel %vm6415, %v7659, 0.0
        %v8385 = vadd.f32 %v8383, %v8384
        %v8386 = vsel %vm6415, %v7660, 0.0
        %v8387 = vadd.f32 %v8385, %v8386
        %v8388 = vsel %vm6415, %v7661, 0.0
        %v8389 = vadd.f32 %v8387, %v8388
        %v8390 = vsel %vm6415, %v7662, 0.0
        %v8391 = vadd.f32 %v8389, %v8390
        %v8392 = vsel %vm6415, %v7663, 0.0
        %v8393 = vadd.f32 %v8391, %v8392
        %v8394 = vsel %vm6415, %v7664, 0.0
        %v8395 = vadd.f32 %v8393, %v8394
        %v8396 = vsel %vm6415, %v7665, 0.0
        %v8397 = vadd.f32 %v8395, %v8396
        %v8398 = vsel %vm6415, %v7666, 0.0
        %v8399 = vadd.f32 %v8397, %v8398
        %v8400 = vsel %vm6415, %v7667, 0.0
        %v8401 = vadd.f32 %v8399, %v8400
        %v8402 = vsel %vm6415, %v7668, 0.0
        %v8403 = vadd.f32 %v8401, %v8402
        %v8404 = vsel %vm6415, %v7669, 0.0
        %v8405 = vadd.f32 %v8403, %v8404
        %v8406 = vsel %vm6415, %v7670, 0.0
        %v8407 = vadd.f32 %v8405, %v8406
        %v8408 = vsel %vm6415, %v7671, 0.0
        %v8409 = vadd.f32 %v8407, %v8408
        %v8410 = vsel %vm6415, %v7672, 0.0
        %v8411 = vadd.f32 %v8409, %v8410
        %v8412 = vsel %vm6415, %v7673, 0.0
        %v8413 = vadd.f32 %v8411, %v8412
        %v8414 = vsel %vm6415, %v7674, 0.0
        %v8415 = vadd.f32 %v8413, %v8414
        %v8416 = vsel %vm6415, %v7675, 0.0
        %v8417 = vadd.f32 %v8415, %v8416
        %v8418 = vsel %vm6415, %v7676, 0.0
        %v8419 = vadd.f32 %v8417, %v8418
        %v8420 = vsel %vm6415, %v7677, 0.0
        %v8421 = vadd.f32 %v8419, %v8420
        %v8422 = vsel %vm6415, %v7678, 0.0
        %v8423 = vadd.f32 %v8421, %v8422
        %v8424 = vsel %vm6415, %v7679, 0.0
        %v8425 = vadd.f32 %v8423, %v8424
        %v8426 = vsel %vm6415, %v7680, 0.0
        %v8427 = vadd.f32 %v8425, %v8426
        %v8428 = vsel %vm6415, %v7681, 0.0
        %v8429 = vadd.f32 %v8427, %v8428
        %v8430 = vsel %vm6415, %v7682, 0.0
        %v8431 = vadd.f32 %v8429, %v8430
        %v8432 = vsel %vm6415, %v7683, 0.0
        %v8433 = vadd.f32 %v8431, %v8432
        %v8434 = vsel %vm6415, %v7684, 0.0
        %v8435 = vadd.f32 %v8433, %v8434
        %v8436 = vsel %vm6415, %v7685, 0.0
        %v8437 = vadd.f32 %v8435, %v8436
        %v8438 = vsel %vm6415, %v7686, 0.0
        %v8439 = vadd.f32 %v8437, %v8438
        %v8440 = vsel %vm6415, %v7687, 0.0
        %v8441 = vadd.f32 %v8439, %v8440
        %v8442 = vsel %vm6415, %v7688, 0.0
        %v8443 = vadd.f32 %v8441, %v8442
        %v8444 = vsel %vm6415, %v7689, 0.0
        %v8445 = vadd.f32 %v8443, %v8444
        %v8446 = vsel %vm6415, %v7690, 0.0
        %v8447 = vadd.f32 %v8445, %v8446
        %v8448 = vsel %vm6415, %v7691, 0.0
        %v8449 = vadd.f32 %v8447, %v8448
        %v8450 = vsel %vm6415, %v7692, 0.0
        %v8451 = vadd.f32 %v8449, %v8450
        %v8452 = vsel %vm6415, %v7693, 0.0
        %v8453 = vadd.f32 %v8451, %v8452
        %v8454 = vsel %vm6415, %v7694, 0.0
        %v8455 = vadd.f32 %v8453, %v8454
        %v8456 = vsel %vm6415, %v7695, 0.0
        %v8457 = vadd.f32 %v8455, %v8456
        %v8458 = vsel %vm6415, %v7696, 0.0
        %v8459 = vadd.f32 %v8457, %v8458
        %v8460 = vsel %vm6415, %v7697, 0.0
        %v8461 = vadd.f32 %v8459, %v8460
        %v8462 = vsel %vm6415, %v7698, 0.0
        %v8463 = vadd.f32 %v8461, %v8462
        %v8464 = vsel %vm6415, %v7699, 0.0
        %v8465 = vadd.f32 %v8463, %v8464
        %v8466 = vsel %vm6415, %v7700, 0.0
        %v8467 = vadd.f32 %v8465, %v8466
        %v8468 = vsel %vm6415, %v7701, 0.0
        %v8469 = vadd.f32 %v8467, %v8468
        %v8470 = vsel %vm6415, %v7702, 0.0
        %v8471 = vadd.f32 %v8469, %v8470
        %v8472 = vsel %vm6415, %v7703, 0.0
        %v8473 = vadd.f32 %v8471, %v8472
        %v8474 = vsel %vm6415, %v7704, 0.0
        %v8475 = vadd.f32 %v8473, %v8474
        %v8476 = vsel %vm6415, %v7705, 0.0
        %v8477 = vadd.f32 %v8475, %v8476
        %v8478 = vsel %vm6415, %v7706, 0.0
        %v8479 = vadd.f32 %v8477, %v8478
        %v8480 = vsel %vm6415, %v7707, 0.0
        %v8481 = vadd.f32 %v8479, %v8480
        %v8482 = vsel %vm6415, %v7708, 0.0
        %v8483 = vadd.f32 %v8481, %v8482
        %v8484 = vsel %vm6415, %v7709, 0.0
        %v8485 = vadd.f32 %v8483, %v8484
        %v8486 = vsel %vm6415, %v7710, 0.0
        %v8487 = vadd.f32 %v8485, %v8486
        %v8488 = vsel %vm6415, %v7711, 0.0
        %v8489 = vadd.f32 %v8487, %v8488
        %v8490 = vsel %vm6415, %v7712, 0.0
        %v8491 = vadd.f32 %v8489, %v8490
        %v8492 = vsel %vm6415, %v7713, 0.0
        %v8493 = vadd.f32 %v8491, %v8492
        %v8494 = vsel %vm6415, %v7714, 0.0
        %v8495 = vadd.f32 %v8493, %v8494
        %v8496 = vsel %vm6415, %v7715, 0.0
        %v8497 = vadd.f32 %v8495, %v8496
        %v8498 = vsel %vm6415, %v7716, 0.0
        %v8499 = vadd.f32 %v8497, %v8498
        %v8500 = vsel %vm6415, %v7717, 0.0
        %v8501 = vadd.f32 %v8499, %v8500
        %v8502 = vsel %vm6415, %v7718, 0.0
        %v8503 = vadd.f32 %v8501, %v8502
        %v8504 = vsel %vm6415, %v7719, 0.0
        %v8505 = vadd.f32 %v8503, %v8504
        %v8506 = vsel %vm6415, %v7720, 0.0
        %v8507 = vadd.f32 %v8505, %v8506
        %v8508 = vsel %vm6415, %v7721, 0.0
        %v8509 = vadd.f32 %v8507, %v8508
        %v8510 = vsel %vm6415, %v7722, 0.0
        %v8511 = vadd.f32 %v8509, %v8510
        %v8512 = vsel %vm6415, %v7723, 0.0
        %v8513 = vadd.f32 %v8511, %v8512
        %v8514 = vsel %vm6415, %v7724, 0.0
        %v8515 = vadd.f32 %v8513, %v8514
        %v8516 = vsel %vm6415, %v7725, 0.0
        %v8517 = vadd.f32 %v8515, %v8516
        %v8518 = vsel %vm6415, %v7726, 0.0
        %v8519 = vadd.f32 %v8517, %v8518
        %v8520 = vsel %vm6415, %v7727, 0.0
        %v8521 = vadd.f32 %v8519, %v8520
        %v8522 = vsel %vm6415, %v7728, 0.0
        %v8523 = vadd.f32 %v8521, %v8522
        %v8524 = vsel %vm6415, %v7729, 0.0
        %v8525 = vadd.f32 %v8523, %v8524
        %v8526 = vsel %vm6415, %v7730, 0.0
        %v8527 = vadd.f32 %v8525, %v8526
        %v8528 = vsel %vm6415, %v7731, 0.0
        %v8529 = vadd.f32 %v8527, %v8528
        %v8530 = vsel %vm6415, %v7732, 0.0
        %v8531 = vadd.f32 %v8529, %v8530
        %v8532 = vsel %vm6415, %v7733, 0.0
        %v8533 = vadd.f32 %v8531, %v8532
        %v8534 = vsel %vm6415, %v7734, 0.0
        %v8535 = vadd.f32 %v8533, %v8534
        %v8536 = vsel %vm6415, %v7735, 0.0
        %v8537 = vadd.f32 %v8535, %v8536
        %v8538 = vsel %vm6415, %v7736, 0.0
        %v8539 = vadd.f32 %v8537, %v8538
        %v8540 = vsel %vm6415, %v7737, 0.0
        %v8541 = vadd.f32 %v8539, %v8540
        %v8542 = vsel %vm6415, %v7738, 0.0
        %v8543 = vadd.f32 %v8541, %v8542
        %v8544 = vsel %vm6415, %v7739, 0.0
        %v8545 = vadd.f32 %v8543, %v8544
        %v8546 = vsel %vm6415, %v7740, 0.0
        %v8547 = vadd.f32 %v8545, %v8546
        %v8548 = vsel %vm6415, %v7741, 0.0
        %v8549 = vadd.f32 %v8547, %v8548
        %v8550 = vsel %vm6415, %v7742, 0.0
        %v8551 = vadd.f32 %v8549, %v8550
        %v8552 = vsel %vm6415, %v7743, 0.0
        %v8553 = vadd.f32 %v8551, %v8552
        %v8554 = vsel %vm6415, %v7744, 0.0
        %v8555 = vadd.f32 %v8553, %v8554
        %v8556 = vsel %vm6415, %v7745, 0.0
        %v8557 = vadd.f32 %v8555, %v8556
        %v8558 = vsel %vm6415, %v7746, 0.0
        %v8559 = vadd.f32 %v8557, %v8558
        %v8560 = vsel %vm6415, %v7747, 0.0
        %v8561 = vadd.f32 %v8559, %v8560
        %v8562 = vsel %vm6415, %v7748, 0.0
        %v8563 = vadd.f32 %v8561, %v8562
        %v8564 = vsel %vm6415, %v7749, 0.0
        %v8565 = vadd.f32 %v8563, %v8564
        %v8566 = vsel %vm6415, %v7750, 0.0
        %v8567 = vadd.f32 %v8565, %v8566
        %v8568 = vsel %vm6415, %v7751, 0.0
        %v8569 = vadd.f32 %v8567, %v8568
        %v8570 = vsel %vm6415, %v7752, 0.0
        %v8571 = vadd.f32 %v8569, %v8570
        %v8572 = vsel %vm6415, %v7753, 0.0
        %v8573 = vadd.f32 %v8571, %v8572
        %v8574 = vsel %vm6415, %v7754, 0.0
        %v8575 = vadd.f32 %v8573, %v8574
        %v8576 = vsel %vm6415, %v7755, 0.0
        %v8577 = vadd.f32 %v8575, %v8576
        %v8578 = vsel %vm6415, %v7756, 0.0
        %v8579 = vadd.f32 %v8577, %v8578
        %v8580 = vsel %vm6415, %v7757, 0.0
        %v8581 = vadd.f32 %v8579, %v8580
        %v8582 = vsel %vm6415, %v7758, 0.0
        %v8583 = vadd.f32 %v8581, %v8582
        %v8584 = vsel %vm6415, %v7759, 0.0
        %v8585 = vadd.f32 %v8583, %v8584
        %v8586 = vsel %vm6415, %v7760, 0.0
        %v8587 = vadd.f32 %v8585, %v8586
        %v8588 = vsel %vm6415, %v7761, 0.0
        %v8589 = vadd.f32 %v8587, %v8588
        %v8590 = vsel %vm6415, %v7762, 0.0
        %v8591 = vadd.f32 %v8589, %v8590
        %v8592 = vsel %vm6415, %v7763, 0.0
        %v8593 = vadd.f32 %v8591, %v8592
        %v8594 = vsel %vm6415, %v7764, 0.0
        %v8595 = vadd.f32 %v8593, %v8594
        %v8596 = vsel %vm6415, %v7765, 0.0
        %v8597 = vadd.f32 %v8595, %v8596
        %v8598 = vsel %vm6415, %v7766, 0.0
        %v8599 = vadd.f32 %v8597, %v8598
        %v8600 = vsel %vm6415, %v7767, 0.0
        %v8601 = vadd.f32 %v8599, %v8600
        %v8602 = vsel %vm6415, %v7768, 0.0
        %v8603 = vadd.f32 %v8601, %v8602
        %v8604 = vsel %vm6415, %v7769, 0.0
        %v8605 = vadd.f32 %v8603, %v8604
        %v8606 = vsel %vm6415, %v7770, 0.0
        %v8607 = vadd.f32 %v8605, %v8606
        %v8608 = vsel %vm6415, %v7771, 0.0
        %v8609 = vadd.f32 %v8607, %v8608
        %v8610 = vsel %vm6415, %v7772, 0.0
        %v8611 = vadd.f32 %v8609, %v8610
        %v8612 = vsel %vm6415, %v7773, 0.0
        %v8613 = vadd.f32 %v8611, %v8612
        %v8614 = vsel %vm6415, %v7774, 0.0
        %v8615 = vadd.f32 %v8613, %v8614
        %v8616 = vsel %vm6415, %v7775, 0.0
        %v8617 = vadd.f32 %v8615, %v8616
        %v8618 = vsel %vm6415, %v7776, 0.0
        %v8619 = vadd.f32 %v8617, %v8618
        %v8620 = vsel %vm6415, %v7777, 0.0
        %v8621 = vadd.f32 %v8619, %v8620
        %v8622 = vsel %vm6415, %v7778, 0.0
        %v8623 = vadd.f32 %v8621, %v8622
        %v8624 = vsel %vm6415, %v7779, 0.0
        %v8625 = vadd.f32 %v8623, %v8624
        %v8626 = vsel %vm6415, %v7780, 0.0
        %v8627 = vadd.f32 %v8625, %v8626
        %v8628 = vsel %vm6415, %v7781, 0.0
        %v8629 = vadd.f32 %v8627, %v8628
        %v8630 = vsel %vm6415, %v7782, 0.0
        %v8631 = vadd.f32 %v8629, %v8630
        %v8632 = vsel %vm6415, %v7783, 0.0
        %v8633 = vadd.f32 %v8631, %v8632
        %v8634 = vsel %vm6415, %v7784, 0.0
        %v8635 = vadd.f32 %v8633, %v8634
        %v8636 = vsel %vm6415, %v7785, 0.0
        %v8637 = vadd.f32 %v8635, %v8636
        %v8638 = vsel %vm6415, %v7786, 0.0
        %v8639 = vadd.f32 %v8637, %v8638
        %v8640 = vsel %vm6415, %v7787, 0.0
        %v8641 = vadd.f32 %v8639, %v8640
        %v8642 = vsel %vm6415, %v7788, 0.0
        %v8643 = vadd.f32 %v8641, %v8642
        %v8644 = vsel %vm6415, %v7789, 0.0
        %v8645 = vadd.f32 %v8643, %v8644
        %v8646 = vsel %vm6415, %v7790, 0.0
        %v8647 = vadd.f32 %v8645, %v8646
        %v8648 = vsel %vm6415, %v7791, 0.0
        %v8649 = vadd.f32 %v8647, %v8648
        %v8650 = vsel %vm6415, %v7792, 0.0
        %v8651 = vadd.f32 %v8649, %v8650
        %v8652 = vsel %vm6415, %v7793, 0.0
        %v8653 = vadd.f32 %v8651, %v8652
        %v8654 = vsel %vm6415, %v7794, 0.0
        %v8655 = vadd.f32 %v8653, %v8654
        %v8656 = vsel %vm6415, %v7795, 0.0
        %v8657 = vadd.f32 %v8655, %v8656
        %v8658 = vsel %vm6415, %v7796, 0.0
        %v8659 = vadd.f32 %v8657, %v8658
        %v8660 = vsel %vm6415, %v7797, 0.0
        %v8661 = vadd.f32 %v8659, %v8660
        %v8662 = vsel %vm6415, %v7798, 0.0
        %v8663 = vadd.f32 %v8661, %v8662
        %v8664 = vsel %vm6415, %v7799, 0.0
        %v8665 = vadd.f32 %v8663, %v8664
        %v8666 = vsel %vm6415, %v7800, 0.0
        %v8667 = vadd.f32 %v8665, %v8666
        %v8668 = vsel %vm6415, %v7801, 0.0
        %v8669 = vadd.f32 %v8667, %v8668
        %v8670 = vsel %vm6415, %v7802, 0.0
        %v8671 = vadd.f32 %v8669, %v8670
        %v8672 = vsel %vm6415, %v7803, 0.0
        %v8673 = vadd.f32 %v8671, %v8672
        %v8674 = vsel %vm6415, %v7804, 0.0
        %v8675 = vadd.f32 %v8673, %v8674
        %v8676 = vsel %vm6415, %v7805, 0.0
        %v8677 = vadd.f32 %v8675, %v8676
        %v8678 = vsel %vm6415, %v7806, 0.0
        %v8679 = vadd.f32 %v8677, %v8678
        %v8680 = vsel %vm6415, %v7807, 0.0
        %v8681 = vadd.f32 %v8679, %v8680
        %v8682 = vsel %vm6415, %v7808, 0.0
        %v8683 = vadd.f32 %v8681, %v8682
        %v8684 = vsel %vm6415, %v7809, 0.0
        %v8685 = vadd.f32 %v8683, %v8684
        %v8686 = vsel %vm6415, %v7810, 0.0
        %v8687 = vadd.f32 %v8685, %v8686
        %v8688 = vsel %vm6415, %v7811, 0.0
        %v8689 = vadd.f32 %v8687, %v8688
        %v8690 = vsel %vm6415, %v7812, 0.0
        %v8691 = vadd.f32 %v8689, %v8690
        %v8692 = vsel %vm6415, %v7813, 0.0
        %v8693 = vadd.f32 %v8691, %v8692
        %v8694 = vsel %vm6415, %v7814, 0.0
        %v8695 = vadd.f32 %v8693, %v8694
        %v8696 = vsel %vm6415, %v7815, 0.0
        %v8697 = vadd.f32 %v8695, %v8696
        %v8698 = vsel %vm6415, %v7816, 0.0
        %v8699 = vadd.f32 %v8697, %v8698
        %v8700 = vsel %vm6415, %v7817, 0.0
        %v8701 = vadd.f32 %v8699, %v8700
        %v8702 = vsel %vm6415, %v7818, 0.0
        %v8703 = vadd.f32 %v8701, %v8702
        %v8704 = vsel %vm6415, %v7819, 0.0
        %v8705 = vadd.f32 %v8703, %v8704
        %v8706 = vsel %vm6415, %v7820, 0.0
        %v8707 = vadd.f32 %v8705, %v8706
        %v8708 = vsel %vm6415, %v7821, 0.0
        %v8709 = vadd.f32 %v8707, %v8708
        %v8710 = vsel %vm6415, %v7822, 0.0
        %v8711 = vadd.f32 %v8709, %v8710
        %v8712 = vsel %vm6415, %v7823, 0.0
        %v8713 = vadd.f32 %v8711, %v8712
        %v8714 = vsel %vm6415, %v7824, 0.0
        %v8715 = vadd.f32 %v8713, %v8714
        %v8716 = vsel %vm6415, %v7825, 0.0
        %v8717 = vadd.f32 %v8715, %v8716
        %v8718 = vsel %vm6415, %v7826, 0.0
        %v8719 = vadd.f32 %v8717, %v8718
        %v8720 = vsel %vm6415, %v7827, 0.0
        %v8721 = vadd.f32 %v8719, %v8720
        %v8722 = vsel %vm6415, %v7828, 0.0
        %v8723 = vadd.f32 %v8721, %v8722
        %v8724 = vsel %vm6415, %v7829, 0.0
        %v8725 = vadd.f32 %v8723, %v8724
        %v8726 = vsel %vm6415, %v7830, 0.0
        %v8727 = vadd.f32 %v8725, %v8726
        %v8728 = vsel %vm6415, %v7831, 0.0
        %v8729 = vadd.f32 %v8727, %v8728
        %v8730 = vsel %vm6415, %v7832, 0.0
        %v8731 = vadd.f32 %v8729, %v8730
        %v8732 = vsel %vm6415, %v7833, 0.0
        %v8733 = vadd.f32 %v8731, %v8732
        %v8734 = vsel %vm6415, %v7834, 0.0
        %v8735 = vadd.f32 %v8733, %v8734
        %v8736 = vsel %vm6415, %v7835, 0.0
        %v8737 = vadd.f32 %v8735, %v8736
        %v8738 = vsel %vm6415, %v7836, 0.0
        %v8739 = vadd.f32 %v8737, %v8738
        %v8740 = vsel %vm6415, %v7837, 0.0
        %v8741 = vadd.f32 %v8739, %v8740
        %v8742 = vsel %vm6415, %v7838, 0.0
        %v8743 = vadd.f32 %v8741, %v8742
        %v8744 = vsel %vm6415, %v7839, 0.0
        %v8745 = vadd.f32 %v8743, %v8744
        %v8746 = vsel %vm6415, %v7840, 0.0
        %v8747 = vadd.f32 %v8745, %v8746
        %v8748 = vsel %vm6415, %v7841, 0.0
        %v8749 = vadd.f32 %v8747, %v8748
        %v8750 = vsel %vm6415, %v7842, 0.0
        %v8751 = vadd.f32 %v8749, %v8750
        %v8752 = vsel %vm6415, %v7843, 0.0
        %v8753 = vadd.f32 %v8751, %v8752
        %v8754 = vsel %vm6415, %v7844, 0.0
        %v8755 = vadd.f32 %v8753, %v8754
        %v8756 = vsel %vm6415, %v7845, 0.0
        %v8757 = vadd.f32 %v8755, %v8756
        %v8758 = vsel %vm6415, %v7846, 0.0
        %v8759 = vadd.f32 %v8757, %v8758
        %v8760 = vsel %vm6415, %v7847, 0.0
        %v8761 = vadd.f32 %v8759, %v8760
        %v8762 = vsel %vm6415, %v7848, 0.0
        %v8763 = vadd.f32 %v8761, %v8762
        %v8764 = vsel %vm6415, %v7849, 0.0
        %v8765 = vadd.f32 %v8763, %v8764
        %v8766 = vsel %vm6415, %v7850, 0.0
        %v8767 = vadd.f32 %v8765, %v8766
        %v8768 = vsel %vm6415, %v7851, 0.0
        %v8769 = vadd.f32 %v8767, %v8768
        %v8770 = vsel %vm6415, %v7852, 0.0
        %v8771 = vadd.f32 %v8769, %v8770
        %v8772 = vsel %vm6415, %v7853, 0.0
        %v8773 = vadd.f32 %v8771, %v8772
        %v8774 = vsel %vm6415, %v7854, 0.0
        %v8775 = vadd.f32 %v8773, %v8774
        %v8776 = vsel %vm6415, %v7855, 0.0
        %v8777 = vadd.f32 %v8775, %v8776
        %v8778 = vsel %vm6415, %v7856, 0.0
        %v8779 = vadd.f32 %v8777, %v8778
        %v8780 = vsel %vm6415, %v7857, 0.0
        %v8781 = vadd.f32 %v8779, %v8780
        %v8782 = vsel %vm6415, %v7858, 0.0
        %v8783 = vadd.f32 %v8781, %v8782
        %v8784 = vsel %vm6415, %v7859, 0.0
        %v8785 = vadd.f32 %v8783, %v8784
        %v8786 = vsel %vm6415, %v7860, 0.0
        %v8787 = vadd.f32 %v8785, %v8786
        %v8788 = vsel %vm6415, %v7861, 0.0
        %v8789 = vadd.f32 %v8787, %v8788
        %v8790 = vsel %vm6415, %v7862, 0.0
        %v8791 = vadd.f32 %v8789, %v8790
        %v8792 = vsel %vm6415, %v7863, 0.0
        %v8793 = vadd.f32 %v8791, %v8792
        %v8794 = vsel %vm6415, %v7864, 0.0
        %v8795 = vadd.f32 %v8793, %v8794
        %v8796 = vsel %vm6415, %v7865, 0.0
        %v8797 = vadd.f32 %v8795, %v8796
        %v8798 = vsel %vm6415, %v7866, 0.0
        %v8799 = vadd.f32 %v8797, %v8798
        %v8800 = vsel %vm6415, %v7867, 0.0
        %v8801 = vadd.f32 %v8799, %v8800
        %v8802 = vsel %vm6415, %v7868, 0.0
        %v8803 = vadd.f32 %v8801, %v8802
        %v8804 = vsel %vm6415, %v7869, 0.0
        %v8805 = vadd.f32 %v8803, %v8804
        %v8806 = vsel %vm6415, %v7870, 0.0
        %v8807 = vadd.f32 %v8805, %v8806
        %v8808 = vsel %vm6415, %v7871, 0.0
        %v8809 = vadd.f32 %v8807, %v8808
        %v8810 = vsel %vm6415, %v7872, 0.0
        %v8811 = vadd.f32 %v8809, %v8810
        %v8812 = vsel %vm6415, %v7873, 0.0
        %v8813 = vadd.f32 %v8811, %v8812
        %v8814 = vsel %vm6415, %v7874, 0.0
        %v8815 = vadd.f32 %v8813, %v8814
        %v8816 = vsel %vm6415, %v7875, 0.0
        %v8817 = vadd.f32 %v8815, %v8816
        %v8818 = vsel %vm6415, %v7876, 0.0
        %v8819 = vadd.f32 %v8817, %v8818
        %v8820 = vsel %vm6415, %v7877, 0.0
        %v8821 = vadd.f32 %v8819, %v8820
        %v8822 = vsel %vm6415, %v7878, 0.0
        %v8823 = vadd.f32 %v8821, %v8822
        %v8824 = vsel %vm6415, %v7879, 0.0
        %v8825 = vadd.f32 %v8823, %v8824
        %v8826 = vsel %vm6415, %v7880, 0.0
        %v8827 = vadd.f32 %v8825, %v8826
        %v8828 = vsel %vm6415, %v7881, 0.0
        %v8829 = vadd.f32 %v8827, %v8828
        %v8830 = vsel %vm6415, %v7882, 0.0
        %v8831 = vadd.f32 %v8829, %v8830
        %v8832 = vsel %vm6415, %v7883, 0.0
        %v8833 = vadd.f32 %v8831, %v8832
        %v8834 = vsel %vm6415, %v7884, 0.0
        %v8835 = vadd.f32 %v8833, %v8834
        %v8836 = vsel %vm6415, %v7885, 0.0
        %v8837 = vadd.f32 %v8835, %v8836
        %v8838 = vsel %vm6415, %v7886, 0.0
        %v8839 = vadd.f32 %v8837, %v8838
        %v8840 = vsel %vm6415, %v7887, 0.0
        %v8841 = vadd.f32 %v8839, %v8840
        %v8842 = vsel %vm6415, %v7888, 0.0
        %v8843 = vadd.f32 %v8841, %v8842
        %v8844 = vsel %vm6415, %v7889, 0.0
        %v8845 = vadd.f32 %v8843, %v8844
        %v8846 = vsel %vm6415, %v7890, 0.0
        %v8847 = vadd.f32 %v8845, %v8846
        %v8848 = vsel %vm6415, %v7891, 0.0
        %v8849 = vadd.f32 %v8847, %v8848
        %v8850 = vsel %vm6415, %v7892, 0.0
        %v8851 = vadd.f32 %v8849, %v8850
        %v8852 = vsel %vm6415, %v7893, 0.0
        %v8853 = vadd.f32 %v8851, %v8852
        %v8854 = vsel %vm6415, %v7894, 0.0
        %v8855 = vadd.f32 %v8853, %v8854
        %v8856 = vsel %vm6415, %v7895, 0.0
        %v8857 = vadd.f32 %v8855, %v8856
        %v8858 = vsel %vm6415, %v7896, 0.0
        %v8859 = vadd.f32 %v8857, %v8858
        %v8860 = vsel %vm6415, %v7897, 0.0
        %v8861 = vadd.f32 %v8859, %v8860
        %v8862 = vsel %vm6415, %v7898, 0.0
        %v8863 = vadd.f32 %v8861, %v8862
        %v8864 = vsel %vm6415, %v7899, 0.0
        %v8865 = vadd.f32 %v8863, %v8864
        %v8866 = vsel %vm6415, %v7900, 0.0
        %v8867 = vadd.f32 %v8865, %v8866
        %v8868 = vsel %vm6415, %v7901, 0.0
        %v8869 = vadd.f32 %v8867, %v8868
        %v8870 = vsel %vm6415, %v7902, 0.0
        %v8871 = vadd.f32 %v8869, %v8870
        %v8872 = vsel %vm6415, %v7903, 0.0
        %v8873 = vadd.f32 %v8871, %v8872
        %v8874 = vsel %vm6415, %v7904, 0.0
        %v8875 = vadd.f32 %v8873, %v8874
        %v8876 = vsel %vm6415, %v7905, 0.0
        %v8877 = vadd.f32 %v8875, %v8876
        %v8878 = vsel %vm6415, %v7906, 0.0
        %v8879 = vadd.f32 %v8877, %v8878
        %v8880 = vsel %vm6415, %v7907, 0.0
        %v8881 = vadd.f32 %v8879, %v8880
        %v8882 = vsel %vm6415, %v7908, 0.0
        %v8883 = vadd.f32 %v8881, %v8882
        %v8884 = vsel %vm6415, %v7909, 0.0
        %v8885 = vadd.f32 %v8883, %v8884
        %v8886 = vsel %vm6415, %v7910, 0.0
        %v8887 = vadd.f32 %v8885, %v8886
        %v8888 = vsel %vm6415, %v7911, 0.0
        %v8889 = vadd.f32 %v8887, %v8888
        %v8890 = vsel %vm6415, %v7912, 0.0
        %v8891 = vadd.f32 %v8889, %v8890
        %v8892 = vsel %vm6415, %v7913, 0.0
        %v8893 = vadd.f32 %v8891, %v8892
        %v8894 = vsel %vm6415, %v7914, 0.0
        %v8895 = vadd.f32 %v8893, %v8894
        %v8896 = vsel %vm6415, %v7915, 0.0
        %v8897 = vadd.f32 %v8895, %v8896
        %v8898 = vsel %vm6415, %v7916, 0.0
        %v8899 = vadd.f32 %v8897, %v8898
        %v8900 = vsel %vm6415, %v7917, 0.0
        %v8901 = vadd.f32 %v8899, %v8900
        %v8902 = vsel %vm6415, %v7918, 0.0
        %v8903 = vadd.f32 %v8901, %v8902
        %v8904 = vsel %vm6415, %v7919, 0.0
        %v8905 = vadd.f32 %v8903, %v8904
        %v8906 = vsel %vm6415, %v7920, 0.0
        %v8907 = vadd.f32 %v8905, %v8906
        %v8908 = vsel %vm6415, %v7921, 0.0
        %v8909 = vadd.f32 %v8907, %v8908
        %v8910 = vsel %vm6415, %v7922, 0.0
        %v8911 = vadd.f32 %v8909, %v8910
        %v8912 = vsel %vm6415, %v7923, 0.0
        %v8913 = vadd.f32 %v8911, %v8912
        %v8914 = vsel %vm6415, %v7924, 0.0
        %v8915 = vadd.f32 %v8913, %v8914
        %v8916 = vsel %vm6415, %v7925, 0.0
        %v8917 = vadd.f32 %v8915, %v8916
        %v8918 = vsel %vm6415, %v7926, 0.0
        %v8919 = vadd.f32 %v8917, %v8918
        %v8920 = vsel %vm6415, %v7927, 0.0
        %v8921 = vadd.f32 %v8919, %v8920
        %v8922 = vsel %vm6415, %v7928, 0.0
        %v8923 = vadd.f32 %v8921, %v8922
        %v8924 = vsel %vm6415, %v7929, 0.0
        %v8925 = vadd.f32 %v8923, %v8924
        %v8926 = vsel %vm6415, %v7930, 0.0
        %v8927 = vadd.f32 %v8925, %v8926
        %v8928 = vsel %vm6415, %v7931, 0.0
        %v8929 = vadd.f32 %v8927, %v8928
        %v8930 = vsel %vm6415, %v7932, 0.0
        %v8931 = vadd.f32 %v8929, %v8930
        %v8932 = vsel %vm6415, %v7933, 0.0
        %v8933 = vadd.f32 %v8931, %v8932
        %v8934 = vsel %vm6415, %v7934, 0.0
        %v8935 = vadd.f32 %v8933, %v8934
        %v8936 = vsel %vm6415, %v7935, 0.0
        %v8937 = vadd.f32 %v8935, %v8936
        %v8938 = vsel %vm6415, %v7936, 0.0
        %v8939 = vadd.f32 %v8937, %v8938
        %v8940 = vsel %vm6415, %v7937, 0.0
        %v8941 = vadd.f32 %v8939, %v8940
        %v8942 = vsel %vm6415, %v7938, 0.0
        %v8943 = vadd.f32 %v8941, %v8942
        %v8944 = vsel %vm6415, %v7939, 0.0
        %v8945 = vadd.f32 %v8943, %v8944
        %v8946 = vsel %vm6415, %v7940, 0.0
        %v8947 = vadd.f32 %v8945, %v8946
        %v8948 = vsel %vm6415, %v7941, 0.0
        %v8949 = vadd.f32 %v8947, %v8948
        %v8950 = vsel %vm6415, %v7942, 0.0
        %v8951 = vadd.f32 %v8949, %v8950
        %v8952 = vsel %vm6415, %v7943, 0.0
        %v8953 = vadd.f32 %v8951, %v8952
        %v8954 = vsel %vm6415, %v7944, 0.0
        %v8955 = vadd.f32 %v8953, %v8954
        %v8956 = vsel %vm6415, %v7945, 0.0
        %v8957 = vadd.f32 %v8955, %v8956
        %v8958 = vsel %vm6415, %v7946, 0.0
        %v8959 = vadd.f32 %v8957, %v8958
        %v8960 = vsel %vm6415, %v7947, 0.0
        %v8961 = vadd.f32 %v8959, %v8960
        %v8962 = vsel %vm6415, %v7948, 0.0
        %v8963 = vadd.f32 %v8961, %v8962
        %v8964 = vsel %vm6415, %v7949, 0.0
        %v8965 = vadd.f32 %v8963, %v8964
        %v8966 = vsel %vm6415, %v7950, 0.0
        %v8967 = vadd.f32 %v8965, %v8966
        %v8968 = vsel %vm6415, %v7951, 0.0
        %v8969 = vadd.f32 %v8967, %v8968
        %v8970 = vsel %vm6415, %v7952, 0.0
        %v8971 = vadd.f32 %v8969, %v8970
        %v8972 = vsel %vm6415, %v7953, 0.0
        %v8973 = vadd.f32 %v8971, %v8972
        %v8974 = vsel %vm6415, %v7954, 0.0
        %v8975 = vadd.f32 %v8973, %v8974
        %v8976 = vsel %vm6415, %v7955, 0.0
        %v8977 = vadd.f32 %v8975, %v8976
        %v8978 = vsel %vm6415, %v7956, 0.0
        %v8979 = vadd.f32 %v8977, %v8978
        %v8980 = vrot.slane %v8979, 4
        %v8981 = vadd.f32 %v8979, %v8980
        %v8982 = vrot.slane %v8981, 2
        %v8983 = vadd.f32 %v8981, %v8982
        %v8984 = vrot.slane %v8983, 1
        %v8985 = vadd.f32 %v8983, %v8984
        %v8986 = vstv %s6414
        %v8987 = vrcp.pop %v8986
        %v8988 = vmul.f32 %v8986, %v8987
        %v8989 = vsub.f32 1.0, %v8988
        %v8990 = vmul.f32 %v8987, %v8989
        %v8991 = vadd.f32 %v8987, %v8990
        %vm8992 = vweird.f32 %v8986
        %vm8993 = vweird.f32 %v8987
        %vm8994 = vmor %vm8992, %vm8993
        %v8995 = vsel %vm8994, %v8987, %v8991
        %v8996 = vand.u32 2147483647, %v8986
        %vm8997 = vcmp.eq.f32.partialorder %v8996, 8.507059e+37
        %v8998 = vand.u32 %v8986, 2147483648
        %v8999 = vor.u32 1.1754944e-38, %v8998
        %v9000 = vsel %vm8997, %v8999, %v8995
        %v9001 = vmul.f32 %v7444, %v9000
        %v9002 = vmul.f32 %v7444, %v9001
        %v9003 = vsub.f32 %v8985, %v9002
        %s9004 = smul.u32 %s19, 4096
        %s9005 = scvt.s32.f32 %s9004
        %s9006 = sadd.f32 %s9005, %s6414
        %v9007 = vld [vmem:[#allocation2] sm:$0x1]
        %v9008 = vsub.f32 %v9001, %v9007
        %v9009 = vstv %s9006
        %v9010 = vrcp.pop %v9009
        %v9011 = vmul.f32 %v9009, %v9010
        %v9012 = vsub.f32 1.0, %v9011
        %v9013 = vmul.f32 %v9010, %v9012
        %v9014 = vadd.f32 %v9010, %v9013
        %vm9015 = vweird.f32 %v9009
        %vm9016 = vweird.f32 %v9010
        %vm9017 = vmor %vm9015, %vm9016
        %v9018 = vsel %vm9017, %v9010, %v9014
        %v9019 = vand.u32 2147483647, %v9009
        %vm9020 = vcmp.eq.f32.partialorder %v9019, 8.507059e+37
        %v9021 = vand.u32 %v9009, 2147483648
        %v9022 = vor.u32 1.1754944e-38, %v9021
        %v9023 = vsel %vm9020, %v9022, %v9018
        %s9024 = vtos %v9023
        %s9025 = smul.f32 %s6414, %s9024
        %v9026 = vstv %s9025
        %v9027 = vmul.f32 %v9008, %v9026
        %v9028 = vadd.f32 %v9007, %v9027
        %vm9029 = vcmask 253952
        %9030 = vst.msk [vmem:[#allocation2] sm:$0x1] %vm9029, %v9028
        %v9031 = vld [vmem:[#allocation3] sm:$0x1]
        %v9032 = vadd.f32 %v9031, %v9003
        %v9033 = vmul.f32 %v9008, %v9008
        %s9034 = smul.f32 %s9005, %s6414
        %v9035 = vstv %s9006
        %v9036 = vrcp.pop %v9035
        %v9037 = vmul.f32 %v9035, %v9036
        %v9038 = vsub.f32 1.0, %v9037
        %v9039 = vmul.f32 %v9036, %v9038
        %v9040 = vadd.f32 %v9036, %v9039
        %vm9041 = vweird.f32 %v9035
        %vm9042 = vweird.f32 %v9036
        %vm9043 = vmor %vm9041, %vm9042
        %v9044 = vsel %vm9043, %v9036, %v9040
        %v9045 = vand.u32 2147483647, %v9035
        %vm9046 = vcmp.eq.f32.partialorder %v9045, 8.507059e+37
        %v9047 = vand.u32 %v9035, 2147483648
        %v9048 = vor.u32 1.1754944e-38, %v9047
        %v9049 = vsel %vm9046, %v9048, %v9044
        %s9050 = vtos %v9049
        %s9051 = smul.f32 %s9034, %s9050
        %v9052 = vstv %s9051
        %v9053 = vmul.f32 %v9033, %v9052
        %v9054 = vadd.f32 %v9032, %v9053
        %9055 = vst.msk [vmem:[#allocation3] sm:$0x1] %vm9029, %v9054
        %p9056 = scmp.eq.s32.totalorder %s19, 2
        // Predicated region
        $region41: #{tpu_custom_call.1} parent=35 // pred_check
          %p9057 = pneg %p9056
        $region42: #{tpu_custom_call.1} parent=35 // pred_check_branch
          %9059 = sbr.rel (%p9057) target = $region44
        $region43: #{tpu_custom_call.1} parent=35 // pred_region
          %v9060 = vld [vmem:[#allocation3] sm:$0x1]
          %v9061 = vrcp.pop 9600.0
          %v9062 = vmul.f32 9600.0, %v9061
          %v9063 = vsub.f32 1.0, %v9062
          %v9064 = vmul.f32 %v9061, %v9063
          %v9065 = vadd.f32 %v9061, %v9064
          %vm9066 = vweird.f32 %v9061
          %v9067 = vsel %vm9066, %v9061, %v9065
          %v9068 = vmul.f32 %v9060, %v9067
          %v9069 = vadd.f32 %v9068, 0.001
          %v9070 = vrsqrt.pop %v9069
          %v9071 = vmul.f32 %v9070, %v9069
          %v9072 = vmul.f32 %v9071, %v9070
          %v9073 = vmul.f32 0.5, %v9072
          %v9074 = vsub.f32 1.5, %v9073
          %v9075 = vmul.f32 %v9070, %v9074
          %vm9076 = vweird.f32 %v9069
          %vm9077 = vweird.f32 %v9070
          %vm9078 = vmor %vm9076, %vm9077
          %v9079 = vsel %vm9078, %v9070, %v9075
          %v9080 = vld [vmem:[%s2] sm:$0x1]
          %v9081 = vmul.f32 %v9080, %v9079
          %9082 = vst.msk [vmem:[#allocation4] sm:$0x1] %vm9029, %v9081
          %v9083 = vld [vmem:[%s3] sm:$0x1]
          %v9084 = vld [vmem:[#allocation2] sm:$0x1]
          %v9085 = vld [vmem:[%s2] sm:$0x1]
          %v9086 = vmul.f32 %v9084, %v9085
          %v9087 = vmul.f32 %v9086, %v9079
          %v9088 = vsub.f32 %v9083, %v9087
          %9089 = vst.msk [vmem:[#allocation6] sm:$0x1] %vm9029, %v9088
        $region44: #{tpu_custom_call.1} parent=35 // pred_fallthru
          _
        // Predicated region
        $region45: #{tpu_custom_call.1} parent=35 // pred_check
          %p9090 = pneg %p121
        $region46: #{tpu_custom_call.1} parent=35 // pred_check_branch
          %9092 = sbr.rel (%p9090) target = $region48
        $region47: #{tpu_custom_call.1} parent=35 // pred_region
          %9094 = vsyncadd [#allocation5], 0
          %s9096 = sshll.u32 [#allocation4], 4
          %s9097 = int_to_ptr.vmem [resolvable:$true] %s9096
          %s9098 = sshll.u32 %s4, 4
          %s9099 = int_to_ptr.hbm [resolvable:$true] %s9098
          %9101 = dma.vmem_to_hbm [thread:$0]  %s9097, 16, %s9099, [#allocation5]
        $region48: #{tpu_custom_call.1} parent=35 // pred_fallthru
          _
        // Predicated region
        $region49: #{tpu_custom_call.1} parent=35 // pred_check
          %p9102 = pneg %p142
        $region50: #{tpu_custom_call.1} parent=35 // pred_check_branch
          %9104 = sbr.rel (%p9102) target = $region52
        $region51: #{tpu_custom_call.1} parent=35 // pred_region
          %9106 = vsyncadd [#allocation7], 0
          %s9108 = sshll.u32 [#allocation6], 4
          %s9109 = int_to_ptr.vmem [resolvable:$true] %s9108
          %s9110 = sshll.u32 %s5, 4
          %s9111 = int_to_ptr.hbm [resolvable:$true] %s9110
          %9113 = dma.vmem_to_hbm [thread:$0]  %s9109, 16, %s9111, [#allocation7]
        $region52: #{tpu_custom_call.1} parent=35 // pred_fallthru
          _
        // Predicated region
        $region53: #{tpu_custom_call.1} parent=35 // pred_check
          %p9114 = pneg %p121
        $region54: #{tpu_custom_call.1} parent=35 // pred_check_branch
          %9116 = sbr.rel (%p9114) target = $region56
        $region55: #{tpu_custom_call.1} parent=35 // pred_region
          %9118 = dma.done [#allocation5], 16
        $region56: #{tpu_custom_call.1} parent=35 // pred_fallthru
          _
        // Predicated region
        $region57: #{tpu_custom_call.1} parent=35 // pred_check
          %p9119 = pneg %p142
        $region58: #{tpu_custom_call.1} parent=35 // pred_check_branch
          %9121 = sbr.rel (%p9119) target = $region60
        $region59: #{tpu_custom_call.1} parent=35 // pred_region
          %9123 = dma.done [#allocation7], 16
        $region60: #{tpu_custom_call.1} parent=35 // pred_fallthru
          _
      $region36: #{tpu_custom_call.1} parent=5 // pred_fallthru
        _
      %p9124 = scmp.le.s32.totalorder 2, %s14
      // Predicated region
      $region61: #{tpu_custom_call.1} parent=5 // pred_check
        %p9125 = pneg %p9124
      $region62: #{tpu_custom_call.1} parent=5 // pred_check_branch
        %9127 = sbr.rel (%p9125) target = $region64
      $region63: #{tpu_custom_call.1} parent=5 // pred_region
        %s9128 = ssub.s32 %s14, 2
      $region64: #{tpu_custom_call.1} parent=5 // pred_fallthru
        _
    $region6: #{tpu_custom_call.1} parent=1 // loop_footer
      %s18 = sadd.s32 1, %s14
    $region7: #{tpu_custom_call.1} parent=1 // loop_footer_branch
      %13 = sbr.rel target = $region3
    $region8: #{tpu_custom_call.1} parent=1 // loop_exit
      _
    %9129 = vsyncpa [#allocation5], 1
    %s9130 = scalar_lea.sflag [#allocation5], 1
    %9131 = vsyncpa %s9130, 1
    %9132 = vsyncpa [#allocation7], 1

</llo_original>
